<compile_context>
chip_gen: v6e
topology: v6e:2x2x1
jax: 0.10.0
libtpu: 0.0.40
codegen_flags: <defaults>
</compile_context>

<pallas_src>
import functools

import jax
import jax.numpy as jnp
from jax.experimental import pallas as pl
from jax.experimental.pallas import tpu as pltpu

_EPS = 1e-5
_LANE = 128          # channel padding granularity (lane width)


def _round_up(x, m):
    return (x + m - 1) // m * m


@functools.lru_cache(maxsize=None)
def _vmem_limit_bytes():
    """Scoped-VMEM budget from the device: ~3/4 of physical, capped at 96 MiB."""
    try:
        cap = int(pltpu.get_tpu_info().vmem_capacity_bytes)
    except Exception:
        cap = 128 * 1024 * 1024
    return min(cap * 3 // 4, 96 * 1024 * 1024)


def _cparams(sem):
    return pltpu.CompilerParams(dimension_semantics=sem,
                                vmem_limit_bytes=_vmem_limit_bytes())


# ---------------- in-kernel helpers ----------------

def _bn_scale_shift(stats_ref, g_ref, b_ref, count):
    """(mean, inv_scale, bias) from a summed (2, C) [sum, sumsq] stats block."""
    mean = stats_ref[0:1, :] * (1.0 / count)
    ex2 = stats_ref[1:2, :] * (1.0 / count)
    var = jnp.maximum(ex2 - mean * mean, 0.0)      # one-pass biased variance
    inv = jax.lax.rsqrt(var + _EPS) * g_ref[...]
    return mean, inv, b_ref[...]


def _channel_stats(y):
    """(2, C) [sum, sum of squares] over rows of a (rows, C) f32 tile."""
    return jnp.concatenate([jnp.sum(y, axis=0, keepdims=True),
                            jnp.sum(y * y, axis=0, keepdims=True)], axis=0)


# ---------------- Pallas kernels ----------------

def _conv1_kernel(x_ref, w_ref, y_ref, st_ref):
    """conv1 (1x1): f32 NHWC rows, cast to bf16 in VMEM, MXU matmul + stats."""
    x = x_ref[0].astype(jnp.bfloat16)                                # (HW, Cin)
    y = jnp.dot(x, w_ref[...], preferred_element_type=jnp.float32)   # (HW, Cp)
    y_ref[0] = y.astype(y_ref.dtype)
    st_ref[0] = _channel_stats(y)


def _conv2_kernel(y1_ref, s1_ref, g1_ref, b1_ref, w2_ref, y2_ref, st_ref,
                  pad_ref, *, h, w, count):
    """Fused bn1+relu, then 3x3 conv (pad=1, stride=1) as 9 accumulating dots."""
    c = y1_ref.shape[-1]
    mean, inv, bias = _bn_scale_shift(s1_ref, g1_ref, b1_ref, count)
    a = jnp.maximum((y1_ref[0].astype(jnp.float32) - mean) * inv + bias, 0.0)

    # Build the 1-pixel halo in a VMEM scratch (no padded HBM activation copy).
    pad_ref[...] = jnp.zeros_like(pad_ref)
    pad_ref[1:h + 1, 1:w + 1, :] = a.astype(jnp.bfloat16).reshape(h, w, c)
    xp = pad_ref[...]                                          # (h+2, w+2, C)

    # 9 accumulating K=C dots (no 9x im2col concat buffer).
    acc = None
    for kh in range(3):
        for kw in range(3):
            tap = xp[kh:kh + h, kw:kw + w, :].reshape(h * w, c)
            part = jnp.dot(tap, w2_ref[kh * 3 + kw],
                           preferred_element_type=jnp.float32)
            acc = part if acc is None else acc + part
    y2_ref[0] = acc.astype(y2_ref.dtype)
    st_ref[0] = _channel_stats(acc)


def _conv3_kernel(y2_ref, s2_ref, g2_ref, b2_ref, w3_ref, y3_ref, st_ref,
                  *, count):
    """Fused bn2+relu, then conv3 (1x1, C -> 4C) + stats."""
    mean, inv, bias = _bn_scale_shift(s2_ref, g2_ref, b2_ref, count)
    a = jnp.maximum((y2_ref[0].astype(jnp.float32) - mean) * inv + bias, 0.0)
    y = jnp.dot(a.astype(jnp.bfloat16), w3_ref[...],
                preferred_element_type=jnp.float32)
    y3_ref[0] = y.astype(y3_ref.dtype)
    st_ref[0] = _channel_stats(y)


def _final_kernel(y3_ref, s3_ref, g3_ref, b3_ref, id_ref, o_ref, *, count, cout):
    """bn3 + residual add + relu; writes the unpadded Cout channels (bf16)."""
    mean, inv, bias = _bn_scale_shift(s3_ref, g3_ref, b3_ref, count)
    y = (y3_ref[0].astype(jnp.float32) - mean) * inv + bias       # (HW, C3p)
    out = jnp.maximum(y[:, :cout] + id_ref[0], 0.0)
    o_ref[0] = out.astype(o_ref.dtype)


# ---------------- pallas_call wrappers (grid = one image per step) ----------------

def _conv1(x3d, w1):
    n, hw, cin = x3d.shape
    c_p = w1.shape[1]
    return pl.pallas_call(
        _conv1_kernel,
        out_shape=(jax.ShapeDtypeStruct((n, hw, c_p), jnp.bfloat16),
                   jax.ShapeDtypeStruct((n, 2, c_p), jnp.float32)),
        grid=(n,),
        in_specs=[pl.BlockSpec((1, hw, cin), lambda i: (i, 0, 0)),
                  pl.BlockSpec((cin, c_p), lambda i: (0, 0))],
        out_specs=(pl.BlockSpec((1, hw, c_p), lambda i: (i, 0, 0)),
                   pl.BlockSpec((1, 2, c_p), lambda i: (i, 0, 0))),
        compiler_params=_cparams(("parallel",)),
    )(x3d, w1)


def _conv2(y1, s1, g1, b1, w2, h, w, count):
    n, hw, c_p = y1.shape
    co = w2.shape[-1]
    kernel = functools.partial(_conv2_kernel, h=h, w=w, count=count)
    return pl.pallas_call(
        kernel,
        out_shape=(jax.ShapeDtypeStruct((n, hw, co), jnp.bfloat16),
                   jax.ShapeDtypeStruct((n, 2, co), jnp.float32)),
        grid=(n,),
        in_specs=[pl.BlockSpec((1, hw, c_p), lambda i: (i, 0, 0)),
                  pl.BlockSpec((2, c_p), lambda i: (0, 0)),
                  pl.BlockSpec((1, c_p), lambda i: (0, 0)),
                  pl.BlockSpec((1, c_p), lambda i: (0, 0)),
                  pl.BlockSpec((9, c_p, co), lambda i: (0, 0, 0))],
        out_specs=(pl.BlockSpec((1, hw, co), lambda i: (i, 0, 0)),
                   pl.BlockSpec((1, 2, co), lambda i: (i, 0, 0))),
        scratch_shapes=[pltpu.VMEM((h + 2, w + 2, c_p), jnp.bfloat16)],
        compiler_params=_cparams(("parallel",)),
    )(y1, s1, g1, b1, w2)


def _conv3(y2, s2, g2, b2, w3, count):
    n, hw, c_p = y2.shape
    c3_p = w3.shape[1]
    kernel = functools.partial(_conv3_kernel, count=count)
    return pl.pallas_call(
        kernel,
        out_shape=(jax.ShapeDtypeStruct((n, hw, c3_p), jnp.bfloat16),
                   jax.ShapeDtypeStruct((n, 2, c3_p), jnp.float32)),
        grid=(n,),
        in_specs=[pl.BlockSpec((1, hw, c_p), lambda i: (i, 0, 0)),
                  pl.BlockSpec((2, c_p), lambda i: (0, 0)),
                  pl.BlockSpec((1, c_p), lambda i: (0, 0)),
                  pl.BlockSpec((1, c_p), lambda i: (0, 0)),
                  pl.BlockSpec((c_p, c3_p), lambda i: (0, 0))],
        out_specs=(pl.BlockSpec((1, hw, c3_p), lambda i: (i, 0, 0)),
                   pl.BlockSpec((1, 2, c3_p), lambda i: (i, 0, 0))),
        compiler_params=_cparams(("parallel",)),
    )(y2, s2, g2, b2, w3)


def _final(y3, s3, g3, b3, identity, count, cout):
    n, hw, c3_p = y3.shape
    kernel = functools.partial(_final_kernel, count=count, cout=cout)
    return pl.pallas_call(
        kernel,
        out_shape=jax.ShapeDtypeStruct((n, hw, cout), jnp.bfloat16),
        grid=(n,),
        in_specs=[pl.BlockSpec((1, hw, c3_p), lambda i: (i, 0, 0)),
                  pl.BlockSpec((2, c3_p), lambda i: (0, 0)),
                  pl.BlockSpec((1, c3_p), lambda i: (0, 0)),
                  pl.BlockSpec((1, c3_p), lambda i: (0, 0)),
                  pl.BlockSpec((1, hw, cout), lambda i: (i, 0, 0))],
        out_specs=pl.BlockSpec((1, hw, cout), lambda i: (i, 0, 0)),
        compiler_params=_cparams(("parallel",)),
    )(y3, s3, g3, b3, identity)


# ---------------- Bottleneck forward ----------------

@functools.partial(jax.jit, static_argnames=("channels", "stride"))
def bottleneck_forward(x_nchw, params, channels, stride=1):
    """Bottleneck with downsample=None (so inchannels == 4*channels, stride==1)."""
    if stride != 1:
        raise ValueError("downsample=None requires stride == 1")
    n, cin, h, w = x_nchw.shape
    cout = 4 * channels
    if cin != cout:
        raise ValueError("downsample=None requires inchannels == 4*channels")

    hw = h * w
    count = float(n * hw)

    # The only XLA layout pass: NCHW -> (N, H*W, Cin) f32.  This slab is both
    # the conv1 input (cast to bf16 in VMEM) and the residual identity.
    x3d = jnp.transpose(x_nchw, (0, 2, 3, 1)).reshape(n, hw, cin)

    # conv1 (1x1); bn1 statistics emitted as per-image partials (parallel grid).
    y1, s1 = _conv1(x3d, params["w1"])
    s1 = jnp.sum(s1, axis=0)                                   # tiny (2, Cp)

    # bn1+relu fused into the 3x3 conv (halo built in VMEM, 9 accumulating dots).
    y2, s2 = _conv2(y1, s1, params["g1"], params["b1"], params["w2"], h, w, count)
    s2 = jnp.sum(s2, axis=0)

    # bn2+relu fused into conv3 (1x1, C -> 4C).
    y3, s3 = _conv3(y2, s2, params["g2"], params["b2"], params["w3"], count)
    s3 = jnp.sum(s3, axis=0)

    # bn3 + residual add + relu; unpadded bf16 store (largest HBM write halved).
    out = _final(y3, s3, params["g3"], params["b3"], x3d, count, cout)

    out = out.reshape(n, h, w, cout)
    # Restore the module interface (NCHW, f32) in the trailing transpose.
    return jnp.transpose(out, (0, 3, 1, 2)).astype(jnp.float32)


# ---------------- parameter construction ----------------

def make_params(key, inchannels, channels):
    expansion = 4
    c_p = _round_up(channels, _LANE)
    c3_p = _round_up(channels * expansion, _LANE)
    k1, k2, k3 = jax.random.split(key, 3)

    # conv1's K dim (inchannels) stays unpadded; intermediate Cout dims are
    # padded to the 128-lane width (inert zero channels).
    w1 = jnp.zeros((inchannels, c_p), jnp.float32).at[:, :channels].set(
        jax.random.normal(k1, (inchannels, channels), jnp.float32) * 0.1)
    w2 = jnp.zeros((3, 3, c_p, c_p), jnp.float32).at[:, :, :channels, :channels].set(
        jax.random.normal(k2, (3, 3, channels, channels), jnp.float32) * 0.1)
    w2 = w2.reshape(9, c_p, c_p)                  # tap-major for 9 accumulating dots
    w3 = jnp.zeros((c_p, c3_p), jnp.float32).at[:channels, :channels * expansion].set(
        jax.random.normal(k3, (channels, channels * expansion), jnp.float32) * 0.1)

    def ones(c):
        return jnp.ones((1, c), jnp.float32)

    def zeros(c):
        return jnp.zeros((1, c), jnp.float32)

    # BatchNorm2d default init: weight=1, bias=0 (padded channels are inert).
    return {
        "w1": w1.astype(jnp.bfloat16), "g1": ones(c_p), "b1": zeros(c_p),
        "w2": w2.astype(jnp.bfloat16), "g2": ones(c_p), "b2": zeros(c_p),
        "w3": w3.astype(jnp.bfloat16), "g3": ones(c3_p), "b3": zeros(c3_p),
    }


# ---------------- pure-JAX reference (f32) ----------------

def _reference(x_nchw, params, channels):
    cin = x_nchw.shape[1]
    cexp = 4 * channels
    c_p = params["w2"].shape[1]

    def bn(y, g, b):
        mean = jnp.mean(y, axis=(0, 1, 2), keepdims=True)
        var = jnp.mean(jnp.square(y - mean), axis=(0, 1, 2), keepdims=True)
        return (y - mean) * jax.lax.rsqrt(var + _EPS) * g + b

    x = jnp.transpose(x_nchw, (0, 2, 3, 1)).astype(jnp.float32)
    w1 = params["w1"].astype(jnp.float32)[:, :channels]
    w2 = params["w2"].astype(jnp.float32).reshape(3, 3, c_p, c_p)[:, :, :channels, :channels]
    w3 = params["w3"].astype(jnp.float32)[:channels, :cexp]
    g1, b1 = params["g1"][0, :channels], params["b1"][0, :channels]
    g2, b2 = params["g2"][0, :channels], params["b2"][0, :channels]
    g3, b3 = params["g3"][0, :cexp], params["b3"][0, :cexp]

    a1 = jax.nn.relu(bn(jnp.einsum("nhwc,cd->nhwd", x, w1), g1, b1))
    n, hh, ww, _ = a1.shape
    a1p = jnp.pad(a1, ((0, 0), (1, 1), (1, 1), (0, 0)))
    y2 = jnp.zeros((n, hh, ww, channels), jnp.float32)
    for kh in range(3):
        for kw in range(3):
            y2 = y2 + jnp.einsum("nhwc,cd->nhwd",
                                 a1p[:, kh:kh + hh, kw:kw + ww, :], w2[kh, kw])
    a2 = jax.nn.relu(bn(y2, g2, b2))
    y3 = jnp.einsum("nhwc,cd->nhwd", a2, w3)
    out = jax.nn.relu(bn(y3, g3, b3) + x)
    return jnp.transpose(out, (0, 3, 1, 2))


if __name__ == "__main__":
    key = jax.random.PRNGKey(0)
    kx, kp = jax.random.split(key)

    # Bottleneck(inchannels=16, channels=4, stride=1, downsample=None)
    N, CHANNELS, H, W = 2, 4, 16, 16
    CIN = CHANNELS * 4

    x = jax.random.normal(kx, (N, CIN, H, W), jnp.float32)
    params = make_params(kp, CIN, CHANNELS)

    y = bottleneck_forward(x, params, channels=CHANNELS, stride=1)
    jax.block_until_ready(y)

    assert y.shape == (N, CHANNELS * 4, H, W), y.shape
    assert bool(jnp.all(y >= 0.0))                      # final ReLU

    y_ref = _reference(x, params, CHANNELS)
    err = float(jnp.max(jnp.abs(y - y_ref)))
    assert err < 0.2, f"max abs err vs reference too large: {err}"

    print("KERNEL_OK")
</pallas_src>

<mosaic_0001>
module attributes {stable_mosaic.version = 11 : i64} {
  func.func @_conv1_kernel(%arg0: i32, %arg1: memref<1x256x16xf32, #tpu.memory_space<vmem>>, %arg2: memref<16x128xbf16, #tpu.memory_space<vmem>>, %arg3: memref<1x256x128xbf16, #tpu.memory_space<vmem>>, %arg4: memref<1x2x128xf32, #tpu.memory_space<vmem>>) attributes {dimension_semantics = [#tpu.dimension_semantics<parallel>], iteration_bounds = array<i64: 2>, scalar_prefetch = 0 : i64, scratch_operands = 0 : i64, tpu.core_type = #tpu.core_type<tc>, window_params = [{transform_indices = @transform_0, window_bounds = array<i64: 1, 256, 16>}, {pipeline_mode = #tpu.pipeline_mode<synchronous>, transform_indices = @transform_1, window_bounds = array<i64: 16, 128>}, {transform_indices = @transform_2, window_bounds = array<i64: 1, 256, 128>}, {transform_indices = @transform_3, window_bounds = array<i64: 1, 2, 128>}]} {
    %c0 = arith.constant 0 : index
    %c0_0 = arith.constant 0 : index
    %c0_1 = arith.constant 0 : index
    %0 = vector.load %arg1[%c0, %c0_0, %c0_1] : memref<1x256x16xf32, #tpu.memory_space<vmem>>, vector<1x256x16xf32>
    %1 = vector.shape_cast %0 : vector<1x256x16xf32> to vector<256x16xf32>
    %2 = arith.truncf %1 : vector<256x16xf32> to vector<256x16xbf16>
    %c0_2 = arith.constant 0 : index
    %c0_3 = arith.constant 0 : index
    %3 = vector.load %arg2[%c0_2, %c0_3] : memref<16x128xbf16, #tpu.memory_space<vmem>>, vector<16x128xbf16>
    %cst = arith.constant dense<0.000000e+00> : vector<256x128xf32>
    %4 = tpu.matmul %2, %3, %cst {dimension_numbers = #tpu.dot_dimension_numbers<[1], [0], [0], [1], [0, 0, 1, 1], [], []>} : vector<256x16xbf16>, vector<16x128xbf16>, vector<256x128xf32> -> vector<256x128xf32>
    %5 = arith.truncf %4 : vector<256x128xf32> to vector<256x128xbf16>
    %c0_4 = arith.constant 0 : index
    %c0_5 = arith.constant 0 : index
    %c0_6 = arith.constant 0 : index
    %6 = vector.load %arg3[%c0_4, %c0_5, %c0_6] : memref<1x256x128xbf16, #tpu.memory_space<vmem>>, vector<1x256x128xbf16>
    %7 = vector.shape_cast %6 : vector<1x256x128xbf16> to vector<256x128xbf16>
    %8 = vector.shape_cast %5 : vector<256x128xbf16> to vector<1x256x128xbf16>
    tpu.vector_store %arg3[%c0_4, %c0_5, %c0_6], %8 {strides = array<i32>} : memref<1x256x128xbf16, #tpu.memory_space<vmem>>, vector<1x256x128xbf16>,
    %cst_7 = arith.constant dense<0.000000e+00> : vector<128xf32>
    %9 = vector.multi_reduction <add>, %4, %cst_7 [0] : vector<256x128xf32> to vector<128xf32>
    %10 = vector.shape_cast %9 : vector<128xf32> to vector<1x128xf32>
    %11 = arith.mulf %4, %4 : vector<256x128xf32>
    %cst_8 = arith.constant dense<0.000000e+00> : vector<128xf32>
    %12 = vector.multi_reduction <add>, %11, %cst_8 [0] : vector<256x128xf32> to vector<128xf32>
    %13 = vector.shape_cast %12 : vector<128xf32> to vector<1x128xf32>
    %14 = tpu.concatenate %10, %13 in 0 : vector<1x128xf32>, vector<1x128xf32> -> vector<2x128xf32>
    %c0_9 = arith.constant 0 : index
    %c0_10 = arith.constant 0 : index
    %c0_11 = arith.constant 0 : index
    %15 = vector.load %arg4[%c0_9, %c0_10, %c0_11] : memref<1x2x128xf32, #tpu.memory_space<vmem>>, vector<1x2x128xf32>
    %16 = vector.shape_cast %15 : vector<1x2x128xf32> to vector<2x128xf32>
    %17 = vector.shape_cast %14 : vector<2x128xf32> to vector<1x2x128xf32>
    tpu.vector_store %arg4[%c0_9, %c0_10, %c0_11], %17 {strides = array<i32>} : memref<1x2x128xf32, #tpu.memory_space<vmem>>, vector<1x2x128xf32>,
    return
  }
  func.func @transform_0(%arg0: i32) -> (i32, i32, i32) {
    %c0_i32 = arith.constant 0 : i32
    %c0_i32_0 = arith.constant 0 : i32
    %c0_i32_1 = arith.constant 0 : i32
    return %arg0, %c0_i32, %c0_i32_0 : i32, i32, i32
  }
  func.func @transform_1(%arg0: i32) -> (i32, i32) {
    %c0_i32 = arith.constant 0 : i32
    %c0_i32_0 = arith.constant 0 : i32
    %c0_i32_1 = arith.constant 0 : i32
    return %c0_i32, %c0_i32_0 : i32, i32
  }
  func.func @transform_2(%arg0: i32) -> (i32, i32, i32) {
    %c0_i32 = arith.constant 0 : i32
    %c0_i32_0 = arith.constant 0 : i32
    %c0_i32_1 = arith.constant 0 : i32
    return %arg0, %c0_i32, %c0_i32_0 : i32, i32, i32
  }
  func.func @transform_3(%arg0: i32) -> (i32, i32, i32) {
    %c0_i32 = arith.constant 0 : i32
    %c0_i32_0 = arith.constant 0 : i32
    %c0_i32_1 = arith.constant 0 : i32
    return %arg0, %c0_i32, %c0_i32_0 : i32, i32, i32
  }
}

module attributes {stable_mosaic.version = 11 : i64} {
  func.func @_conv2_kernel(%arg0: i32, %arg1: memref<1x256x128xbf16, #tpu.memory_space<vmem>>, %arg2: memref<2x128xf32, #tpu.memory_space<vmem>>, %arg3: memref<1x128xf32, #tpu.memory_space<vmem>>, %arg4: memref<1x128xf32, #tpu.memory_space<vmem>>, %arg5: memref<9x128x128xbf16, #tpu.memory_space<vmem>>, %arg6: memref<1x256x128xbf16, #tpu.memory_space<vmem>>, %arg7: memref<1x2x128xf32, #tpu.memory_space<vmem>>, %arg8: memref<18x18x128xbf16, #tpu.memory_space<vmem>>) attributes {dimension_semantics = [#tpu.dimension_semantics<parallel>], iteration_bounds = array<i64: 2>, scalar_prefetch = 0 : i64, scratch_operands = 1 : i64, tpu.core_type = #tpu.core_type<tc>, window_params = [{transform_indices = @transform_0, window_bounds = array<i64: 1, 256, 128>}, {pipeline_mode = #tpu.pipeline_mode<synchronous>, transform_indices = @transform_1, window_bounds = array<i64: 2, 128>}, {pipeline_mode = #tpu.pipeline_mode<synchronous>, transform_indices = @transform_2, window_bounds = array<i64: 1, 128>}, {pipeline_mode = #tpu.pipeline_mode<synchronous>, transform_indices = @transform_3, window_bounds = array<i64: 1, 128>}, {pipeline_mode = #tpu.pipeline_mode<synchronous>, transform_indices = @transform_4, window_bounds = array<i64: 9, 128, 128>}, {transform_indices = @transform_5, window_bounds = array<i64: 1, 256, 128>}, {transform_indices = @transform_6, window_bounds = array<i64: 1, 2, 128>}]} {
    %c0 = arith.constant 0 : index
    %c0_0 = arith.constant 0 : index
    %0 = vector.load %arg2[%c0, %c0_0] : memref<2x128xf32, #tpu.memory_space<vmem>>, vector<1x128xf32>
    %cst = arith.constant 0.001953125 : f32
    %1 = vector.broadcast %cst : f32 to vector<1x128xf32>
    %2 = arith.mulf %0, %1 : vector<1x128xf32>
    %c1 = arith.constant 1 : index
    %c0_1 = arith.constant 0 : index
    %3 = vector.load %arg2[%c1, %c0_1] : memref<2x128xf32, #tpu.memory_space<vmem>>, vector<1x128xf32>
    %cst_2 = arith.constant 0.001953125 : f32
    %4 = vector.broadcast %cst_2 : f32 to vector<1x128xf32>
    %5 = arith.mulf %3, %4 : vector<1x128xf32>
    %6 = arith.mulf %2, %2 : vector<1x128xf32>
    %7 = arith.subf %5, %6 : vector<1x128xf32>
    %cst_3 = arith.constant 0.000000e+00 : f32
    %8 = vector.broadcast %cst_3 : f32 to vector<1x128xf32>
    %9 = arith.maximumf %7, %8 : vector<1x128xf32>
    %cst_4 = arith.constant 9.99999974E-6 : f32
    %10 = vector.broadcast %cst_4 : f32 to vector<1x128xf32>
    %11 = arith.addf %9, %10 : vector<1x128xf32>
    %12 = math.rsqrt %11 : vector<1x128xf32>
    %c0_5 = arith.constant 0 : index
    %c0_6 = arith.constant 0 : index
    %13 = vector.load %arg3[%c0_5, %c0_6] : memref<1x128xf32, #tpu.memory_space<vmem>>, vector<1x128xf32>
    %14 = arith.mulf %12, %13 : vector<1x128xf32>
    %c0_7 = arith.constant 0 : index
    %c0_8 = arith.constant 0 : index
    %15 = vector.load %arg4[%c0_7, %c0_8] : memref<1x128xf32, #tpu.memory_space<vmem>>, vector<1x128xf32>
    %c0_9 = arith.constant 0 : index
    %c0_10 = arith.constant 0 : index
    %c0_11 = arith.constant 0 : index
    %16 = vector.load %arg1[%c0_9, %c0_10, %c0_11] : memref<1x256x128xbf16, #tpu.memory_space<vmem>>, vector<1x256x128xbf16>
    %17 = vector.shape_cast %16 : vector<1x256x128xbf16> to vector<256x128xbf16>
    %18 = arith.extf %17 : vector<256x128xbf16> to vector<256x128xf32>
    %19 = vector.broadcast %2 : vector<1x128xf32> to vector<256x128xf32>
    %20 = arith.subf %18, %19 : vector<256x128xf32>
    %21 = vector.broadcast %14 : vector<1x128xf32> to vector<256x128xf32>
    %22 = arith.mulf %20, %21 : vector<256x128xf32>
    %23 = vector.broadcast %15 : vector<1x128xf32> to vector<256x128xf32>
    %24 = arith.addf %22, %23 : vector<256x128xf32>
    %cst_12 = arith.constant 0.000000e+00 : f32
    %25 = vector.broadcast %cst_12 : f32 to vector<256x128xf32>
    %26 = arith.maximumf %24, %25 : vector<256x128xf32>
    %cst_13 = arith.constant 0.000000e+00 : bf16
    %27 = vector.broadcast %cst_13 : bf16 to vector<18x18x128xbf16>
    %c0_14 = arith.constant 0 : index
    %c0_15 = arith.constant 0 : index
    %c0_16 = arith.constant 0 : index
    %28 = vector.load %arg8[%c0_14, %c0_15, %c0_16] : memref<18x18x128xbf16, #tpu.memory_space<vmem>>, vector<18x18x128xbf16>
    tpu.vector_store %arg8[%c0_14, %c0_15, %c0_16], %27 {strides = array<i32>} : memref<18x18x128xbf16, #tpu.memory_space<vmem>>, vector<18x18x128xbf16>,
    %29 = arith.truncf %26 : vector<256x128xf32> to vector<256x128xbf16>
    %30 = vector.shape_cast %29 : vector<256x128xbf16> to vector<16x16x128xbf16>
    %c1_17 = arith.constant 1 : index
    %c1_18 = arith.constant 1 : index
    %c0_19 = arith.constant 0 : index
    %31 = vector.load %arg8[%c1_17, %c1_18, %c0_19] : memref<18x18x128xbf16, #tpu.memory_space<vmem>>, vector<16x16x128xbf16>
    tpu.vector_store %arg8[%c1_17, %c1_18, %c0_19], %30 {strides = array<i32>} : memref<18x18x128xbf16, #tpu.memory_space<vmem>>, vector<16x16x128xbf16>,
    %c0_20 = arith.constant 0 : index
    %c0_21 = arith.constant 0 : index
    %c0_22 = arith.constant 0 : index
    %32 = vector.load %arg8[%c0_20, %c0_21, %c0_22] : memref<18x18x128xbf16, #tpu.memory_space<vmem>>, vector<18x18x128xbf16>
    %33 = vector.extract_strided_slice %32 {offsets = [0, 0, 0], sizes = [16, 16, 128], strides = [1, 1, 1]} : vector<18x18x128xbf16> to vector<16x16x128xbf16>
    %34 = vector.shape_cast %33 : vector<16x16x128xbf16> to vector<256x128xbf16>
    %c0_23 = arith.constant 0 : index
    %c0_24 = arith.constant 0 : index
    %c0_25 = arith.constant 0 : index
    %35 = vector.load %arg5[%c0_23, %c0_24, %c0_25] : memref<9x128x128xbf16, #tpu.memory_space<vmem>>, vector<1x128x128xbf16>
    %36 = vector.shape_cast %35 : vector<1x128x128xbf16> to vector<128x128xbf16>
    %cst_26 = arith.constant dense<0.000000e+00> : vector<256x128xf32>
    %37 = tpu.matmul %34, %36, %cst_26 {dimension_numbers = #tpu.dot_dimension_numbers<[1], [0], [0], [1], [0, 0, 1, 1], [], []>} : vector<256x128xbf16>, vector<128x128xbf16>, vector<256x128xf32> -> vector<256x128xf32>
    %38 = vector.extract_strided_slice %32 {offsets = [0, 1, 0], sizes = [16, 16, 128], strides = [1, 1, 1]} : vector<18x18x128xbf16> to vector<16x16x128xbf16>
    %39 = vector.shape_cast %38 : vector<16x16x128xbf16> to vector<256x128xbf16>
    %c1_27 = arith.constant 1 : index
    %c0_28 = arith.constant 0 : index
    %c0_29 = arith.constant 0 : index
    %40 = vector.load %arg5[%c1_27, %c0_28, %c0_29] : memref<9x128x128xbf16, #tpu.memory_space<vmem>>, vector<1x128x128xbf16>
    %41 = vector.shape_cast %40 : vector<1x128x128xbf16> to vector<128x128xbf16>
    %cst_30 = arith.constant dense<0.000000e+00> : vector<256x128xf32>
    %42 = tpu.matmul %39, %41, %cst_30 {dimension_numbers = #tpu.dot_dimension_numbers<[1], [0], [0], [1], [0, 0, 1, 1], [], []>} : vector<256x128xbf16>, vector<128x128xbf16>, vector<256x128xf32> -> vector<256x128xf32>
    %43 = arith.addf %37, %42 : vector<256x128xf32>
    %44 = vector.extract_strided_slice %32 {offsets = [0, 2, 0], sizes = [16, 16, 128], strides = [1, 1, 1]} : vector<18x18x128xbf16> to vector<16x16x128xbf16>
    %45 = vector.shape_cast %44 : vector<16x16x128xbf16> to vector<256x128xbf16>
    %c2 = arith.constant 2 : index
    %c0_31 = arith.constant 0 : index
    %c0_32 = arith.constant 0 : index
    %46 = vector.load %arg5[%c2, %c0_31, %c0_32] : memref<9x128x128xbf16, #tpu.memory_space<vmem>>, vector<1x128x128xbf16>
    %47 = vector.shape_cast %46 : vector<1x128x128xbf16> to vector<128x128xbf16>
    %cst_33 = arith.constant dense<0.000000e+00> : vector<256x128xf32>
    %48 = tpu.matmul %45, %47, %cst_33 {dimension_numbers = #tpu.dot_dimension_numbers<[1], [0], [0], [1], [0, 0, 1, 1], [], []>} : vector<256x128xbf16>, vector<128x128xbf16>, vector<256x128xf32> -> vector<256x128xf32>
    %49 = arith.addf %43, %48 : vector<256x128xf32>
    %50 = vector.extract_strided_slice %32 {offsets = [1, 0, 0], sizes = [16, 16, 128], strides = [1, 1, 1]} : vector<18x18x128xbf16> to vector<16x16x128xbf16>
    %51 = vector.shape_cast %50 : vector<16x16x128xbf16> to vector<256x128xbf16>
    %c3 = arith.constant 3 : index
    %c0_34 = arith.constant 0 : index
    %c0_35 = arith.constant 0 : index
    %52 = vector.load %arg5[%c3, %c0_34, %c0_35] : memref<9x128x128xbf16, #tpu.memory_space<vmem>>, vector<1x128x128xbf16>
    %53 = vector.shape_cast %52 : vector<1x128x128xbf16> to vector<128x128xbf16>
    %cst_36 = arith.constant dense<0.000000e+00> : vector<256x128xf32>
    %54 = tpu.matmul %51, %53, %cst_36 {dimension_numbers = #tpu.dot_dimension_numbers<[1], [0], [0], [1], [0, 0, 1, 1], [], []>} : vector<256x128xbf16>, vector<128x128xbf16>, vector<256x128xf32> -> vector<256x128xf32>
    %55 = arith.addf %49, %54 : vector<256x128xf32>
    %56 = vector.extract_strided_slice %32 {offsets = [1, 1, 0], sizes = [16, 16, 128], strides = [1, 1, 1]} : vector<18x18x128xbf16> to vector<16x16x128xbf16>
    %57 = vector.shape_cast %56 : vector<16x16x128xbf16> to vector<256x128xbf16>
    %c4 = arith.constant 4 : index
    %c0_37 = arith.constant 0 : index
    %c0_38 = arith.constant 0 : index
    %58 = vector.load %arg5[%c4, %c0_37, %c0_38] : memref<9x128x128xbf16, #tpu.memory_space<vmem>>, vector<1x128x128xbf16>
    %59 = vector.shape_cast %58 : vector<1x128x128xbf16> to vector<128x128xbf16>
    %cst_39 = arith.constant dense<0.000000e+00> : vector<256x128xf32>
    %60 = tpu.matmul %57, %59, %cst_39 {dimension_numbers = #tpu.dot_dimension_numbers<[1], [0], [0], [1], [0, 0, 1, 1], [], []>} : vector<256x128xbf16>, vector<128x128xbf16>, vector<256x128xf32> -> vector<256x128xf32>
    %61 = arith.addf %55, %60 : vector<256x128xf32>
    %62 = vector.extract_strided_slice %32 {offsets = [1, 2, 0], sizes = [16, 16, 128], strides = [1, 1, 1]} : vector<18x18x128xbf16> to vector<16x16x128xbf16>
    %63 = vector.shape_cast %62 : vector<16x16x128xbf16> to vector<256x128xbf16>
    %c5 = arith.constant 5 : index
    %c0_40 = arith.constant 0 : index
    %c0_41 = arith.constant 0 : index
    %64 = vector.load %arg5[%c5, %c0_40, %c0_41] : memref<9x128x128xbf16, #tpu.memory_space<vmem>>, vector<1x128x128xbf16>
    %65 = vector.shape_cast %64 : vector<1x128x128xbf16> to vector<128x128xbf16>
    %cst_42 = arith.constant dense<0.000000e+00> : vector<256x128xf32>
    %66 = tpu.matmul %63, %65, %cst_42 {dimension_numbers = #tpu.dot_dimension_numbers<[1], [0], [0], [1], [0, 0, 1, 1], [], []>} : vector<256x128xbf16>, vector<128x128xbf16>, vector<256x128xf32> -> vector<256x128xf32>
    %67 = arith.addf %61, %66 : vector<256x128xf32>
    %68 = vector.extract_strided_slice %32 {offsets = [2, 0, 0], sizes = [16, 16, 128], strides = [1, 1, 1]} : vector<18x18x128xbf16> to vector<16x16x128xbf16>
    %69 = vector.shape_cast %68 : vector<16x16x128xbf16> to vector<256x128xbf16>
    %c6 = arith.constant 6 : index
    %c0_43 = arith.constant 0 : index
    %c0_44 = arith.constant 0 : index
    %70 = vector.load %arg5[%c6, %c0_43, %c0_44] : memref<9x128x128xbf16, #tpu.memory_space<vmem>>, vector<1x128x128xbf16>
    %71 = vector.shape_cast %70 : vector<1x128x128xbf16> to vector<128x128xbf16>
    %cst_45 = arith.constant dense<0.000000e+00> : vector<256x128xf32>
    %72 = tpu.matmul %69, %71, %cst_45 {dimension_numbers = #tpu.dot_dimension_numbers<[1], [0], [0], [1], [0, 0, 1, 1], [], []>} : vector<256x128xbf16>, vector<128x128xbf16>, vector<256x128xf32> -> vector<256x128xf32>
    %73 = arith.addf %67, %72 : vector<256x128xf32>
    %74 = vector.extract_strided_slice %32 {offsets = [2, 1, 0], sizes = [16, 16, 128], strides = [1, 1, 1]} : vector<18x18x128xbf16> to vector<16x16x128xbf16>
    %75 = vector.shape_cast %74 : vector<16x16x128xbf16> to vector<256x128xbf16>
    %c7 = arith.constant 7 : index
    %c0_46 = arith.constant 0 : index
    %c0_47 = arith.constant 0 : index
    %76 = vector.load %arg5[%c7, %c0_46, %c0_47] : memref<9x128x128xbf16, #tpu.memory_space<vmem>>, vector<1x128x128xbf16>
    %77 = vector.shape_cast %76 : vector<1x128x128xbf16> to vector<128x128xbf16>
    %cst_48 = arith.constant dense<0.000000e+00> : vector<256x128xf32>
    %78 = tpu.matmul %75, %77, %cst_48 {dimension_numbers = #tpu.dot_dimension_numbers<[1], [0], [0], [1], [0, 0, 1, 1], [], []>} : vector<256x128xbf16>, vector<128x128xbf16>, vector<256x128xf32> -> vector<256x128xf32>
    %79 = arith.addf %73, %78 : vector<256x128xf32>
    %80 = vector.extract_strided_slice %32 {offsets = [2, 2, 0], sizes = [16, 16, 128], strides = [1, 1, 1]} : vector<18x18x128xbf16> to vector<16x16x128xbf16>
    %81 = vector.shape_cast %80 : vector<16x16x128xbf16> to vector<256x128xbf16>
    %c8 = arith.constant 8 : index
    %c0_49 = arith.constant 0 : index
    %c0_50 = arith.constant 0 : index
    %82 = vector.load %arg5[%c8, %c0_49, %c0_50] : memref<9x128x128xbf16, #tpu.memory_space<vmem>>, vector<1x128x128xbf16>
    %83 = vector.shape_cast %82 : vector<1x128x128xbf16> to vector<128x128xbf16>
    %cst_51 = arith.constant dense<0.000000e+00> : vector<256x128xf32>
    %84 = tpu.matmul %81, %83, %cst_51 {dimension_numbers = #tpu.dot_dimension_numbers<[1], [0], [0], [1], [0, 0, 1, 1], [], []>} : vector<256x128xbf16>, vector<128x128xbf16>, vector<256x128xf32> -> vector<256x128xf32>
    %85 = arith.addf %79, %84 : vector<256x128xf32>
    %86 = arith.truncf %85 : vector<256x128xf32> to vector<256x128xbf16>
    %c0_52 = arith.constant 0 : index
    %c0_53 = arith.constant 0 : index
    %c0_54 = arith.constant 0 : index
    %87 = vector.load %arg6[%c0_52, %c0_53, %c0_54] : memref<1x256x128xbf16, #tpu.memory_space<vmem>>, vector<1x256x128xbf16>
    %88 = vector.shape_cast %87 : vector<1x256x128xbf16> to vector<256x128xbf16>
    %89 = vector.shape_cast %86 : vector<256x128xbf16> to vector<1x256x128xbf16>
    tpu.vector_store %arg6[%c0_52, %c0_53, %c0_54], %89 {strides = array<i32>} : memref<1x256x128xbf16, #tpu.memory_space<vmem>>, vector<1x256x128xbf16>,
    %cst_55 = arith.constant dense<0.000000e+00> : vector<128xf32>
    %90 = vector.multi_reduction <add>, %85, %cst_55 [0] : vector<256x128xf32> to vector<128xf32>
    %91 = vector.shape_cast %90 : vector<128xf32> to vector<1x128xf32>
    %92 = arith.mulf %85, %85 : vector<256x128xf32>
    %cst_56 = arith.constant dense<0.000000e+00> : vector<128xf32>
    %93 = vector.multi_reduction <add>, %92, %cst_56 [0] : vector<256x128xf32> to vector<128xf32>
    %94 = vector.shape_cast %93 : vector<128xf32> to vector<1x128xf32>
    %95 = tpu.concatenate %91, %94 in 0 : vector<1x128xf32>, vector<1x128xf32> -> vector<2x128xf32>
    %c0_57 = arith.constant 0 : index
    %c0_58 = arith.constant 0 : index
    %c0_59 = arith.constant 0 : index
    %96 = vector.load %arg7[%c0_57, %c0_58, %c0_59] : memref<1x2x128xf32, #tpu.memory_space<vmem>>, vector<1x2x128xf32>
    %97 = vector.shape_cast %96 : vector<1x2x128xf32> to vector<2x128xf32>
    %98 = vector.shape_cast %95 : vector<2x128xf32> to vector<1x2x128xf32>
    tpu.vector_store %arg7[%c0_57, %c0_58, %c0_59], %98 {strides = array<i32>} : memref<1x2x128xf32, #tpu.memory_space<vmem>>, vector<1x2x128xf32>,
    return
  }
  func.func @transform_0(%arg0: i32) -> (i32, i32, i32) {
    %c0_i32 = arith.constant 0 : i32
    %c0_i32_0 = arith.constant 0 : i32
    %c0_i32_1 = arith.constant 0 : i32
    return %arg0, %c0_i32, %c0_i32_0 : i32, i32, i32
  }
  func.func @transform_1(%arg0: i32) -> (i32, i32) {
    %c0_i32 = arith.constant 0 : i32
    %c0_i32_0 = arith.constant 0 : i32
    %c0_i32_1 = arith.constant 0 : i32
    return %c0_i32, %c0_i32_0 : i32, i32
  }
  func.func @transform_2(%arg0: i32) -> (i32, i32) {
    %c0_i32 = arith.constant 0 : i32
    %c0_i32_0 = arith.constant 0 : i32
    %c0_i32_1 = arith.constant 0 : i32
    return %c0_i32, %c0_i32_0 : i32, i32
  }
  func.func @transform_3(%arg0: i32) -> (i32, i32) {
    %c0_i32 = arith.constant 0 : i32
    %c0_i32_0 = arith.constant 0 : i32
    %c0_i32_1 = arith.constant 0 : i32
    return %c0_i32, %c0_i32_0 : i32, i32
  }
  func.func @transform_4(%arg0: i32) -> (i32, i32, i32) {
    %c0_i32 = arith.constant 0 : i32
    %c0_i32_0 = arith.constant 0 : i32
    %c0_i32_1 = arith.constant 0 : i32
    %c0_i32_2 = arith.constant 0 : i32
    return %c0_i32, %c0_i32_0, %c0_i32_1 : i32, i32, i32
  }
  func.func @transform_5(%arg0: i32) -> (i32, i32, i32) {
    %c0_i32 = arith.constant 0 : i32
    %c0_i32_0 = arith.constant 0 : i32
    %c0_i32_1 = arith.constant 0 : i32
    return %arg0, %c0_i32, %c0_i32_0 : i32, i32, i32
  }
  func.func @transform_6(%arg0: i32) -> (i32, i32, i32) {
    %c0_i32 = arith.constant 0 : i32
    %c0_i32_0 = arith.constant 0 : i32
    %c0_i32_1 = arith.constant 0 : i32
    return %arg0, %c0_i32, %c0_i32_0 : i32, i32, i32
  }
}

module attributes {stable_mosaic.version = 11 : i64} {
  func.func @_conv3_kernel(%arg0: i32, %arg1: memref<1x256x128xbf16, #tpu.memory_space<vmem>>, %arg2: memref<2x128xf32, #tpu.memory_space<vmem>>, %arg3: memref<1x128xf32, #tpu.memory_space<vmem>>, %arg4: memref<1x128xf32, #tpu.memory_space<vmem>>, %arg5: memref<128x128xbf16, #tpu.memory_space<vmem>>, %arg6: memref<1x256x128xbf16, #tpu.memory_space<vmem>>, %arg7: memref<1x2x128xf32, #tpu.memory_space<vmem>>) attributes {dimension_semantics = [#tpu.dimension_semantics<parallel>], iteration_bounds = array<i64: 2>, scalar_prefetch = 0 : i64, scratch_operands = 0 : i64, tpu.core_type = #tpu.core_type<tc>, window_params = [{transform_indices = @transform_0, window_bounds = array<i64: 1, 256, 128>}, {pipeline_mode = #tpu.pipeline_mode<synchronous>, transform_indices = @transform_1, window_bounds = array<i64: 2, 128>}, {pipeline_mode = #tpu.pipeline_mode<synchronous>, transform_indices = @transform_2, window_bounds = array<i64: 1, 128>}, {pipeline_mode = #tpu.pipeline_mode<synchronous>, transform_indices = @transform_3, window_bounds = array<i64: 1, 128>}, {pipeline_mode = #tpu.pipeline_mode<synchronous>, transform_indices = @transform_4, window_bounds = array<i64: 128, 128>}, {transform_indices = @transform_5, window_bounds = array<i64: 1, 256, 128>}, {transform_indices = @transform_6, window_bounds = array<i64: 1, 2, 128>}]} {
    %c0 = arith.constant 0 : index
    %c0_0 = arith.constant 0 : index
    %0 = vector.load %arg2[%c0, %c0_0] : memref<2x128xf32, #tpu.memory_space<vmem>>, vector<1x128xf32>
    %cst = arith.constant 0.001953125 : f32
    %1 = vector.broadcast %cst : f32 to vector<1x128xf32>
    %2 = arith.mulf %0, %1 : vector<1x128xf32>
    %c1 = arith.constant 1 : index
    %c0_1 = arith.constant 0 : index
    %3 = vector.load %arg2[%c1, %c0_1] : memref<2x128xf32, #tpu.memory_space<vmem>>, vector<1x128xf32>
    %cst_2 = arith.constant 0.001953125 : f32
    %4 = vector.broadcast %cst_2 : f32 to vector<1x128xf32>
    %5 = arith.mulf %3, %4 : vector<1x128xf32>
    %6 = arith.mulf %2, %2 : vector<1x128xf32>
    %7 = arith.subf %5, %6 : vector<1x128xf32>
    %cst_3 = arith.constant 0.000000e+00 : f32
    %8 = vector.broadcast %cst_3 : f32 to vector<1x128xf32>
    %9 = arith.maximumf %7, %8 : vector<1x128xf32>
    %cst_4 = arith.constant 9.99999974E-6 : f32
    %10 = vector.broadcast %cst_4 : f32 to vector<1x128xf32>
    %11 = arith.addf %9, %10 : vector<1x128xf32>
    %12 = math.rsqrt %11 : vector<1x128xf32>
    %c0_5 = arith.constant 0 : index
    %c0_6 = arith.constant 0 : index
    %13 = vector.load %arg3[%c0_5, %c0_6] : memref<1x128xf32, #tpu.memory_space<vmem>>, vector<1x128xf32>
    %14 = arith.mulf %12, %13 : vector<1x128xf32>
    %c0_7 = arith.constant 0 : index
    %c0_8 = arith.constant 0 : index
    %15 = vector.load %arg4[%c0_7, %c0_8] : memref<1x128xf32, #tpu.memory_space<vmem>>, vector<1x128xf32>
    %c0_9 = arith.constant 0 : index
    %c0_10 = arith.constant 0 : index
    %c0_11 = arith.constant 0 : index
    %16 = vector.load %arg1[%c0_9, %c0_10, %c0_11] : memref<1x256x128xbf16, #tpu.memory_space<vmem>>, vector<1x256x128xbf16>
    %17 = vector.shape_cast %16 : vector<1x256x128xbf16> to vector<256x128xbf16>
    %18 = arith.extf %17 : vector<256x128xbf16> to vector<256x128xf32>
    %19 = vector.broadcast %2 : vector<1x128xf32> to vector<256x128xf32>
    %20 = arith.subf %18, %19 : vector<256x128xf32>
    %21 = vector.broadcast %14 : vector<1x128xf32> to vector<256x128xf32>
    %22 = arith.mulf %20, %21 : vector<256x128xf32>
    %23 = vector.broadcast %15 : vector<1x128xf32> to vector<256x128xf32>
    %24 = arith.addf %22, %23 : vector<256x128xf32>
    %cst_12 = arith.constant 0.000000e+00 : f32
    %25 = vector.broadcast %cst_12 : f32 to vector<256x128xf32>
    %26 = arith.maximumf %24, %25 : vector<256x128xf32>
    %27 = arith.truncf %26 : vector<256x128xf32> to vector<256x128xbf16>
    %c0_13 = arith.constant 0 : index
    %c0_14 = arith.constant 0 : index
    %28 = vector.load %arg5[%c0_13, %c0_14] : memref<128x128xbf16, #tpu.memory_space<vmem>>, vector<128x128xbf16>
    %cst_15 = arith.constant dense<0.000000e+00> : vector<256x128xf32>
    %29 = tpu.matmul %27, %28, %cst_15 {dimension_numbers = #tpu.dot_dimension_numbers<[1], [0], [0], [1], [0, 0, 1, 1], [], []>} : vector<256x128xbf16>, vector<128x128xbf16>, vector<256x128xf32> -> vector<256x128xf32>
    %30 = arith.truncf %29 : vector<256x128xf32> to vector<256x128xbf16>
    %c0_16 = arith.constant 0 : index
    %c0_17 = arith.constant 0 : index
    %c0_18 = arith.constant 0 : index
    %31 = vector.load %arg6[%c0_16, %c0_17, %c0_18] : memref<1x256x128xbf16, #tpu.memory_space<vmem>>, vector<1x256x128xbf16>
    %32 = vector.shape_cast %31 : vector<1x256x128xbf16> to vector<256x128xbf16>
    %33 = vector.shape_cast %30 : vector<256x128xbf16> to vector<1x256x128xbf16>
    tpu.vector_store %arg6[%c0_16, %c0_17, %c0_18], %33 {strides = array<i32>} : memref<1x256x128xbf16, #tpu.memory_space<vmem>>, vector<1x256x128xbf16>,
    %cst_19 = arith.constant dense<0.000000e+00> : vector<128xf32>
    %34 = vector.multi_reduction <add>, %29, %cst_19 [0] : vector<256x128xf32> to vector<128xf32>
    %35 = vector.shape_cast %34 : vector<128xf32> to vector<1x128xf32>
    %36 = arith.mulf %29, %29 : vector<256x128xf32>
    %cst_20 = arith.constant dense<0.000000e+00> : vector<128xf32>
    %37 = vector.multi_reduction <add>, %36, %cst_20 [0] : vector<256x128xf32> to vector<128xf32>
    %38 = vector.shape_cast %37 : vector<128xf32> to vector<1x128xf32>
    %39 = tpu.concatenate %35, %38 in 0 : vector<1x128xf32>, vector<1x128xf32> -> vector<2x128xf32>
    %c0_21 = arith.constant 0 : index
    %c0_22 = arith.constant 0 : index
    %c0_23 = arith.constant 0 : index
    %40 = vector.load %arg7[%c0_21, %c0_22, %c0_23] : memref<1x2x128xf32, #tpu.memory_space<vmem>>, vector<1x2x128xf32>
    %41 = vector.shape_cast %40 : vector<1x2x128xf32> to vector<2x128xf32>
    %42 = vector.shape_cast %39 : vector<2x128xf32> to vector<1x2x128xf32>
    tpu.vector_store %arg7[%c0_21, %c0_22, %c0_23], %42 {strides = array<i32>} : memref<1x2x128xf32, #tpu.memory_space<vmem>>, vector<1x2x128xf32>,
    return
  }
  func.func @transform_0(%arg0: i32) -> (i32, i32, i32) {
    %c0_i32 = arith.constant 0 : i32
    %c0_i32_0 = arith.constant 0 : i32
    %c0_i32_1 = arith.constant 0 : i32
    return %arg0, %c0_i32, %c0_i32_0 : i32, i32, i32
  }
  func.func @transform_1(%arg0: i32) -> (i32, i32) {
    %c0_i32 = arith.constant 0 : i32
    %c0_i32_0 = arith.constant 0 : i32
    %c0_i32_1 = arith.constant 0 : i32
    return %c0_i32, %c0_i32_0 : i32, i32
  }
  func.func @transform_2(%arg0: i32) -> (i32, i32) {
    %c0_i32 = arith.constant 0 : i32
    %c0_i32_0 = arith.constant 0 : i32
    %c0_i32_1 = arith.constant 0 : i32
    return %c0_i32, %c0_i32_0 : i32, i32
  }
  func.func @transform_3(%arg0: i32) -> (i32, i32) {
    %c0_i32 = arith.constant 0 : i32
    %c0_i32_0 = arith.constant 0 : i32
    %c0_i32_1 = arith.constant 0 : i32
    return %c0_i32, %c0_i32_0 : i32, i32
  }
  func.func @transform_4(%arg0: i32) -> (i32, i32) {
    %c0_i32 = arith.constant 0 : i32
    %c0_i32_0 = arith.constant 0 : i32
    %c0_i32_1 = arith.constant 0 : i32
    return %c0_i32, %c0_i32_0 : i32, i32
  }
  func.func @transform_5(%arg0: i32) -> (i32, i32, i32) {
    %c0_i32 = arith.constant 0 : i32
    %c0_i32_0 = arith.constant 0 : i32
    %c0_i32_1 = arith.constant 0 : i32
    return %arg0, %c0_i32, %c0_i32_0 : i32, i32, i32
  }
  func.func @transform_6(%arg0: i32) -> (i32, i32, i32) {
    %c0_i32 = arith.constant 0 : i32
    %c0_i32_0 = arith.constant 0 : i32
    %c0_i32_1 = arith.constant 0 : i32
    return %arg0, %c0_i32, %c0_i32_0 : i32, i32, i32
  }
}

module attributes {stable_mosaic.version = 11 : i64} {
  func.func @_final_kernel(%arg0: i32, %arg1: memref<1x256x128xbf16, #tpu.memory_space<vmem>>, %arg2: memref<2x128xf32, #tpu.memory_space<vmem>>, %arg3: memref<1x128xf32, #tpu.memory_space<vmem>>, %arg4: memref<1x128xf32, #tpu.memory_space<vmem>>, %arg5: memref<1x256x16xf32, #tpu.memory_space<vmem>>, %arg6: memref<1x256x16xbf16, #tpu.memory_space<vmem>>) attributes {dimension_semantics = [#tpu.dimension_semantics<parallel>], iteration_bounds = array<i64: 2>, scalar_prefetch = 0 : i64, scratch_operands = 0 : i64, tpu.core_type = #tpu.core_type<tc>, window_params = [{transform_indices = @transform_0, window_bounds = array<i64: 1, 256, 128>}, {pipeline_mode = #tpu.pipeline_mode<synchronous>, transform_indices = @transform_1, window_bounds = array<i64: 2, 128>}, {pipeline_mode = #tpu.pipeline_mode<synchronous>, transform_indices = @transform_2, window_bounds = array<i64: 1, 128>}, {pipeline_mode = #tpu.pipeline_mode<synchronous>, transform_indices = @transform_3, window_bounds = array<i64: 1, 128>}, {transform_indices = @transform_4, window_bounds = array<i64: 1, 256, 16>}, {transform_indices = @transform_5, window_bounds = array<i64: 1, 256, 16>}]} {
    %c0 = arith.constant 0 : index
    %c0_0 = arith.constant 0 : index
    %0 = vector.load %arg2[%c0, %c0_0] : memref<2x128xf32, #tpu.memory_space<vmem>>, vector<1x128xf32>
    %cst = arith.constant 0.001953125 : f32
    %1 = vector.broadcast %cst : f32 to vector<1x128xf32>
    %2 = arith.mulf %0, %1 : vector<1x128xf32>
    %c1 = arith.constant 1 : index
    %c0_1 = arith.constant 0 : index
    %3 = vector.load %arg2[%c1, %c0_1] : memref<2x128xf32, #tpu.memory_space<vmem>>, vector<1x128xf32>
    %cst_2 = arith.constant 0.001953125 : f32
    %4 = vector.broadcast %cst_2 : f32 to vector<1x128xf32>
    %5 = arith.mulf %3, %4 : vector<1x128xf32>
    %6 = arith.mulf %2, %2 : vector<1x128xf32>
    %7 = arith.subf %5, %6 : vector<1x128xf32>
    %cst_3 = arith.constant 0.000000e+00 : f32
    %8 = vector.broadcast %cst_3 : f32 to vector<1x128xf32>
    %9 = arith.maximumf %7, %8 : vector<1x128xf32>
    %cst_4 = arith.constant 9.99999974E-6 : f32
    %10 = vector.broadcast %cst_4 : f32 to vector<1x128xf32>
    %11 = arith.addf %9, %10 : vector<1x128xf32>
    %12 = math.rsqrt %11 : vector<1x128xf32>
    %c0_5 = arith.constant 0 : index
    %c0_6 = arith.constant 0 : index
    %13 = vector.load %arg3[%c0_5, %c0_6] : memref<1x128xf32, #tpu.memory_space<vmem>>, vector<1x128xf32>
    %14 = arith.mulf %12, %13 : vector<1x128xf32>
    %c0_7 = arith.constant 0 : index
    %c0_8 = arith.constant 0 : index
    %15 = vector.load %arg4[%c0_7, %c0_8] : memref<1x128xf32, #tpu.memory_space<vmem>>, vector<1x128xf32>
    %c0_9 = arith.constant 0 : index
    %c0_10 = arith.constant 0 : index
    %c0_11 = arith.constant 0 : index
    %16 = vector.load %arg1[%c0_9, %c0_10, %c0_11] : memref<1x256x128xbf16, #tpu.memory_space<vmem>>, vector<1x256x128xbf16>
    %17 = vector.shape_cast %16 : vector<1x256x128xbf16> to vector<256x128xbf16>
    %18 = arith.extf %17 : vector<256x128xbf16> to vector<256x128xf32>
    %19 = vector.broadcast %2 : vector<1x128xf32> to vector<256x128xf32>
    %20 = arith.subf %18, %19 : vector<256x128xf32>
    %21 = vector.broadcast %14 : vector<1x128xf32> to vector<256x128xf32>
    %22 = arith.mulf %20, %21 : vector<256x128xf32>
    %23 = vector.broadcast %15 : vector<1x128xf32> to vector<256x128xf32>
    %24 = arith.addf %22, %23 : vector<256x128xf32>
    %25 = vector.extract_strided_slice %24 {offsets = [0, 0], sizes = [256, 16], strides = [1, 1]} : vector<256x128xf32> to vector<256x16xf32>
    %c0_12 = arith.constant 0 : index
    %c0_13 = arith.constant 0 : index
    %c0_14 = arith.constant 0 : index
    %26 = vector.load %arg5[%c0_12, %c0_13, %c0_14] : memref<1x256x16xf32, #tpu.memory_space<vmem>>, vector<1x256x16xf32>
    %27 = vector.shape_cast %26 : vector<1x256x16xf32> to vector<256x16xf32>
    %28 = arith.addf %25, %27 : vector<256x16xf32>
    %cst_15 = arith.constant 0.000000e+00 : f32
    %29 = vector.broadcast %cst_15 : f32 to vector<256x16xf32>
    %30 = arith.maximumf %28, %29 : vector<256x16xf32>
    %31 = arith.truncf %30 : vector<256x16xf32> to vector<256x16xbf16>
    %c0_16 = arith.constant 0 : index
    %c0_17 = arith.constant 0 : index
    %c0_18 = arith.constant 0 : index
    %32 = vector.load %arg6[%c0_16, %c0_17, %c0_18] : memref<1x256x16xbf16, #tpu.memory_space<vmem>>, vector<1x256x16xbf16>
    %33 = vector.shape_cast %32 : vector<1x256x16xbf16> to vector<256x16xbf16>
    %34 = vector.shape_cast %31 : vector<256x16xbf16> to vector<1x256x16xbf16>
    tpu.vector_store %arg6[%c0_16, %c0_17, %c0_18], %34 {strides = array<i32>} : memref<1x256x16xbf16, #tpu.memory_space<vmem>>, vector<1x256x16xbf16>,
    return
  }
  func.func @transform_0(%arg0: i32) -> (i32, i32, i32) {
    %c0_i32 = arith.constant 0 : i32
    %c0_i32_0 = arith.constant 0 : i32
    %c0_i32_1 = arith.constant 0 : i32
    return %arg0, %c0_i32, %c0_i32_0 : i32, i32, i32
  }
  func.func @transform_1(%arg0: i32) -> (i32, i32) {
    %c0_i32 = arith.constant 0 : i32
    %c0_i32_0 = arith.constant 0 : i32
    %c0_i32_1 = arith.constant 0 : i32
    return %c0_i32, %c0_i32_0 : i32, i32
  }
  func.func @transform_2(%arg0: i32) -> (i32, i32) {
    %c0_i32 = arith.constant 0 : i32
    %c0_i32_0 = arith.constant 0 : i32
    %c0_i32_1 = arith.constant 0 : i32
    return %c0_i32, %c0_i32_0 : i32, i32
  }
  func.func @transform_3(%arg0: i32) -> (i32, i32) {
    %c0_i32 = arith.constant 0 : i32
    %c0_i32_0 = arith.constant 0 : i32
    %c0_i32_1 = arith.constant 0 : i32
    return %c0_i32, %c0_i32_0 : i32, i32
  }
  func.func @transform_4(%arg0: i32) -> (i32, i32, i32) {
    %c0_i32 = arith.constant 0 : i32
    %c0_i32_0 = arith.constant 0 : i32
    %c0_i32_1 = arith.constant 0 : i32
    return %arg0, %c0_i32, %c0_i32_0 : i32, i32, i32
  }
  func.func @transform_5(%arg0: i32) -> (i32, i32, i32) {
    %c0_i32 = arith.constant 0 : i32
    %c0_i32_0 = arith.constant 0 : i32
    %c0_i32_1 = arith.constant 0 : i32
    return %arg0, %c0_i32, %c0_i32_0 : i32, i32, i32
  }
}

</mosaic_0001>

<llo_original>
// kernel: bottleneck_forward.4
$region0: #{bottleneck_forward.4}
  #allocation0 [shape = 'u32[]', space=smem, size = 0x4, offset = 0x4, fixed_abs, tag = 'smem constant byte address 0x4 - core index']
  #allocation1 [shape = 'u32[144,128]{1,0:T(1,128)}', space=vmem, size = 0x12000, scoped, tag = 'internal scratch']
  %s0 = inlined_call_operand.vmem [shape: f32[2,256,16], index: 0, kind: input, shape index: {}]
  %s1 = inlined_call_operand.vmem [shape: bf16[16,128], index: 1, kind: input, shape index: {}]
  %s2 = inlined_call_operand.vmem [shape: bf16[2,256,128], index: 2, kind: output, shape index: {0}]
  %s3 = inlined_call_operand.vmem [shape: f32[2,2,128], index: 3, kind: output, shape index: {1}]
  %4 = xla_tuple %s2, %s3
  %s5 = sld [smem:[#allocation0]]
  $region49: #{bottleneck_forward.4} parent=0
    _
  %s7 = ssub.s32 1, %s5
  %s8 = scalar_select 0, %s7, %s5
  loop: start=0, step=1, limit=4
  $region2: #{bottleneck_forward.4} parent=0 // loop_pre_header
    _
  $region3: #{bottleneck_forward.4} parent=0 // loop_header
    %s10 = sphi 0, %s14
    %p11 = scmp.ge.s32.totalorder %s10, 4
    %s20 = sphi 0, %s22
    %s23 = sphi 0, %s20
    %s24 = sphi 0, %s23
    %s40 = sphi 0, %s24
    %s44 = sphi 0, %s44
    %s46 = sphi 0, %s44
    %s47 = sphi 0, %s46
    %s61 = sphi 0, %s47
    %s67 = sphi 0, %s69
    %s70 = sphi 0, %s67
    %s71 = sphi 0, %s70
    %s87 = sphi 0, %s71
    %s93 = sphi 0, %s95
    %s96 = sphi 0, %s93
    %s97 = sphi 0, %s96
    %s113 = sphi 0, %s97
  $region4: #{bottleneck_forward.4} parent=0 // loop_header_branch
    %13 = sbr.rel (%p11) target = $region8
  $region5: #{bottleneck_forward.4} parent=0 // loop_body
    %s15 = ssub.s32 %s10, 1
    %s16 = ssub.s32 %s10, 2
    %s17 = sadd.s32 %s10, 1
    %s18 = ssub.s32 %s10, %s17
    %p19 = scmp.eq.s32.totalorder %s18, 0
    %s21 = sadd.s32 %s20, 1
    %s22 = scalar_select %p19, %s20, %s21
    %p25 = pneg %p19
    %p26 = scmp.eq.s32.totalorder %s10, 1
    %p27 = por %p25, %p26
    %p28 = scmp.ne.s32.totalorder %s20, %s23
    %p29 = scmp.eq.s32.totalorder %s10, 0
    %p30 = por %p28, %p29
    %p31 = scmp.ne.s32.totalorder %s20, %s23
    %p32 = scmp.eq.s32.totalorder %s15, 1
    %p33 = por %p31, %p32
    %p34 = scmp.ne.s32.totalorder %s23, %s24
    %p35 = scmp.eq.s32.totalorder %s15, 0
    %p36 = por %p34, %p35
    %p37 = scmp.ne.s32.totalorder %s23, %s24
    %p38 = scmp.eq.s32.totalorder %s16, 1
    %p39 = por %p37, %p38
    %p41 = scmp.ne.s32.totalorder %s24, %s40
    %p42 = scmp.eq.s32.totalorder %s16, 0
    %p43 = por %p41, %p42
    %s45 = sadd.s32 %s44, 1
    %p48 = scmp.eq.s32.totalorder %s10, 1
    %p49 = scmp.ne.s32.totalorder %s44, %s46
    %p50 = scmp.eq.s32.totalorder %s10, 0
    %p51 = por %p49, %p50
    %p52 = scmp.ne.s32.totalorder %s44, %s46
    %p53 = scmp.eq.s32.totalorder %s15, 1
    %p54 = por %p52, %p53
    %p55 = scmp.ne.s32.totalorder %s46, %s47
    %p56 = scmp.eq.s32.totalorder %s15, 0
    %p57 = por %p55, %p56
    %p58 = scmp.ne.s32.totalorder %s46, %s47
    %p59 = scmp.eq.s32.totalorder %s16, 1
    %p60 = por %p58, %p59
    %p62 = scmp.ne.s32.totalorder %s47, %s61
    %p63 = scmp.eq.s32.totalorder %s16, 0
    %p64 = por %p62, %p63
    %s65 = ssub.s32 %s10, %s17
    %p66 = scmp.eq.s32.totalorder %s65, 0
    %s68 = sadd.s32 %s67, 1
    %s69 = scalar_select %p66, %s67, %s68
    %p72 = pneg %p66
    %p73 = scmp.eq.s32.totalorder %s10, 1
    %p74 = por %p72, %p73
    %p75 = scmp.ne.s32.totalorder %s67, %s70
    %p76 = scmp.eq.s32.totalorder %s10, 0
    %p77 = por %p75, %p76
    %p78 = scmp.ne.s32.totalorder %s67, %s70
    %p79 = scmp.eq.s32.totalorder %s15, 1
    %p80 = por %p78, %p79
    %p81 = scmp.ne.s32.totalorder %s70, %s71
    %p82 = scmp.eq.s32.totalorder %s15, 0
    %p83 = por %p81, %p82
    %p84 = scmp.ne.s32.totalorder %s70, %s71
    %p85 = scmp.eq.s32.totalorder %s16, 1
    %p86 = por %p84, %p85
    %p88 = scmp.ne.s32.totalorder %s71, %s87
    %p89 = scmp.eq.s32.totalorder %s16, 0
    %p90 = por %p88, %p89
    %s91 = ssub.s32 %s10, %s17
    %p92 = scmp.eq.s32.totalorder %s91, 0
    %s94 = sadd.s32 %s93, 1
    %s95 = scalar_select %p92, %s93, %s94
    %p98 = pneg %p92
    %p99 = scmp.eq.s32.totalorder %s10, 1
    %p100 = por %p98, %p99
    %p101 = scmp.ne.s32.totalorder %s93, %s96
    %p102 = scmp.eq.s32.totalorder %s10, 0
    %p103 = por %p101, %p102
    %p104 = scmp.ne.s32.totalorder %s93, %s96
    %p105 = scmp.eq.s32.totalorder %s15, 1
    %p106 = por %p104, %p105
    %p107 = scmp.ne.s32.totalorder %s96, %s97
    %p108 = scmp.eq.s32.totalorder %s15, 0
    %p109 = por %p107, %p108
    %p110 = scmp.ne.s32.totalorder %s96, %s97
    %p111 = scmp.eq.s32.totalorder %s16, 1
    %p112 = por %p110, %p111
    %p114 = scmp.ne.s32.totalorder %s97, %s113
    %p115 = scmp.eq.s32.totalorder %s16, 0
    %p116 = por %p114, %p115
    %p117 = scmp.le.s32.totalorder 1, %s10
    %p118 = scmp.lt.s32.totalorder %s10, 3
    %p119 = pnand %p117, %p118
    %p120 = pneg %p119
    // Predicated region
    $region9: #{bottleneck_forward.4} parent=5 // pred_check
      _
    $region10: #{bottleneck_forward.4} parent=5 // pred_check_branch
      %122 = sbr.rel (%p119) target = $region12
    $region11: #{bottleneck_forward.4} parent=5 // pred_region
      %s123 = ssub.s32 %s10, 1
      // Predicated region
      $region13: #{bottleneck_forward.4} parent=11 // pred_check
        %p124 = pneg %p57
      $region14: #{bottleneck_forward.4} parent=11 // pred_check_branch
        %126 = sbr.rel (%p124) target = $region16
      $region15: #{bottleneck_forward.4} parent=11 // pred_region
        _
      $region16: #{bottleneck_forward.4} parent=11 // pred_fallthru
        _
    $region12: #{bottleneck_forward.4} parent=5 // pred_fallthru
      _
    %p127 = scmp.lt.s32.totalorder %s10, 2
    // Predicated region
    $region17: #{bottleneck_forward.4} parent=5 // pred_check
      %p128 = pneg %p127
    $region18: #{bottleneck_forward.4} parent=5 // pred_check_branch
      %130 = sbr.rel (%p128) target = $region20
    $region19: #{bottleneck_forward.4} parent=5 // pred_region
      // Predicated region
      $region21: #{bottleneck_forward.4} parent=19 // pred_check
        %p131 = pneg %p30
      $region22: #{bottleneck_forward.4} parent=19 // pred_check_branch
        %133 = sbr.rel (%p131) target = $region24
      $region23: #{bottleneck_forward.4} parent=19 // pred_region
        %p134 = scmp.lt.s32.totalorder %s10, 1
        %s135 = scalar_select %p134, %s10, 1
        %s136 = smul.addr %s135, 32
        %s137 = smul.addr %s136, 8
        %s138 = scalar_lea.vmem %s0, %s137
      $region24: #{bottleneck_forward.4} parent=19 // pred_fallthru
        _
    $region20: #{bottleneck_forward.4} parent=5 // pred_fallthru
      _
    %p139 = scmp.le.s32.totalorder 1, %s10
    %p140 = scmp.lt.s32.totalorder %s10, 3
    %p141 = pnand %p139, %p140
    %p142 = pneg %p141
    // Predicated region
    $region25: #{bottleneck_forward.4} parent=5 // pred_check
      _
    $region26: #{bottleneck_forward.4} parent=5 // pred_check_branch
      %144 = sbr.rel (%p141) target = $region28
    $region27: #{bottleneck_forward.4} parent=5 // pred_region
      %s145 = ssub.s32 %s10, 1
      %p146 = scmp.lt.s32.totalorder %s15, 1
      %s147 = scalar_select %p146, %s15, 1
      %s148 = smul.addr %s147, 32
      %s149 = smul.addr %s148, 8
      %s150 = scalar_lea.vmem %s0, %s149
      %p151 = pneg %p36
      %p152 = pneg %p33
      %p153 = pneg %p57
      %p154 = pneg %p54
      %p155 = pneg %p83
      %p156 = pneg %p80
      %p157 = scmp.lt.s32.totalorder %s15, 1
      %s158 = scalar_select %p157, %s15, 1
      %s159 = smul.addr %s158, 32
      %s160 = smul.addr %s159, 4
      %s161 = scalar_lea.vmem %s2, %s160
      %p162 = pneg %p109
      %p163 = pneg %p106
      %p164 = scmp.lt.s32.totalorder %s15, 1
      %s165 = scalar_select %p164, %s15, 1
      %s166 = smul.addr %s165, 2
      %s167 = scalar_lea.vmem %s3, %s166
      %p168 = scmp.lt.s32.totalorder %s15, 1
      %s169 = scalar_select %p168, %s15, 1
      %s170 = smul.addr %s169, 32
      %s171 = smul.addr %s170, 8
      %s172 = scalar_lea.vmem %s0, %s171
      %p173 = scmp.lt.s32.totalorder %s15, 1
      %s174 = scalar_select %p173, %s15, 1
      %s175 = smul.addr %s174, 32
      %s176 = smul.addr %s175, 4
      %s177 = scalar_lea.vmem %s2, %s176
      %p178 = scmp.lt.s32.totalorder %s15, 1
      %s179 = scalar_select %p178, %s15, 1
      %s180 = smul.addr %s179, 2
      %s181 = scalar_lea.vmem %s3, %s180
      %v183 = vld [vmem:[%s172] sm:$0xff]
      %v184 = vld [vmem:[%s172 + $0x8] sm:$0xff]
      %v185 = vld [vmem:[%s172 + $0x10] sm:$0xff]
      %v186 = vld [vmem:[%s172 + $0x18] sm:$0xff]
      %v187 = vld [vmem:[%s172 + $0x20] sm:$0xff]
      %v188 = vld [vmem:[%s172 + $0x28] sm:$0xff]
      %v189 = vld [vmem:[%s172 + $0x30] sm:$0xff]
      %v190 = vld [vmem:[%s172 + $0x38] sm:$0xff]
      %v191 = vld [vmem:[%s172 + $0x40] sm:$0xff]
      %v192 = vld [vmem:[%s172 + $0x48] sm:$0xff]
      %v193 = vld [vmem:[%s172 + $0x50] sm:$0xff]
      %v194 = vld [vmem:[%s172 + $0x58] sm:$0xff]
      %v195 = vld [vmem:[%s172 + $0x60] sm:$0xff]
      %v196 = vld [vmem:[%s172 + $0x68] sm:$0xff]
      %v197 = vld [vmem:[%s172 + $0x70] sm:$0xff]
      %v198 = vld [vmem:[%s172 + $0x78] sm:$0xff]
      %v199 = vld [vmem:[%s172 + $0x80] sm:$0xff]
      %v200 = vld [vmem:[%s172 + $0x88] sm:$0xff]
      %v201 = vld [vmem:[%s172 + $0x90] sm:$0xff]
      %v202 = vld [vmem:[%s172 + $0x98] sm:$0xff]
      %v203 = vld [vmem:[%s172 + $0xa0] sm:$0xff]
      %v204 = vld [vmem:[%s172 + $0xa8] sm:$0xff]
      %v205 = vld [vmem:[%s172 + $0xb0] sm:$0xff]
      %v206 = vld [vmem:[%s172 + $0xb8] sm:$0xff]
      %v207 = vld [vmem:[%s172 + $0xc0] sm:$0xff]
      %v208 = vld [vmem:[%s172 + $0xc8] sm:$0xff]
      %v209 = vld [vmem:[%s172 + $0xd0] sm:$0xff]
      %v210 = vld [vmem:[%s172 + $0xd8] sm:$0xff]
      %v211 = vld [vmem:[%s172 + $0xe0] sm:$0xff]
      %v212 = vld [vmem:[%s172 + $0xe8] sm:$0xff]
      %v213 = vld [vmem:[%s172 + $0xf0] sm:$0xff]
      %v214 = vld [vmem:[%s172 + $0xf8] sm:$0xff]
      %v215 = vpack.c.bf16 %v184, %v183
      %v216 = vpack.c.bf16 %v186, %v185
      %v217 = vpack.c.bf16 %v188, %v187
      %v218 = vpack.c.bf16 %v190, %v189
      %v219 = vpack.c.bf16 %v192, %v191
      %v220 = vpack.c.bf16 %v194, %v193
      %v221 = vpack.c.bf16 %v196, %v195
      %v222 = vpack.c.bf16 %v198, %v197
      %v223 = vpack.c.bf16 %v200, %v199
      %v224 = vpack.c.bf16 %v202, %v201
      %v225 = vpack.c.bf16 %v204, %v203
      %v226 = vpack.c.bf16 %v206, %v205
      %v227 = vpack.c.bf16 %v208, %v207
      %v228 = vpack.c.bf16 %v210, %v209
      %v229 = vpack.c.bf16 %v212, %v211
      %v230 = vpack.c.bf16 %v214, %v213
      %v231 = vld [vmem:[%s1] sm:$0xf]
      %v232 = vld [vmem:[%s1 + $0x4] sm:$0xf]
      %v235 = vunpack.c.l.b16 %v231
      %v236 = vunpack.c.l.b16 %v232
      %v237 = vpack.c.b16 %v236, %v235
      %vm239 = vcmask 130048
      %v241 = vsel %vm239, %v215, 0
      %v244 = vsel %vm239, %v216, 0
      %v247 = vsel %vm239, %v217, 0
      %v250 = vsel %vm239, %v218, 0
      %v253 = vsel %vm239, %v219, 0
      %v256 = vsel %vm239, %v220, 0
      %v259 = vsel %vm239, %v221, 0
      %v262 = vsel %vm239, %v222, 0
      %v265 = vsel %vm239, %v223, 0
      %v268 = vsel %vm239, %v224, 0
      %v271 = vsel %vm239, %v225, 0
      %v274 = vsel %vm239, %v226, 0
      %v277 = vsel %vm239, %v227, 0
      %v280 = vsel %vm239, %v228, 0
      %v283 = vsel %vm239, %v229, 0
      %v286 = vsel %vm239, %v230, 0
      %288 = vmatprep.subr.bf16.mxu0 0
      %289 = vmatpush1.bf16.msra.mxu0 0
      %290 = vmatprep.subr.bf16.mxu0 0
      %291 = vmatpush1.bf16.msra.mxu0 0
      %292 = vmatprep.subr.bf16.mxu0 0
      %293 = vmatpush1.bf16.msra.mxu0 0
      %294 = vmatprep.subr.bf16.mxu0 0
      %295 = vmatpush1.bf16.msra.mxu0 0
      %296 = vmatprep.subr.bf16.mxu0 0
      %297 = vmatpush1.bf16.msra.mxu0 0
      %298 = vmatprep.subr.bf16.mxu0 0
      %299 = vmatpush1.bf16.msra.mxu0 0
      %300 = vmatprep.subr.bf16.mxu0 0
      %301 = vmatpush1.bf16.msra.mxu0 0
      %302 = vmatprep.subr.bf16.mxu0 0
      %303 = vmatpush1.bf16.msra.mxu0 %v237
      %304 = vmatprep.subr.bf16.mxu0 0
      %305 = vmatpush2.bf16.msra.mxu0 0
      %306 = vmatprep.subr.bf16.mxu0 0
      %307 = vmatpush2.bf16.msra.mxu0 0
      %308 = vmatprep.subr.bf16.mxu0 0
      %309 = vmatpush2.bf16.msra.mxu0 0
      %310 = vmatprep.subr.bf16.mxu0 0
      %311 = vmatpush2.bf16.msra.mxu0 0
      %312 = vmatprep.subr.bf16.mxu0 0
      %313 = vmatpush2.bf16.msra.mxu0 0
      %314 = vmatprep.subr.bf16.mxu0 0
      %315 = vmatpush2.bf16.msra.mxu0 0
      %316 = vmatprep.subr.bf16.mxu0 0
      %317 = vmatpush2.bf16.msra.mxu0 0
      %318 = vmatprep.subr.bf16.mxu0 0
      %319 = vmatpush2.bf16.msra.mxu0 0
      %320 = vmatprep.mubr.bf16.mxu0 0
      %321 = vmatmul.mubr.bf16.gmra.mxu0 %v241
      %v322 = vpop.f32.mrf.mxu0
      %v323 = vadd.f32 0.0, %v322
      %v324 = vpop.f32.mrf.mxu0
      %v325 = vpop.f32.mrf.mxu0
      %v326 = vadd.f32 0.0, %v325
      %v327 = vpop.f32.mrf.mxu0
      %328 = vmatprep.mubr.bf16.mxu0 0
      %329 = vmatmul.mubr.bf16.gmra.mxu0 %v244
      %v330 = vpop.f32.mrf.mxu0
      %v331 = vadd.f32 0.0, %v330
      %v332 = vpop.f32.mrf.mxu0
      %v333 = vpop.f32.mrf.mxu0
      %v334 = vadd.f32 0.0, %v333
      %v335 = vpop.f32.mrf.mxu0
      %336 = vmatprep.mubr.bf16.mxu0 0
      %337 = vmatmul.mubr.bf16.gmra.mxu0 %v247
      %v338 = vpop.f32.mrf.mxu0
      %v339 = vadd.f32 0.0, %v338
      %v340 = vpop.f32.mrf.mxu0
      %v341 = vpop.f32.mrf.mxu0
      %v342 = vadd.f32 0.0, %v341
      %v343 = vpop.f32.mrf.mxu0
      %344 = vmatprep.mubr.bf16.mxu0 0
      %345 = vmatmul.mubr.bf16.gmra.mxu0 %v250
      %v346 = vpop.f32.mrf.mxu0
      %v347 = vadd.f32 0.0, %v346
      %v348 = vpop.f32.mrf.mxu0
      %v349 = vpop.f32.mrf.mxu0
      %v350 = vadd.f32 0.0, %v349
      %v351 = vpop.f32.mrf.mxu0
      %352 = vmatprep.mubr.bf16.mxu0 0
      %353 = vmatmul.mubr.bf16.gmra.mxu0 %v253
      %v354 = vpop.f32.mrf.mxu0
      %v355 = vadd.f32 0.0, %v354
      %v356 = vpop.f32.mrf.mxu0
      %v357 = vpop.f32.mrf.mxu0
      %v358 = vadd.f32 0.0, %v357
      %v359 = vpop.f32.mrf.mxu0
      %360 = vmatprep.mubr.bf16.mxu0 0
      %361 = vmatmul.mubr.bf16.gmra.mxu0 %v256
      %v362 = vpop.f32.mrf.mxu0
      %v363 = vadd.f32 0.0, %v362
      %v364 = vpop.f32.mrf.mxu0
      %v365 = vpop.f32.mrf.mxu0
      %v366 = vadd.f32 0.0, %v365
      %v367 = vpop.f32.mrf.mxu0
      %368 = vmatprep.mubr.bf16.mxu0 0
      %369 = vmatmul.mubr.bf16.gmra.mxu0 %v259
      %v370 = vpop.f32.mrf.mxu0
      %v371 = vadd.f32 0.0, %v370
      %v372 = vpop.f32.mrf.mxu0
      %v373 = vpop.f32.mrf.mxu0
      %v374 = vadd.f32 0.0, %v373
      %v375 = vpop.f32.mrf.mxu0
      %376 = vmatprep.mubr.bf16.mxu0 0
      %377 = vmatmul.mubr.bf16.gmra.mxu0 %v262
      %v378 = vpop.f32.mrf.mxu0
      %v379 = vadd.f32 0.0, %v378
      %v380 = vpop.f32.mrf.mxu0
      %v381 = vpop.f32.mrf.mxu0
      %v382 = vadd.f32 0.0, %v381
      %v383 = vpop.f32.mrf.mxu0
      %384 = vmatprep.mubr.bf16.mxu0 0
      %385 = vmatmul.mubr.bf16.gmra.mxu0 %v265
      %v386 = vpop.f32.mrf.mxu0
      %v387 = vadd.f32 0.0, %v386
      %v388 = vpop.f32.mrf.mxu0
      %v389 = vpop.f32.mrf.mxu0
      %v390 = vadd.f32 0.0, %v389
      %v391 = vpop.f32.mrf.mxu0
      %392 = vmatprep.mubr.bf16.mxu0 0
      %393 = vmatmul.mubr.bf16.gmra.mxu0 %v268
      %v394 = vpop.f32.mrf.mxu0
      %v395 = vadd.f32 0.0, %v394
      %v396 = vpop.f32.mrf.mxu0
      %v397 = vpop.f32.mrf.mxu0
      %v398 = vadd.f32 0.0, %v397
      %v399 = vpop.f32.mrf.mxu0
      %400 = vmatprep.mubr.bf16.mxu0 0
      %401 = vmatmul.mubr.bf16.gmra.mxu0 %v271
      %v402 = vpop.f32.mrf.mxu0
      %v403 = vadd.f32 0.0, %v402
      %v404 = vpop.f32.mrf.mxu0
      %v405 = vpop.f32.mrf.mxu0
      %v406 = vadd.f32 0.0, %v405
      %v407 = vpop.f32.mrf.mxu0
      %408 = vmatprep.mubr.bf16.mxu0 0
      %409 = vmatmul.mubr.bf16.gmra.mxu0 %v274
      %v410 = vpop.f32.mrf.mxu0
      %v411 = vadd.f32 0.0, %v410
      %v412 = vpop.f32.mrf.mxu0
      %v413 = vpop.f32.mrf.mxu0
      %v414 = vadd.f32 0.0, %v413
      %v415 = vpop.f32.mrf.mxu0
      %416 = vmatprep.mubr.bf16.mxu0 0
      %417 = vmatmul.mubr.bf16.gmra.mxu0 %v277
      %v418 = vpop.f32.mrf.mxu0
      %v419 = vadd.f32 0.0, %v418
      %v420 = vpop.f32.mrf.mxu0
      %v421 = vpop.f32.mrf.mxu0
      %v422 = vadd.f32 0.0, %v421
      %v423 = vpop.f32.mrf.mxu0
      %424 = vmatprep.mubr.bf16.mxu0 0
      %425 = vmatmul.mubr.bf16.gmra.mxu0 %v280
      %v426 = vpop.f32.mrf.mxu0
      %v427 = vadd.f32 0.0, %v426
      %v428 = vpop.f32.mrf.mxu0
      %v429 = vpop.f32.mrf.mxu0
      %v430 = vadd.f32 0.0, %v429
      %v431 = vpop.f32.mrf.mxu0
      %432 = vmatprep.mubr.bf16.mxu0 0
      %433 = vmatmul.mubr.bf16.gmra.mxu0 %v283
      %v434 = vpop.f32.mrf.mxu0
      %v435 = vadd.f32 0.0, %v434
      %v436 = vpop.f32.mrf.mxu0
      %v437 = vpop.f32.mrf.mxu0
      %v438 = vadd.f32 0.0, %v437
      %v439 = vpop.f32.mrf.mxu0
      %440 = vmatprep.mubr.bf16.mxu0 0
      %441 = vmatmul.mubr.bf16.gmra.mxu0 %v286
      %v442 = vpop.f32.mrf.mxu0
      %v443 = vadd.f32 0.0, %v442
      %v444 = vpop.f32.mrf.mxu0
      %v445 = vpop.f32.mrf.mxu0
      %v446 = vadd.f32 0.0, %v445
      %v447 = vpop.f32.mrf.mxu0
      %448 = vdwg.mxu0
      %v449 = vpack.c.bf16 %v326, %v323
      %v450 = vpack.c.bf16 %v334, %v331
      %v451 = vpack.c.bf16 %v342, %v339
      %v452 = vpack.c.bf16 %v350, %v347
      %v453 = vpack.c.bf16 %v358, %v355
      %v454 = vpack.c.bf16 %v366, %v363
      %v455 = vpack.c.bf16 %v374, %v371
      %v456 = vpack.c.bf16 %v382, %v379
      %v457 = vpack.c.bf16 %v390, %v387
      %v458 = vpack.c.bf16 %v398, %v395
      %v459 = vpack.c.bf16 %v406, %v403
      %v460 = vpack.c.bf16 %v414, %v411
      %v461 = vpack.c.bf16 %v422, %v419
      %v462 = vpack.c.bf16 %v430, %v427
      %v463 = vpack.c.bf16 %v438, %v435
      %v464 = vpack.c.bf16 %v446, %v443
      %v481 = vunpack.c.l.b16 %v449
      %v482 = vunpack.c.h.b16 %v449
      %v483 = vunpack.c.l.b16 %v450
      %v484 = vunpack.c.h.b16 %v450
      %v485 = vunpack.c.l.b16 %v451
      %v486 = vunpack.c.h.b16 %v451
      %v487 = vunpack.c.l.b16 %v452
      %v488 = vunpack.c.h.b16 %v452
      %v489 = vunpack.c.l.b16 %v453
      %v490 = vunpack.c.h.b16 %v453
      %v491 = vunpack.c.l.b16 %v454
      %v492 = vunpack.c.h.b16 %v454
      %v493 = vunpack.c.l.b16 %v455
      %v494 = vunpack.c.h.b16 %v455
      %v495 = vunpack.c.l.b16 %v456
      %v496 = vunpack.c.h.b16 %v456
      %v497 = vunpack.c.l.b16 %v457
      %v498 = vunpack.c.h.b16 %v457
      %v499 = vunpack.c.l.b16 %v458
      %v500 = vunpack.c.h.b16 %v458
      %v501 = vunpack.c.l.b16 %v459
      %v502 = vunpack.c.h.b16 %v459
      %v503 = vunpack.c.l.b16 %v460
      %v504 = vunpack.c.h.b16 %v460
      %v505 = vunpack.c.l.b16 %v461
      %v506 = vunpack.c.h.b16 %v461
      %v507 = vunpack.c.l.b16 %v462
      %v508 = vunpack.c.h.b16 %v462
      %v509 = vunpack.c.l.b16 %v463
      %v510 = vunpack.c.h.b16 %v463
      %v511 = vunpack.c.l.b16 %v464
      %v512 = vunpack.c.h.b16 %v464
      %v513 = vpack.c.b16 %v481, %v481
      %v514 = vpack.c.b16 %v482, %v482
      %v515 = vpack.c.b16 %v483, %v483
      %v516 = vpack.c.b16 %v484, %v484
      %v517 = vpack.c.b16 %v485, %v485
      %v518 = vpack.c.b16 %v486, %v486
      %v519 = vpack.c.b16 %v487, %v487
      %v520 = vpack.c.b16 %v488, %v488
      %v521 = vpack.c.b16 %v489, %v489
      %v522 = vpack.c.b16 %v490, %v490
      %v523 = vpack.c.b16 %v491, %v491
      %v524 = vpack.c.b16 %v492, %v492
      %v525 = vpack.c.b16 %v493, %v493
      %v526 = vpack.c.b16 %v494, %v494
      %v527 = vpack.c.b16 %v495, %v495
      %v528 = vpack.c.b16 %v496, %v496
      %v529 = vpack.c.b16 %v497, %v497
      %v530 = vpack.c.b16 %v498, %v498
      %v531 = vpack.c.b16 %v499, %v499
      %v532 = vpack.c.b16 %v500, %v500
      %v533 = vpack.c.b16 %v501, %v501
      %v534 = vpack.c.b16 %v502, %v502
      %v535 = vpack.c.b16 %v503, %v503
      %v536 = vpack.c.b16 %v504, %v504
      %v537 = vpack.c.b16 %v505, %v505
      %v538 = vpack.c.b16 %v506, %v506
      %v539 = vpack.c.b16 %v507, %v507
      %v540 = vpack.c.b16 %v508, %v508
      %v541 = vpack.c.b16 %v509, %v509
      %v542 = vpack.c.b16 %v510, %v510
      %v543 = vpack.c.b16 %v511, %v511
      %v544 = vpack.c.b16 %v512, %v512
      %577 = vst [vmem:[%s177] sm:$0xf] %v513
      %578 = vst [vmem:[%s177 + $0x4] sm:$0xf] %v514
      %579 = vst [vmem:[%s177 + $0x8] sm:$0xf] %v515
      %580 = vst [vmem:[%s177 + $0xc] sm:$0xf] %v516
      %581 = vst [vmem:[%s177 + $0x10] sm:$0xf] %v517
      %582 = vst [vmem:[%s177 + $0x14] sm:$0xf] %v518
      %583 = vst [vmem:[%s177 + $0x18] sm:$0xf] %v519
      %584 = vst [vmem:[%s177 + $0x1c] sm:$0xf] %v520
      %585 = vst [vmem:[%s177 + $0x20] sm:$0xf] %v521
      %586 = vst [vmem:[%s177 + $0x24] sm:$0xf] %v522
      %587 = vst [vmem:[%s177 + $0x28] sm:$0xf] %v523
      %588 = vst [vmem:[%s177 + $0x2c] sm:$0xf] %v524
      %589 = vst [vmem:[%s177 + $0x30] sm:$0xf] %v525
      %590 = vst [vmem:[%s177 + $0x34] sm:$0xf] %v526
      %591 = vst [vmem:[%s177 + $0x38] sm:$0xf] %v527
      %592 = vst [vmem:[%s177 + $0x3c] sm:$0xf] %v528
      %593 = vst [vmem:[%s177 + $0x40] sm:$0xf] %v529
      %594 = vst [vmem:[%s177 + $0x44] sm:$0xf] %v530
      %595 = vst [vmem:[%s177 + $0x48] sm:$0xf] %v531
      %596 = vst [vmem:[%s177 + $0x4c] sm:$0xf] %v532
      %597 = vst [vmem:[%s177 + $0x50] sm:$0xf] %v533
      %598 = vst [vmem:[%s177 + $0x54] sm:$0xf] %v534
      %599 = vst [vmem:[%s177 + $0x58] sm:$0xf] %v535
      %600 = vst [vmem:[%s177 + $0x5c] sm:$0xf] %v536
      %601 = vst [vmem:[%s177 + $0x60] sm:$0xf] %v537
      %602 = vst [vmem:[%s177 + $0x64] sm:$0xf] %v538
      %603 = vst [vmem:[%s177 + $0x68] sm:$0xf] %v539
      %604 = vst [vmem:[%s177 + $0x6c] sm:$0xf] %v540
      %605 = vst [vmem:[%s177 + $0x70] sm:$0xf] %v541
      %606 = vst [vmem:[%s177 + $0x74] sm:$0xf] %v542
      %607 = vst [vmem:[%s177 + $0x78] sm:$0xf] %v543
      %608 = vst [vmem:[%s177 + $0x7c] sm:$0xf] %v544
      %v609 = vadd.f32 %v323, %v326
      %v610 = vadd.f32 %v609, %v331
      %v611 = vadd.f32 %v610, %v334
      %v612 = vadd.f32 %v611, %v339
      %v613 = vadd.f32 %v612, %v342
      %v614 = vadd.f32 %v613, %v347
      %v615 = vadd.f32 %v614, %v350
      %v616 = vadd.f32 %v615, %v355
      %v617 = vadd.f32 %v616, %v358
      %v618 = vadd.f32 %v617, %v363
      %v619 = vadd.f32 %v618, %v366
      %v620 = vadd.f32 %v619, %v371
      %v621 = vadd.f32 %v620, %v374
      %v622 = vadd.f32 %v621, %v379
      %v623 = vadd.f32 %v622, %v382
      %v624 = vadd.f32 %v623, %v387
      %v625 = vadd.f32 %v624, %v390
      %v626 = vadd.f32 %v625, %v395
      %v627 = vadd.f32 %v626, %v398
      %v628 = vadd.f32 %v627, %v403
      %v629 = vadd.f32 %v628, %v406
      %v630 = vadd.f32 %v629, %v411
      %v631 = vadd.f32 %v630, %v414
      %v632 = vadd.f32 %v631, %v419
      %v633 = vadd.f32 %v632, %v422
      %v634 = vadd.f32 %v633, %v427
      %v635 = vadd.f32 %v634, %v430
      %v636 = vadd.f32 %v635, %v435
      %v637 = vadd.f32 %v636, %v438
      %v638 = vadd.f32 %v637, %v443
      %v639 = vadd.f32 %v638, %v446
      %v640 = vrot.slane %v639, 4
      %v641 = vadd.f32 %v639, %v640
      %v642 = vrot.slane %v641, 2
      %v643 = vadd.f32 %v641, %v642
      %v644 = vrot.slane %v643, 1
      %v645 = vadd.f32 %v643, %v644
      %v646 = vmul.f32 %v323, %v323
      %v647 = vmul.f32 %v326, %v326
      %v648 = vmul.f32 %v331, %v331
      %v649 = vmul.f32 %v334, %v334
      %v650 = vmul.f32 %v339, %v339
      %v651 = vmul.f32 %v342, %v342
      %v652 = vmul.f32 %v347, %v347
      %v653 = vmul.f32 %v350, %v350
      %v654 = vmul.f32 %v355, %v355
      %v655 = vmul.f32 %v358, %v358
      %v656 = vmul.f32 %v363, %v363
      %v657 = vmul.f32 %v366, %v366
      %v658 = vmul.f32 %v371, %v371
      %v659 = vmul.f32 %v374, %v374
      %v660 = vmul.f32 %v379, %v379
      %v661 = vmul.f32 %v382, %v382
      %v662 = vmul.f32 %v387, %v387
      %v663 = vmul.f32 %v390, %v390
      %v664 = vmul.f32 %v395, %v395
      %v665 = vmul.f32 %v398, %v398
      %v666 = vmul.f32 %v403, %v403
      %v667 = vmul.f32 %v406, %v406
      %v668 = vmul.f32 %v411, %v411
      %v669 = vmul.f32 %v414, %v414
      %v670 = vmul.f32 %v419, %v419
      %v671 = vmul.f32 %v422, %v422
      %v672 = vmul.f32 %v427, %v427
      %v673 = vmul.f32 %v430, %v430
      %v674 = vmul.f32 %v435, %v435
      %v675 = vmul.f32 %v438, %v438
      %v676 = vmul.f32 %v443, %v443
      %v677 = vmul.f32 %v446, %v446
      %v678 = vadd.f32 %v646, %v647
      %v679 = vadd.f32 %v678, %v648
      %v680 = vadd.f32 %v679, %v649
      %v681 = vadd.f32 %v680, %v650
      %v682 = vadd.f32 %v681, %v651
      %v683 = vadd.f32 %v682, %v652
      %v684 = vadd.f32 %v683, %v653
      %v685 = vadd.f32 %v684, %v654
      %v686 = vadd.f32 %v685, %v655
      %v687 = vadd.f32 %v686, %v656
      %v688 = vadd.f32 %v687, %v657
      %v689 = vadd.f32 %v688, %v658
      %v690 = vadd.f32 %v689, %v659
      %v691 = vadd.f32 %v690, %v660
      %v692 = vadd.f32 %v691, %v661
      %v693 = vadd.f32 %v692, %v662
      %v694 = vadd.f32 %v693, %v663
      %v695 = vadd.f32 %v694, %v664
      %v696 = vadd.f32 %v695, %v665
      %v697 = vadd.f32 %v696, %v666
      %v698 = vadd.f32 %v697, %v667
      %v699 = vadd.f32 %v698, %v668
      %v700 = vadd.f32 %v699, %v669
      %v701 = vadd.f32 %v700, %v670
      %v702 = vadd.f32 %v701, %v671
      %v703 = vadd.f32 %v702, %v672
      %v704 = vadd.f32 %v703, %v673
      %v705 = vadd.f32 %v704, %v674
      %v706 = vadd.f32 %v705, %v675
      %v707 = vadd.f32 %v706, %v676
      %v708 = vadd.f32 %v707, %v677
      %v709 = vrot.slane %v708, 4
      %v710 = vadd.f32 %v708, %v709
      %v711 = vrot.slane %v710, 2
      %v712 = vadd.f32 %v710, %v711
      %v713 = vrot.slane %v712, 1
      %v714 = vadd.f32 %v712, %v713
      %vm715 = vcmask 1040384
      %v716 = vsel %vm715, %v645, %v714
      %717 = vst [vmem:[%s181] sm:$0x3] %v716
      %p718 = scmp.lt.s32.totalorder %s15, 1
      %s719 = scalar_select %p718, %s15, 1
      %s720 = smul.addr %s719, 32
      %s721 = smul.addr %s720, 4
      %s722 = scalar_lea.vmem %s2, %s721
      %p723 = scmp.lt.s32.totalorder %s15, 1
      %s724 = scalar_select %p723, %s15, 1
      %s725 = smul.addr %s724, 2
      %s726 = scalar_lea.vmem %s3, %s725
      // Predicated region
      $region29: #{bottleneck_forward.4} parent=27 // pred_check
        %p727 = pneg %p80
      $region30: #{bottleneck_forward.4} parent=27 // pred_check_branch
        %729 = sbr.rel (%p727) target = $region32
      $region31: #{bottleneck_forward.4} parent=27 // pred_region
        _
      $region32: #{bottleneck_forward.4} parent=27 // pred_fallthru
        _
      // Predicated region
      $region33: #{bottleneck_forward.4} parent=27 // pred_check
        %p730 = pneg %p106
      $region34: #{bottleneck_forward.4} parent=27 // pred_check_branch
        %732 = sbr.rel (%p730) target = $region36
      $region35: #{bottleneck_forward.4} parent=27 // pred_region
        _
      $region36: #{bottleneck_forward.4} parent=27 // pred_fallthru
        _
    $region28: #{bottleneck_forward.4} parent=5 // pred_fallthru
      _
    %p733 = scmp.le.s32.totalorder 2, %s10
    // Predicated region
    $region37: #{bottleneck_forward.4} parent=5 // pred_check
      %p734 = pneg %p733
    $region38: #{bottleneck_forward.4} parent=5 // pred_check_branch
      %736 = sbr.rel (%p734) target = $region40
    $region39: #{bottleneck_forward.4} parent=5 // pred_region
      %s737 = ssub.s32 %s10, 2
      // Predicated region
      $region41: #{bottleneck_forward.4} parent=39 // pred_check
        %p738 = pneg %p86
      $region42: #{bottleneck_forward.4} parent=39 // pred_check_branch
        %740 = sbr.rel (%p738) target = $region44
      $region43: #{bottleneck_forward.4} parent=39 // pred_region
        %p741 = scmp.lt.s32.totalorder %s16, 1
        %s742 = scalar_select %p741, %s16, 1
        %s743 = smul.addr %s742, 32
        %s744 = smul.addr %s743, 4
        %s745 = scalar_lea.vmem %s2, %s744
      $region44: #{bottleneck_forward.4} parent=39 // pred_fallthru
        _
      // Predicated region
      $region45: #{bottleneck_forward.4} parent=39 // pred_check
        %p746 = pneg %p112
      $region46: #{bottleneck_forward.4} parent=39 // pred_check_branch
        %748 = sbr.rel (%p746) target = $region48
      $region47: #{bottleneck_forward.4} parent=39 // pred_region
        %p749 = scmp.lt.s32.totalorder %s16, 1
        %s750 = scalar_select %p749, %s16, 1
        %s751 = smul.addr %s750, 2
        %s752 = scalar_lea.vmem %s3, %s751
      $region48: #{bottleneck_forward.4} parent=39 // pred_fallthru
        _
    $region40: #{bottleneck_forward.4} parent=5 // pred_fallthru
      _
  $region6: #{bottleneck_forward.4} parent=0 // loop_footer
    %s14 = sadd.s32 1, %s10
  $region7: #{bottleneck_forward.4} parent=0 // loop_footer_branch
    %9 = sbr.rel target = $region3
  $region8: #{bottleneck_forward.4} parent=0 // loop_exit
    _

// kernel: bottleneck_forward.6
$region0: #{bottleneck_forward.6}
  #allocation0 [shape = 'u32[]', space=smem, size = 0x4, offset = 0x4, fixed_abs, tag = 'smem constant byte address 0x4 - core index']
  #allocation1 [shape = 'u32[144,128]{1,0:T(1,128)}', space=vmem, size = 0x12000, scoped, tag = 'internal scratch']
  %s0 = inlined_call_operand.vmem [shape: bf16[2,256,128], index: 0, kind: input, shape index: {}]
  %s1 = inlined_call_operand.vmem [shape: f32[2,128], index: 1, kind: input, shape index: {}]
  %s2 = inlined_call_operand.vmem [shape: f32[1,128], index: 2, kind: input, shape index: {}]
  %s3 = inlined_call_operand.vmem [shape: f32[1,128], index: 3, kind: input, shape index: {}]
  %s4 = inlined_call_operand.vmem [shape: bf16[128,128], index: 4, kind: input, shape index: {}]
  %s5 = inlined_call_operand.vmem [shape: bf16[2,256,128], index: 5, kind: output, shape index: {0}]
  %s6 = inlined_call_operand.vmem [shape: f32[2,2,128], index: 6, kind: output, shape index: {1}]
  %7 = xla_tuple %s5, %s6
  %s8 = sld [smem:[#allocation0]]
  $region61: #{bottleneck_forward.6} parent=0
    _
  %s10 = ssub.s32 1, %s8
  %s11 = scalar_select 0, %s10, %s8
  loop: start=0, step=1, limit=4
  $region2: #{bottleneck_forward.6} parent=0 // loop_pre_header
    _
  $region3: #{bottleneck_forward.6} parent=0 // loop_header
    %s13 = sphi 0, %s17
    %p14 = scmp.ge.s32.totalorder %s13, 4
    %s23 = sphi 0, %s25
    %s26 = sphi 0, %s23
    %s27 = sphi 0, %s26
    %s43 = sphi 0, %s27
    %s47 = sphi 0, %s47
    %s49 = sphi 0, %s47
    %s50 = sphi 0, %s49
    %s64 = sphi 0, %s50
    %s68 = sphi 0, %s68
    %s70 = sphi 0, %s68
    %s71 = sphi 0, %s70
    %s85 = sphi 0, %s71
    %s89 = sphi 0, %s89
    %s91 = sphi 0, %s89
    %s92 = sphi 0, %s91
    %s106 = sphi 0, %s92
    %s110 = sphi 0, %s110
    %s112 = sphi 0, %s110
    %s113 = sphi 0, %s112
    %s127 = sphi 0, %s113
    %s133 = sphi 0, %s135
    %s136 = sphi 0, %s133
    %s137 = sphi 0, %s136
    %s153 = sphi 0, %s137
    %s159 = sphi 0, %s161
    %s162 = sphi 0, %s159
    %s163 = sphi 0, %s162
    %s179 = sphi 0, %s163
  $region4: #{bottleneck_forward.6} parent=0 // loop_header_branch
    %16 = sbr.rel (%p14) target = $region8
  $region5: #{bottleneck_forward.6} parent=0 // loop_body
    %s18 = ssub.s32 %s13, 1
    %s19 = ssub.s32 %s13, 2
    %s20 = sadd.s32 %s13, 1
    %s21 = ssub.s32 %s13, %s20
    %p22 = scmp.eq.s32.totalorder %s21, 0
    %s24 = sadd.s32 %s23, 1
    %s25 = scalar_select %p22, %s23, %s24
    %p28 = pneg %p22
    %p29 = scmp.eq.s32.totalorder %s13, 1
    %p30 = por %p28, %p29
    %p31 = scmp.ne.s32.totalorder %s23, %s26
    %p32 = scmp.eq.s32.totalorder %s13, 0
    %p33 = por %p31, %p32
    %p34 = scmp.ne.s32.totalorder %s23, %s26
    %p35 = scmp.eq.s32.totalorder %s18, 1
    %p36 = por %p34, %p35
    %p37 = scmp.ne.s32.totalorder %s26, %s27
    %p38 = scmp.eq.s32.totalorder %s18, 0
    %p39 = por %p37, %p38
    %p40 = scmp.ne.s32.totalorder %s26, %s27
    %p41 = scmp.eq.s32.totalorder %s19, 1
    %p42 = por %p40, %p41
    %p44 = scmp.ne.s32.totalorder %s27, %s43
    %p45 = scmp.eq.s32.totalorder %s19, 0
    %p46 = por %p44, %p45
    %s48 = sadd.s32 %s47, 1
    %p51 = scmp.eq.s32.totalorder %s13, 1
    %p52 = scmp.ne.s32.totalorder %s47, %s49
    %p53 = scmp.eq.s32.totalorder %s13, 0
    %p54 = por %p52, %p53
    %p55 = scmp.ne.s32.totalorder %s47, %s49
    %p56 = scmp.eq.s32.totalorder %s18, 1
    %p57 = por %p55, %p56
    %p58 = scmp.ne.s32.totalorder %s49, %s50
    %p59 = scmp.eq.s32.totalorder %s18, 0
    %p60 = por %p58, %p59
    %p61 = scmp.ne.s32.totalorder %s49, %s50
    %p62 = scmp.eq.s32.totalorder %s19, 1
    %p63 = por %p61, %p62
    %p65 = scmp.ne.s32.totalorder %s50, %s64
    %p66 = scmp.eq.s32.totalorder %s19, 0
    %p67 = por %p65, %p66
    %s69 = sadd.s32 %s68, 1
    %p72 = scmp.eq.s32.totalorder %s13, 1
    %p73 = scmp.ne.s32.totalorder %s68, %s70
    %p74 = scmp.eq.s32.totalorder %s13, 0
    %p75 = por %p73, %p74
    %p76 = scmp.ne.s32.totalorder %s68, %s70
    %p77 = scmp.eq.s32.totalorder %s18, 1
    %p78 = por %p76, %p77
    %p79 = scmp.ne.s32.totalorder %s70, %s71
    %p80 = scmp.eq.s32.totalorder %s18, 0
    %p81 = por %p79, %p80
    %p82 = scmp.ne.s32.totalorder %s70, %s71
    %p83 = scmp.eq.s32.totalorder %s19, 1
    %p84 = por %p82, %p83
    %p86 = scmp.ne.s32.totalorder %s71, %s85
    %p87 = scmp.eq.s32.totalorder %s19, 0
    %p88 = por %p86, %p87
    %s90 = sadd.s32 %s89, 1
    %p93 = scmp.eq.s32.totalorder %s13, 1
    %p94 = scmp.ne.s32.totalorder %s89, %s91
    %p95 = scmp.eq.s32.totalorder %s13, 0
    %p96 = por %p94, %p95
    %p97 = scmp.ne.s32.totalorder %s89, %s91
    %p98 = scmp.eq.s32.totalorder %s18, 1
    %p99 = por %p97, %p98
    %p100 = scmp.ne.s32.totalorder %s91, %s92
    %p101 = scmp.eq.s32.totalorder %s18, 0
    %p102 = por %p100, %p101
    %p103 = scmp.ne.s32.totalorder %s91, %s92
    %p104 = scmp.eq.s32.totalorder %s19, 1
    %p105 = por %p103, %p104
    %p107 = scmp.ne.s32.totalorder %s92, %s106
    %p108 = scmp.eq.s32.totalorder %s19, 0
    %p109 = por %p107, %p108
    %s111 = sadd.s32 %s110, 1
    %p114 = scmp.eq.s32.totalorder %s13, 1
    %p115 = scmp.ne.s32.totalorder %s110, %s112
    %p116 = scmp.eq.s32.totalorder %s13, 0
    %p117 = por %p115, %p116
    %p118 = scmp.ne.s32.totalorder %s110, %s112
    %p119 = scmp.eq.s32.totalorder %s18, 1
    %p120 = por %p118, %p119
    %p121 = scmp.ne.s32.totalorder %s112, %s113
    %p122 = scmp.eq.s32.totalorder %s18, 0
    %p123 = por %p121, %p122
    %p124 = scmp.ne.s32.totalorder %s112, %s113
    %p125 = scmp.eq.s32.totalorder %s19, 1
    %p126 = por %p124, %p125
    %p128 = scmp.ne.s32.totalorder %s113, %s127
    %p129 = scmp.eq.s32.totalorder %s19, 0
    %p130 = por %p128, %p129
    %s131 = ssub.s32 %s13, %s20
    %p132 = scmp.eq.s32.totalorder %s131, 0
    %s134 = sadd.s32 %s133, 1
    %s135 = scalar_select %p132, %s133, %s134
    %p138 = pneg %p132
    %p139 = scmp.eq.s32.totalorder %s13, 1
    %p140 = por %p138, %p139
    %p141 = scmp.ne.s32.totalorder %s133, %s136
    %p142 = scmp.eq.s32.totalorder %s13, 0
    %p143 = por %p141, %p142
    %p144 = scmp.ne.s32.totalorder %s133, %s136
    %p145 = scmp.eq.s32.totalorder %s18, 1
    %p146 = por %p144, %p145
    %p147 = scmp.ne.s32.totalorder %s136, %s137
    %p148 = scmp.eq.s32.totalorder %s18, 0
    %p149 = por %p147, %p148
    %p150 = scmp.ne.s32.totalorder %s136, %s137
    %p151 = scmp.eq.s32.totalorder %s19, 1
    %p152 = por %p150, %p151
    %p154 = scmp.ne.s32.totalorder %s137, %s153
    %p155 = scmp.eq.s32.totalorder %s19, 0
    %p156 = por %p154, %p155
    %s157 = ssub.s32 %s13, %s20
    %p158 = scmp.eq.s32.totalorder %s157, 0
    %s160 = sadd.s32 %s159, 1
    %s161 = scalar_select %p158, %s159, %s160
    %p164 = pneg %p158
    %p165 = scmp.eq.s32.totalorder %s13, 1
    %p166 = por %p164, %p165
    %p167 = scmp.ne.s32.totalorder %s159, %s162
    %p168 = scmp.eq.s32.totalorder %s13, 0
    %p169 = por %p167, %p168
    %p170 = scmp.ne.s32.totalorder %s159, %s162
    %p171 = scmp.eq.s32.totalorder %s18, 1
    %p172 = por %p170, %p171
    %p173 = scmp.ne.s32.totalorder %s162, %s163
    %p174 = scmp.eq.s32.totalorder %s18, 0
    %p175 = por %p173, %p174
    %p176 = scmp.ne.s32.totalorder %s162, %s163
    %p177 = scmp.eq.s32.totalorder %s19, 1
    %p178 = por %p176, %p177
    %p180 = scmp.ne.s32.totalorder %s163, %s179
    %p181 = scmp.eq.s32.totalorder %s19, 0
    %p182 = por %p180, %p181
    %p183 = scmp.le.s32.totalorder 1, %s13
    %p184 = scmp.lt.s32.totalorder %s13, 3
    %p185 = pnand %p183, %p184
    %p186 = pneg %p185
    // Predicated region
    $region9: #{bottleneck_forward.6} parent=5 // pred_check
      _
    $region10: #{bottleneck_forward.6} parent=5 // pred_check_branch
      %188 = sbr.rel (%p185) target = $region12
    $region11: #{bottleneck_forward.6} parent=5 // pred_region
      %s189 = ssub.s32 %s13, 1
      // Predicated region
      $region13: #{bottleneck_forward.6} parent=11 // pred_check
        %p190 = pneg %p60
      $region14: #{bottleneck_forward.6} parent=11 // pred_check_branch
        %192 = sbr.rel (%p190) target = $region16
      $region15: #{bottleneck_forward.6} parent=11 // pred_region
        _
      $region16: #{bottleneck_forward.6} parent=11 // pred_fallthru
        _
      // Predicated region
      $region17: #{bottleneck_forward.6} parent=11 // pred_check
        %p193 = pneg %p81
      $region18: #{bottleneck_forward.6} parent=11 // pred_check_branch
        %195 = sbr.rel (%p193) target = $region20
      $region19: #{bottleneck_forward.6} parent=11 // pred_region
        _
      $region20: #{bottleneck_forward.6} parent=11 // pred_fallthru
        _
      // Predicated region
      $region21: #{bottleneck_forward.6} parent=11 // pred_check
        %p196 = pneg %p102
      $region22: #{bottleneck_forward.6} parent=11 // pred_check_branch
        %198 = sbr.rel (%p196) target = $region24
      $region23: #{bottleneck_forward.6} parent=11 // pred_region
        _
      $region24: #{bottleneck_forward.6} parent=11 // pred_fallthru
        _
      // Predicated region
      $region25: #{bottleneck_forward.6} parent=11 // pred_check
        %p199 = pneg %p123
      $region26: #{bottleneck_forward.6} parent=11 // pred_check_branch
        %201 = sbr.rel (%p199) target = $region28
      $region27: #{bottleneck_forward.6} parent=11 // pred_region
        _
      $region28: #{bottleneck_forward.6} parent=11 // pred_fallthru
        _
    $region12: #{bottleneck_forward.6} parent=5 // pred_fallthru
      _
    %p202 = scmp.lt.s32.totalorder %s13, 2
    // Predicated region
    $region29: #{bottleneck_forward.6} parent=5 // pred_check
      %p203 = pneg %p202
    $region30: #{bottleneck_forward.6} parent=5 // pred_check_branch
      %205 = sbr.rel (%p203) target = $region32
    $region31: #{bottleneck_forward.6} parent=5 // pred_region
      // Predicated region
      $region33: #{bottleneck_forward.6} parent=31 // pred_check
        %p206 = pneg %p33
      $region34: #{bottleneck_forward.6} parent=31 // pred_check_branch
        %208 = sbr.rel (%p206) target = $region36
      $region35: #{bottleneck_forward.6} parent=31 // pred_region
        %p209 = scmp.lt.s32.totalorder %s13, 1
        %s210 = scalar_select %p209, %s13, 1
        %s211 = smul.addr %s210, 32
        %s212 = smul.addr %s211, 4
        %s213 = scalar_lea.vmem %s0, %s212
      $region36: #{bottleneck_forward.6} parent=31 // pred_fallthru
        _
    $region32: #{bottleneck_forward.6} parent=5 // pred_fallthru
      _
    %p214 = scmp.le.s32.totalorder 1, %s13
    %p215 = scmp.lt.s32.totalorder %s13, 3
    %p216 = pnand %p214, %p215
    %p217 = pneg %p216
    // Predicated region
    $region37: #{bottleneck_forward.6} parent=5 // pred_check
      _
    $region38: #{bottleneck_forward.6} parent=5 // pred_check_branch
      %219 = sbr.rel (%p216) target = $region40
    $region39: #{bottleneck_forward.6} parent=5 // pred_region
      %s220 = ssub.s32 %s13, 1
      %p221 = scmp.lt.s32.totalorder %s18, 1
      %s222 = scalar_select %p221, %s18, 1
      %s223 = smul.addr %s222, 32
      %s224 = smul.addr %s223, 4
      %s225 = scalar_lea.vmem %s0, %s224
      %p226 = pneg %p39
      %p227 = pneg %p36
      %p228 = pneg %p60
      %p229 = pneg %p57
      %p230 = pneg %p81
      %p231 = pneg %p78
      %p232 = pneg %p102
      %p233 = pneg %p99
      %p234 = pneg %p123
      %p235 = pneg %p120
      %p236 = pneg %p149
      %p237 = pneg %p146
      %p238 = scmp.lt.s32.totalorder %s18, 1
      %s239 = scalar_select %p238, %s18, 1
      %s240 = smul.addr %s239, 32
      %s241 = smul.addr %s240, 4
      %s242 = scalar_lea.vmem %s5, %s241
      %p243 = pneg %p175
      %p244 = pneg %p172
      %p245 = scmp.lt.s32.totalorder %s18, 1
      %s246 = scalar_select %p245, %s18, 1
      %s247 = smul.addr %s246, 2
      %s248 = scalar_lea.vmem %s6, %s247
      %p249 = scmp.lt.s32.totalorder %s18, 1
      %s250 = scalar_select %p249, %s18, 1
      %s251 = smul.addr %s250, 32
      %s252 = smul.addr %s251, 4
      %s253 = scalar_lea.vmem %s0, %s252
      %p254 = scmp.lt.s32.totalorder %s18, 1
      %s255 = scalar_select %p254, %s18, 1
      %s256 = smul.addr %s255, 32
      %s257 = smul.addr %s256, 4
      %s258 = scalar_lea.vmem %s5, %s257
      %p259 = scmp.lt.s32.totalorder %s18, 1
      %s260 = scalar_select %p259, %s18, 1
      %s261 = smul.addr %s260, 2
      %s262 = scalar_lea.vmem %s6, %s261
      %v264 = vld [vmem:[%s1] sm:$0x1]
      %v265 = vmul.f32 %v264, 0.001953125
      %v266 = vld [vmem:[%s1 + $0x1] sm:$0x1]
      %v267 = vmul.f32 %v266, 0.001953125
      %v268 = vmul.f32 %v265, %v265
      %v269 = vsub.f32 %v267, %v268
      %v270 = vmax.f32 %v269, 0.0
      %v271 = vadd.f32 %v270, 1e-05
      %v272 = vrsqrt.pop %v271
      %v273 = vld [vmem:[%s2] sm:$0x1]
      %v274 = vmul.f32 %v272, %v273
      %v275 = vld [vmem:[%s3] sm:$0x1]
      %v276 = vld [vmem:[%s253] sm:$0xf]
      %v277 = vld [vmem:[%s253 + $0x4] sm:$0xf]
      %v278 = vld [vmem:[%s253 + $0x8] sm:$0xf]
      %v279 = vld [vmem:[%s253 + $0xc] sm:$0xf]
      %v280 = vld [vmem:[%s253 + $0x10] sm:$0xf]
      %v281 = vld [vmem:[%s253 + $0x14] sm:$0xf]
      %v282 = vld [vmem:[%s253 + $0x18] sm:$0xf]
      %v283 = vld [vmem:[%s253 + $0x1c] sm:$0xf]
      %v284 = vld [vmem:[%s253 + $0x20] sm:$0xf]
      %v285 = vld [vmem:[%s253 + $0x24] sm:$0xf]
      %v286 = vld [vmem:[%s253 + $0x28] sm:$0xf]
      %v287 = vld [vmem:[%s253 + $0x2c] sm:$0xf]
      %v288 = vld [vmem:[%s253 + $0x30] sm:$0xf]
      %v289 = vld [vmem:[%s253 + $0x34] sm:$0xf]
      %v290 = vld [vmem:[%s253 + $0x38] sm:$0xf]
      %v291 = vld [vmem:[%s253 + $0x3c] sm:$0xf]
      %v292 = vld [vmem:[%s253 + $0x40] sm:$0xf]
      %v293 = vld [vmem:[%s253 + $0x44] sm:$0xf]
      %v294 = vld [vmem:[%s253 + $0x48] sm:$0xf]
      %v295 = vld [vmem:[%s253 + $0x4c] sm:$0xf]
      %v296 = vld [vmem:[%s253 + $0x50] sm:$0xf]
      %v297 = vld [vmem:[%s253 + $0x54] sm:$0xf]
      %v298 = vld [vmem:[%s253 + $0x58] sm:$0xf]
      %v299 = vld [vmem:[%s253 + $0x5c] sm:$0xf]
      %v300 = vld [vmem:[%s253 + $0x60] sm:$0xf]
      %v301 = vld [vmem:[%s253 + $0x64] sm:$0xf]
      %v302 = vld [vmem:[%s253 + $0x68] sm:$0xf]
      %v303 = vld [vmem:[%s253 + $0x6c] sm:$0xf]
      %v304 = vld [vmem:[%s253 + $0x70] sm:$0xf]
      %v305 = vld [vmem:[%s253 + $0x74] sm:$0xf]
      %v306 = vld [vmem:[%s253 + $0x78] sm:$0xf]
      %v307 = vld [vmem:[%s253 + $0x7c] sm:$0xf]
      %v308 = vunpack.c.l.bf16 %v276
      %v309 = vunpack.c.l.bf16 %v277
      %v310 = vunpack.c.l.bf16 %v278
      %v311 = vunpack.c.l.bf16 %v279
      %v312 = vunpack.c.l.bf16 %v280
      %v313 = vunpack.c.l.bf16 %v281
      %v314 = vunpack.c.l.bf16 %v282
      %v315 = vunpack.c.l.bf16 %v283
      %v316 = vunpack.c.l.bf16 %v284
      %v317 = vunpack.c.l.bf16 %v285
      %v318 = vunpack.c.l.bf16 %v286
      %v319 = vunpack.c.l.bf16 %v287
      %v320 = vunpack.c.l.bf16 %v288
      %v321 = vunpack.c.l.bf16 %v289
      %v322 = vunpack.c.l.bf16 %v290
      %v323 = vunpack.c.l.bf16 %v291
      %v324 = vunpack.c.l.bf16 %v292
      %v325 = vunpack.c.l.bf16 %v293
      %v326 = vunpack.c.l.bf16 %v294
      %v327 = vunpack.c.l.bf16 %v295
      %v328 = vunpack.c.l.bf16 %v296
      %v329 = vunpack.c.l.bf16 %v297
      %v330 = vunpack.c.l.bf16 %v298
      %v331 = vunpack.c.l.bf16 %v299
      %v332 = vunpack.c.l.bf16 %v300
      %v333 = vunpack.c.l.bf16 %v301
      %v334 = vunpack.c.l.bf16 %v302
      %v335 = vunpack.c.l.bf16 %v303
      %v336 = vunpack.c.l.bf16 %v304
      %v337 = vunpack.c.l.bf16 %v305
      %v338 = vunpack.c.l.bf16 %v306
      %v339 = vunpack.c.l.bf16 %v307
      %v340 = vlaneseq
      %v341 = vshrl.u32 %v340, 7
      %v342 = vsub.s32 0, %v341
      %v343 = vrot.slane %v265, %v342
      %v344 = vsub.f32 %v308, %v343
      %v345 = vsub.f32 %v309, %v343
      %v346 = vsub.f32 %v310, %v343
      %v347 = vsub.f32 %v311, %v343
      %v348 = vsub.f32 %v312, %v343
      %v349 = vsub.f32 %v313, %v343
      %v350 = vsub.f32 %v314, %v343
      %v351 = vsub.f32 %v315, %v343
      %v352 = vsub.f32 %v316, %v343
      %v353 = vsub.f32 %v317, %v343
      %v354 = vsub.f32 %v318, %v343
      %v355 = vsub.f32 %v319, %v343
      %v356 = vsub.f32 %v320, %v343
      %v357 = vsub.f32 %v321, %v343
      %v358 = vsub.f32 %v322, %v343
      %v359 = vsub.f32 %v323, %v343
      %v360 = vsub.f32 %v324, %v343
      %v361 = vsub.f32 %v325, %v343
      %v362 = vsub.f32 %v326, %v343
      %v363 = vsub.f32 %v327, %v343
      %v364 = vsub.f32 %v328, %v343
      %v365 = vsub.f32 %v329, %v343
      %v366 = vsub.f32 %v330, %v343
      %v367 = vsub.f32 %v331, %v343
      %v368 = vsub.f32 %v332, %v343
      %v369 = vsub.f32 %v333, %v343
      %v370 = vsub.f32 %v334, %v343
      %v371 = vsub.f32 %v335, %v343
      %v372 = vsub.f32 %v336, %v343
      %v373 = vsub.f32 %v337, %v343
      %v374 = vsub.f32 %v338, %v343
      %v375 = vsub.f32 %v339, %v343
      %v376 = vlaneseq
      %v377 = vshrl.u32 %v376, 7
      %v378 = vsub.s32 0, %v377
      %v379 = vrot.slane %v274, %v378
      %v380 = vmul.f32 %v344, %v379
      %v381 = vmul.f32 %v345, %v379
      %v382 = vmul.f32 %v346, %v379
      %v383 = vmul.f32 %v347, %v379
      %v384 = vmul.f32 %v348, %v379
      %v385 = vmul.f32 %v349, %v379
      %v386 = vmul.f32 %v350, %v379
      %v387 = vmul.f32 %v351, %v379
      %v388 = vmul.f32 %v352, %v379
      %v389 = vmul.f32 %v353, %v379
      %v390 = vmul.f32 %v354, %v379
      %v391 = vmul.f32 %v355, %v379
      %v392 = vmul.f32 %v356, %v379
      %v393 = vmul.f32 %v357, %v379
      %v394 = vmul.f32 %v358, %v379
      %v395 = vmul.f32 %v359, %v379
      %v396 = vmul.f32 %v360, %v379
      %v397 = vmul.f32 %v361, %v379
      %v398 = vmul.f32 %v362, %v379
      %v399 = vmul.f32 %v363, %v379
      %v400 = vmul.f32 %v364, %v379
      %v401 = vmul.f32 %v365, %v379
      %v402 = vmul.f32 %v366, %v379
      %v403 = vmul.f32 %v367, %v379
      %v404 = vmul.f32 %v368, %v379
      %v405 = vmul.f32 %v369, %v379
      %v406 = vmul.f32 %v370, %v379
      %v407 = vmul.f32 %v371, %v379
      %v408 = vmul.f32 %v372, %v379
      %v409 = vmul.f32 %v373, %v379
      %v410 = vmul.f32 %v374, %v379
      %v411 = vmul.f32 %v375, %v379
      %v413 = vlaneseq
      %v414 = vshrl.u32 %v413, 7
      %v415 = vsub.s32 0, %v414
      %v416 = vrot.slane %v275, %v415
      %v418 = vadd.f32 %v380, %v416
      %v419 = vadd.f32 %v381, %v416
      %v420 = vadd.f32 %v382, %v416
      %v421 = vadd.f32 %v383, %v416
      %v422 = vadd.f32 %v384, %v416
      %v423 = vadd.f32 %v385, %v416
      %v424 = vadd.f32 %v386, %v416
      %v425 = vadd.f32 %v387, %v416
      %v426 = vadd.f32 %v388, %v416
      %v427 = vadd.f32 %v389, %v416
      %v428 = vadd.f32 %v390, %v416
      %v429 = vadd.f32 %v391, %v416
      %v430 = vadd.f32 %v392, %v416
      %v431 = vadd.f32 %v393, %v416
      %v432 = vadd.f32 %v394, %v416
      %v433 = vadd.f32 %v395, %v416
      %v434 = vadd.f32 %v396, %v416
      %v435 = vadd.f32 %v397, %v416
      %v436 = vadd.f32 %v398, %v416
      %v437 = vadd.f32 %v399, %v416
      %v438 = vadd.f32 %v400, %v416
      %v439 = vadd.f32 %v401, %v416
      %v440 = vadd.f32 %v402, %v416
      %v441 = vadd.f32 %v403, %v416
      %v442 = vadd.f32 %v404, %v416
      %v443 = vadd.f32 %v405, %v416
      %v444 = vadd.f32 %v406, %v416
      %v445 = vadd.f32 %v407, %v416
      %v446 = vadd.f32 %v408, %v416
      %v447 = vadd.f32 %v409, %v416
      %v448 = vadd.f32 %v410, %v416
      %v449 = vadd.f32 %v411, %v416
      %v450 = vmax.f32 %v418, 0.0
      %v451 = vmax.f32 %v419, 0.0
      %v452 = vmax.f32 %v420, 0.0
      %v453 = vmax.f32 %v421, 0.0
      %v454 = vmax.f32 %v422, 0.0
      %v455 = vmax.f32 %v423, 0.0
      %v456 = vmax.f32 %v424, 0.0
      %v457 = vmax.f32 %v425, 0.0
      %v458 = vmax.f32 %v426, 0.0
      %v459 = vmax.f32 %v427, 0.0
      %v460 = vmax.f32 %v428, 0.0
      %v461 = vmax.f32 %v429, 0.0
      %v462 = vmax.f32 %v430, 0.0
      %v463 = vmax.f32 %v431, 0.0
      %v464 = vmax.f32 %v432, 0.0
      %v465 = vmax.f32 %v433, 0.0
      %v466 = vmax.f32 %v434, 0.0
      %v467 = vmax.f32 %v435, 0.0
      %v468 = vmax.f32 %v436, 0.0
      %v469 = vmax.f32 %v437, 0.0
      %v470 = vmax.f32 %v438, 0.0
      %v471 = vmax.f32 %v439, 0.0
      %v472 = vmax.f32 %v440, 0.0
      %v473 = vmax.f32 %v441, 0.0
      %v474 = vmax.f32 %v442, 0.0
      %v475 = vmax.f32 %v443, 0.0
      %v476 = vmax.f32 %v444, 0.0
      %v477 = vmax.f32 %v445, 0.0
      %v478 = vmax.f32 %v446, 0.0
      %v479 = vmax.f32 %v447, 0.0
      %v480 = vmax.f32 %v448, 0.0
      %v481 = vmax.f32 %v449, 0.0
      %v482 = vpack.c.bf16 %v451, %v450
      %v483 = vpack.c.bf16 %v453, %v452
      %v484 = vpack.c.bf16 %v455, %v454
      %v485 = vpack.c.bf16 %v457, %v456
      %v486 = vpack.c.bf16 %v459, %v458
      %v487 = vpack.c.bf16 %v461, %v460
      %v488 = vpack.c.bf16 %v463, %v462
      %v489 = vpack.c.bf16 %v465, %v464
      %v490 = vpack.c.bf16 %v467, %v466
      %v491 = vpack.c.bf16 %v469, %v468
      %v492 = vpack.c.bf16 %v471, %v470
      %v493 = vpack.c.bf16 %v473, %v472
      %v494 = vpack.c.bf16 %v475, %v474
      %v495 = vpack.c.bf16 %v477, %v476
      %v496 = vpack.c.bf16 %v479, %v478
      %v497 = vpack.c.bf16 %v481, %v480
      %v498 = vld [vmem:[%s4] sm:$0xf]
      %v499 = vld [vmem:[%s4 + $0x4] sm:$0xf]
      %v500 = vld [vmem:[%s4 + $0x8] sm:$0xf]
      %v501 = vld [vmem:[%s4 + $0xc] sm:$0xf]
      %v502 = vld [vmem:[%s4 + $0x10] sm:$0xf]
      %v503 = vld [vmem:[%s4 + $0x14] sm:$0xf]
      %v504 = vld [vmem:[%s4 + $0x18] sm:$0xf]
      %v505 = vld [vmem:[%s4 + $0x1c] sm:$0xf]
      %v506 = vld [vmem:[%s4 + $0x20] sm:$0xf]
      %v507 = vld [vmem:[%s4 + $0x24] sm:$0xf]
      %v508 = vld [vmem:[%s4 + $0x28] sm:$0xf]
      %v509 = vld [vmem:[%s4 + $0x2c] sm:$0xf]
      %v510 = vld [vmem:[%s4 + $0x30] sm:$0xf]
      %v511 = vld [vmem:[%s4 + $0x34] sm:$0xf]
      %v512 = vld [vmem:[%s4 + $0x38] sm:$0xf]
      %v513 = vld [vmem:[%s4 + $0x3c] sm:$0xf]
      %v530 = vunpack.c.l.b16 %v498
      %v531 = vunpack.c.l.b16 %v499
      %v532 = vunpack.c.l.b16 %v500
      %v533 = vunpack.c.l.b16 %v501
      %v534 = vunpack.c.l.b16 %v502
      %v535 = vunpack.c.l.b16 %v503
      %v536 = vunpack.c.l.b16 %v504
      %v537 = vunpack.c.l.b16 %v505
      %v538 = vunpack.c.l.b16 %v506
      %v539 = vunpack.c.l.b16 %v507
      %v540 = vunpack.c.l.b16 %v508
      %v541 = vunpack.c.l.b16 %v509
      %v542 = vunpack.c.l.b16 %v510
      %v543 = vunpack.c.l.b16 %v511
      %v544 = vunpack.c.l.b16 %v512
      %v545 = vunpack.c.l.b16 %v513
      %v546 = vpack.c.b16 %v531, %v530
      %v547 = vpack.c.b16 %v533, %v532
      %v548 = vpack.c.b16 %v535, %v534
      %v549 = vpack.c.b16 %v537, %v536
      %v550 = vpack.c.b16 %v539, %v538
      %v551 = vpack.c.b16 %v541, %v540
      %v552 = vpack.c.b16 %v543, %v542
      %v553 = vpack.c.b16 %v545, %v544
      %562 = vmatprep.subr.bf16.mxu0 0
      %563 = vmatpush1.bf16.msra.mxu0 %v553
      %564 = vmatprep.subr.bf16.mxu0 0
      %565 = vmatpush1.bf16.msra.mxu0 %v552
      %566 = vmatprep.subr.bf16.mxu0 0
      %567 = vmatpush1.bf16.msra.mxu0 %v551
      %568 = vmatprep.subr.bf16.mxu0 0
      %569 = vmatpush1.bf16.msra.mxu0 %v550
      %570 = vmatprep.subr.bf16.mxu0 0
      %571 = vmatpush1.bf16.msra.mxu0 %v549
      %572 = vmatprep.subr.bf16.mxu0 0
      %573 = vmatpush1.bf16.msra.mxu0 %v548
      %574 = vmatprep.subr.bf16.mxu0 0
      %575 = vmatpush1.bf16.msra.mxu0 %v547
      %576 = vmatprep.subr.bf16.mxu0 0
      %577 = vmatpush1.bf16.msra.mxu0 %v546
      %578 = vmatprep.subr.bf16.mxu0 0
      %579 = vmatpush2.bf16.msra.mxu0 0
      %580 = vmatprep.subr.bf16.mxu0 0
      %581 = vmatpush2.bf16.msra.mxu0 0
      %582 = vmatprep.subr.bf16.mxu0 0
      %583 = vmatpush2.bf16.msra.mxu0 0
      %584 = vmatprep.subr.bf16.mxu0 0
      %585 = vmatpush2.bf16.msra.mxu0 0
      %586 = vmatprep.subr.bf16.mxu0 0
      %587 = vmatpush2.bf16.msra.mxu0 0
      %588 = vmatprep.subr.bf16.mxu0 0
      %589 = vmatpush2.bf16.msra.mxu0 0
      %590 = vmatprep.subr.bf16.mxu0 0
      %591 = vmatpush2.bf16.msra.mxu0 0
      %592 = vmatprep.subr.bf16.mxu0 0
      %593 = vmatpush2.bf16.msra.mxu0 0
      %594 = vmatprep.mubr.bf16.mxu0 0
      %595 = vmatmul.mubr.bf16.gmra.mxu0 %v482
      %v596 = vpop.f32.mrf.mxu0
      %v597 = vadd.f32 0.0, %v596
      %v598 = vpop.f32.mrf.mxu0
      %v599 = vpop.f32.mrf.mxu0
      %v600 = vadd.f32 0.0, %v599
      %v601 = vpop.f32.mrf.mxu0
      %602 = vmatprep.mubr.bf16.mxu0 0
      %603 = vmatmul.mubr.bf16.gmra.mxu0 %v483
      %v604 = vpop.f32.mrf.mxu0
      %v605 = vadd.f32 0.0, %v604
      %v606 = vpop.f32.mrf.mxu0
      %v607 = vpop.f32.mrf.mxu0
      %v608 = vadd.f32 0.0, %v607
      %v609 = vpop.f32.mrf.mxu0
      %610 = vmatprep.mubr.bf16.mxu0 0
      %611 = vmatmul.mubr.bf16.gmra.mxu0 %v484
      %v612 = vpop.f32.mrf.mxu0
      %v613 = vadd.f32 0.0, %v612
      %v614 = vpop.f32.mrf.mxu0
      %v615 = vpop.f32.mrf.mxu0
      %v616 = vadd.f32 0.0, %v615
      %v617 = vpop.f32.mrf.mxu0
      %618 = vmatprep.mubr.bf16.mxu0 0
      %619 = vmatmul.mubr.bf16.gmra.mxu0 %v485
      %v620 = vpop.f32.mrf.mxu0
      %v621 = vadd.f32 0.0, %v620
      %v622 = vpop.f32.mrf.mxu0
      %v623 = vpop.f32.mrf.mxu0
      %v624 = vadd.f32 0.0, %v623
      %v625 = vpop.f32.mrf.mxu0
      %626 = vmatprep.mubr.bf16.mxu0 0
      %627 = vmatmul.mubr.bf16.gmra.mxu0 %v486
      %v628 = vpop.f32.mrf.mxu0
      %v629 = vadd.f32 0.0, %v628
      %v630 = vpop.f32.mrf.mxu0
      %v631 = vpop.f32.mrf.mxu0
      %v632 = vadd.f32 0.0, %v631
      %v633 = vpop.f32.mrf.mxu0
      %634 = vmatprep.mubr.bf16.mxu0 0
      %635 = vmatmul.mubr.bf16.gmra.mxu0 %v487
      %v636 = vpop.f32.mrf.mxu0
      %v637 = vadd.f32 0.0, %v636
      %v638 = vpop.f32.mrf.mxu0
      %v639 = vpop.f32.mrf.mxu0
      %v640 = vadd.f32 0.0, %v639
      %v641 = vpop.f32.mrf.mxu0
      %642 = vmatprep.mubr.bf16.mxu0 0
      %643 = vmatmul.mubr.bf16.gmra.mxu0 %v488
      %v644 = vpop.f32.mrf.mxu0
      %v645 = vadd.f32 0.0, %v644
      %v646 = vpop.f32.mrf.mxu0
      %v647 = vpop.f32.mrf.mxu0
      %v648 = vadd.f32 0.0, %v647
      %v649 = vpop.f32.mrf.mxu0
      %650 = vmatprep.mubr.bf16.mxu0 0
      %651 = vmatmul.mubr.bf16.gmra.mxu0 %v489
      %v652 = vpop.f32.mrf.mxu0
      %v653 = vadd.f32 0.0, %v652
      %v654 = vpop.f32.mrf.mxu0
      %v655 = vpop.f32.mrf.mxu0
      %v656 = vadd.f32 0.0, %v655
      %v657 = vpop.f32.mrf.mxu0
      %658 = vmatprep.mubr.bf16.mxu0 0
      %659 = vmatmul.mubr.bf16.gmra.mxu0 %v490
      %v660 = vpop.f32.mrf.mxu0
      %v661 = vadd.f32 0.0, %v660
      %v662 = vpop.f32.mrf.mxu0
      %v663 = vpop.f32.mrf.mxu0
      %v664 = vadd.f32 0.0, %v663
      %v665 = vpop.f32.mrf.mxu0
      %666 = vmatprep.mubr.bf16.mxu0 0
      %667 = vmatmul.mubr.bf16.gmra.mxu0 %v491
      %v668 = vpop.f32.mrf.mxu0
      %v669 = vadd.f32 0.0, %v668
      %v670 = vpop.f32.mrf.mxu0
      %v671 = vpop.f32.mrf.mxu0
      %v672 = vadd.f32 0.0, %v671
      %v673 = vpop.f32.mrf.mxu0
      %674 = vmatprep.mubr.bf16.mxu0 0
      %675 = vmatmul.mubr.bf16.gmra.mxu0 %v492
      %v676 = vpop.f32.mrf.mxu0
      %v677 = vadd.f32 0.0, %v676
      %v678 = vpop.f32.mrf.mxu0
      %v679 = vpop.f32.mrf.mxu0
      %v680 = vadd.f32 0.0, %v679
      %v681 = vpop.f32.mrf.mxu0
      %682 = vmatprep.mubr.bf16.mxu0 0
      %683 = vmatmul.mubr.bf16.gmra.mxu0 %v493
      %v684 = vpop.f32.mrf.mxu0
      %v685 = vadd.f32 0.0, %v684
      %v686 = vpop.f32.mrf.mxu0
      %v687 = vpop.f32.mrf.mxu0
      %v688 = vadd.f32 0.0, %v687
      %v689 = vpop.f32.mrf.mxu0
      %690 = vmatprep.mubr.bf16.mxu0 0
      %691 = vmatmul.mubr.bf16.gmra.mxu0 %v494
      %v692 = vpop.f32.mrf.mxu0
      %v693 = vadd.f32 0.0, %v692
      %v694 = vpop.f32.mrf.mxu0
      %v695 = vpop.f32.mrf.mxu0
      %v696 = vadd.f32 0.0, %v695
      %v697 = vpop.f32.mrf.mxu0
      %698 = vmatprep.mubr.bf16.mxu0 0
      %699 = vmatmul.mubr.bf16.gmra.mxu0 %v495
      %v700 = vpop.f32.mrf.mxu0
      %v701 = vadd.f32 0.0, %v700
      %v702 = vpop.f32.mrf.mxu0
      %v703 = vpop.f32.mrf.mxu0
      %v704 = vadd.f32 0.0, %v703
      %v705 = vpop.f32.mrf.mxu0
      %706 = vmatprep.mubr.bf16.mxu0 0
      %707 = vmatmul.mubr.bf16.gmra.mxu0 %v496
      %v708 = vpop.f32.mrf.mxu0
      %v709 = vadd.f32 0.0, %v708
      %v710 = vpop.f32.mrf.mxu0
      %v711 = vpop.f32.mrf.mxu0
      %v712 = vadd.f32 0.0, %v711
      %v713 = vpop.f32.mrf.mxu0
      %714 = vmatprep.mubr.bf16.mxu0 0
      %715 = vmatmul.mubr.bf16.gmra.mxu0 %v497
      %v716 = vpop.f32.mrf.mxu0
      %v717 = vadd.f32 0.0, %v716
      %v718 = vpop.f32.mrf.mxu0
      %v719 = vpop.f32.mrf.mxu0
      %v720 = vadd.f32 0.0, %v719
      %v721 = vpop.f32.mrf.mxu0
      %722 = vdwg.mxu0
      %v723 = vpack.c.bf16 %v600, %v597
      %v724 = vpack.c.bf16 %v608, %v605
      %v725 = vpack.c.bf16 %v616, %v613
      %v726 = vpack.c.bf16 %v624, %v621
      %v727 = vpack.c.bf16 %v632, %v629
      %v728 = vpack.c.bf16 %v640, %v637
      %v729 = vpack.c.bf16 %v648, %v645
      %v730 = vpack.c.bf16 %v656, %v653
      %v731 = vpack.c.bf16 %v664, %v661
      %v732 = vpack.c.bf16 %v672, %v669
      %v733 = vpack.c.bf16 %v680, %v677
      %v734 = vpack.c.bf16 %v688, %v685
      %v735 = vpack.c.bf16 %v696, %v693
      %v736 = vpack.c.bf16 %v704, %v701
      %v737 = vpack.c.bf16 %v712, %v709
      %v738 = vpack.c.bf16 %v720, %v717
      %v755 = vunpack.c.l.b16 %v723
      %v756 = vunpack.c.h.b16 %v723
      %v757 = vunpack.c.l.b16 %v724
      %v758 = vunpack.c.h.b16 %v724
      %v759 = vunpack.c.l.b16 %v725
      %v760 = vunpack.c.h.b16 %v725
      %v761 = vunpack.c.l.b16 %v726
      %v762 = vunpack.c.h.b16 %v726
      %v763 = vunpack.c.l.b16 %v727
      %v764 = vunpack.c.h.b16 %v727
      %v765 = vunpack.c.l.b16 %v728
      %v766 = vunpack.c.h.b16 %v728
      %v767 = vunpack.c.l.b16 %v729
      %v768 = vunpack.c.h.b16 %v729
      %v769 = vunpack.c.l.b16 %v730
      %v770 = vunpack.c.h.b16 %v730
      %v771 = vunpack.c.l.b16 %v731
      %v772 = vunpack.c.h.b16 %v731
      %v773 = vunpack.c.l.b16 %v732
      %v774 = vunpack.c.h.b16 %v732
      %v775 = vunpack.c.l.b16 %v733
      %v776 = vunpack.c.h.b16 %v733
      %v777 = vunpack.c.l.b16 %v734
      %v778 = vunpack.c.h.b16 %v734
      %v779 = vunpack.c.l.b16 %v735
      %v780 = vunpack.c.h.b16 %v735
      %v781 = vunpack.c.l.b16 %v736
      %v782 = vunpack.c.h.b16 %v736
      %v783 = vunpack.c.l.b16 %v737
      %v784 = vunpack.c.h.b16 %v737
      %v785 = vunpack.c.l.b16 %v738
      %v786 = vunpack.c.h.b16 %v738
      %v787 = vpack.c.b16 %v755, %v755
      %v788 = vpack.c.b16 %v756, %v756
      %v789 = vpack.c.b16 %v757, %v757
      %v790 = vpack.c.b16 %v758, %v758
      %v791 = vpack.c.b16 %v759, %v759
      %v792 = vpack.c.b16 %v760, %v760
      %v793 = vpack.c.b16 %v761, %v761
      %v794 = vpack.c.b16 %v762, %v762
      %v795 = vpack.c.b16 %v763, %v763
      %v796 = vpack.c.b16 %v764, %v764
      %v797 = vpack.c.b16 %v765, %v765
      %v798 = vpack.c.b16 %v766, %v766
      %v799 = vpack.c.b16 %v767, %v767
      %v800 = vpack.c.b16 %v768, %v768
      %v801 = vpack.c.b16 %v769, %v769
      %v802 = vpack.c.b16 %v770, %v770
      %v803 = vpack.c.b16 %v771, %v771
      %v804 = vpack.c.b16 %v772, %v772
      %v805 = vpack.c.b16 %v773, %v773
      %v806 = vpack.c.b16 %v774, %v774
      %v807 = vpack.c.b16 %v775, %v775
      %v808 = vpack.c.b16 %v776, %v776
      %v809 = vpack.c.b16 %v777, %v777
      %v810 = vpack.c.b16 %v778, %v778
      %v811 = vpack.c.b16 %v779, %v779
      %v812 = vpack.c.b16 %v780, %v780
      %v813 = vpack.c.b16 %v781, %v781
      %v814 = vpack.c.b16 %v782, %v782
      %v815 = vpack.c.b16 %v783, %v783
      %v816 = vpack.c.b16 %v784, %v784
      %v817 = vpack.c.b16 %v785, %v785
      %v818 = vpack.c.b16 %v786, %v786
      %851 = vst [vmem:[%s258] sm:$0xf] %v787
      %852 = vst [vmem:[%s258 + $0x4] sm:$0xf] %v788
      %853 = vst [vmem:[%s258 + $0x8] sm:$0xf] %v789
      %854 = vst [vmem:[%s258 + $0xc] sm:$0xf] %v790
      %855 = vst [vmem:[%s258 + $0x10] sm:$0xf] %v791
      %856 = vst [vmem:[%s258 + $0x14] sm:$0xf] %v792
      %857 = vst [vmem:[%s258 + $0x18] sm:$0xf] %v793
      %858 = vst [vmem:[%s258 + $0x1c] sm:$0xf] %v794
      %859 = vst [vmem:[%s258 + $0x20] sm:$0xf] %v795
      %860 = vst [vmem:[%s258 + $0x24] sm:$0xf] %v796
      %861 = vst [vmem:[%s258 + $0x28] sm:$0xf] %v797
      %862 = vst [vmem:[%s258 + $0x2c] sm:$0xf] %v798
      %863 = vst [vmem:[%s258 + $0x30] sm:$0xf] %v799
      %864 = vst [vmem:[%s258 + $0x34] sm:$0xf] %v800
      %865 = vst [vmem:[%s258 + $0x38] sm:$0xf] %v801
      %866 = vst [vmem:[%s258 + $0x3c] sm:$0xf] %v802
      %867 = vst [vmem:[%s258 + $0x40] sm:$0xf] %v803
      %868 = vst [vmem:[%s258 + $0x44] sm:$0xf] %v804
      %869 = vst [vmem:[%s258 + $0x48] sm:$0xf] %v805
      %870 = vst [vmem:[%s258 + $0x4c] sm:$0xf] %v806
      %871 = vst [vmem:[%s258 + $0x50] sm:$0xf] %v807
      %872 = vst [vmem:[%s258 + $0x54] sm:$0xf] %v808
      %873 = vst [vmem:[%s258 + $0x58] sm:$0xf] %v809
      %874 = vst [vmem:[%s258 + $0x5c] sm:$0xf] %v810
      %875 = vst [vmem:[%s258 + $0x60] sm:$0xf] %v811
      %876 = vst [vmem:[%s258 + $0x64] sm:$0xf] %v812
      %877 = vst [vmem:[%s258 + $0x68] sm:$0xf] %v813
      %878 = vst [vmem:[%s258 + $0x6c] sm:$0xf] %v814
      %879 = vst [vmem:[%s258 + $0x70] sm:$0xf] %v815
      %880 = vst [vmem:[%s258 + $0x74] sm:$0xf] %v816
      %881 = vst [vmem:[%s258 + $0x78] sm:$0xf] %v817
      %882 = vst [vmem:[%s258 + $0x7c] sm:$0xf] %v818
      %v883 = vadd.f32 %v597, %v600
      %v884 = vadd.f32 %v883, %v605
      %v885 = vadd.f32 %v884, %v608
      %v886 = vadd.f32 %v885, %v613
      %v887 = vadd.f32 %v886, %v616
      %v888 = vadd.f32 %v887, %v621
      %v889 = vadd.f32 %v888, %v624
      %v890 = vadd.f32 %v889, %v629
      %v891 = vadd.f32 %v890, %v632
      %v892 = vadd.f32 %v891, %v637
      %v893 = vadd.f32 %v892, %v640
      %v894 = vadd.f32 %v893, %v645
      %v895 = vadd.f32 %v894, %v648
      %v896 = vadd.f32 %v895, %v653
      %v897 = vadd.f32 %v896, %v656
      %v898 = vadd.f32 %v897, %v661
      %v899 = vadd.f32 %v898, %v664
      %v900 = vadd.f32 %v899, %v669
      %v901 = vadd.f32 %v900, %v672
      %v902 = vadd.f32 %v901, %v677
      %v903 = vadd.f32 %v902, %v680
      %v904 = vadd.f32 %v903, %v685
      %v905 = vadd.f32 %v904, %v688
      %v906 = vadd.f32 %v905, %v693
      %v907 = vadd.f32 %v906, %v696
      %v908 = vadd.f32 %v907, %v701
      %v909 = vadd.f32 %v908, %v704
      %v910 = vadd.f32 %v909, %v709
      %v911 = vadd.f32 %v910, %v712
      %v912 = vadd.f32 %v911, %v717
      %v913 = vadd.f32 %v912, %v720
      %v914 = vrot.slane %v913, 4
      %v915 = vadd.f32 %v913, %v914
      %v916 = vrot.slane %v915, 2
      %v917 = vadd.f32 %v915, %v916
      %v918 = vrot.slane %v917, 1
      %v919 = vadd.f32 %v917, %v918
      %v920 = vmul.f32 %v597, %v597
      %v921 = vmul.f32 %v600, %v600
      %v922 = vmul.f32 %v605, %v605
      %v923 = vmul.f32 %v608, %v608
      %v924 = vmul.f32 %v613, %v613
      %v925 = vmul.f32 %v616, %v616
      %v926 = vmul.f32 %v621, %v621
      %v927 = vmul.f32 %v624, %v624
      %v928 = vmul.f32 %v629, %v629
      %v929 = vmul.f32 %v632, %v632
      %v930 = vmul.f32 %v637, %v637
      %v931 = vmul.f32 %v640, %v640
      %v932 = vmul.f32 %v645, %v645
      %v933 = vmul.f32 %v648, %v648
      %v934 = vmul.f32 %v653, %v653
      %v935 = vmul.f32 %v656, %v656
      %v936 = vmul.f32 %v661, %v661
      %v937 = vmul.f32 %v664, %v664
      %v938 = vmul.f32 %v669, %v669
      %v939 = vmul.f32 %v672, %v672
      %v940 = vmul.f32 %v677, %v677
      %v941 = vmul.f32 %v680, %v680
      %v942 = vmul.f32 %v685, %v685
      %v943 = vmul.f32 %v688, %v688
      %v944 = vmul.f32 %v693, %v693
      %v945 = vmul.f32 %v696, %v696
      %v946 = vmul.f32 %v701, %v701
      %v947 = vmul.f32 %v704, %v704
      %v948 = vmul.f32 %v709, %v709
      %v949 = vmul.f32 %v712, %v712
      %v950 = vmul.f32 %v717, %v717
      %v951 = vmul.f32 %v720, %v720
      %v952 = vadd.f32 %v920, %v921
      %v953 = vadd.f32 %v952, %v922
      %v954 = vadd.f32 %v953, %v923
      %v955 = vadd.f32 %v954, %v924
      %v956 = vadd.f32 %v955, %v925
      %v957 = vadd.f32 %v956, %v926
      %v958 = vadd.f32 %v957, %v927
      %v959 = vadd.f32 %v958, %v928
      %v960 = vadd.f32 %v959, %v929
      %v961 = vadd.f32 %v960, %v930
      %v962 = vadd.f32 %v961, %v931
      %v963 = vadd.f32 %v962, %v932
      %v964 = vadd.f32 %v963, %v933
      %v965 = vadd.f32 %v964, %v934
      %v966 = vadd.f32 %v965, %v935
      %v967 = vadd.f32 %v966, %v936
      %v968 = vadd.f32 %v967, %v937
      %v969 = vadd.f32 %v968, %v938
      %v970 = vadd.f32 %v969, %v939
      %v971 = vadd.f32 %v970, %v940
      %v972 = vadd.f32 %v971, %v941
      %v973 = vadd.f32 %v972, %v942
      %v974 = vadd.f32 %v973, %v943
      %v975 = vadd.f32 %v974, %v944
      %v976 = vadd.f32 %v975, %v945
      %v977 = vadd.f32 %v976, %v946
      %v978 = vadd.f32 %v977, %v947
      %v979 = vadd.f32 %v978, %v948
      %v980 = vadd.f32 %v979, %v949
      %v981 = vadd.f32 %v980, %v950
      %v982 = vadd.f32 %v981, %v951
      %v983 = vrot.slane %v982, 4
      %v984 = vadd.f32 %v982, %v983
      %v985 = vrot.slane %v984, 2
      %v986 = vadd.f32 %v984, %v985
      %v987 = vrot.slane %v986, 1
      %v988 = vadd.f32 %v986, %v987
      %vm989 = vcmask 1040384
      %v990 = vsel %vm989, %v919, %v988
      %991 = vst [vmem:[%s262] sm:$0x3] %v990
      %p992 = scmp.lt.s32.totalorder %s18, 1
      %s993 = scalar_select %p992, %s18, 1
      %s994 = smul.addr %s993, 32
      %s995 = smul.addr %s994, 4
      %s996 = scalar_lea.vmem %s5, %s995
      %p997 = scmp.lt.s32.totalorder %s18, 1
      %s998 = scalar_select %p997, %s18, 1
      %s999 = smul.addr %s998, 2
      %s1000 = scalar_lea.vmem %s6, %s999
      // Predicated region
      $region41: #{bottleneck_forward.6} parent=39 // pred_check
        %p1001 = pneg %p146
      $region42: #{bottleneck_forward.6} parent=39 // pred_check_branch
        %1003 = sbr.rel (%p1001) target = $region44
      $region43: #{bottleneck_forward.6} parent=39 // pred_region
        _
      $region44: #{bottleneck_forward.6} parent=39 // pred_fallthru
        _
      // Predicated region
      $region45: #{bottleneck_forward.6} parent=39 // pred_check
        %p1004 = pneg %p172
      $region46: #{bottleneck_forward.6} parent=39 // pred_check_branch
        %1006 = sbr.rel (%p1004) target = $region48
      $region47: #{bottleneck_forward.6} parent=39 // pred_region
        _
      $region48: #{bottleneck_forward.6} parent=39 // pred_fallthru
        _
    $region40: #{bottleneck_forward.6} parent=5 // pred_fallthru
      _
    %p1007 = scmp.le.s32.totalorder 2, %s13
    // Predicated region
    $region49: #{bottleneck_forward.6} parent=5 // pred_check
      %p1008 = pneg %p1007
    $region50: #{bottleneck_forward.6} parent=5 // pred_check_branch
      %1010 = sbr.rel (%p1008) target = $region52
    $region51: #{bottleneck_forward.6} parent=5 // pred_region
      %s1011 = ssub.s32 %s13, 2
      // Predicated region
      $region53: #{bottleneck_forward.6} parent=51 // pred_check
        %p1012 = pneg %p152
      $region54: #{bottleneck_forward.6} parent=51 // pred_check_branch
        %1014 = sbr.rel (%p1012) target = $region56
      $region55: #{bottleneck_forward.6} parent=51 // pred_region
        %p1015 = scmp.lt.s32.totalorder %s19, 1
        %s1016 = scalar_select %p1015, %s19, 1
        %s1017 = smul.addr %s1016, 32
        %s1018 = smul.addr %s1017, 4
        %s1019 = scalar_lea.vmem %s5, %s1018
      $region56: #{bottleneck_forward.6} parent=51 // pred_fallthru
        _
      // Predicated region
      $region57: #{bottleneck_forward.6} parent=51 // pred_check
        %p1020 = pneg %p178
      $region58: #{bottleneck_forward.6} parent=51 // pred_check_branch
        %1022 = sbr.rel (%p1020) target = $region60
      $region59: #{bottleneck_forward.6} parent=51 // pred_region
        %p1023 = scmp.lt.s32.totalorder %s19, 1
        %s1024 = scalar_select %p1023, %s19, 1
        %s1025 = smul.addr %s1024, 2
        %s1026 = scalar_lea.vmem %s6, %s1025
      $region60: #{bottleneck_forward.6} parent=51 // pred_fallthru
        _
    $region52: #{bottleneck_forward.6} parent=5 // pred_fallthru
      _
  $region6: #{bottleneck_forward.6} parent=0 // loop_footer
    %s17 = sadd.s32 1, %s13
  $region7: #{bottleneck_forward.6} parent=0 // loop_footer_branch
    %12 = sbr.rel target = $region3
  $region8: #{bottleneck_forward.6} parent=0 // loop_exit
    _

// kernel: bottleneck_forward.7
$region0: #{bottleneck_forward.7}
  #allocation0 [shape = 'u32[]', space=smem, size = 0x4, offset = 0x4, fixed_abs, tag = 'smem constant byte address 0x4 - core index']
  #allocation1 [shape = 'u32[144,128]{1,0:T(1,128)}', space=vmem, size = 0x12000, scoped, tag = 'internal scratch']
  %s0 = inlined_call_operand.vmem [shape: bf16[2,256,128], index: 0, kind: input, shape index: {}]
  %s1 = inlined_call_operand.vmem [shape: f32[2,128], index: 1, kind: input, shape index: {}]
  %s2 = inlined_call_operand.vmem [shape: f32[1,128], index: 2, kind: input, shape index: {}]
  %s3 = inlined_call_operand.vmem [shape: f32[1,128], index: 3, kind: input, shape index: {}]
  %s4 = inlined_call_operand.vmem [shape: f32[2,256,16], index: 4, kind: input, shape index: {}]
  %s5 = inlined_call_operand.vmem [shape: bf16[2,256,16], index: 5, kind: output, shape index: {}]
  %s6 = sld [smem:[#allocation0]]
  $region53: #{bottleneck_forward.7} parent=0
    _
  %s8 = ssub.s32 1, %s6
  %s9 = scalar_select 0, %s8, %s6
  loop: start=0, step=1, limit=4
  $region2: #{bottleneck_forward.7} parent=0 // loop_pre_header
    _
  $region3: #{bottleneck_forward.7} parent=0 // loop_header
    %s11 = sphi 0, %s15
    %p12 = scmp.ge.s32.totalorder %s11, 4
    %s21 = sphi 0, %s23
    %s24 = sphi 0, %s21
    %s25 = sphi 0, %s24
    %s41 = sphi 0, %s25
    %s45 = sphi 0, %s45
    %s47 = sphi 0, %s45
    %s48 = sphi 0, %s47
    %s62 = sphi 0, %s48
    %s66 = sphi 0, %s66
    %s68 = sphi 0, %s66
    %s69 = sphi 0, %s68
    %s83 = sphi 0, %s69
    %s87 = sphi 0, %s87
    %s89 = sphi 0, %s87
    %s90 = sphi 0, %s89
    %s104 = sphi 0, %s90
    %s110 = sphi 0, %s112
    %s113 = sphi 0, %s110
    %s114 = sphi 0, %s113
    %s130 = sphi 0, %s114
    %s136 = sphi 0, %s138
    %s139 = sphi 0, %s136
    %s140 = sphi 0, %s139
    %s156 = sphi 0, %s140
  $region4: #{bottleneck_forward.7} parent=0 // loop_header_branch
    %14 = sbr.rel (%p12) target = $region8
  $region5: #{bottleneck_forward.7} parent=0 // loop_body
    %s16 = ssub.s32 %s11, 1
    %s17 = ssub.s32 %s11, 2
    %s18 = sadd.s32 %s11, 1
    %s19 = ssub.s32 %s11, %s18
    %p20 = scmp.eq.s32.totalorder %s19, 0
    %s22 = sadd.s32 %s21, 1
    %s23 = scalar_select %p20, %s21, %s22
    %p26 = pneg %p20
    %p27 = scmp.eq.s32.totalorder %s11, 1
    %p28 = por %p26, %p27
    %p29 = scmp.ne.s32.totalorder %s21, %s24
    %p30 = scmp.eq.s32.totalorder %s11, 0
    %p31 = por %p29, %p30
    %p32 = scmp.ne.s32.totalorder %s21, %s24
    %p33 = scmp.eq.s32.totalorder %s16, 1
    %p34 = por %p32, %p33
    %p35 = scmp.ne.s32.totalorder %s24, %s25
    %p36 = scmp.eq.s32.totalorder %s16, 0
    %p37 = por %p35, %p36
    %p38 = scmp.ne.s32.totalorder %s24, %s25
    %p39 = scmp.eq.s32.totalorder %s17, 1
    %p40 = por %p38, %p39
    %p42 = scmp.ne.s32.totalorder %s25, %s41
    %p43 = scmp.eq.s32.totalorder %s17, 0
    %p44 = por %p42, %p43
    %s46 = sadd.s32 %s45, 1
    %p49 = scmp.eq.s32.totalorder %s11, 1
    %p50 = scmp.ne.s32.totalorder %s45, %s47
    %p51 = scmp.eq.s32.totalorder %s11, 0
    %p52 = por %p50, %p51
    %p53 = scmp.ne.s32.totalorder %s45, %s47
    %p54 = scmp.eq.s32.totalorder %s16, 1
    %p55 = por %p53, %p54
    %p56 = scmp.ne.s32.totalorder %s47, %s48
    %p57 = scmp.eq.s32.totalorder %s16, 0
    %p58 = por %p56, %p57
    %p59 = scmp.ne.s32.totalorder %s47, %s48
    %p60 = scmp.eq.s32.totalorder %s17, 1
    %p61 = por %p59, %p60
    %p63 = scmp.ne.s32.totalorder %s48, %s62
    %p64 = scmp.eq.s32.totalorder %s17, 0
    %p65 = por %p63, %p64
    %s67 = sadd.s32 %s66, 1
    %p70 = scmp.eq.s32.totalorder %s11, 1
    %p71 = scmp.ne.s32.totalorder %s66, %s68
    %p72 = scmp.eq.s32.totalorder %s11, 0
    %p73 = por %p71, %p72
    %p74 = scmp.ne.s32.totalorder %s66, %s68
    %p75 = scmp.eq.s32.totalorder %s16, 1
    %p76 = por %p74, %p75
    %p77 = scmp.ne.s32.totalorder %s68, %s69
    %p78 = scmp.eq.s32.totalorder %s16, 0
    %p79 = por %p77, %p78
    %p80 = scmp.ne.s32.totalorder %s68, %s69
    %p81 = scmp.eq.s32.totalorder %s17, 1
    %p82 = por %p80, %p81
    %p84 = scmp.ne.s32.totalorder %s69, %s83
    %p85 = scmp.eq.s32.totalorder %s17, 0
    %p86 = por %p84, %p85
    %s88 = sadd.s32 %s87, 1
    %p91 = scmp.eq.s32.totalorder %s11, 1
    %p92 = scmp.ne.s32.totalorder %s87, %s89
    %p93 = scmp.eq.s32.totalorder %s11, 0
    %p94 = por %p92, %p93
    %p95 = scmp.ne.s32.totalorder %s87, %s89
    %p96 = scmp.eq.s32.totalorder %s16, 1
    %p97 = por %p95, %p96
    %p98 = scmp.ne.s32.totalorder %s89, %s90
    %p99 = scmp.eq.s32.totalorder %s16, 0
    %p100 = por %p98, %p99
    %p101 = scmp.ne.s32.totalorder %s89, %s90
    %p102 = scmp.eq.s32.totalorder %s17, 1
    %p103 = por %p101, %p102
    %p105 = scmp.ne.s32.totalorder %s90, %s104
    %p106 = scmp.eq.s32.totalorder %s17, 0
    %p107 = por %p105, %p106
    %s108 = ssub.s32 %s11, %s18
    %p109 = scmp.eq.s32.totalorder %s108, 0
    %s111 = sadd.s32 %s110, 1
    %s112 = scalar_select %p109, %s110, %s111
    %p115 = pneg %p109
    %p116 = scmp.eq.s32.totalorder %s11, 1
    %p117 = por %p115, %p116
    %p118 = scmp.ne.s32.totalorder %s110, %s113
    %p119 = scmp.eq.s32.totalorder %s11, 0
    %p120 = por %p118, %p119
    %p121 = scmp.ne.s32.totalorder %s110, %s113
    %p122 = scmp.eq.s32.totalorder %s16, 1
    %p123 = por %p121, %p122
    %p124 = scmp.ne.s32.totalorder %s113, %s114
    %p125 = scmp.eq.s32.totalorder %s16, 0
    %p126 = por %p124, %p125
    %p127 = scmp.ne.s32.totalorder %s113, %s114
    %p128 = scmp.eq.s32.totalorder %s17, 1
    %p129 = por %p127, %p128
    %p131 = scmp.ne.s32.totalorder %s114, %s130
    %p132 = scmp.eq.s32.totalorder %s17, 0
    %p133 = por %p131, %p132
    %s134 = ssub.s32 %s11, %s18
    %p135 = scmp.eq.s32.totalorder %s134, 0
    %s137 = sadd.s32 %s136, 1
    %s138 = scalar_select %p135, %s136, %s137
    %p141 = pneg %p135
    %p142 = scmp.eq.s32.totalorder %s11, 1
    %p143 = por %p141, %p142
    %p144 = scmp.ne.s32.totalorder %s136, %s139
    %p145 = scmp.eq.s32.totalorder %s11, 0
    %p146 = por %p144, %p145
    %p147 = scmp.ne.s32.totalorder %s136, %s139
    %p148 = scmp.eq.s32.totalorder %s16, 1
    %p149 = por %p147, %p148
    %p150 = scmp.ne.s32.totalorder %s139, %s140
    %p151 = scmp.eq.s32.totalorder %s16, 0
    %p152 = por %p150, %p151
    %p153 = scmp.ne.s32.totalorder %s139, %s140
    %p154 = scmp.eq.s32.totalorder %s17, 1
    %p155 = por %p153, %p154
    %p157 = scmp.ne.s32.totalorder %s140, %s156
    %p158 = scmp.eq.s32.totalorder %s17, 0
    %p159 = por %p157, %p158
    %p160 = scmp.le.s32.totalorder 1, %s11
    %p161 = scmp.lt.s32.totalorder %s11, 3
    %p162 = pnand %p160, %p161
    %p163 = pneg %p162
    // Predicated region
    $region9: #{bottleneck_forward.7} parent=5 // pred_check
      _
    $region10: #{bottleneck_forward.7} parent=5 // pred_check_branch
      %165 = sbr.rel (%p162) target = $region12
    $region11: #{bottleneck_forward.7} parent=5 // pred_region
      %s166 = ssub.s32 %s11, 1
      // Predicated region
      $region13: #{bottleneck_forward.7} parent=11 // pred_check
        %p167 = pneg %p58
      $region14: #{bottleneck_forward.7} parent=11 // pred_check_branch
        %169 = sbr.rel (%p167) target = $region16
      $region15: #{bottleneck_forward.7} parent=11 // pred_region
        _
      $region16: #{bottleneck_forward.7} parent=11 // pred_fallthru
        _
      // Predicated region
      $region17: #{bottleneck_forward.7} parent=11 // pred_check
        %p170 = pneg %p79
      $region18: #{bottleneck_forward.7} parent=11 // pred_check_branch
        %172 = sbr.rel (%p170) target = $region20
      $region19: #{bottleneck_forward.7} parent=11 // pred_region
        _
      $region20: #{bottleneck_forward.7} parent=11 // pred_fallthru
        _
      // Predicated region
      $region21: #{bottleneck_forward.7} parent=11 // pred_check
        %p173 = pneg %p100
      $region22: #{bottleneck_forward.7} parent=11 // pred_check_branch
        %175 = sbr.rel (%p173) target = $region24
      $region23: #{bottleneck_forward.7} parent=11 // pred_region
        _
      $region24: #{bottleneck_forward.7} parent=11 // pred_fallthru
        _
    $region12: #{bottleneck_forward.7} parent=5 // pred_fallthru
      _
    %p176 = scmp.lt.s32.totalorder %s11, 2
    // Predicated region
    $region25: #{bottleneck_forward.7} parent=5 // pred_check
      %p177 = pneg %p176
    $region26: #{bottleneck_forward.7} parent=5 // pred_check_branch
      %179 = sbr.rel (%p177) target = $region28
    $region27: #{bottleneck_forward.7} parent=5 // pred_region
      // Predicated region
      $region29: #{bottleneck_forward.7} parent=27 // pred_check
        %p180 = pneg %p31
      $region30: #{bottleneck_forward.7} parent=27 // pred_check_branch
        %182 = sbr.rel (%p180) target = $region32
      $region31: #{bottleneck_forward.7} parent=27 // pred_region
        %p183 = scmp.lt.s32.totalorder %s11, 1
        %s184 = scalar_select %p183, %s11, 1
        %s185 = smul.addr %s184, 32
        %s186 = smul.addr %s185, 4
        %s187 = scalar_lea.vmem %s0, %s186
      $region32: #{bottleneck_forward.7} parent=27 // pred_fallthru
        _
      // Predicated region
      $region33: #{bottleneck_forward.7} parent=27 // pred_check
        %p188 = pneg %p120
      $region34: #{bottleneck_forward.7} parent=27 // pred_check_branch
        %190 = sbr.rel (%p188) target = $region36
      $region35: #{bottleneck_forward.7} parent=27 // pred_region
        %p191 = scmp.lt.s32.totalorder %s11, 1
        %s192 = scalar_select %p191, %s11, 1
        %s193 = smul.addr %s192, 32
        %s194 = smul.addr %s193, 8
        %s195 = scalar_lea.vmem %s4, %s194
      $region36: #{bottleneck_forward.7} parent=27 // pred_fallthru
        _
    $region28: #{bottleneck_forward.7} parent=5 // pred_fallthru
      _
    %p196 = scmp.le.s32.totalorder 1, %s11
    %p197 = scmp.lt.s32.totalorder %s11, 3
    %p198 = pnand %p196, %p197
    %p199 = pneg %p198
    // Predicated region
    $region37: #{bottleneck_forward.7} parent=5 // pred_check
      _
    $region38: #{bottleneck_forward.7} parent=5 // pred_check_branch
      %201 = sbr.rel (%p198) target = $region40
    $region39: #{bottleneck_forward.7} parent=5 // pred_region
      %s202 = ssub.s32 %s11, 1
      %p203 = scmp.lt.s32.totalorder %s16, 1
      %s204 = scalar_select %p203, %s16, 1
      %s205 = smul.addr %s204, 32
      %s206 = smul.addr %s205, 4
      %s207 = scalar_lea.vmem %s0, %s206
      %p208 = pneg %p37
      %p209 = pneg %p34
      %p210 = pneg %p58
      %p211 = pneg %p55
      %p212 = pneg %p79
      %p213 = pneg %p76
      %p214 = pneg %p100
      %p215 = pneg %p97
      %p216 = scmp.lt.s32.totalorder %s16, 1
      %s217 = scalar_select %p216, %s16, 1
      %s218 = smul.addr %s217, 32
      %s219 = smul.addr %s218, 8
      %s220 = scalar_lea.vmem %s4, %s219
      %p221 = pneg %p126
      %p222 = pneg %p123
      %p223 = pneg %p152
      %p224 = pneg %p149
      %p225 = scmp.lt.s32.totalorder %s16, 1
      %s226 = scalar_select %p225, %s16, 1
      %s227 = smul.addr %s226, 32
      %s228 = smul.addr %s227, 4
      %s229 = scalar_lea.vmem %s5, %s228
      %p230 = scmp.lt.s32.totalorder %s16, 1
      %s231 = scalar_select %p230, %s16, 1
      %s232 = smul.addr %s231, 32
      %s233 = smul.addr %s232, 4
      %s234 = scalar_lea.vmem %s0, %s233
      %p235 = scmp.lt.s32.totalorder %s16, 1
      %s236 = scalar_select %p235, %s16, 1
      %s237 = smul.addr %s236, 32
      %s238 = smul.addr %s237, 8
      %s239 = scalar_lea.vmem %s4, %s238
      %p240 = scmp.lt.s32.totalorder %s16, 1
      %s241 = scalar_select %p240, %s16, 1
      %s242 = smul.addr %s241, 32
      %s243 = smul.addr %s242, 4
      %s244 = scalar_lea.vmem %s5, %s243
      %v245 = vld [vmem:[%s1] sm:$0x1]
      %v246 = vmul.f32 %v245, 0.001953125
      %v247 = vld [vmem:[%s1 + $0x1] sm:$0x1]
      %v248 = vmul.f32 %v247, 0.001953125
      %v249 = vmul.f32 %v246, %v246
      %v250 = vsub.f32 %v248, %v249
      %v251 = vmax.f32 %v250, 0.0
      %v252 = vadd.f32 %v251, 1e-05
      %v253 = vrsqrt.pop %v252
      %v254 = vld [vmem:[%s2] sm:$0x1]
      %v255 = vmul.f32 %v253, %v254
      %v256 = vld [vmem:[%s3] sm:$0x1]
      %v257 = vld [vmem:[%s234] sm:$0xf]
      %v258 = vld [vmem:[%s234 + $0x4] sm:$0xf]
      %v259 = vld [vmem:[%s234 + $0x8] sm:$0xf]
      %v260 = vld [vmem:[%s234 + $0xc] sm:$0xf]
      %v261 = vld [vmem:[%s234 + $0x10] sm:$0xf]
      %v262 = vld [vmem:[%s234 + $0x14] sm:$0xf]
      %v263 = vld [vmem:[%s234 + $0x18] sm:$0xf]
      %v264 = vld [vmem:[%s234 + $0x1c] sm:$0xf]
      %v265 = vld [vmem:[%s234 + $0x20] sm:$0xf]
      %v266 = vld [vmem:[%s234 + $0x24] sm:$0xf]
      %v267 = vld [vmem:[%s234 + $0x28] sm:$0xf]
      %v268 = vld [vmem:[%s234 + $0x2c] sm:$0xf]
      %v269 = vld [vmem:[%s234 + $0x30] sm:$0xf]
      %v270 = vld [vmem:[%s234 + $0x34] sm:$0xf]
      %v271 = vld [vmem:[%s234 + $0x38] sm:$0xf]
      %v272 = vld [vmem:[%s234 + $0x3c] sm:$0xf]
      %v273 = vld [vmem:[%s234 + $0x40] sm:$0xf]
      %v274 = vld [vmem:[%s234 + $0x44] sm:$0xf]
      %v275 = vld [vmem:[%s234 + $0x48] sm:$0xf]
      %v276 = vld [vmem:[%s234 + $0x4c] sm:$0xf]
      %v277 = vld [vmem:[%s234 + $0x50] sm:$0xf]
      %v278 = vld [vmem:[%s234 + $0x54] sm:$0xf]
      %v279 = vld [vmem:[%s234 + $0x58] sm:$0xf]
      %v280 = vld [vmem:[%s234 + $0x5c] sm:$0xf]
      %v281 = vld [vmem:[%s234 + $0x60] sm:$0xf]
      %v282 = vld [vmem:[%s234 + $0x64] sm:$0xf]
      %v283 = vld [vmem:[%s234 + $0x68] sm:$0xf]
      %v284 = vld [vmem:[%s234 + $0x6c] sm:$0xf]
      %v285 = vld [vmem:[%s234 + $0x70] sm:$0xf]
      %v286 = vld [vmem:[%s234 + $0x74] sm:$0xf]
      %v287 = vld [vmem:[%s234 + $0x78] sm:$0xf]
      %v288 = vld [vmem:[%s234 + $0x7c] sm:$0xf]
      %v289 = vunpack.c.l.bf16 %v257
      %v290 = vunpack.c.l.bf16 %v258
      %v291 = vunpack.c.l.bf16 %v259
      %v292 = vunpack.c.l.bf16 %v260
      %v293 = vunpack.c.l.bf16 %v261
      %v294 = vunpack.c.l.bf16 %v262
      %v295 = vunpack.c.l.bf16 %v263
      %v296 = vunpack.c.l.bf16 %v264
      %v297 = vunpack.c.l.bf16 %v265
      %v298 = vunpack.c.l.bf16 %v266
      %v299 = vunpack.c.l.bf16 %v267
      %v300 = vunpack.c.l.bf16 %v268
      %v301 = vunpack.c.l.bf16 %v269
      %v302 = vunpack.c.l.bf16 %v270
      %v303 = vunpack.c.l.bf16 %v271
      %v304 = vunpack.c.l.bf16 %v272
      %v305 = vunpack.c.l.bf16 %v273
      %v306 = vunpack.c.l.bf16 %v274
      %v307 = vunpack.c.l.bf16 %v275
      %v308 = vunpack.c.l.bf16 %v276
      %v309 = vunpack.c.l.bf16 %v277
      %v310 = vunpack.c.l.bf16 %v278
      %v311 = vunpack.c.l.bf16 %v279
      %v312 = vunpack.c.l.bf16 %v280
      %v313 = vunpack.c.l.bf16 %v281
      %v314 = vunpack.c.l.bf16 %v282
      %v315 = vunpack.c.l.bf16 %v283
      %v316 = vunpack.c.l.bf16 %v284
      %v317 = vunpack.c.l.bf16 %v285
      %v318 = vunpack.c.l.bf16 %v286
      %v319 = vunpack.c.l.bf16 %v287
      %v320 = vunpack.c.l.bf16 %v288
      %v321 = vlaneseq
      %v322 = vshrl.u32 %v321, 7
      %v323 = vsub.s32 0, %v322
      %v324 = vrot.slane %v246, %v323
      %v325 = vsub.f32 %v289, %v324
      %v326 = vsub.f32 %v290, %v324
      %v327 = vsub.f32 %v291, %v324
      %v328 = vsub.f32 %v292, %v324
      %v329 = vsub.f32 %v293, %v324
      %v330 = vsub.f32 %v294, %v324
      %v331 = vsub.f32 %v295, %v324
      %v332 = vsub.f32 %v296, %v324
      %v333 = vsub.f32 %v297, %v324
      %v334 = vsub.f32 %v298, %v324
      %v335 = vsub.f32 %v299, %v324
      %v336 = vsub.f32 %v300, %v324
      %v337 = vsub.f32 %v301, %v324
      %v338 = vsub.f32 %v302, %v324
      %v339 = vsub.f32 %v303, %v324
      %v340 = vsub.f32 %v304, %v324
      %v341 = vsub.f32 %v305, %v324
      %v342 = vsub.f32 %v306, %v324
      %v343 = vsub.f32 %v307, %v324
      %v344 = vsub.f32 %v308, %v324
      %v345 = vsub.f32 %v309, %v324
      %v346 = vsub.f32 %v310, %v324
      %v347 = vsub.f32 %v311, %v324
      %v348 = vsub.f32 %v312, %v324
      %v349 = vsub.f32 %v313, %v324
      %v350 = vsub.f32 %v314, %v324
      %v351 = vsub.f32 %v315, %v324
      %v352 = vsub.f32 %v316, %v324
      %v353 = vsub.f32 %v317, %v324
      %v354 = vsub.f32 %v318, %v324
      %v355 = vsub.f32 %v319, %v324
      %v356 = vsub.f32 %v320, %v324
      %v357 = vlaneseq
      %v358 = vshrl.u32 %v357, 7
      %v359 = vsub.s32 0, %v358
      %v360 = vrot.slane %v255, %v359
      %v361 = vmul.f32 %v325, %v360
      %v362 = vmul.f32 %v326, %v360
      %v363 = vmul.f32 %v327, %v360
      %v364 = vmul.f32 %v328, %v360
      %v365 = vmul.f32 %v329, %v360
      %v366 = vmul.f32 %v330, %v360
      %v367 = vmul.f32 %v331, %v360
      %v368 = vmul.f32 %v332, %v360
      %v369 = vmul.f32 %v333, %v360
      %v370 = vmul.f32 %v334, %v360
      %v371 = vmul.f32 %v335, %v360
      %v372 = vmul.f32 %v336, %v360
      %v373 = vmul.f32 %v337, %v360
      %v374 = vmul.f32 %v338, %v360
      %v375 = vmul.f32 %v339, %v360
      %v376 = vmul.f32 %v340, %v360
      %v377 = vmul.f32 %v341, %v360
      %v378 = vmul.f32 %v342, %v360
      %v379 = vmul.f32 %v343, %v360
      %v380 = vmul.f32 %v344, %v360
      %v381 = vmul.f32 %v345, %v360
      %v382 = vmul.f32 %v346, %v360
      %v383 = vmul.f32 %v347, %v360
      %v384 = vmul.f32 %v348, %v360
      %v385 = vmul.f32 %v349, %v360
      %v386 = vmul.f32 %v350, %v360
      %v387 = vmul.f32 %v351, %v360
      %v388 = vmul.f32 %v352, %v360
      %v389 = vmul.f32 %v353, %v360
      %v390 = vmul.f32 %v354, %v360
      %v391 = vmul.f32 %v355, %v360
      %v392 = vmul.f32 %v356, %v360
      %v394 = vlaneseq
      %v395 = vshrl.u32 %v394, 7
      %v396 = vsub.s32 0, %v395
      %v397 = vrot.slane %v256, %v396
      %v399 = vadd.f32 %v361, %v397
      %v400 = vadd.f32 %v362, %v397
      %v401 = vadd.f32 %v363, %v397
      %v402 = vadd.f32 %v364, %v397
      %v403 = vadd.f32 %v365, %v397
      %v404 = vadd.f32 %v366, %v397
      %v405 = vadd.f32 %v367, %v397
      %v406 = vadd.f32 %v368, %v397
      %v407 = vadd.f32 %v369, %v397
      %v408 = vadd.f32 %v370, %v397
      %v409 = vadd.f32 %v371, %v397
      %v410 = vadd.f32 %v372, %v397
      %v411 = vadd.f32 %v373, %v397
      %v412 = vadd.f32 %v374, %v397
      %v413 = vadd.f32 %v375, %v397
      %v414 = vadd.f32 %v376, %v397
      %v415 = vadd.f32 %v377, %v397
      %v416 = vadd.f32 %v378, %v397
      %v417 = vadd.f32 %v379, %v397
      %v418 = vadd.f32 %v380, %v397
      %v419 = vadd.f32 %v381, %v397
      %v420 = vadd.f32 %v382, %v397
      %v421 = vadd.f32 %v383, %v397
      %v422 = vadd.f32 %v384, %v397
      %v423 = vadd.f32 %v385, %v397
      %v424 = vadd.f32 %v386, %v397
      %v425 = vadd.f32 %v387, %v397
      %v426 = vadd.f32 %v388, %v397
      %v427 = vadd.f32 %v389, %v397
      %v428 = vadd.f32 %v390, %v397
      %v429 = vadd.f32 %v391, %v397
      %v430 = vadd.f32 %v392, %v397
      %v431 = vld [vmem:[%s239] sm:$0xff]
      %v432 = vld [vmem:[%s239 + $0x8] sm:$0xff]
      %v433 = vld [vmem:[%s239 + $0x10] sm:$0xff]
      %v434 = vld [vmem:[%s239 + $0x18] sm:$0xff]
      %v435 = vld [vmem:[%s239 + $0x20] sm:$0xff]
      %v436 = vld [vmem:[%s239 + $0x28] sm:$0xff]
      %v437 = vld [vmem:[%s239 + $0x30] sm:$0xff]
      %v438 = vld [vmem:[%s239 + $0x38] sm:$0xff]
      %v439 = vld [vmem:[%s239 + $0x40] sm:$0xff]
      %v440 = vld [vmem:[%s239 + $0x48] sm:$0xff]
      %v441 = vld [vmem:[%s239 + $0x50] sm:$0xff]
      %v442 = vld [vmem:[%s239 + $0x58] sm:$0xff]
      %v443 = vld [vmem:[%s239 + $0x60] sm:$0xff]
      %v444 = vld [vmem:[%s239 + $0x68] sm:$0xff]
      %v445 = vld [vmem:[%s239 + $0x70] sm:$0xff]
      %v446 = vld [vmem:[%s239 + $0x78] sm:$0xff]
      %v447 = vld [vmem:[%s239 + $0x80] sm:$0xff]
      %v448 = vld [vmem:[%s239 + $0x88] sm:$0xff]
      %v449 = vld [vmem:[%s239 + $0x90] sm:$0xff]
      %v450 = vld [vmem:[%s239 + $0x98] sm:$0xff]
      %v451 = vld [vmem:[%s239 + $0xa0] sm:$0xff]
      %v452 = vld [vmem:[%s239 + $0xa8] sm:$0xff]
      %v453 = vld [vmem:[%s239 + $0xb0] sm:$0xff]
      %v454 = vld [vmem:[%s239 + $0xb8] sm:$0xff]
      %v455 = vld [vmem:[%s239 + $0xc0] sm:$0xff]
      %v456 = vld [vmem:[%s239 + $0xc8] sm:$0xff]
      %v457 = vld [vmem:[%s239 + $0xd0] sm:$0xff]
      %v458 = vld [vmem:[%s239 + $0xd8] sm:$0xff]
      %v459 = vld [vmem:[%s239 + $0xe0] sm:$0xff]
      %v460 = vld [vmem:[%s239 + $0xe8] sm:$0xff]
      %v461 = vld [vmem:[%s239 + $0xf0] sm:$0xff]
      %v462 = vld [vmem:[%s239 + $0xf8] sm:$0xff]
      %v463 = vadd.f32 %v399, %v431
      %v464 = vadd.f32 %v400, %v432
      %v465 = vadd.f32 %v401, %v433
      %v466 = vadd.f32 %v402, %v434
      %v467 = vadd.f32 %v403, %v435
      %v468 = vadd.f32 %v404, %v436
      %v469 = vadd.f32 %v405, %v437
      %v470 = vadd.f32 %v406, %v438
      %v471 = vadd.f32 %v407, %v439
      %v472 = vadd.f32 %v408, %v440
      %v473 = vadd.f32 %v409, %v441
      %v474 = vadd.f32 %v410, %v442
      %v475 = vadd.f32 %v411, %v443
      %v476 = vadd.f32 %v412, %v444
      %v477 = vadd.f32 %v413, %v445
      %v478 = vadd.f32 %v414, %v446
      %v479 = vadd.f32 %v415, %v447
      %v480 = vadd.f32 %v416, %v448
      %v481 = vadd.f32 %v417, %v449
      %v482 = vadd.f32 %v418, %v450
      %v483 = vadd.f32 %v419, %v451
      %v484 = vadd.f32 %v420, %v452
      %v485 = vadd.f32 %v421, %v453
      %v486 = vadd.f32 %v422, %v454
      %v487 = vadd.f32 %v423, %v455
      %v488 = vadd.f32 %v424, %v456
      %v489 = vadd.f32 %v425, %v457
      %v490 = vadd.f32 %v426, %v458
      %v491 = vadd.f32 %v427, %v459
      %v492 = vadd.f32 %v428, %v460
      %v493 = vadd.f32 %v429, %v461
      %v494 = vadd.f32 %v430, %v462
      %v495 = vmax.f32 %v463, 0.0
      %v496 = vmax.f32 %v464, 0.0
      %v497 = vmax.f32 %v465, 0.0
      %v498 = vmax.f32 %v466, 0.0
      %v499 = vmax.f32 %v467, 0.0
      %v500 = vmax.f32 %v468, 0.0
      %v501 = vmax.f32 %v469, 0.0
      %v502 = vmax.f32 %v470, 0.0
      %v503 = vmax.f32 %v471, 0.0
      %v504 = vmax.f32 %v472, 0.0
      %v505 = vmax.f32 %v473, 0.0
      %v506 = vmax.f32 %v474, 0.0
      %v507 = vmax.f32 %v475, 0.0
      %v508 = vmax.f32 %v476, 0.0
      %v509 = vmax.f32 %v477, 0.0
      %v510 = vmax.f32 %v478, 0.0
      %v511 = vmax.f32 %v479, 0.0
      %v512 = vmax.f32 %v480, 0.0
      %v513 = vmax.f32 %v481, 0.0
      %v514 = vmax.f32 %v482, 0.0
      %v515 = vmax.f32 %v483, 0.0
      %v516 = vmax.f32 %v484, 0.0
      %v517 = vmax.f32 %v485, 0.0
      %v518 = vmax.f32 %v486, 0.0
      %v519 = vmax.f32 %v487, 0.0
      %v520 = vmax.f32 %v488, 0.0
      %v521 = vmax.f32 %v489, 0.0
      %v522 = vmax.f32 %v490, 0.0
      %v523 = vmax.f32 %v491, 0.0
      %v524 = vmax.f32 %v492, 0.0
      %v525 = vmax.f32 %v493, 0.0
      %v526 = vmax.f32 %v494, 0.0
      %v527 = vpack.c.bf16 %v496, %v495
      %v528 = vpack.c.bf16 %v498, %v497
      %v529 = vpack.c.bf16 %v500, %v499
      %v530 = vpack.c.bf16 %v502, %v501
      %v531 = vpack.c.bf16 %v504, %v503
      %v532 = vpack.c.bf16 %v506, %v505
      %v533 = vpack.c.bf16 %v508, %v507
      %v534 = vpack.c.bf16 %v510, %v509
      %v535 = vpack.c.bf16 %v512, %v511
      %v536 = vpack.c.bf16 %v514, %v513
      %v537 = vpack.c.bf16 %v516, %v515
      %v538 = vpack.c.bf16 %v518, %v517
      %v539 = vpack.c.bf16 %v520, %v519
      %v540 = vpack.c.bf16 %v522, %v521
      %v541 = vpack.c.bf16 %v524, %v523
      %v542 = vpack.c.bf16 %v526, %v525
      %v559 = vunpack.c.l.b16 %v527
      %v560 = vunpack.c.h.b16 %v527
      %v561 = vunpack.c.l.b16 %v528
      %v562 = vunpack.c.h.b16 %v528
      %v563 = vunpack.c.l.b16 %v529
      %v564 = vunpack.c.h.b16 %v529
      %v565 = vunpack.c.l.b16 %v530
      %v566 = vunpack.c.h.b16 %v530
      %v567 = vunpack.c.l.b16 %v531
      %v568 = vunpack.c.h.b16 %v531
      %v569 = vunpack.c.l.b16 %v532
      %v570 = vunpack.c.h.b16 %v532
      %v571 = vunpack.c.l.b16 %v533
      %v572 = vunpack.c.h.b16 %v533
      %v573 = vunpack.c.l.b16 %v534
      %v574 = vunpack.c.h.b16 %v534
      %v575 = vunpack.c.l.b16 %v535
      %v576 = vunpack.c.h.b16 %v535
      %v577 = vunpack.c.l.b16 %v536
      %v578 = vunpack.c.h.b16 %v536
      %v579 = vunpack.c.l.b16 %v537
      %v580 = vunpack.c.h.b16 %v537
      %v581 = vunpack.c.l.b16 %v538
      %v582 = vunpack.c.h.b16 %v538
      %v583 = vunpack.c.l.b16 %v539
      %v584 = vunpack.c.h.b16 %v539
      %v585 = vunpack.c.l.b16 %v540
      %v586 = vunpack.c.h.b16 %v540
      %v587 = vunpack.c.l.b16 %v541
      %v588 = vunpack.c.h.b16 %v541
      %v589 = vunpack.c.l.b16 %v542
      %v590 = vunpack.c.h.b16 %v542
      %v591 = vpack.c.b16 %v559, %v559
      %v592 = vpack.c.b16 %v560, %v560
      %v593 = vpack.c.b16 %v561, %v561
      %v594 = vpack.c.b16 %v562, %v562
      %v595 = vpack.c.b16 %v563, %v563
      %v596 = vpack.c.b16 %v564, %v564
      %v597 = vpack.c.b16 %v565, %v565
      %v598 = vpack.c.b16 %v566, %v566
      %v599 = vpack.c.b16 %v567, %v567
      %v600 = vpack.c.b16 %v568, %v568
      %v601 = vpack.c.b16 %v569, %v569
      %v602 = vpack.c.b16 %v570, %v570
      %v603 = vpack.c.b16 %v571, %v571
      %v604 = vpack.c.b16 %v572, %v572
      %v605 = vpack.c.b16 %v573, %v573
      %v606 = vpack.c.b16 %v574, %v574
      %v607 = vpack.c.b16 %v575, %v575
      %v608 = vpack.c.b16 %v576, %v576
      %v609 = vpack.c.b16 %v577, %v577
      %v610 = vpack.c.b16 %v578, %v578
      %v611 = vpack.c.b16 %v579, %v579
      %v612 = vpack.c.b16 %v580, %v580
      %v613 = vpack.c.b16 %v581, %v581
      %v614 = vpack.c.b16 %v582, %v582
      %v615 = vpack.c.b16 %v583, %v583
      %v616 = vpack.c.b16 %v584, %v584
      %v617 = vpack.c.b16 %v585, %v585
      %v618 = vpack.c.b16 %v586, %v586
      %v619 = vpack.c.b16 %v587, %v587
      %v620 = vpack.c.b16 %v588, %v588
      %v621 = vpack.c.b16 %v589, %v589
      %v622 = vpack.c.b16 %v590, %v590
      %vm655 = vcmask 125952
      %656 = vst.msk [vmem:[%s244] sm:$0xf] %vm655, %v591
      %657 = vst.msk [vmem:[%s244 + $0x4] sm:$0xf] %vm655, %v592
      %658 = vst.msk [vmem:[%s244 + $0x8] sm:$0xf] %vm655, %v593
      %659 = vst.msk [vmem:[%s244 + $0xc] sm:$0xf] %vm655, %v594
      %660 = vst.msk [vmem:[%s244 + $0x10] sm:$0xf] %vm655, %v595
      %661 = vst.msk [vmem:[%s244 + $0x14] sm:$0xf] %vm655, %v596
      %662 = vst.msk [vmem:[%s244 + $0x18] sm:$0xf] %vm655, %v597
      %663 = vst.msk [vmem:[%s244 + $0x1c] sm:$0xf] %vm655, %v598
      %664 = vst.msk [vmem:[%s244 + $0x20] sm:$0xf] %vm655, %v599
      %665 = vst.msk [vmem:[%s244 + $0x24] sm:$0xf] %vm655, %v600
      %666 = vst.msk [vmem:[%s244 + $0x28] sm:$0xf] %vm655, %v601
      %667 = vst.msk [vmem:[%s244 + $0x2c] sm:$0xf] %vm655, %v602
      %668 = vst.msk [vmem:[%s244 + $0x30] sm:$0xf] %vm655, %v603
      %669 = vst.msk [vmem:[%s244 + $0x34] sm:$0xf] %vm655, %v604
      %670 = vst.msk [vmem:[%s244 + $0x38] sm:$0xf] %vm655, %v605
      %671 = vst.msk [vmem:[%s244 + $0x3c] sm:$0xf] %vm655, %v606
      %672 = vst.msk [vmem:[%s244 + $0x40] sm:$0xf] %vm655, %v607
      %673 = vst.msk [vmem:[%s244 + $0x44] sm:$0xf] %vm655, %v608
      %674 = vst.msk [vmem:[%s244 + $0x48] sm:$0xf] %vm655, %v609
      %675 = vst.msk [vmem:[%s244 + $0x4c] sm:$0xf] %vm655, %v610
      %676 = vst.msk [vmem:[%s244 + $0x50] sm:$0xf] %vm655, %v611
      %677 = vst.msk [vmem:[%s244 + $0x54] sm:$0xf] %vm655, %v612
      %678 = vst.msk [vmem:[%s244 + $0x58] sm:$0xf] %vm655, %v613
      %679 = vst.msk [vmem:[%s244 + $0x5c] sm:$0xf] %vm655, %v614
      %680 = vst.msk [vmem:[%s244 + $0x60] sm:$0xf] %vm655, %v615
      %681 = vst.msk [vmem:[%s244 + $0x64] sm:$0xf] %vm655, %v616
      %682 = vst.msk [vmem:[%s244 + $0x68] sm:$0xf] %vm655, %v617
      %683 = vst.msk [vmem:[%s244 + $0x6c] sm:$0xf] %vm655, %v618
      %684 = vst.msk [vmem:[%s244 + $0x70] sm:$0xf] %vm655, %v619
      %685 = vst.msk [vmem:[%s244 + $0x74] sm:$0xf] %vm655, %v620
      %686 = vst.msk [vmem:[%s244 + $0x78] sm:$0xf] %vm655, %v621
      %687 = vst.msk [vmem:[%s244 + $0x7c] sm:$0xf] %vm655, %v622
      %p688 = scmp.lt.s32.totalorder %s16, 1
      %s689 = scalar_select %p688, %s16, 1
      %s690 = smul.addr %s689, 32
      %s691 = smul.addr %s690, 4
      %s692 = scalar_lea.vmem %s5, %s691
      // Predicated region
      $region41: #{bottleneck_forward.7} parent=39 // pred_check
        %p693 = pneg %p149
      $region42: #{bottleneck_forward.7} parent=39 // pred_check_branch
        %695 = sbr.rel (%p693) target = $region44
      $region43: #{bottleneck_forward.7} parent=39 // pred_region
        _
      $region44: #{bottleneck_forward.7} parent=39 // pred_fallthru
        _
    $region40: #{bottleneck_forward.7} parent=5 // pred_fallthru
      _
    %p696 = scmp.le.s32.totalorder 2, %s11
    // Predicated region
    $region45: #{bottleneck_forward.7} parent=5 // pred_check
      %p697 = pneg %p696
    $region46: #{bottleneck_forward.7} parent=5 // pred_check_branch
      %699 = sbr.rel (%p697) target = $region48
    $region47: #{bottleneck_forward.7} parent=5 // pred_region
      %s700 = ssub.s32 %s11, 2
      // Predicated region
      $region49: #{bottleneck_forward.7} parent=47 // pred_check
        %p701 = pneg %p155
      $region50: #{bottleneck_forward.7} parent=47 // pred_check_branch
        %703 = sbr.rel (%p701) target = $region52
      $region51: #{bottleneck_forward.7} parent=47 // pred_region
        %p704 = scmp.lt.s32.totalorder %s17, 1
        %s705 = scalar_select %p704, %s17, 1
        %s706 = smul.addr %s705, 32
        %s707 = smul.addr %s706, 4
        %s708 = scalar_lea.vmem %s5, %s707
      $region52: #{bottleneck_forward.7} parent=47 // pred_fallthru
        _
    $region48: #{bottleneck_forward.7} parent=5 // pred_fallthru
      _
  $region6: #{bottleneck_forward.7} parent=0 // loop_footer
    %s15 = sadd.s32 1, %s11
  $region7: #{bottleneck_forward.7} parent=0 // loop_footer_branch
    %10 = sbr.rel target = $region3
  $region8: #{bottleneck_forward.7} parent=0 // loop_exit
    _

// kernel: bottleneck_forward.5
$region0: #{bottleneck_forward.5}
  #allocation0 [shape = 'u32[]', space=smem, size = 0x4, offset = 0x4, fixed_abs, tag = 'smem constant byte address 0x4 - core index']
  #allocation1 [shape = 'u32[144,128]{1,0:T(1,128)}', space=vmem, size = 0x12000, scoped, tag = 'internal scratch']
  #allocation2 [shape = 'bf16[18,18,128]{2,1,0:T(8,128)(2,1)}', space=vmem, size = 0x1b000, scoped, tag = 'scratch operand']
  %s0 = inlined_call_operand.vmem [shape: bf16[2,256,128], index: 0, kind: input, shape index: {}]
  %s1 = inlined_call_operand.vmem [shape: f32[2,128], index: 1, kind: input, shape index: {}]
  %s2 = inlined_call_operand.vmem [shape: f32[1,128], index: 2, kind: input, shape index: {}]
  %s3 = inlined_call_operand.vmem [shape: f32[1,128], index: 3, kind: input, shape index: {}]
  %s4 = inlined_call_operand.vmem [shape: bf16[9,128,128], index: 4, kind: input, shape index: {}]
  %s5 = inlined_call_operand.vmem [shape: bf16[2,256,128], index: 5, kind: output, shape index: {0}]
  %s6 = inlined_call_operand.vmem [shape: f32[2,2,128], index: 6, kind: output, shape index: {1}]
  %7 = xla_tuple %s5, %s6
  %s8 = sld [smem:[#allocation0]]
  $region61: #{bottleneck_forward.5} parent=0
    _
  %s10 = ssub.s32 1, %s8
  %s11 = scalar_select 0, %s10, %s8
  loop: start=0, step=1, limit=4
  $region2: #{bottleneck_forward.5} parent=0 // loop_pre_header
    _
  $region3: #{bottleneck_forward.5} parent=0 // loop_header
    %s13 = sphi 0, %s17
    %p14 = scmp.ge.s32.totalorder %s13, 4
    %s23 = sphi 0, %s25
    %s26 = sphi 0, %s23
    %s27 = sphi 0, %s26
    %s43 = sphi 0, %s27
    %s47 = sphi 0, %s47
    %s49 = sphi 0, %s47
    %s50 = sphi 0, %s49
    %s64 = sphi 0, %s50
    %s68 = sphi 0, %s68
    %s70 = sphi 0, %s68
    %s71 = sphi 0, %s70
    %s85 = sphi 0, %s71
    %s89 = sphi 0, %s89
    %s91 = sphi 0, %s89
    %s92 = sphi 0, %s91
    %s106 = sphi 0, %s92
    %s110 = sphi 0, %s110
    %s112 = sphi 0, %s110
    %s113 = sphi 0, %s112
    %s127 = sphi 0, %s113
    %s133 = sphi 0, %s135
    %s136 = sphi 0, %s133
    %s137 = sphi 0, %s136
    %s153 = sphi 0, %s137
    %s159 = sphi 0, %s161
    %s162 = sphi 0, %s159
    %s163 = sphi 0, %s162
    %s179 = sphi 0, %s163
  $region4: #{bottleneck_forward.5} parent=0 // loop_header_branch
    %16 = sbr.rel (%p14) target = $region8
  $region5: #{bottleneck_forward.5} parent=0 // loop_body
    %s18 = ssub.s32 %s13, 1
    %s19 = ssub.s32 %s13, 2
    %s20 = sadd.s32 %s13, 1
    %s21 = ssub.s32 %s13, %s20
    %p22 = scmp.eq.s32.totalorder %s21, 0
    %s24 = sadd.s32 %s23, 1
    %s25 = scalar_select %p22, %s23, %s24
    %p28 = pneg %p22
    %p29 = scmp.eq.s32.totalorder %s13, 1
    %p30 = por %p28, %p29
    %p31 = scmp.ne.s32.totalorder %s23, %s26
    %p32 = scmp.eq.s32.totalorder %s13, 0
    %p33 = por %p31, %p32
    %p34 = scmp.ne.s32.totalorder %s23, %s26
    %p35 = scmp.eq.s32.totalorder %s18, 1
    %p36 = por %p34, %p35
    %p37 = scmp.ne.s32.totalorder %s26, %s27
    %p38 = scmp.eq.s32.totalorder %s18, 0
    %p39 = por %p37, %p38
    %p40 = scmp.ne.s32.totalorder %s26, %s27
    %p41 = scmp.eq.s32.totalorder %s19, 1
    %p42 = por %p40, %p41
    %p44 = scmp.ne.s32.totalorder %s27, %s43
    %p45 = scmp.eq.s32.totalorder %s19, 0
    %p46 = por %p44, %p45
    %s48 = sadd.s32 %s47, 1
    %p51 = scmp.eq.s32.totalorder %s13, 1
    %p52 = scmp.ne.s32.totalorder %s47, %s49
    %p53 = scmp.eq.s32.totalorder %s13, 0
    %p54 = por %p52, %p53
    %p55 = scmp.ne.s32.totalorder %s47, %s49
    %p56 = scmp.eq.s32.totalorder %s18, 1
    %p57 = por %p55, %p56
    %p58 = scmp.ne.s32.totalorder %s49, %s50
    %p59 = scmp.eq.s32.totalorder %s18, 0
    %p60 = por %p58, %p59
    %p61 = scmp.ne.s32.totalorder %s49, %s50
    %p62 = scmp.eq.s32.totalorder %s19, 1
    %p63 = por %p61, %p62
    %p65 = scmp.ne.s32.totalorder %s50, %s64
    %p66 = scmp.eq.s32.totalorder %s19, 0
    %p67 = por %p65, %p66
    %s69 = sadd.s32 %s68, 1
    %p72 = scmp.eq.s32.totalorder %s13, 1
    %p73 = scmp.ne.s32.totalorder %s68, %s70
    %p74 = scmp.eq.s32.totalorder %s13, 0
    %p75 = por %p73, %p74
    %p76 = scmp.ne.s32.totalorder %s68, %s70
    %p77 = scmp.eq.s32.totalorder %s18, 1
    %p78 = por %p76, %p77
    %p79 = scmp.ne.s32.totalorder %s70, %s71
    %p80 = scmp.eq.s32.totalorder %s18, 0
    %p81 = por %p79, %p80
    %p82 = scmp.ne.s32.totalorder %s70, %s71
    %p83 = scmp.eq.s32.totalorder %s19, 1
    %p84 = por %p82, %p83
    %p86 = scmp.ne.s32.totalorder %s71, %s85
    %p87 = scmp.eq.s32.totalorder %s19, 0
    %p88 = por %p86, %p87
    %s90 = sadd.s32 %s89, 1
    %p93 = scmp.eq.s32.totalorder %s13, 1
    %p94 = scmp.ne.s32.totalorder %s89, %s91
    %p95 = scmp.eq.s32.totalorder %s13, 0
    %p96 = por %p94, %p95
    %p97 = scmp.ne.s32.totalorder %s89, %s91
    %p98 = scmp.eq.s32.totalorder %s18, 1
    %p99 = por %p97, %p98
    %p100 = scmp.ne.s32.totalorder %s91, %s92
    %p101 = scmp.eq.s32.totalorder %s18, 0
    %p102 = por %p100, %p101
    %p103 = scmp.ne.s32.totalorder %s91, %s92
    %p104 = scmp.eq.s32.totalorder %s19, 1
    %p105 = por %p103, %p104
    %p107 = scmp.ne.s32.totalorder %s92, %s106
    %p108 = scmp.eq.s32.totalorder %s19, 0
    %p109 = por %p107, %p108
    %s111 = sadd.s32 %s110, 1
    %p114 = scmp.eq.s32.totalorder %s13, 1
    %p115 = scmp.ne.s32.totalorder %s110, %s112
    %p116 = scmp.eq.s32.totalorder %s13, 0
    %p117 = por %p115, %p116
    %p118 = scmp.ne.s32.totalorder %s110, %s112
    %p119 = scmp.eq.s32.totalorder %s18, 1
    %p120 = por %p118, %p119
    %p121 = scmp.ne.s32.totalorder %s112, %s113
    %p122 = scmp.eq.s32.totalorder %s18, 0
    %p123 = por %p121, %p122
    %p124 = scmp.ne.s32.totalorder %s112, %s113
    %p125 = scmp.eq.s32.totalorder %s19, 1
    %p126 = por %p124, %p125
    %p128 = scmp.ne.s32.totalorder %s113, %s127
    %p129 = scmp.eq.s32.totalorder %s19, 0
    %p130 = por %p128, %p129
    %s131 = ssub.s32 %s13, %s20
    %p132 = scmp.eq.s32.totalorder %s131, 0
    %s134 = sadd.s32 %s133, 1
    %s135 = scalar_select %p132, %s133, %s134
    %p138 = pneg %p132
    %p139 = scmp.eq.s32.totalorder %s13, 1
    %p140 = por %p138, %p139
    %p141 = scmp.ne.s32.totalorder %s133, %s136
    %p142 = scmp.eq.s32.totalorder %s13, 0
    %p143 = por %p141, %p142
    %p144 = scmp.ne.s32.totalorder %s133, %s136
    %p145 = scmp.eq.s32.totalorder %s18, 1
    %p146 = por %p144, %p145
    %p147 = scmp.ne.s32.totalorder %s136, %s137
    %p148 = scmp.eq.s32.totalorder %s18, 0
    %p149 = por %p147, %p148
    %p150 = scmp.ne.s32.totalorder %s136, %s137
    %p151 = scmp.eq.s32.totalorder %s19, 1
    %p152 = por %p150, %p151
    %p154 = scmp.ne.s32.totalorder %s137, %s153
    %p155 = scmp.eq.s32.totalorder %s19, 0
    %p156 = por %p154, %p155
    %s157 = ssub.s32 %s13, %s20
    %p158 = scmp.eq.s32.totalorder %s157, 0
    %s160 = sadd.s32 %s159, 1
    %s161 = scalar_select %p158, %s159, %s160
    %p164 = pneg %p158
    %p165 = scmp.eq.s32.totalorder %s13, 1
    %p166 = por %p164, %p165
    %p167 = scmp.ne.s32.totalorder %s159, %s162
    %p168 = scmp.eq.s32.totalorder %s13, 0
    %p169 = por %p167, %p168
    %p170 = scmp.ne.s32.totalorder %s159, %s162
    %p171 = scmp.eq.s32.totalorder %s18, 1
    %p172 = por %p170, %p171
    %p173 = scmp.ne.s32.totalorder %s162, %s163
    %p174 = scmp.eq.s32.totalorder %s18, 0
    %p175 = por %p173, %p174
    %p176 = scmp.ne.s32.totalorder %s162, %s163
    %p177 = scmp.eq.s32.totalorder %s19, 1
    %p178 = por %p176, %p177
    %p180 = scmp.ne.s32.totalorder %s163, %s179
    %p181 = scmp.eq.s32.totalorder %s19, 0
    %p182 = por %p180, %p181
    %p183 = scmp.le.s32.totalorder 1, %s13
    %p184 = scmp.lt.s32.totalorder %s13, 3
    %p185 = pnand %p183, %p184
    %p186 = pneg %p185
    // Predicated region
    $region9: #{bottleneck_forward.5} parent=5 // pred_check
      _
    $region10: #{bottleneck_forward.5} parent=5 // pred_check_branch
      %188 = sbr.rel (%p185) target = $region12
    $region11: #{bottleneck_forward.5} parent=5 // pred_region
      %s189 = ssub.s32 %s13, 1
      // Predicated region
      $region13: #{bottleneck_forward.5} parent=11 // pred_check
        %p190 = pneg %p60
      $region14: #{bottleneck_forward.5} parent=11 // pred_check_branch
        %192 = sbr.rel (%p190) target = $region16
      $region15: #{bottleneck_forward.5} parent=11 // pred_region
        _
      $region16: #{bottleneck_forward.5} parent=11 // pred_fallthru
        _
      // Predicated region
      $region17: #{bottleneck_forward.5} parent=11 // pred_check
        %p193 = pneg %p81
      $region18: #{bottleneck_forward.5} parent=11 // pred_check_branch
        %195 = sbr.rel (%p193) target = $region20
      $region19: #{bottleneck_forward.5} parent=11 // pred_region
        _
      $region20: #{bottleneck_forward.5} parent=11 // pred_fallthru
        _
      // Predicated region
      $region21: #{bottleneck_forward.5} parent=11 // pred_check
        %p196 = pneg %p102
      $region22: #{bottleneck_forward.5} parent=11 // pred_check_branch
        %198 = sbr.rel (%p196) target = $region24
      $region23: #{bottleneck_forward.5} parent=11 // pred_region
        _
      $region24: #{bottleneck_forward.5} parent=11 // pred_fallthru
        _
      // Predicated region
      $region25: #{bottleneck_forward.5} parent=11 // pred_check
        %p199 = pneg %p123
      $region26: #{bottleneck_forward.5} parent=11 // pred_check_branch
        %201 = sbr.rel (%p199) target = $region28
      $region27: #{bottleneck_forward.5} parent=11 // pred_region
        _
      $region28: #{bottleneck_forward.5} parent=11 // pred_fallthru
        _
    $region12: #{bottleneck_forward.5} parent=5 // pred_fallthru
      _
    %p202 = scmp.lt.s32.totalorder %s13, 2
    // Predicated region
    $region29: #{bottleneck_forward.5} parent=5 // pred_check
      %p203 = pneg %p202
    $region30: #{bottleneck_forward.5} parent=5 // pred_check_branch
      %205 = sbr.rel (%p203) target = $region32
    $region31: #{bottleneck_forward.5} parent=5 // pred_region
      // Predicated region
      $region33: #{bottleneck_forward.5} parent=31 // pred_check
        %p206 = pneg %p33
      $region34: #{bottleneck_forward.5} parent=31 // pred_check_branch
        %208 = sbr.rel (%p206) target = $region36
      $region35: #{bottleneck_forward.5} parent=31 // pred_region
        %p209 = scmp.lt.s32.totalorder %s13, 1
        %s210 = scalar_select %p209, %s13, 1
        %s211 = smul.addr %s210, 32
        %s212 = smul.addr %s211, 4
        %s213 = scalar_lea.vmem %s0, %s212
      $region36: #{bottleneck_forward.5} parent=31 // pred_fallthru
        _
    $region32: #{bottleneck_forward.5} parent=5 // pred_fallthru
      _
    %p214 = scmp.le.s32.totalorder 1, %s13
    %p215 = scmp.lt.s32.totalorder %s13, 3
    %p216 = pnand %p214, %p215
    %p217 = pneg %p216
    // Predicated region
    $region37: #{bottleneck_forward.5} parent=5 // pred_check
      _
    $region38: #{bottleneck_forward.5} parent=5 // pred_check_branch
      %219 = sbr.rel (%p216) target = $region40
    $region39: #{bottleneck_forward.5} parent=5 // pred_region
      %s220 = ssub.s32 %s13, 1
      %p221 = scmp.lt.s32.totalorder %s18, 1
      %s222 = scalar_select %p221, %s18, 1
      %s223 = smul.addr %s222, 32
      %s224 = smul.addr %s223, 4
      %s225 = scalar_lea.vmem %s0, %s224
      %p226 = pneg %p39
      %p227 = pneg %p36
      %p228 = pneg %p60
      %p229 = pneg %p57
      %p230 = pneg %p81
      %p231 = pneg %p78
      %p232 = pneg %p102
      %p233 = pneg %p99
      %p234 = pneg %p123
      %p235 = pneg %p120
      %p236 = pneg %p149
      %p237 = pneg %p146
      %p238 = scmp.lt.s32.totalorder %s18, 1
      %s239 = scalar_select %p238, %s18, 1
      %s240 = smul.addr %s239, 32
      %s241 = smul.addr %s240, 4
      %s242 = scalar_lea.vmem %s5, %s241
      %p243 = pneg %p175
      %p244 = pneg %p172
      %p245 = scmp.lt.s32.totalorder %s18, 1
      %s246 = scalar_select %p245, %s18, 1
      %s247 = smul.addr %s246, 2
      %s248 = scalar_lea.vmem %s6, %s247
      %p249 = scmp.lt.s32.totalorder %s18, 1
      %s250 = scalar_select %p249, %s18, 1
      %s251 = smul.addr %s250, 32
      %s252 = smul.addr %s251, 4
      %s253 = scalar_lea.vmem %s0, %s252
      %p254 = scmp.lt.s32.totalorder %s18, 1
      %s255 = scalar_select %p254, %s18, 1
      %s256 = smul.addr %s255, 32
      %s257 = smul.addr %s256, 4
      %s258 = scalar_lea.vmem %s5, %s257
      %p259 = scmp.lt.s32.totalorder %s18, 1
      %s260 = scalar_select %p259, %s18, 1
      %s261 = smul.addr %s260, 2
      %s262 = scalar_lea.vmem %s6, %s261
      %v264 = vld [vmem:[%s1] sm:$0x1]
      %v265 = vmul.f32 %v264, 0.001953125
      %v266 = vld [vmem:[%s1 + $0x1] sm:$0x1]
      %v267 = vmul.f32 %v266, 0.001953125
      %v268 = vmul.f32 %v265, %v265
      %v269 = vsub.f32 %v267, %v268
      %v270 = vmax.f32 %v269, 0.0
      %v271 = vadd.f32 %v270, 1e-05
      %v272 = vrsqrt.pop %v271
      %v273 = vld [vmem:[%s2] sm:$0x1]
      %v274 = vmul.f32 %v272, %v273
      %v275 = vld [vmem:[%s3] sm:$0x1]
      %v276 = vld [vmem:[%s253] sm:$0xf]
      %v277 = vld [vmem:[%s253 + $0x4] sm:$0xf]
      %v278 = vld [vmem:[%s253 + $0x8] sm:$0xf]
      %v279 = vld [vmem:[%s253 + $0xc] sm:$0xf]
      %v280 = vld [vmem:[%s253 + $0x10] sm:$0xf]
      %v281 = vld [vmem:[%s253 + $0x14] sm:$0xf]
      %v282 = vld [vmem:[%s253 + $0x18] sm:$0xf]
      %v283 = vld [vmem:[%s253 + $0x1c] sm:$0xf]
      %v284 = vld [vmem:[%s253 + $0x20] sm:$0xf]
      %v285 = vld [vmem:[%s253 + $0x24] sm:$0xf]
      %v286 = vld [vmem:[%s253 + $0x28] sm:$0xf]
      %v287 = vld [vmem:[%s253 + $0x2c] sm:$0xf]
      %v288 = vld [vmem:[%s253 + $0x30] sm:$0xf]
      %v289 = vld [vmem:[%s253 + $0x34] sm:$0xf]
      %v290 = vld [vmem:[%s253 + $0x38] sm:$0xf]
      %v291 = vld [vmem:[%s253 + $0x3c] sm:$0xf]
      %v292 = vld [vmem:[%s253 + $0x40] sm:$0xf]
      %v293 = vld [vmem:[%s253 + $0x44] sm:$0xf]
      %v294 = vld [vmem:[%s253 + $0x48] sm:$0xf]
      %v295 = vld [vmem:[%s253 + $0x4c] sm:$0xf]
      %v296 = vld [vmem:[%s253 + $0x50] sm:$0xf]
      %v297 = vld [vmem:[%s253 + $0x54] sm:$0xf]
      %v298 = vld [vmem:[%s253 + $0x58] sm:$0xf]
      %v299 = vld [vmem:[%s253 + $0x5c] sm:$0xf]
      %v300 = vld [vmem:[%s253 + $0x60] sm:$0xf]
      %v301 = vld [vmem:[%s253 + $0x64] sm:$0xf]
      %v302 = vld [vmem:[%s253 + $0x68] sm:$0xf]
      %v303 = vld [vmem:[%s253 + $0x6c] sm:$0xf]
      %v304 = vld [vmem:[%s253 + $0x70] sm:$0xf]
      %v305 = vld [vmem:[%s253 + $0x74] sm:$0xf]
      %v306 = vld [vmem:[%s253 + $0x78] sm:$0xf]
      %v307 = vld [vmem:[%s253 + $0x7c] sm:$0xf]
      %v308 = vunpack.c.l.bf16 %v276
      %v309 = vunpack.c.l.bf16 %v277
      %v310 = vunpack.c.l.bf16 %v278
      %v311 = vunpack.c.l.bf16 %v279
      %v312 = vunpack.c.l.bf16 %v280
      %v313 = vunpack.c.l.bf16 %v281
      %v314 = vunpack.c.l.bf16 %v282
      %v315 = vunpack.c.l.bf16 %v283
      %v316 = vunpack.c.l.bf16 %v284
      %v317 = vunpack.c.l.bf16 %v285
      %v318 = vunpack.c.l.bf16 %v286
      %v319 = vunpack.c.l.bf16 %v287
      %v320 = vunpack.c.l.bf16 %v288
      %v321 = vunpack.c.l.bf16 %v289
      %v322 = vunpack.c.l.bf16 %v290
      %v323 = vunpack.c.l.bf16 %v291
      %v324 = vunpack.c.l.bf16 %v292
      %v325 = vunpack.c.l.bf16 %v293
      %v326 = vunpack.c.l.bf16 %v294
      %v327 = vunpack.c.l.bf16 %v295
      %v328 = vunpack.c.l.bf16 %v296
      %v329 = vunpack.c.l.bf16 %v297
      %v330 = vunpack.c.l.bf16 %v298
      %v331 = vunpack.c.l.bf16 %v299
      %v332 = vunpack.c.l.bf16 %v300
      %v333 = vunpack.c.l.bf16 %v301
      %v334 = vunpack.c.l.bf16 %v302
      %v335 = vunpack.c.l.bf16 %v303
      %v336 = vunpack.c.l.bf16 %v304
      %v337 = vunpack.c.l.bf16 %v305
      %v338 = vunpack.c.l.bf16 %v306
      %v339 = vunpack.c.l.bf16 %v307
      %v340 = vlaneseq
      %v341 = vshrl.u32 %v340, 7
      %v342 = vsub.s32 0, %v341
      %v343 = vrot.slane %v265, %v342
      %v344 = vsub.f32 %v308, %v343
      %v345 = vsub.f32 %v309, %v343
      %v346 = vsub.f32 %v310, %v343
      %v347 = vsub.f32 %v311, %v343
      %v348 = vsub.f32 %v312, %v343
      %v349 = vsub.f32 %v313, %v343
      %v350 = vsub.f32 %v314, %v343
      %v351 = vsub.f32 %v315, %v343
      %v352 = vsub.f32 %v316, %v343
      %v353 = vsub.f32 %v317, %v343
      %v354 = vsub.f32 %v318, %v343
      %v355 = vsub.f32 %v319, %v343
      %v356 = vsub.f32 %v320, %v343
      %v357 = vsub.f32 %v321, %v343
      %v358 = vsub.f32 %v322, %v343
      %v359 = vsub.f32 %v323, %v343
      %v360 = vsub.f32 %v324, %v343
      %v361 = vsub.f32 %v325, %v343
      %v362 = vsub.f32 %v326, %v343
      %v363 = vsub.f32 %v327, %v343
      %v364 = vsub.f32 %v328, %v343
      %v365 = vsub.f32 %v329, %v343
      %v366 = vsub.f32 %v330, %v343
      %v367 = vsub.f32 %v331, %v343
      %v368 = vsub.f32 %v332, %v343
      %v369 = vsub.f32 %v333, %v343
      %v370 = vsub.f32 %v334, %v343
      %v371 = vsub.f32 %v335, %v343
      %v372 = vsub.f32 %v336, %v343
      %v373 = vsub.f32 %v337, %v343
      %v374 = vsub.f32 %v338, %v343
      %v375 = vsub.f32 %v339, %v343
      %v376 = vlaneseq
      %v377 = vshrl.u32 %v376, 7
      %v378 = vsub.s32 0, %v377
      %v379 = vrot.slane %v274, %v378
      %v380 = vmul.f32 %v344, %v379
      %v381 = vmul.f32 %v345, %v379
      %v382 = vmul.f32 %v346, %v379
      %v383 = vmul.f32 %v347, %v379
      %v384 = vmul.f32 %v348, %v379
      %v385 = vmul.f32 %v349, %v379
      %v386 = vmul.f32 %v350, %v379
      %v387 = vmul.f32 %v351, %v379
      %v388 = vmul.f32 %v352, %v379
      %v389 = vmul.f32 %v353, %v379
      %v390 = vmul.f32 %v354, %v379
      %v391 = vmul.f32 %v355, %v379
      %v392 = vmul.f32 %v356, %v379
      %v393 = vmul.f32 %v357, %v379
      %v394 = vmul.f32 %v358, %v379
      %v395 = vmul.f32 %v359, %v379
      %v396 = vmul.f32 %v360, %v379
      %v397 = vmul.f32 %v361, %v379
      %v398 = vmul.f32 %v362, %v379
      %v399 = vmul.f32 %v363, %v379
      %v400 = vmul.f32 %v364, %v379
      %v401 = vmul.f32 %v365, %v379
      %v402 = vmul.f32 %v366, %v379
      %v403 = vmul.f32 %v367, %v379
      %v404 = vmul.f32 %v368, %v379
      %v405 = vmul.f32 %v369, %v379
      %v406 = vmul.f32 %v370, %v379
      %v407 = vmul.f32 %v371, %v379
      %v408 = vmul.f32 %v372, %v379
      %v409 = vmul.f32 %v373, %v379
      %v410 = vmul.f32 %v374, %v379
      %v411 = vmul.f32 %v375, %v379
      %v413 = vlaneseq
      %v414 = vshrl.u32 %v413, 7
      %v415 = vsub.s32 0, %v414
      %v416 = vrot.slane %v275, %v415
      %v418 = vadd.f32 %v380, %v416
      %v419 = vadd.f32 %v381, %v416
      %v420 = vadd.f32 %v382, %v416
      %v421 = vadd.f32 %v383, %v416
      %v422 = vadd.f32 %v384, %v416
      %v423 = vadd.f32 %v385, %v416
      %v424 = vadd.f32 %v386, %v416
      %v425 = vadd.f32 %v387, %v416
      %v426 = vadd.f32 %v388, %v416
      %v427 = vadd.f32 %v389, %v416
      %v428 = vadd.f32 %v390, %v416
      %v429 = vadd.f32 %v391, %v416
      %v430 = vadd.f32 %v392, %v416
      %v431 = vadd.f32 %v393, %v416
      %v432 = vadd.f32 %v394, %v416
      %v433 = vadd.f32 %v395, %v416
      %v434 = vadd.f32 %v396, %v416
      %v435 = vadd.f32 %v397, %v416
      %v436 = vadd.f32 %v398, %v416
      %v437 = vadd.f32 %v399, %v416
      %v438 = vadd.f32 %v400, %v416
      %v439 = vadd.f32 %v401, %v416
      %v440 = vadd.f32 %v402, %v416
      %v441 = vadd.f32 %v403, %v416
      %v442 = vadd.f32 %v404, %v416
      %v443 = vadd.f32 %v405, %v416
      %v444 = vadd.f32 %v406, %v416
      %v445 = vadd.f32 %v407, %v416
      %v446 = vadd.f32 %v408, %v416
      %v447 = vadd.f32 %v409, %v416
      %v448 = vadd.f32 %v410, %v416
      %v449 = vadd.f32 %v411, %v416
      %v450 = vmax.f32 %v418, 0.0
      %v451 = vmax.f32 %v419, 0.0
      %v452 = vmax.f32 %v420, 0.0
      %v453 = vmax.f32 %v421, 0.0
      %v454 = vmax.f32 %v422, 0.0
      %v455 = vmax.f32 %v423, 0.0
      %v456 = vmax.f32 %v424, 0.0
      %v457 = vmax.f32 %v425, 0.0
      %v458 = vmax.f32 %v426, 0.0
      %v459 = vmax.f32 %v427, 0.0
      %v460 = vmax.f32 %v428, 0.0
      %v461 = vmax.f32 %v429, 0.0
      %v462 = vmax.f32 %v430, 0.0
      %v463 = vmax.f32 %v431, 0.0
      %v464 = vmax.f32 %v432, 0.0
      %v465 = vmax.f32 %v433, 0.0
      %v466 = vmax.f32 %v434, 0.0
      %v467 = vmax.f32 %v435, 0.0
      %v468 = vmax.f32 %v436, 0.0
      %v469 = vmax.f32 %v437, 0.0
      %v470 = vmax.f32 %v438, 0.0
      %v471 = vmax.f32 %v439, 0.0
      %v472 = vmax.f32 %v440, 0.0
      %v473 = vmax.f32 %v441, 0.0
      %v474 = vmax.f32 %v442, 0.0
      %v475 = vmax.f32 %v443, 0.0
      %v476 = vmax.f32 %v444, 0.0
      %v477 = vmax.f32 %v445, 0.0
      %v478 = vmax.f32 %v446, 0.0
      %v479 = vmax.f32 %v447, 0.0
      %v480 = vmax.f32 %v448, 0.0
      %v481 = vmax.f32 %v449, 0.0
      %482 = vst [vmem:[#allocation2] sm:$0xf] 0
      %483 = vst [vmem:[#allocation2 + $0x4] sm:$0xf] 0
      %484 = vst [vmem:[#allocation2 + $0x8] sm:$0x1] 0
      %485 = vst [vmem:[#allocation2 + $0xc] sm:$0xf] 0
      %486 = vst [vmem:[#allocation2 + $0x10] sm:$0xf] 0
      %487 = vst [vmem:[#allocation2 + $0x14] sm:$0x1] 0
      %488 = vst [vmem:[#allocation2 + $0x18] sm:$0xf] 0
      %489 = vst [vmem:[#allocation2 + $0x1c] sm:$0xf] 0
      %490 = vst [vmem:[#allocation2 + $0x20] sm:$0x1] 0
      %491 = vst [vmem:[#allocation2 + $0x24] sm:$0xf] 0
      %492 = vst [vmem:[#allocation2 + $0x28] sm:$0xf] 0
      %493 = vst [vmem:[#allocation2 + $0x2c] sm:$0x1] 0
      %494 = vst [vmem:[#allocation2 + $0x30] sm:$0xf] 0
      %495 = vst [vmem:[#allocation2 + $0x34] sm:$0xf] 0
      %496 = vst [vmem:[#allocation2 + $0x38] sm:$0x1] 0
      %497 = vst [vmem:[#allocation2 + $0x3c] sm:$0xf] 0
      %498 = vst [vmem:[#allocation2 + $0x40] sm:$0xf] 0
      %499 = vst [vmem:[#allocation2 + $0x44] sm:$0x1] 0
      %500 = vst [vmem:[#allocation2 + $0x48] sm:$0xf] 0
      %501 = vst [vmem:[#allocation2 + $0x4c] sm:$0xf] 0
      %502 = vst [vmem:[#allocation2 + $0x50] sm:$0x1] 0
      %503 = vst [vmem:[#allocation2 + $0x54] sm:$0xf] 0
      %504 = vst [vmem:[#allocation2 + $0x58] sm:$0xf] 0
      %505 = vst [vmem:[#allocation2 + $0x5c] sm:$0x1] 0
      %506 = vst [vmem:[#allocation2 + $0x60] sm:$0xf] 0
      %507 = vst [vmem:[#allocation2 + $0x64] sm:$0xf] 0
      %508 = vst [vmem:[#allocation2 + $0x68] sm:$0x1] 0
      %509 = vst [vmem:[#allocation2 + $0x6c] sm:$0xf] 0
      %510 = vst [vmem:[#allocation2 + $0x70] sm:$0xf] 0
      %511 = vst [vmem:[#allocation2 + $0x74] sm:$0x1] 0
      %512 = vst [vmem:[#allocation2 + $0x78] sm:$0xf] 0
      %513 = vst [vmem:[#allocation2 + $0x7c] sm:$0xf] 0
      %514 = vst [vmem:[#allocation2 + $0x80] sm:$0x1] 0
      %515 = vst [vmem:[#allocation2 + $0x84] sm:$0xf] 0
      %516 = vst [vmem:[#allocation2 + $0x88] sm:$0xf] 0
      %517 = vst [vmem:[#allocation2 + $0x8c] sm:$0x1] 0
      %518 = vst [vmem:[#allocation2 + $0x90] sm:$0xf] 0
      %519 = vst [vmem:[#allocation2 + $0x94] sm:$0xf] 0
      %520 = vst [vmem:[#allocation2 + $0x98] sm:$0x1] 0
      %521 = vst [vmem:[#allocation2 + $0x9c] sm:$0xf] 0
      %522 = vst [vmem:[#allocation2 + $0xa0] sm:$0xf] 0
      %523 = vst [vmem:[#allocation2 + $0xa4] sm:$0x1] 0
      %524 = vst [vmem:[#allocation2 + $0xa8] sm:$0xf] 0
      %525 = vst [vmem:[#allocation2 + $0xac] sm:$0xf] 0
      %526 = vst [vmem:[#allocation2 + $0xb0] sm:$0x1] 0
      %527 = vst [vmem:[#allocation2 + $0xb4] sm:$0xf] 0
      %528 = vst [vmem:[#allocation2 + $0xb8] sm:$0xf] 0
      %529 = vst [vmem:[#allocation2 + $0xbc] sm:$0x1] 0
      %530 = vst [vmem:[#allocation2 + $0xc0] sm:$0xf] 0
      %531 = vst [vmem:[#allocation2 + $0xc4] sm:$0xf] 0
      %532 = vst [vmem:[#allocation2 + $0xc8] sm:$0x1] 0
      %533 = vst [vmem:[#allocation2 + $0xcc] sm:$0xf] 0
      %534 = vst [vmem:[#allocation2 + $0xd0] sm:$0xf] 0
      %535 = vst [vmem:[#allocation2 + $0xd4] sm:$0x1] 0
      %v536 = vpack.c.bf16 %v451, %v450
      %v537 = vpack.c.bf16 %v453, %v452
      %v538 = vpack.c.bf16 %v455, %v454
      %v539 = vpack.c.bf16 %v457, %v456
      %v540 = vpack.c.bf16 %v459, %v458
      %v541 = vpack.c.bf16 %v461, %v460
      %v542 = vpack.c.bf16 %v463, %v462
      %v543 = vpack.c.bf16 %v465, %v464
      %v544 = vpack.c.bf16 %v467, %v466
      %v545 = vpack.c.bf16 %v469, %v468
      %v546 = vpack.c.bf16 %v471, %v470
      %v547 = vpack.c.bf16 %v473, %v472
      %v548 = vpack.c.bf16 %v475, %v474
      %v549 = vpack.c.bf16 %v477, %v476
      %v550 = vpack.c.bf16 %v479, %v478
      %v551 = vpack.c.bf16 %v481, %v480
      %v568 = vunpack.c.l.b16 %v536
      %v569 = vunpack.c.h.b16 %v536
      %v570 = vunpack.c.l.b16 %v537
      %v571 = vunpack.c.h.b16 %v537
      %v572 = vunpack.c.l.b16 %v538
      %v573 = vunpack.c.h.b16 %v538
      %v574 = vunpack.c.l.b16 %v539
      %v575 = vunpack.c.h.b16 %v539
      %v576 = vunpack.c.l.b16 %v540
      %v577 = vunpack.c.h.b16 %v540
      %v578 = vunpack.c.l.b16 %v541
      %v579 = vunpack.c.h.b16 %v541
      %v580 = vunpack.c.l.b16 %v542
      %v581 = vunpack.c.h.b16 %v542
      %v582 = vunpack.c.l.b16 %v543
      %v583 = vunpack.c.h.b16 %v543
      %v584 = vunpack.c.l.b16 %v544
      %v585 = vunpack.c.h.b16 %v544
      %v586 = vunpack.c.l.b16 %v545
      %v587 = vunpack.c.h.b16 %v545
      %v588 = vunpack.c.l.b16 %v546
      %v589 = vunpack.c.h.b16 %v546
      %v590 = vunpack.c.l.b16 %v547
      %v591 = vunpack.c.h.b16 %v547
      %v592 = vunpack.c.l.b16 %v548
      %v593 = vunpack.c.h.b16 %v548
      %v594 = vunpack.c.l.b16 %v549
      %v595 = vunpack.c.h.b16 %v549
      %v596 = vunpack.c.l.b16 %v550
      %v597 = vunpack.c.h.b16 %v550
      %v598 = vunpack.c.l.b16 %v551
      %v599 = vunpack.c.h.b16 %v551
      %v600 = vpack.c.b16 %v568, %v568
      %v601 = vpack.c.b16 %v569, %v569
      %v602 = vpack.c.b16 %v570, %v570
      %v603 = vpack.c.b16 %v571, %v571
      %v604 = vpack.c.b16 %v572, %v572
      %v605 = vpack.c.b16 %v573, %v573
      %v606 = vpack.c.b16 %v574, %v574
      %v607 = vpack.c.b16 %v575, %v575
      %v608 = vpack.c.b16 %v576, %v576
      %v609 = vpack.c.b16 %v577, %v577
      %v610 = vpack.c.b16 %v578, %v578
      %v611 = vpack.c.b16 %v579, %v579
      %v612 = vpack.c.b16 %v580, %v580
      %v613 = vpack.c.b16 %v581, %v581
      %v614 = vpack.c.b16 %v582, %v582
      %v615 = vpack.c.b16 %v583, %v583
      %v616 = vpack.c.b16 %v584, %v584
      %v617 = vpack.c.b16 %v585, %v585
      %v618 = vpack.c.b16 %v586, %v586
      %v619 = vpack.c.b16 %v587, %v587
      %v620 = vpack.c.b16 %v588, %v588
      %v621 = vpack.c.b16 %v589, %v589
      %v622 = vpack.c.b16 %v590, %v590
      %v623 = vpack.c.b16 %v591, %v591
      %v624 = vpack.c.b16 %v592, %v592
      %v625 = vpack.c.b16 %v593, %v593
      %v626 = vpack.c.b16 %v594, %v594
      %v627 = vpack.c.b16 %v595, %v595
      %v628 = vpack.c.b16 %v596, %v596
      %v629 = vpack.c.b16 %v597, %v597
      %v630 = vpack.c.b16 %v598, %v598
      %v631 = vpack.c.b16 %v599, %v599
      %vm632 = vsmask.f32 256
      %vm633 = vsmask.f32 4368
      %vm634 = vmor %vm632, %vm633
      %v636 = vshrl.u32 %v600, 16
      %v638 = vrot.slane %v636, 7
      %v639 = vshll.u32 %v600, 16
      %v641 = vor.u32 %v638, %v639
      %v642 = vrot.slane %v638, 4
      %v644 = vshrl.u32 %v601, 16
      %v646 = vrot.slane %v644, 7
      %v647 = vshll.u32 %v601, 16
      %v649 = vor.u32 %v646, %v647
      %v650 = vsel %vm634, %v642, %v649
      %v651 = vrot.slane %v646, 4
      %v653 = vshrl.u32 %v602, 16
      %v655 = vrot.slane %v653, 7
      %v656 = vshll.u32 %v602, 16
      %v658 = vor.u32 %v655, %v656
      %v659 = vrot.slane %v655, 4
      %v661 = vshrl.u32 %v603, 16
      %v663 = vrot.slane %v661, 7
      %v664 = vshll.u32 %v603, 16
      %v666 = vor.u32 %v663, %v664
      %v667 = vsel %vm634, %v659, %v666
      %v668 = vrot.slane %v663, 4
      %v670 = vshrl.u32 %v604, 16
      %v672 = vrot.slane %v670, 7
      %v673 = vshll.u32 %v604, 16
      %v675 = vor.u32 %v672, %v673
      %v676 = vrot.slane %v672, 4
      %v678 = vshrl.u32 %v605, 16
      %v680 = vrot.slane %v678, 7
      %v681 = vshll.u32 %v605, 16
      %v683 = vor.u32 %v680, %v681
      %v684 = vsel %vm634, %v676, %v683
      %v685 = vrot.slane %v680, 4
      %v687 = vshrl.u32 %v606, 16
      %v689 = vrot.slane %v687, 7
      %v690 = vshll.u32 %v606, 16
      %v692 = vor.u32 %v689, %v690
      %v693 = vrot.slane %v689, 4
      %v695 = vshrl.u32 %v607, 16
      %v697 = vrot.slane %v695, 7
      %v698 = vshll.u32 %v607, 16
      %v700 = vor.u32 %v697, %v698
      %v701 = vsel %vm634, %v693, %v700
      %v702 = vrot.slane %v697, 4
      %v704 = vshrl.u32 %v608, 16
      %v706 = vrot.slane %v704, 7
      %v707 = vshll.u32 %v608, 16
      %v709 = vor.u32 %v706, %v707
      %v710 = vrot.slane %v706, 4
      %v712 = vshrl.u32 %v609, 16
      %v714 = vrot.slane %v712, 7
      %v715 = vshll.u32 %v609, 16
      %v717 = vor.u32 %v714, %v715
      %v718 = vsel %vm634, %v710, %v717
      %v719 = vrot.slane %v714, 4
      %v721 = vshrl.u32 %v610, 16
      %v723 = vrot.slane %v721, 7
      %v724 = vshll.u32 %v610, 16
      %v726 = vor.u32 %v723, %v724
      %v727 = vrot.slane %v723, 4
      %v729 = vshrl.u32 %v611, 16
      %v731 = vrot.slane %v729, 7
      %v732 = vshll.u32 %v611, 16
      %v734 = vor.u32 %v731, %v732
      %v735 = vsel %vm634, %v727, %v734
      %v736 = vrot.slane %v731, 4
      %v738 = vshrl.u32 %v612, 16
      %v740 = vrot.slane %v738, 7
      %v741 = vshll.u32 %v612, 16
      %v743 = vor.u32 %v740, %v741
      %v744 = vrot.slane %v740, 4
      %v746 = vshrl.u32 %v613, 16
      %v748 = vrot.slane %v746, 7
      %v749 = vshll.u32 %v613, 16
      %v751 = vor.u32 %v748, %v749
      %v752 = vsel %vm634, %v744, %v751
      %v753 = vrot.slane %v748, 4
      %v755 = vshrl.u32 %v614, 16
      %v757 = vrot.slane %v755, 7
      %v758 = vshll.u32 %v614, 16
      %v760 = vor.u32 %v757, %v758
      %v761 = vrot.slane %v757, 4
      %v763 = vshrl.u32 %v615, 16
      %v765 = vrot.slane %v763, 7
      %v766 = vshll.u32 %v615, 16
      %v768 = vor.u32 %v765, %v766
      %v769 = vsel %vm634, %v761, %v768
      %v770 = vrot.slane %v765, 4
      %v772 = vshrl.u32 %v616, 16
      %v774 = vrot.slane %v772, 7
      %v775 = vshll.u32 %v616, 16
      %v777 = vor.u32 %v774, %v775
      %v778 = vrot.slane %v774, 4
      %v780 = vshrl.u32 %v617, 16
      %v782 = vrot.slane %v780, 7
      %v783 = vshll.u32 %v617, 16
      %v785 = vor.u32 %v782, %v783
      %v786 = vsel %vm634, %v778, %v785
      %v787 = vrot.slane %v782, 4
      %v789 = vshrl.u32 %v618, 16
      %v791 = vrot.slane %v789, 7
      %v792 = vshll.u32 %v618, 16
      %v794 = vor.u32 %v791, %v792
      %v795 = vrot.slane %v791, 4
      %v797 = vshrl.u32 %v619, 16
      %v799 = vrot.slane %v797, 7
      %v800 = vshll.u32 %v619, 16
      %v802 = vor.u32 %v799, %v800
      %v803 = vsel %vm634, %v795, %v802
      %v804 = vrot.slane %v799, 4
      %v806 = vshrl.u32 %v620, 16
      %v808 = vrot.slane %v806, 7
      %v809 = vshll.u32 %v620, 16
      %v811 = vor.u32 %v808, %v809
      %v812 = vrot.slane %v808, 4
      %v814 = vshrl.u32 %v621, 16
      %v816 = vrot.slane %v814, 7
      %v817 = vshll.u32 %v621, 16
      %v819 = vor.u32 %v816, %v817
      %v820 = vsel %vm634, %v812, %v819
      %v821 = vrot.slane %v816, 4
      %v823 = vshrl.u32 %v622, 16
      %v825 = vrot.slane %v823, 7
      %v826 = vshll.u32 %v622, 16
      %v828 = vor.u32 %v825, %v826
      %v829 = vrot.slane %v825, 4
      %v831 = vshrl.u32 %v623, 16
      %v833 = vrot.slane %v831, 7
      %v834 = vshll.u32 %v623, 16
      %v836 = vor.u32 %v833, %v834
      %v837 = vsel %vm634, %v829, %v836
      %v838 = vrot.slane %v833, 4
      %v840 = vshrl.u32 %v624, 16
      %v842 = vrot.slane %v840, 7
      %v843 = vshll.u32 %v624, 16
      %v845 = vor.u32 %v842, %v843
      %v846 = vrot.slane %v842, 4
      %v848 = vshrl.u32 %v625, 16
      %v850 = vrot.slane %v848, 7
      %v851 = vshll.u32 %v625, 16
      %v853 = vor.u32 %v850, %v851
      %v854 = vsel %vm634, %v846, %v853
      %v855 = vrot.slane %v850, 4
      %v857 = vshrl.u32 %v626, 16
      %v859 = vrot.slane %v857, 7
      %v860 = vshll.u32 %v626, 16
      %v862 = vor.u32 %v859, %v860
      %v863 = vrot.slane %v859, 4
      %v865 = vshrl.u32 %v627, 16
      %v867 = vrot.slane %v865, 7
      %v868 = vshll.u32 %v627, 16
      %v870 = vor.u32 %v867, %v868
      %v871 = vsel %vm634, %v863, %v870
      %v872 = vrot.slane %v867, 4
      %v874 = vshrl.u32 %v628, 16
      %v876 = vrot.slane %v874, 7
      %v877 = vshll.u32 %v628, 16
      %v879 = vor.u32 %v876, %v877
      %v880 = vrot.slane %v876, 4
      %v882 = vshrl.u32 %v629, 16
      %v884 = vrot.slane %v882, 7
      %v885 = vshll.u32 %v629, 16
      %v887 = vor.u32 %v884, %v885
      %v888 = vsel %vm634, %v880, %v887
      %v889 = vrot.slane %v884, 4
      %v891 = vshrl.u32 %v630, 16
      %v893 = vrot.slane %v891, 7
      %v894 = vshll.u32 %v630, 16
      %v896 = vor.u32 %v893, %v894
      %v897 = vrot.slane %v893, 4
      %v899 = vshrl.u32 %v631, 16
      %v901 = vrot.slane %v899, 7
      %v902 = vshll.u32 %v631, 16
      %v904 = vor.u32 %v901, %v902
      %v905 = vsel %vm634, %v897, %v904
      %v906 = vrot.slane %v901, 4
      %s955 = scalar_lea.vmem [#allocation2], 12
      %vm956 = vcmask 1043456
      %vm957 = vsmask.f32 7938
      %vm958 = vmand %vm956, %vm957
      %v959 = vld [vmem:[%s955] sm:$0xf]
      %v960 = vsel %vm958, %v641, %v959
      %961 = vst [vmem:[%s955] sm:$0xf] %v960
      %962 = vst [vmem:[%s955 + $0x4] sm:$0xf] %v650
      %vm963 = vcmask 1040384
      %vm964 = vmand %vm963, %vm632
      %v965 = vld [vmem:[%s955 + $0x8] sm:$0x1]
      %v966 = vsel %vm964, %v651, %v965
      %967 = vst [vmem:[%s955 + $0x8] sm:$0x1] %v966
      %v968 = vld [vmem:[%s955 + $0xc] sm:$0xf]
      %v969 = vsel %vm958, %v658, %v968
      %970 = vst [vmem:[%s955 + $0xc] sm:$0xf] %v969
      %971 = vst [vmem:[%s955 + $0x10] sm:$0xf] %v667
      %v972 = vld [vmem:[%s955 + $0x14] sm:$0x1]
      %v973 = vsel %vm964, %v668, %v972
      %974 = vst [vmem:[%s955 + $0x14] sm:$0x1] %v973
      %v975 = vld [vmem:[%s955 + $0x18] sm:$0xf]
      %v976 = vsel %vm958, %v675, %v975
      %977 = vst [vmem:[%s955 + $0x18] sm:$0xf] %v976
      %978 = vst [vmem:[%s955 + $0x1c] sm:$0xf] %v684
      %v979 = vld [vmem:[%s955 + $0x20] sm:$0x1]
      %v980 = vsel %vm964, %v685, %v979
      %981 = vst [vmem:[%s955 + $0x20] sm:$0x1] %v980
      %v982 = vld [vmem:[%s955 + $0x24] sm:$0xf]
      %v983 = vsel %vm958, %v692, %v982
      %984 = vst [vmem:[%s955 + $0x24] sm:$0xf] %v983
      %985 = vst [vmem:[%s955 + $0x28] sm:$0xf] %v701
      %v986 = vld [vmem:[%s955 + $0x2c] sm:$0x1]
      %v987 = vsel %vm964, %v702, %v986
      %988 = vst [vmem:[%s955 + $0x2c] sm:$0x1] %v987
      %v989 = vld [vmem:[%s955 + $0x30] sm:$0xf]
      %v990 = vsel %vm958, %v709, %v989
      %991 = vst [vmem:[%s955 + $0x30] sm:$0xf] %v990
      %992 = vst [vmem:[%s955 + $0x34] sm:$0xf] %v718
      %v993 = vld [vmem:[%s955 + $0x38] sm:$0x1]
      %v994 = vsel %vm964, %v719, %v993
      %995 = vst [vmem:[%s955 + $0x38] sm:$0x1] %v994
      %v996 = vld [vmem:[%s955 + $0x3c] sm:$0xf]
      %v997 = vsel %vm958, %v726, %v996
      %998 = vst [vmem:[%s955 + $0x3c] sm:$0xf] %v997
      %999 = vst [vmem:[%s955 + $0x40] sm:$0xf] %v735
      %v1000 = vld [vmem:[%s955 + $0x44] sm:$0x1]
      %v1001 = vsel %vm964, %v736, %v1000
      %1002 = vst [vmem:[%s955 + $0x44] sm:$0x1] %v1001
      %v1003 = vld [vmem:[%s955 + $0x48] sm:$0xf]
      %v1004 = vsel %vm958, %v743, %v1003
      %1005 = vst [vmem:[%s955 + $0x48] sm:$0xf] %v1004
      %1006 = vst [vmem:[%s955 + $0x4c] sm:$0xf] %v752
      %v1007 = vld [vmem:[%s955 + $0x50] sm:$0x1]
      %v1008 = vsel %vm964, %v753, %v1007
      %1009 = vst [vmem:[%s955 + $0x50] sm:$0x1] %v1008
      %v1010 = vld [vmem:[%s955 + $0x54] sm:$0xf]
      %v1011 = vsel %vm958, %v760, %v1010
      %1012 = vst [vmem:[%s955 + $0x54] sm:$0xf] %v1011
      %1013 = vst [vmem:[%s955 + $0x58] sm:$0xf] %v769
      %v1014 = vld [vmem:[%s955 + $0x5c] sm:$0x1]
      %v1015 = vsel %vm964, %v770, %v1014
      %1016 = vst [vmem:[%s955 + $0x5c] sm:$0x1] %v1015
      %v1017 = vld [vmem:[%s955 + $0x60] sm:$0xf]
      %v1018 = vsel %vm958, %v777, %v1017
      %1019 = vst [vmem:[%s955 + $0x60] sm:$0xf] %v1018
      %1020 = vst [vmem:[%s955 + $0x64] sm:$0xf] %v786
      %v1021 = vld [vmem:[%s955 + $0x68] sm:$0x1]
      %v1022 = vsel %vm964, %v787, %v1021
      %1023 = vst [vmem:[%s955 + $0x68] sm:$0x1] %v1022
      %v1024 = vld [vmem:[%s955 + $0x6c] sm:$0xf]
      %v1025 = vsel %vm958, %v794, %v1024
      %1026 = vst [vmem:[%s955 + $0x6c] sm:$0xf] %v1025
      %1027 = vst [vmem:[%s955 + $0x70] sm:$0xf] %v803
      %v1028 = vld [vmem:[%s955 + $0x74] sm:$0x1]
      %v1029 = vsel %vm964, %v804, %v1028
      %1030 = vst [vmem:[%s955 + $0x74] sm:$0x1] %v1029
      %v1031 = vld [vmem:[%s955 + $0x78] sm:$0xf]
      %v1032 = vsel %vm958, %v811, %v1031
      %1033 = vst [vmem:[%s955 + $0x78] sm:$0xf] %v1032
      %1034 = vst [vmem:[%s955 + $0x7c] sm:$0xf] %v820
      %v1035 = vld [vmem:[%s955 + $0x80] sm:$0x1]
      %v1036 = vsel %vm964, %v821, %v1035
      %1037 = vst [vmem:[%s955 + $0x80] sm:$0x1] %v1036
      %v1038 = vld [vmem:[%s955 + $0x84] sm:$0xf]
      %v1039 = vsel %vm958, %v828, %v1038
      %1040 = vst [vmem:[%s955 + $0x84] sm:$0xf] %v1039
      %1041 = vst [vmem:[%s955 + $0x88] sm:$0xf] %v837
      %v1042 = vld [vmem:[%s955 + $0x8c] sm:$0x1]
      %v1043 = vsel %vm964, %v838, %v1042
      %1044 = vst [vmem:[%s955 + $0x8c] sm:$0x1] %v1043
      %v1045 = vld [vmem:[%s955 + $0x90] sm:$0xf]
      %v1046 = vsel %vm958, %v845, %v1045
      %1047 = vst [vmem:[%s955 + $0x90] sm:$0xf] %v1046
      %1048 = vst [vmem:[%s955 + $0x94] sm:$0xf] %v854
      %v1049 = vld [vmem:[%s955 + $0x98] sm:$0x1]
      %v1050 = vsel %vm964, %v855, %v1049
      %1051 = vst [vmem:[%s955 + $0x98] sm:$0x1] %v1050
      %v1052 = vld [vmem:[%s955 + $0x9c] sm:$0xf]
      %v1053 = vsel %vm958, %v862, %v1052
      %1054 = vst [vmem:[%s955 + $0x9c] sm:$0xf] %v1053
      %1055 = vst [vmem:[%s955 + $0xa0] sm:$0xf] %v871
      %v1056 = vld [vmem:[%s955 + $0xa4] sm:$0x1]
      %v1057 = vsel %vm964, %v872, %v1056
      %1058 = vst [vmem:[%s955 + $0xa4] sm:$0x1] %v1057
      %v1059 = vld [vmem:[%s955 + $0xa8] sm:$0xf]
      %v1060 = vsel %vm958, %v879, %v1059
      %1061 = vst [vmem:[%s955 + $0xa8] sm:$0xf] %v1060
      %1062 = vst [vmem:[%s955 + $0xac] sm:$0xf] %v888
      %v1063 = vld [vmem:[%s955 + $0xb0] sm:$0x1]
      %v1064 = vsel %vm964, %v889, %v1063
      %1065 = vst [vmem:[%s955 + $0xb0] sm:$0x1] %v1064
      %v1066 = vld [vmem:[%s955 + $0xb4] sm:$0xf]
      %v1067 = vsel %vm958, %v896, %v1066
      %1068 = vst [vmem:[%s955 + $0xb4] sm:$0xf] %v1067
      %1069 = vst [vmem:[%s955 + $0xb8] sm:$0xf] %v905
      %v1070 = vld [vmem:[%s955 + $0xbc] sm:$0x1]
      %v1071 = vsel %vm964, %v906, %v1070
      %1072 = vst [vmem:[%s955 + $0xbc] sm:$0x1] %v1071
      %v1073 = vld [vmem:[#allocation2] sm:$0xf]
      %v1074 = vld [vmem:[#allocation2 + $0x4] sm:$0xf]
      %v1075 = vld [vmem:[#allocation2 + $0x8] sm:$0x1]
      %v1076 = vld [vmem:[#allocation2 + $0xc] sm:$0xf]
      %v1077 = vld [vmem:[#allocation2 + $0x10] sm:$0xf]
      %v1078 = vld [vmem:[#allocation2 + $0x14] sm:$0x1]
      %v1079 = vld [vmem:[#allocation2 + $0x18] sm:$0xf]
      %v1080 = vld [vmem:[#allocation2 + $0x1c] sm:$0xf]
      %v1081 = vld [vmem:[#allocation2 + $0x20] sm:$0x1]
      %v1082 = vld [vmem:[#allocation2 + $0x24] sm:$0xf]
      %v1083 = vld [vmem:[#allocation2 + $0x28] sm:$0xf]
      %v1084 = vld [vmem:[#allocation2 + $0x2c] sm:$0x1]
      %v1085 = vld [vmem:[#allocation2 + $0x30] sm:$0xf]
      %v1086 = vld [vmem:[#allocation2 + $0x34] sm:$0xf]
      %v1087 = vld [vmem:[#allocation2 + $0x38] sm:$0x1]
      %v1088 = vld [vmem:[#allocation2 + $0x3c] sm:$0xf]
      %v1089 = vld [vmem:[#allocation2 + $0x40] sm:$0xf]
      %v1090 = vld [vmem:[#allocation2 + $0x44] sm:$0x1]
      %v1091 = vld [vmem:[#allocation2 + $0x48] sm:$0xf]
      %v1092 = vld [vmem:[#allocation2 + $0x4c] sm:$0xf]
      %v1093 = vld [vmem:[#allocation2 + $0x50] sm:$0x1]
      %v1094 = vld [vmem:[#allocation2 + $0x54] sm:$0xf]
      %v1095 = vld [vmem:[#allocation2 + $0x58] sm:$0xf]
      %v1096 = vld [vmem:[#allocation2 + $0x5c] sm:$0x1]
      %v1097 = vld [vmem:[#allocation2 + $0x60] sm:$0xf]
      %v1098 = vld [vmem:[#allocation2 + $0x64] sm:$0xf]
      %v1099 = vld [vmem:[#allocation2 + $0x68] sm:$0x1]
      %v1100 = vld [vmem:[#allocation2 + $0x6c] sm:$0xf]
      %v1101 = vld [vmem:[#allocation2 + $0x70] sm:$0xf]
      %v1102 = vld [vmem:[#allocation2 + $0x74] sm:$0x1]
      %v1103 = vld [vmem:[#allocation2 + $0x78] sm:$0xf]
      %v1104 = vld [vmem:[#allocation2 + $0x7c] sm:$0xf]
      %v1105 = vld [vmem:[#allocation2 + $0x80] sm:$0x1]
      %v1106 = vld [vmem:[#allocation2 + $0x84] sm:$0xf]
      %v1107 = vld [vmem:[#allocation2 + $0x88] sm:$0xf]
      %v1108 = vld [vmem:[#allocation2 + $0x8c] sm:$0x1]
      %v1109 = vld [vmem:[#allocation2 + $0x90] sm:$0xf]
      %v1110 = vld [vmem:[#allocation2 + $0x94] sm:$0xf]
      %v1111 = vld [vmem:[#allocation2 + $0x98] sm:$0x1]
      %v1112 = vld [vmem:[#allocation2 + $0x9c] sm:$0xf]
      %v1113 = vld [vmem:[#allocation2 + $0xa0] sm:$0xf]
      %v1114 = vld [vmem:[#allocation2 + $0xa4] sm:$0x1]
      %v1115 = vld [vmem:[#allocation2 + $0xa8] sm:$0xf]
      %v1116 = vld [vmem:[#allocation2 + $0xac] sm:$0xf]
      %v1117 = vld [vmem:[#allocation2 + $0xb0] sm:$0x1]
      %v1118 = vld [vmem:[#allocation2 + $0xb4] sm:$0xf]
      %v1119 = vld [vmem:[#allocation2 + $0xb8] sm:$0xf]
      %v1120 = vld [vmem:[#allocation2 + $0xbc] sm:$0x1]
      %v1121 = vld [vmem:[#allocation2 + $0xc0] sm:$0xf]
      %v1122 = vld [vmem:[#allocation2 + $0xc4] sm:$0xf]
      %v1123 = vld [vmem:[#allocation2 + $0xc8] sm:$0x1]
      %v1124 = vld [vmem:[#allocation2 + $0xcc] sm:$0xf]
      %v1125 = vld [vmem:[#allocation2 + $0xd0] sm:$0xf]
      %v1126 = vld [vmem:[#allocation2 + $0xd4] sm:$0x1]
      %v1127 = vld [vmem:[%s4] sm:$0xf]
      %v1128 = vld [vmem:[%s4 + $0x4] sm:$0xf]
      %v1129 = vld [vmem:[%s4 + $0x8] sm:$0xf]
      %v1130 = vld [vmem:[%s4 + $0xc] sm:$0xf]
      %v1131 = vld [vmem:[%s4 + $0x10] sm:$0xf]
      %v1132 = vld [vmem:[%s4 + $0x14] sm:$0xf]
      %v1133 = vld [vmem:[%s4 + $0x18] sm:$0xf]
      %v1134 = vld [vmem:[%s4 + $0x1c] sm:$0xf]
      %v1135 = vld [vmem:[%s4 + $0x20] sm:$0xf]
      %v1136 = vld [vmem:[%s4 + $0x24] sm:$0xf]
      %v1137 = vld [vmem:[%s4 + $0x28] sm:$0xf]
      %v1138 = vld [vmem:[%s4 + $0x2c] sm:$0xf]
      %v1139 = vld [vmem:[%s4 + $0x30] sm:$0xf]
      %v1140 = vld [vmem:[%s4 + $0x34] sm:$0xf]
      %v1141 = vld [vmem:[%s4 + $0x38] sm:$0xf]
      %v1142 = vld [vmem:[%s4 + $0x3c] sm:$0xf]
      %vm1143 = vsmask.f32 3328
      %vm1144 = vsmask.f32 7440
      %vm1145 = vmor %vm1143, %vm1144
      %v1147 = vshrl.u32 %v1073, 16
      %v1149 = vrot.slane %v1147, 4
      %v1150 = vshll.u32 %v1073, 16
      %v1152 = vrot.slane %v1150, 5
      %v1153 = vor.u32 %v1149, %v1152
      %v1154 = vrot.slane %v1153, 4
      %v1156 = vshll.u32 %v1074, 16
      %v1158 = vrot.slane %v1156, 5
      %v1159 = vsel %vm1145, %v1154, %v1158
      %v1160 = vshrl.u32 %v1074, 16
      %v1162 = vrot.slane %v1160, 4
      %v1163 = vor.u32 %v1162, %v1158
      %v1164 = vrot.slane %v1163, 4
      %v1166 = vshll.u32 %v1075, 16
      %v1168 = vrot.slane %v1166, 5
      %v1169 = vsel %vm1145, %v1164, %v1168
      %v1171 = vshrl.u32 %v1076, 16
      %v1173 = vrot.slane %v1171, 4
      %v1174 = vshll.u32 %v1076, 16
      %v1176 = vrot.slane %v1174, 5
      %v1177 = vor.u32 %v1173, %v1176
      %v1178 = vrot.slane %v1177, 4
      %v1180 = vshll.u32 %v1077, 16
      %v1182 = vrot.slane %v1180, 5
      %v1183 = vsel %vm1145, %v1178, %v1182
      %v1184 = vshrl.u32 %v1077, 16
      %v1186 = vrot.slane %v1184, 4
      %v1187 = vor.u32 %v1186, %v1182
      %v1188 = vrot.slane %v1187, 4
      %v1190 = vshll.u32 %v1078, 16
      %v1192 = vrot.slane %v1190, 5
      %v1193 = vsel %vm1145, %v1188, %v1192
      %v1195 = vshrl.u32 %v1079, 16
      %v1197 = vrot.slane %v1195, 4
      %v1198 = vshll.u32 %v1079, 16
      %v1200 = vrot.slane %v1198, 5
      %v1201 = vor.u32 %v1197, %v1200
      %v1202 = vrot.slane %v1201, 4
      %v1204 = vshll.u32 %v1080, 16
      %v1206 = vrot.slane %v1204, 5
      %v1207 = vsel %vm1145, %v1202, %v1206
      %v1208 = vshrl.u32 %v1080, 16
      %v1210 = vrot.slane %v1208, 4
      %v1211 = vor.u32 %v1210, %v1206
      %v1212 = vrot.slane %v1211, 4
      %v1214 = vshll.u32 %v1081, 16
      %v1216 = vrot.slane %v1214, 5
      %v1217 = vsel %vm1145, %v1212, %v1216
      %v1219 = vshrl.u32 %v1082, 16
      %v1221 = vrot.slane %v1219, 4
      %v1222 = vshll.u32 %v1082, 16
      %v1224 = vrot.slane %v1222, 5
      %v1225 = vor.u32 %v1221, %v1224
      %v1226 = vrot.slane %v1225, 4
      %v1228 = vshll.u32 %v1083, 16
      %v1230 = vrot.slane %v1228, 5
      %v1231 = vsel %vm1145, %v1226, %v1230
      %v1232 = vshrl.u32 %v1083, 16
      %v1234 = vrot.slane %v1232, 4
      %v1235 = vor.u32 %v1234, %v1230
      %v1236 = vrot.slane %v1235, 4
      %v1238 = vshll.u32 %v1084, 16
      %v1240 = vrot.slane %v1238, 5
      %v1241 = vsel %vm1145, %v1236, %v1240
      %v1243 = vshrl.u32 %v1085, 16
      %v1245 = vrot.slane %v1243, 4
      %v1246 = vshll.u32 %v1085, 16
      %v1248 = vrot.slane %v1246, 5
      %v1249 = vor.u32 %v1245, %v1248
      %v1250 = vrot.slane %v1249, 4
      %v1252 = vshll.u32 %v1086, 16
      %v1254 = vrot.slane %v1252, 5
      %v1255 = vsel %vm1145, %v1250, %v1254
      %v1256 = vshrl.u32 %v1086, 16
      %v1258 = vrot.slane %v1256, 4
      %v1259 = vor.u32 %v1258, %v1254
      %v1260 = vrot.slane %v1259, 4
      %v1262 = vshll.u32 %v1087, 16
      %v1264 = vrot.slane %v1262, 5
      %v1265 = vsel %vm1145, %v1260, %v1264
      %v1267 = vshrl.u32 %v1088, 16
      %v1269 = vrot.slane %v1267, 4
      %v1270 = vshll.u32 %v1088, 16
      %v1272 = vrot.slane %v1270, 5
      %v1273 = vor.u32 %v1269, %v1272
      %v1274 = vrot.slane %v1273, 4
      %v1276 = vshll.u32 %v1089, 16
      %v1278 = vrot.slane %v1276, 5
      %v1279 = vsel %vm1145, %v1274, %v1278
      %v1280 = vshrl.u32 %v1089, 16
      %v1282 = vrot.slane %v1280, 4
      %v1283 = vor.u32 %v1282, %v1278
      %v1284 = vrot.slane %v1283, 4
      %v1286 = vshll.u32 %v1090, 16
      %v1288 = vrot.slane %v1286, 5
      %v1289 = vsel %vm1145, %v1284, %v1288
      %v1291 = vshrl.u32 %v1091, 16
      %v1293 = vrot.slane %v1291, 4
      %v1294 = vshll.u32 %v1091, 16
      %v1296 = vrot.slane %v1294, 5
      %v1297 = vor.u32 %v1293, %v1296
      %v1298 = vrot.slane %v1297, 4
      %v1300 = vshll.u32 %v1092, 16
      %v1302 = vrot.slane %v1300, 5
      %v1303 = vsel %vm1145, %v1298, %v1302
      %v1304 = vshrl.u32 %v1092, 16
      %v1306 = vrot.slane %v1304, 4
      %v1307 = vor.u32 %v1306, %v1302
      %v1308 = vrot.slane %v1307, 4
      %v1310 = vshll.u32 %v1093, 16
      %v1312 = vrot.slane %v1310, 5
      %v1313 = vsel %vm1145, %v1308, %v1312
      %v1315 = vshrl.u32 %v1094, 16
      %v1317 = vrot.slane %v1315, 4
      %v1318 = vshll.u32 %v1094, 16
      %v1320 = vrot.slane %v1318, 5
      %v1321 = vor.u32 %v1317, %v1320
      %v1322 = vrot.slane %v1321, 4
      %v1324 = vshll.u32 %v1095, 16
      %v1326 = vrot.slane %v1324, 5
      %v1327 = vsel %vm1145, %v1322, %v1326
      %v1328 = vshrl.u32 %v1095, 16
      %v1330 = vrot.slane %v1328, 4
      %v1331 = vor.u32 %v1330, %v1326
      %v1332 = vrot.slane %v1331, 4
      %v1334 = vshll.u32 %v1096, 16
      %v1336 = vrot.slane %v1334, 5
      %v1337 = vsel %vm1145, %v1332, %v1336
      %v1339 = vshrl.u32 %v1097, 16
      %v1341 = vrot.slane %v1339, 4
      %v1342 = vshll.u32 %v1097, 16
      %v1344 = vrot.slane %v1342, 5
      %v1345 = vor.u32 %v1341, %v1344
      %v1346 = vrot.slane %v1345, 4
      %v1348 = vshll.u32 %v1098, 16
      %v1350 = vrot.slane %v1348, 5
      %v1351 = vsel %vm1145, %v1346, %v1350
      %v1352 = vshrl.u32 %v1098, 16
      %v1354 = vrot.slane %v1352, 4
      %v1355 = vor.u32 %v1354, %v1350
      %v1356 = vrot.slane %v1355, 4
      %v1358 = vshll.u32 %v1099, 16
      %v1360 = vrot.slane %v1358, 5
      %v1361 = vsel %vm1145, %v1356, %v1360
      %v1363 = vshrl.u32 %v1100, 16
      %v1365 = vrot.slane %v1363, 4
      %v1366 = vshll.u32 %v1100, 16
      %v1368 = vrot.slane %v1366, 5
      %v1369 = vor.u32 %v1365, %v1368
      %v1370 = vrot.slane %v1369, 4
      %v1372 = vshll.u32 %v1101, 16
      %v1374 = vrot.slane %v1372, 5
      %v1375 = vsel %vm1145, %v1370, %v1374
      %v1376 = vshrl.u32 %v1101, 16
      %v1378 = vrot.slane %v1376, 4
      %v1379 = vor.u32 %v1378, %v1374
      %v1380 = vrot.slane %v1379, 4
      %v1382 = vshll.u32 %v1102, 16
      %v1384 = vrot.slane %v1382, 5
      %v1385 = vsel %vm1145, %v1380, %v1384
      %v1387 = vshrl.u32 %v1103, 16
      %v1389 = vrot.slane %v1387, 4
      %v1390 = vshll.u32 %v1103, 16
      %v1392 = vrot.slane %v1390, 5
      %v1393 = vor.u32 %v1389, %v1392
      %v1394 = vrot.slane %v1393, 4
      %v1396 = vshll.u32 %v1104, 16
      %v1398 = vrot.slane %v1396, 5
      %v1399 = vsel %vm1145, %v1394, %v1398
      %v1400 = vshrl.u32 %v1104, 16
      %v1402 = vrot.slane %v1400, 4
      %v1403 = vor.u32 %v1402, %v1398
      %v1404 = vrot.slane %v1403, 4
      %v1406 = vshll.u32 %v1105, 16
      %v1408 = vrot.slane %v1406, 5
      %v1409 = vsel %vm1145, %v1404, %v1408
      %v1411 = vshrl.u32 %v1106, 16
      %v1413 = vrot.slane %v1411, 4
      %v1414 = vshll.u32 %v1106, 16
      %v1416 = vrot.slane %v1414, 5
      %v1417 = vor.u32 %v1413, %v1416
      %v1418 = vrot.slane %v1417, 4
      %v1420 = vshll.u32 %v1107, 16
      %v1422 = vrot.slane %v1420, 5
      %v1423 = vsel %vm1145, %v1418, %v1422
      %v1424 = vshrl.u32 %v1107, 16
      %v1426 = vrot.slane %v1424, 4
      %v1427 = vor.u32 %v1426, %v1422
      %v1428 = vrot.slane %v1427, 4
      %v1430 = vshll.u32 %v1108, 16
      %v1432 = vrot.slane %v1430, 5
      %v1433 = vsel %vm1145, %v1428, %v1432
      %v1435 = vshrl.u32 %v1109, 16
      %v1437 = vrot.slane %v1435, 4
      %v1438 = vshll.u32 %v1109, 16
      %v1440 = vrot.slane %v1438, 5
      %v1441 = vor.u32 %v1437, %v1440
      %v1442 = vrot.slane %v1441, 4
      %v1444 = vshll.u32 %v1110, 16
      %v1446 = vrot.slane %v1444, 5
      %v1447 = vsel %vm1145, %v1442, %v1446
      %v1448 = vshrl.u32 %v1110, 16
      %v1450 = vrot.slane %v1448, 4
      %v1451 = vor.u32 %v1450, %v1446
      %v1452 = vrot.slane %v1451, 4
      %v1454 = vshll.u32 %v1111, 16
      %v1456 = vrot.slane %v1454, 5
      %v1457 = vsel %vm1145, %v1452, %v1456
      %v1459 = vshrl.u32 %v1112, 16
      %v1461 = vrot.slane %v1459, 4
      %v1462 = vshll.u32 %v1112, 16
      %v1464 = vrot.slane %v1462, 5
      %v1465 = vor.u32 %v1461, %v1464
      %v1466 = vrot.slane %v1465, 4
      %v1468 = vshll.u32 %v1113, 16
      %v1470 = vrot.slane %v1468, 5
      %v1471 = vsel %vm1145, %v1466, %v1470
      %v1472 = vshrl.u32 %v1113, 16
      %v1474 = vrot.slane %v1472, 4
      %v1475 = vor.u32 %v1474, %v1470
      %v1476 = vrot.slane %v1475, 4
      %v1478 = vshll.u32 %v1114, 16
      %v1480 = vrot.slane %v1478, 5
      %v1481 = vsel %vm1145, %v1476, %v1480
      %v1483 = vshrl.u32 %v1115, 16
      %v1485 = vrot.slane %v1483, 4
      %v1486 = vshll.u32 %v1115, 16
      %v1488 = vrot.slane %v1486, 5
      %v1489 = vor.u32 %v1485, %v1488
      %v1490 = vrot.slane %v1489, 4
      %v1492 = vshll.u32 %v1116, 16
      %v1494 = vrot.slane %v1492, 5
      %v1495 = vsel %vm1145, %v1490, %v1494
      %v1496 = vshrl.u32 %v1116, 16
      %v1498 = vrot.slane %v1496, 4
      %v1499 = vor.u32 %v1498, %v1494
      %v1500 = vrot.slane %v1499, 4
      %v1502 = vshll.u32 %v1117, 16
      %v1504 = vrot.slane %v1502, 5
      %v1505 = vsel %vm1145, %v1500, %v1504
      %v1507 = vshrl.u32 %v1118, 16
      %v1509 = vrot.slane %v1507, 4
      %v1510 = vshll.u32 %v1118, 16
      %v1512 = vrot.slane %v1510, 5
      %v1513 = vor.u32 %v1509, %v1512
      %v1514 = vrot.slane %v1513, 4
      %v1516 = vshll.u32 %v1119, 16
      %v1518 = vrot.slane %v1516, 5
      %v1519 = vsel %vm1145, %v1514, %v1518
      %v1520 = vshrl.u32 %v1119, 16
      %v1522 = vrot.slane %v1520, 4
      %v1523 = vor.u32 %v1522, %v1518
      %v1524 = vrot.slane %v1523, 4
      %v1526 = vshll.u32 %v1120, 16
      %v1528 = vrot.slane %v1526, 5
      %v1529 = vsel %vm1145, %v1524, %v1528
      %s1530 = scalar_lea.vmem %s4, 64
      %v1531 = vld [vmem:[%s1530] sm:$0xf]
      %v1532 = vld [vmem:[%s1530 + $0x4] sm:$0xf]
      %v1533 = vld [vmem:[%s1530 + $0x8] sm:$0xf]
      %v1534 = vld [vmem:[%s1530 + $0xc] sm:$0xf]
      %v1535 = vld [vmem:[%s1530 + $0x10] sm:$0xf]
      %v1536 = vld [vmem:[%s1530 + $0x14] sm:$0xf]
      %v1537 = vld [vmem:[%s1530 + $0x18] sm:$0xf]
      %v1538 = vld [vmem:[%s1530 + $0x1c] sm:$0xf]
      %v1539 = vld [vmem:[%s1530 + $0x20] sm:$0xf]
      %v1540 = vld [vmem:[%s1530 + $0x24] sm:$0xf]
      %v1541 = vld [vmem:[%s1530 + $0x28] sm:$0xf]
      %v1542 = vld [vmem:[%s1530 + $0x2c] sm:$0xf]
      %v1543 = vld [vmem:[%s1530 + $0x30] sm:$0xf]
      %v1544 = vld [vmem:[%s1530 + $0x34] sm:$0xf]
      %v1545 = vld [vmem:[%s1530 + $0x38] sm:$0xf]
      %v1546 = vld [vmem:[%s1530 + $0x3c] sm:$0xf]
      %v1547 = vunpack.c.l.b16 %v1159
      %v1548 = vunpack.c.l.b16 %v1169
      %v1549 = vunpack.c.l.b16 %v1183
      %v1550 = vunpack.c.l.b16 %v1193
      %v1551 = vunpack.c.l.b16 %v1207
      %v1552 = vunpack.c.l.b16 %v1217
      %v1553 = vunpack.c.l.b16 %v1231
      %v1554 = vunpack.c.l.b16 %v1241
      %v1555 = vunpack.c.l.b16 %v1255
      %v1556 = vunpack.c.l.b16 %v1265
      %v1557 = vunpack.c.l.b16 %v1279
      %v1558 = vunpack.c.l.b16 %v1289
      %v1559 = vunpack.c.l.b16 %v1303
      %v1560 = vunpack.c.l.b16 %v1313
      %v1561 = vunpack.c.l.b16 %v1327
      %v1562 = vunpack.c.l.b16 %v1337
      %v1563 = vunpack.c.l.b16 %v1351
      %v1564 = vunpack.c.l.b16 %v1361
      %v1565 = vunpack.c.l.b16 %v1375
      %v1566 = vunpack.c.l.b16 %v1385
      %v1567 = vunpack.c.l.b16 %v1399
      %v1568 = vunpack.c.l.b16 %v1409
      %v1569 = vunpack.c.l.b16 %v1423
      %v1570 = vunpack.c.l.b16 %v1433
      %v1571 = vunpack.c.l.b16 %v1447
      %v1572 = vunpack.c.l.b16 %v1457
      %v1573 = vunpack.c.l.b16 %v1471
      %v1574 = vunpack.c.l.b16 %v1481
      %v1575 = vunpack.c.l.b16 %v1495
      %v1576 = vunpack.c.l.b16 %v1505
      %v1577 = vunpack.c.l.b16 %v1519
      %v1578 = vunpack.c.l.b16 %v1529
      %v1579 = vpack.c.b16 %v1548, %v1547
      %v1580 = vpack.c.b16 %v1550, %v1549
      %v1581 = vpack.c.b16 %v1552, %v1551
      %v1582 = vpack.c.b16 %v1554, %v1553
      %v1583 = vpack.c.b16 %v1556, %v1555
      %v1584 = vpack.c.b16 %v1558, %v1557
      %v1585 = vpack.c.b16 %v1560, %v1559
      %v1586 = vpack.c.b16 %v1562, %v1561
      %v1587 = vpack.c.b16 %v1564, %v1563
      %v1588 = vpack.c.b16 %v1566, %v1565
      %v1589 = vpack.c.b16 %v1568, %v1567
      %v1590 = vpack.c.b16 %v1570, %v1569
      %v1591 = vpack.c.b16 %v1572, %v1571
      %v1592 = vpack.c.b16 %v1574, %v1573
      %v1593 = vpack.c.b16 %v1576, %v1575
      %v1594 = vpack.c.b16 %v1578, %v1577
      %v1627 = vunpack.c.l.b16 %v1531
      %v1628 = vunpack.c.l.b16 %v1532
      %v1629 = vunpack.c.l.b16 %v1533
      %v1630 = vunpack.c.l.b16 %v1534
      %v1631 = vunpack.c.l.b16 %v1535
      %v1632 = vunpack.c.l.b16 %v1536
      %v1633 = vunpack.c.l.b16 %v1537
      %v1634 = vunpack.c.l.b16 %v1538
      %v1635 = vunpack.c.l.b16 %v1539
      %v1636 = vunpack.c.l.b16 %v1540
      %v1637 = vunpack.c.l.b16 %v1541
      %v1638 = vunpack.c.l.b16 %v1542
      %v1639 = vunpack.c.l.b16 %v1543
      %v1640 = vunpack.c.l.b16 %v1544
      %v1641 = vunpack.c.l.b16 %v1545
      %v1642 = vunpack.c.l.b16 %v1546
      %v1643 = vpack.c.b16 %v1628, %v1627
      %v1644 = vpack.c.b16 %v1630, %v1629
      %v1645 = vpack.c.b16 %v1632, %v1631
      %v1646 = vpack.c.b16 %v1634, %v1633
      %v1647 = vpack.c.b16 %v1636, %v1635
      %v1648 = vpack.c.b16 %v1638, %v1637
      %v1649 = vpack.c.b16 %v1640, %v1639
      %v1650 = vpack.c.b16 %v1642, %v1641
      %1659 = vmatprep.subr.bf16.mxu0 0
      %1660 = vmatpush1.bf16.msra.mxu0 %v1650
      %1661 = vmatprep.subr.bf16.mxu0 0
      %1662 = vmatpush1.bf16.msra.mxu0 %v1649
      %1663 = vmatprep.subr.bf16.mxu0 0
      %1664 = vmatpush1.bf16.msra.mxu0 %v1648
      %1665 = vmatprep.subr.bf16.mxu0 0
      %1666 = vmatpush1.bf16.msra.mxu0 %v1647
      %1667 = vmatprep.subr.bf16.mxu0 0
      %1668 = vmatpush1.bf16.msra.mxu0 %v1646
      %1669 = vmatprep.subr.bf16.mxu0 0
      %1670 = vmatpush1.bf16.msra.mxu0 %v1645
      %1671 = vmatprep.subr.bf16.mxu0 0
      %1672 = vmatpush1.bf16.msra.mxu0 %v1644
      %1673 = vmatprep.subr.bf16.mxu0 0
      %1674 = vmatpush1.bf16.msra.mxu0 %v1643
      %1675 = vmatprep.subr.bf16.mxu0 0
      %1676 = vmatpush2.bf16.msra.mxu0 0
      %1677 = vmatprep.subr.bf16.mxu0 0
      %1678 = vmatpush2.bf16.msra.mxu0 0
      %1679 = vmatprep.subr.bf16.mxu0 0
      %1680 = vmatpush2.bf16.msra.mxu0 0
      %1681 = vmatprep.subr.bf16.mxu0 0
      %1682 = vmatpush2.bf16.msra.mxu0 0
      %1683 = vmatprep.subr.bf16.mxu0 0
      %1684 = vmatpush2.bf16.msra.mxu0 0
      %1685 = vmatprep.subr.bf16.mxu0 0
      %1686 = vmatpush2.bf16.msra.mxu0 0
      %1687 = vmatprep.subr.bf16.mxu0 0
      %1688 = vmatpush2.bf16.msra.mxu0 0
      %1689 = vmatprep.subr.bf16.mxu0 0
      %1690 = vmatpush2.bf16.msra.mxu0 0
      %1691 = vmatprep.mubr.bf16.mxu0 0
      %1692 = vmatmul.mubr.bf16.gmra.mxu0 %v1579
      %v1693 = vpop.f32.mrf.mxu0
      %v1694 = vadd.f32 0.0, %v1693
      %v1695 = vpop.f32.mrf.mxu0
      %v1696 = vpop.f32.mrf.mxu0
      %v1697 = vadd.f32 0.0, %v1696
      %v1698 = vpop.f32.mrf.mxu0
      %1699 = vmatprep.mubr.bf16.mxu0 0
      %1700 = vmatmul.mubr.bf16.gmra.mxu0 %v1580
      %v1701 = vpop.f32.mrf.mxu0
      %v1702 = vadd.f32 0.0, %v1701
      %v1703 = vpop.f32.mrf.mxu0
      %v1704 = vpop.f32.mrf.mxu0
      %v1705 = vadd.f32 0.0, %v1704
      %v1706 = vpop.f32.mrf.mxu0
      %1707 = vmatprep.mubr.bf16.mxu0 0
      %1708 = vmatmul.mubr.bf16.gmra.mxu0 %v1581
      %v1709 = vpop.f32.mrf.mxu0
      %v1710 = vadd.f32 0.0, %v1709
      %v1711 = vpop.f32.mrf.mxu0
      %v1712 = vpop.f32.mrf.mxu0
      %v1713 = vadd.f32 0.0, %v1712
      %v1714 = vpop.f32.mrf.mxu0
      %1715 = vmatprep.mubr.bf16.mxu0 0
      %1716 = vmatmul.mubr.bf16.gmra.mxu0 %v1582
      %v1717 = vpop.f32.mrf.mxu0
      %v1718 = vadd.f32 0.0, %v1717
      %v1719 = vpop.f32.mrf.mxu0
      %v1720 = vpop.f32.mrf.mxu0
      %v1721 = vadd.f32 0.0, %v1720
      %v1722 = vpop.f32.mrf.mxu0
      %1723 = vmatprep.mubr.bf16.mxu0 0
      %1724 = vmatmul.mubr.bf16.gmra.mxu0 %v1583
      %v1725 = vpop.f32.mrf.mxu0
      %v1726 = vadd.f32 0.0, %v1725
      %v1727 = vpop.f32.mrf.mxu0
      %v1728 = vpop.f32.mrf.mxu0
      %v1729 = vadd.f32 0.0, %v1728
      %v1730 = vpop.f32.mrf.mxu0
      %1731 = vmatprep.mubr.bf16.mxu0 0
      %1732 = vmatmul.mubr.bf16.gmra.mxu0 %v1584
      %v1733 = vpop.f32.mrf.mxu0
      %v1734 = vadd.f32 0.0, %v1733
      %v1735 = vpop.f32.mrf.mxu0
      %v1736 = vpop.f32.mrf.mxu0
      %v1737 = vadd.f32 0.0, %v1736
      %v1738 = vpop.f32.mrf.mxu0
      %1739 = vmatprep.mubr.bf16.mxu0 0
      %1740 = vmatmul.mubr.bf16.gmra.mxu0 %v1585
      %v1741 = vpop.f32.mrf.mxu0
      %v1742 = vadd.f32 0.0, %v1741
      %v1743 = vpop.f32.mrf.mxu0
      %v1744 = vpop.f32.mrf.mxu0
      %v1745 = vadd.f32 0.0, %v1744
      %v1746 = vpop.f32.mrf.mxu0
      %1747 = vmatprep.mubr.bf16.mxu0 0
      %1748 = vmatmul.mubr.bf16.gmra.mxu0 %v1586
      %v1749 = vpop.f32.mrf.mxu0
      %v1750 = vadd.f32 0.0, %v1749
      %v1751 = vpop.f32.mrf.mxu0
      %v1752 = vpop.f32.mrf.mxu0
      %v1753 = vadd.f32 0.0, %v1752
      %v1754 = vpop.f32.mrf.mxu0
      %1755 = vmatprep.mubr.bf16.mxu0 0
      %1756 = vmatmul.mubr.bf16.gmra.mxu0 %v1587
      %v1757 = vpop.f32.mrf.mxu0
      %v1758 = vadd.f32 0.0, %v1757
      %v1759 = vpop.f32.mrf.mxu0
      %v1760 = vpop.f32.mrf.mxu0
      %v1761 = vadd.f32 0.0, %v1760
      %v1762 = vpop.f32.mrf.mxu0
      %1763 = vmatprep.mubr.bf16.mxu0 0
      %1764 = vmatmul.mubr.bf16.gmra.mxu0 %v1588
      %v1765 = vpop.f32.mrf.mxu0
      %v1766 = vadd.f32 0.0, %v1765
      %v1767 = vpop.f32.mrf.mxu0
      %v1768 = vpop.f32.mrf.mxu0
      %v1769 = vadd.f32 0.0, %v1768
      %v1770 = vpop.f32.mrf.mxu0
      %1771 = vmatprep.mubr.bf16.mxu0 0
      %1772 = vmatmul.mubr.bf16.gmra.mxu0 %v1589
      %v1773 = vpop.f32.mrf.mxu0
      %v1774 = vadd.f32 0.0, %v1773
      %v1775 = vpop.f32.mrf.mxu0
      %v1776 = vpop.f32.mrf.mxu0
      %v1777 = vadd.f32 0.0, %v1776
      %v1778 = vpop.f32.mrf.mxu0
      %1779 = vmatprep.mubr.bf16.mxu0 0
      %1780 = vmatmul.mubr.bf16.gmra.mxu0 %v1590
      %v1781 = vpop.f32.mrf.mxu0
      %v1782 = vadd.f32 0.0, %v1781
      %v1783 = vpop.f32.mrf.mxu0
      %v1784 = vpop.f32.mrf.mxu0
      %v1785 = vadd.f32 0.0, %v1784
      %v1786 = vpop.f32.mrf.mxu0
      %1787 = vmatprep.mubr.bf16.mxu0 0
      %1788 = vmatmul.mubr.bf16.gmra.mxu0 %v1591
      %v1789 = vpop.f32.mrf.mxu0
      %v1790 = vadd.f32 0.0, %v1789
      %v1791 = vpop.f32.mrf.mxu0
      %v1792 = vpop.f32.mrf.mxu0
      %v1793 = vadd.f32 0.0, %v1792
      %v1794 = vpop.f32.mrf.mxu0
      %1795 = vmatprep.mubr.bf16.mxu0 0
      %1796 = vmatmul.mubr.bf16.gmra.mxu0 %v1592
      %v1797 = vpop.f32.mrf.mxu0
      %v1798 = vadd.f32 0.0, %v1797
      %v1799 = vpop.f32.mrf.mxu0
      %v1800 = vpop.f32.mrf.mxu0
      %v1801 = vadd.f32 0.0, %v1800
      %v1802 = vpop.f32.mrf.mxu0
      %1803 = vmatprep.mubr.bf16.mxu0 0
      %1804 = vmatmul.mubr.bf16.gmra.mxu0 %v1593
      %v1805 = vpop.f32.mrf.mxu0
      %v1806 = vadd.f32 0.0, %v1805
      %v1807 = vpop.f32.mrf.mxu0
      %v1808 = vpop.f32.mrf.mxu0
      %v1809 = vadd.f32 0.0, %v1808
      %v1810 = vpop.f32.mrf.mxu0
      %1811 = vmatprep.mubr.bf16.mxu0 0
      %1812 = vmatmul.mubr.bf16.gmra.mxu0 %v1594
      %v1813 = vpop.f32.mrf.mxu0
      %v1814 = vadd.f32 0.0, %v1813
      %v1815 = vpop.f32.mrf.mxu0
      %v1816 = vpop.f32.mrf.mxu0
      %v1817 = vadd.f32 0.0, %v1816
      %v1818 = vpop.f32.mrf.mxu0
      %1819 = vdwg.mxu0
      %v1852 = vunpack.c.l.b16 %v1073
      %v1853 = vunpack.c.l.b16 %v1074
      %v1854 = vunpack.c.l.b16 %v1076
      %v1855 = vunpack.c.l.b16 %v1077
      %v1856 = vunpack.c.l.b16 %v1079
      %v1857 = vunpack.c.l.b16 %v1080
      %v1858 = vunpack.c.l.b16 %v1082
      %v1859 = vunpack.c.l.b16 %v1083
      %v1860 = vunpack.c.l.b16 %v1085
      %v1861 = vunpack.c.l.b16 %v1086
      %v1862 = vunpack.c.l.b16 %v1088
      %v1863 = vunpack.c.l.b16 %v1089
      %v1864 = vunpack.c.l.b16 %v1091
      %v1865 = vunpack.c.l.b16 %v1092
      %v1866 = vunpack.c.l.b16 %v1094
      %v1867 = vunpack.c.l.b16 %v1095
      %v1868 = vunpack.c.l.b16 %v1097
      %v1869 = vunpack.c.l.b16 %v1098
      %v1870 = vunpack.c.l.b16 %v1100
      %v1871 = vunpack.c.l.b16 %v1101
      %v1872 = vunpack.c.l.b16 %v1103
      %v1873 = vunpack.c.l.b16 %v1104
      %v1874 = vunpack.c.l.b16 %v1106
      %v1875 = vunpack.c.l.b16 %v1107
      %v1876 = vunpack.c.l.b16 %v1109
      %v1877 = vunpack.c.l.b16 %v1110
      %v1878 = vunpack.c.l.b16 %v1112
      %v1879 = vunpack.c.l.b16 %v1113
      %v1880 = vunpack.c.l.b16 %v1115
      %v1881 = vunpack.c.l.b16 %v1116
      %v1882 = vunpack.c.l.b16 %v1118
      %v1883 = vunpack.c.l.b16 %v1119
      %v1884 = vpack.c.b16 %v1853, %v1852
      %v1885 = vpack.c.b16 %v1855, %v1854
      %v1886 = vpack.c.b16 %v1857, %v1856
      %v1887 = vpack.c.b16 %v1859, %v1858
      %v1888 = vpack.c.b16 %v1861, %v1860
      %v1889 = vpack.c.b16 %v1863, %v1862
      %v1890 = vpack.c.b16 %v1865, %v1864
      %v1891 = vpack.c.b16 %v1867, %v1866
      %v1892 = vpack.c.b16 %v1869, %v1868
      %v1893 = vpack.c.b16 %v1871, %v1870
      %v1894 = vpack.c.b16 %v1873, %v1872
      %v1895 = vpack.c.b16 %v1875, %v1874
      %v1896 = vpack.c.b16 %v1877, %v1876
      %v1897 = vpack.c.b16 %v1879, %v1878
      %v1898 = vpack.c.b16 %v1881, %v1880
      %v1899 = vpack.c.b16 %v1883, %v1882
      %v1932 = vunpack.c.l.b16 %v1127
      %v1933 = vunpack.c.l.b16 %v1128
      %v1934 = vunpack.c.l.b16 %v1129
      %v1935 = vunpack.c.l.b16 %v1130
      %v1936 = vunpack.c.l.b16 %v1131
      %v1937 = vunpack.c.l.b16 %v1132
      %v1938 = vunpack.c.l.b16 %v1133
      %v1939 = vunpack.c.l.b16 %v1134
      %v1940 = vunpack.c.l.b16 %v1135
      %v1941 = vunpack.c.l.b16 %v1136
      %v1942 = vunpack.c.l.b16 %v1137
      %v1943 = vunpack.c.l.b16 %v1138
      %v1944 = vunpack.c.l.b16 %v1139
      %v1945 = vunpack.c.l.b16 %v1140
      %v1946 = vunpack.c.l.b16 %v1141
      %v1947 = vunpack.c.l.b16 %v1142
      %v1948 = vpack.c.b16 %v1933, %v1932
      %v1949 = vpack.c.b16 %v1935, %v1934
      %v1950 = vpack.c.b16 %v1937, %v1936
      %v1951 = vpack.c.b16 %v1939, %v1938
      %v1952 = vpack.c.b16 %v1941, %v1940
      %v1953 = vpack.c.b16 %v1943, %v1942
      %v1954 = vpack.c.b16 %v1945, %v1944
      %v1955 = vpack.c.b16 %v1947, %v1946
      %1964 = vmatprep.subr.bf16.mxu0 0
      %1965 = vmatpush1.bf16.msra.mxu0 %v1955
      %1966 = vmatprep.subr.bf16.mxu0 0
      %1967 = vmatpush1.bf16.msra.mxu0 %v1954
      %1968 = vmatprep.subr.bf16.mxu0 0
      %1969 = vmatpush1.bf16.msra.mxu0 %v1953
      %1970 = vmatprep.subr.bf16.mxu0 0
      %1971 = vmatpush1.bf16.msra.mxu0 %v1952
      %1972 = vmatprep.subr.bf16.mxu0 0
      %1973 = vmatpush1.bf16.msra.mxu0 %v1951
      %1974 = vmatprep.subr.bf16.mxu0 0
      %1975 = vmatpush1.bf16.msra.mxu0 %v1950
      %1976 = vmatprep.subr.bf16.mxu0 0
      %1977 = vmatpush1.bf16.msra.mxu0 %v1949
      %1978 = vmatprep.subr.bf16.mxu0 0
      %1979 = vmatpush1.bf16.msra.mxu0 %v1948
      %1980 = vmatprep.subr.bf16.mxu0 0
      %1981 = vmatpush2.bf16.msra.mxu0 0
      %1982 = vmatprep.subr.bf16.mxu0 0
      %1983 = vmatpush2.bf16.msra.mxu0 0
      %1984 = vmatprep.subr.bf16.mxu0 0
      %1985 = vmatpush2.bf16.msra.mxu0 0
      %1986 = vmatprep.subr.bf16.mxu0 0
      %1987 = vmatpush2.bf16.msra.mxu0 0
      %1988 = vmatprep.subr.bf16.mxu0 0
      %1989 = vmatpush2.bf16.msra.mxu0 0
      %1990 = vmatprep.subr.bf16.mxu0 0
      %1991 = vmatpush2.bf16.msra.mxu0 0
      %1992 = vmatprep.subr.bf16.mxu0 0
      %1993 = vmatpush2.bf16.msra.mxu0 0
      %1994 = vmatprep.subr.bf16.mxu0 0
      %1995 = vmatpush2.bf16.msra.mxu0 0
      %1996 = vmatprep.mubr.bf16.mxu0 0
      %1997 = vmatmul.mubr.bf16.gmra.mxu0 %v1884
      %v1998 = vpop.f32.mrf.mxu0
      %v1999 = vadd.f32 %v1694, %v1998
      %v2000 = vpop.f32.mrf.mxu0
      %v2001 = vpop.f32.mrf.mxu0
      %v2002 = vadd.f32 %v1697, %v2001
      %v2003 = vpop.f32.mrf.mxu0
      %2004 = vmatprep.mubr.bf16.mxu0 0
      %2005 = vmatmul.mubr.bf16.gmra.mxu0 %v1885
      %v2006 = vpop.f32.mrf.mxu0
      %v2007 = vadd.f32 %v1702, %v2006
      %v2008 = vpop.f32.mrf.mxu0
      %v2009 = vpop.f32.mrf.mxu0
      %v2010 = vadd.f32 %v1705, %v2009
      %v2011 = vpop.f32.mrf.mxu0
      %2012 = vmatprep.mubr.bf16.mxu0 0
      %2013 = vmatmul.mubr.bf16.gmra.mxu0 %v1886
      %v2014 = vpop.f32.mrf.mxu0
      %v2015 = vadd.f32 %v1710, %v2014
      %v2016 = vpop.f32.mrf.mxu0
      %v2017 = vpop.f32.mrf.mxu0
      %v2018 = vadd.f32 %v1713, %v2017
      %v2019 = vpop.f32.mrf.mxu0
      %2020 = vmatprep.mubr.bf16.mxu0 0
      %2021 = vmatmul.mubr.bf16.gmra.mxu0 %v1887
      %v2022 = vpop.f32.mrf.mxu0
      %v2023 = vadd.f32 %v1718, %v2022
      %v2024 = vpop.f32.mrf.mxu0
      %v2025 = vpop.f32.mrf.mxu0
      %v2026 = vadd.f32 %v1721, %v2025
      %v2027 = vpop.f32.mrf.mxu0
      %2028 = vmatprep.mubr.bf16.mxu0 0
      %2029 = vmatmul.mubr.bf16.gmra.mxu0 %v1888
      %v2030 = vpop.f32.mrf.mxu0
      %v2031 = vadd.f32 %v1726, %v2030
      %v2032 = vpop.f32.mrf.mxu0
      %v2033 = vpop.f32.mrf.mxu0
      %v2034 = vadd.f32 %v1729, %v2033
      %v2035 = vpop.f32.mrf.mxu0
      %2036 = vmatprep.mubr.bf16.mxu0 0
      %2037 = vmatmul.mubr.bf16.gmra.mxu0 %v1889
      %v2038 = vpop.f32.mrf.mxu0
      %v2039 = vadd.f32 %v1734, %v2038
      %v2040 = vpop.f32.mrf.mxu0
      %v2041 = vpop.f32.mrf.mxu0
      %v2042 = vadd.f32 %v1737, %v2041
      %v2043 = vpop.f32.mrf.mxu0
      %2044 = vmatprep.mubr.bf16.mxu0 0
      %2045 = vmatmul.mubr.bf16.gmra.mxu0 %v1890
      %v2046 = vpop.f32.mrf.mxu0
      %v2047 = vadd.f32 %v1742, %v2046
      %v2048 = vpop.f32.mrf.mxu0
      %v2049 = vpop.f32.mrf.mxu0
      %v2050 = vadd.f32 %v1745, %v2049
      %v2051 = vpop.f32.mrf.mxu0
      %2052 = vmatprep.mubr.bf16.mxu0 0
      %2053 = vmatmul.mubr.bf16.gmra.mxu0 %v1891
      %v2054 = vpop.f32.mrf.mxu0
      %v2055 = vadd.f32 %v1750, %v2054
      %v2056 = vpop.f32.mrf.mxu0
      %v2057 = vpop.f32.mrf.mxu0
      %v2058 = vadd.f32 %v1753, %v2057
      %v2059 = vpop.f32.mrf.mxu0
      %2060 = vmatprep.mubr.bf16.mxu0 0
      %2061 = vmatmul.mubr.bf16.gmra.mxu0 %v1892
      %v2062 = vpop.f32.mrf.mxu0
      %v2063 = vadd.f32 %v1758, %v2062
      %v2064 = vpop.f32.mrf.mxu0
      %v2065 = vpop.f32.mrf.mxu0
      %v2066 = vadd.f32 %v1761, %v2065
      %v2067 = vpop.f32.mrf.mxu0
      %2068 = vmatprep.mubr.bf16.mxu0 0
      %2069 = vmatmul.mubr.bf16.gmra.mxu0 %v1893
      %v2070 = vpop.f32.mrf.mxu0
      %v2071 = vadd.f32 %v1766, %v2070
      %v2072 = vpop.f32.mrf.mxu0
      %v2073 = vpop.f32.mrf.mxu0
      %v2074 = vadd.f32 %v1769, %v2073
      %v2075 = vpop.f32.mrf.mxu0
      %2076 = vmatprep.mubr.bf16.mxu0 0
      %2077 = vmatmul.mubr.bf16.gmra.mxu0 %v1894
      %v2078 = vpop.f32.mrf.mxu0
      %v2079 = vadd.f32 %v1774, %v2078
      %v2080 = vpop.f32.mrf.mxu0
      %v2081 = vpop.f32.mrf.mxu0
      %v2082 = vadd.f32 %v1777, %v2081
      %v2083 = vpop.f32.mrf.mxu0
      %2084 = vmatprep.mubr.bf16.mxu0 0
      %2085 = vmatmul.mubr.bf16.gmra.mxu0 %v1895
      %v2086 = vpop.f32.mrf.mxu0
      %v2087 = vadd.f32 %v1782, %v2086
      %v2088 = vpop.f32.mrf.mxu0
      %v2089 = vpop.f32.mrf.mxu0
      %v2090 = vadd.f32 %v1785, %v2089
      %v2091 = vpop.f32.mrf.mxu0
      %2092 = vmatprep.mubr.bf16.mxu0 0
      %2093 = vmatmul.mubr.bf16.gmra.mxu0 %v1896
      %v2094 = vpop.f32.mrf.mxu0
      %v2095 = vadd.f32 %v1790, %v2094
      %v2096 = vpop.f32.mrf.mxu0
      %v2097 = vpop.f32.mrf.mxu0
      %v2098 = vadd.f32 %v1793, %v2097
      %v2099 = vpop.f32.mrf.mxu0
      %2100 = vmatprep.mubr.bf16.mxu0 0
      %2101 = vmatmul.mubr.bf16.gmra.mxu0 %v1897
      %v2102 = vpop.f32.mrf.mxu0
      %v2103 = vadd.f32 %v1798, %v2102
      %v2104 = vpop.f32.mrf.mxu0
      %v2105 = vpop.f32.mrf.mxu0
      %v2106 = vadd.f32 %v1801, %v2105
      %v2107 = vpop.f32.mrf.mxu0
      %2108 = vmatprep.mubr.bf16.mxu0 0
      %2109 = vmatmul.mubr.bf16.gmra.mxu0 %v1898
      %v2110 = vpop.f32.mrf.mxu0
      %v2111 = vadd.f32 %v1806, %v2110
      %v2112 = vpop.f32.mrf.mxu0
      %v2113 = vpop.f32.mrf.mxu0
      %v2114 = vadd.f32 %v1809, %v2113
      %v2115 = vpop.f32.mrf.mxu0
      %2116 = vmatprep.mubr.bf16.mxu0 0
      %2117 = vmatmul.mubr.bf16.gmra.mxu0 %v1899
      %v2118 = vpop.f32.mrf.mxu0
      %v2119 = vadd.f32 %v1814, %v2118
      %v2120 = vpop.f32.mrf.mxu0
      %v2121 = vpop.f32.mrf.mxu0
      %v2122 = vadd.f32 %v1817, %v2121
      %v2123 = vpop.f32.mrf.mxu0
      %2124 = vdwg.mxu0
      %vm2141 = vcmask 1042432
      %vm2142 = vcmask 1046532
      %vm2143 = vmor %vm2141, %vm2142
      %v2144 = vrot.slane %v1073, 5
      %v2145 = vrot.slane %v2144, 4
      %v2146 = vrot.slane %v1074, 5
      %v2147 = vsel %vm2143, %v2145, %v2146
      %v2148 = vrot.slane %v2146, 4
      %v2149 = vrot.slane %v1075, 5
      %v2150 = vsel %vm2143, %v2148, %v2149
      %v2151 = vrot.slane %v1076, 5
      %v2152 = vrot.slane %v2151, 4
      %v2153 = vrot.slane %v1077, 5
      %v2154 = vsel %vm2143, %v2152, %v2153
      %v2155 = vrot.slane %v2153, 4
      %v2156 = vrot.slane %v1078, 5
      %v2157 = vsel %vm2143, %v2155, %v2156
      %v2158 = vrot.slane %v1079, 5
      %v2159 = vrot.slane %v2158, 4
      %v2160 = vrot.slane %v1080, 5
      %v2161 = vsel %vm2143, %v2159, %v2160
      %v2162 = vrot.slane %v2160, 4
      %v2163 = vrot.slane %v1081, 5
      %v2164 = vsel %vm2143, %v2162, %v2163
      %v2165 = vrot.slane %v1082, 5
      %v2166 = vrot.slane %v2165, 4
      %v2167 = vrot.slane %v1083, 5
      %v2168 = vsel %vm2143, %v2166, %v2167
      %v2169 = vrot.slane %v2167, 4
      %v2170 = vrot.slane %v1084, 5
      %v2171 = vsel %vm2143, %v2169, %v2170
      %v2172 = vrot.slane %v1085, 5
      %v2173 = vrot.slane %v2172, 4
      %v2174 = vrot.slane %v1086, 5
      %v2175 = vsel %vm2143, %v2173, %v2174
      %v2176 = vrot.slane %v2174, 4
      %v2177 = vrot.slane %v1087, 5
      %v2178 = vsel %vm2143, %v2176, %v2177
      %v2179 = vrot.slane %v1088, 5
      %v2180 = vrot.slane %v2179, 4
      %v2181 = vrot.slane %v1089, 5
      %v2182 = vsel %vm2143, %v2180, %v2181
      %v2183 = vrot.slane %v2181, 4
      %v2184 = vrot.slane %v1090, 5
      %v2185 = vsel %vm2143, %v2183, %v2184
      %v2186 = vrot.slane %v1091, 5
      %v2187 = vrot.slane %v2186, 4
      %v2188 = vrot.slane %v1092, 5
      %v2189 = vsel %vm2143, %v2187, %v2188
      %v2190 = vrot.slane %v2188, 4
      %v2191 = vrot.slane %v1093, 5
      %v2192 = vsel %vm2143, %v2190, %v2191
      %v2193 = vrot.slane %v1094, 5
      %v2194 = vrot.slane %v2193, 4
      %v2195 = vrot.slane %v1095, 5
      %v2196 = vsel %vm2143, %v2194, %v2195
      %v2197 = vrot.slane %v2195, 4
      %v2198 = vrot.slane %v1096, 5
      %v2199 = vsel %vm2143, %v2197, %v2198
      %v2200 = vrot.slane %v1097, 5
      %v2201 = vrot.slane %v2200, 4
      %v2202 = vrot.slane %v1098, 5
      %v2203 = vsel %vm2143, %v2201, %v2202
      %v2204 = vrot.slane %v2202, 4
      %v2205 = vrot.slane %v1099, 5
      %v2206 = vsel %vm2143, %v2204, %v2205
      %v2207 = vrot.slane %v1100, 5
      %v2208 = vrot.slane %v2207, 4
      %v2209 = vrot.slane %v1101, 5
      %v2210 = vsel %vm2143, %v2208, %v2209
      %v2211 = vrot.slane %v2209, 4
      %v2212 = vrot.slane %v1102, 5
      %v2213 = vsel %vm2143, %v2211, %v2212
      %v2214 = vrot.slane %v1103, 5
      %v2215 = vrot.slane %v2214, 4
      %v2216 = vrot.slane %v1104, 5
      %v2217 = vsel %vm2143, %v2215, %v2216
      %v2218 = vrot.slane %v2216, 4
      %v2219 = vrot.slane %v1105, 5
      %v2220 = vsel %vm2143, %v2218, %v2219
      %v2221 = vrot.slane %v1106, 5
      %v2222 = vrot.slane %v2221, 4
      %v2223 = vrot.slane %v1107, 5
      %v2224 = vsel %vm2143, %v2222, %v2223
      %v2225 = vrot.slane %v2223, 4
      %v2226 = vrot.slane %v1108, 5
      %v2227 = vsel %vm2143, %v2225, %v2226
      %v2228 = vrot.slane %v1109, 5
      %v2229 = vrot.slane %v2228, 4
      %v2230 = vrot.slane %v1110, 5
      %v2231 = vsel %vm2143, %v2229, %v2230
      %v2232 = vrot.slane %v2230, 4
      %v2233 = vrot.slane %v1111, 5
      %v2234 = vsel %vm2143, %v2232, %v2233
      %v2235 = vrot.slane %v1112, 5
      %v2236 = vrot.slane %v2235, 4
      %v2237 = vrot.slane %v1113, 5
      %v2238 = vsel %vm2143, %v2236, %v2237
      %v2239 = vrot.slane %v2237, 4
      %v2240 = vrot.slane %v1114, 5
      %v2241 = vsel %vm2143, %v2239, %v2240
      %v2242 = vrot.slane %v1115, 5
      %v2243 = vrot.slane %v2242, 4
      %v2244 = vrot.slane %v1116, 5
      %v2245 = vsel %vm2143, %v2243, %v2244
      %v2246 = vrot.slane %v2244, 4
      %v2247 = vrot.slane %v1117, 5
      %v2248 = vsel %vm2143, %v2246, %v2247
      %v2249 = vrot.slane %v1118, 5
      %v2250 = vrot.slane %v2249, 4
      %v2251 = vrot.slane %v1119, 5
      %v2252 = vsel %vm2143, %v2250, %v2251
      %v2253 = vrot.slane %v2251, 4
      %v2254 = vrot.slane %v1120, 5
      %v2255 = vsel %vm2143, %v2253, %v2254
      %s2256 = scalar_lea.vmem %s4, 128
      %v2257 = vld [vmem:[%s2256] sm:$0xf]
      %v2258 = vld [vmem:[%s2256 + $0x4] sm:$0xf]
      %v2259 = vld [vmem:[%s2256 + $0x8] sm:$0xf]
      %v2260 = vld [vmem:[%s2256 + $0xc] sm:$0xf]
      %v2261 = vld [vmem:[%s2256 + $0x10] sm:$0xf]
      %v2262 = vld [vmem:[%s2256 + $0x14] sm:$0xf]
      %v2263 = vld [vmem:[%s2256 + $0x18] sm:$0xf]
      %v2264 = vld [vmem:[%s2256 + $0x1c] sm:$0xf]
      %v2265 = vld [vmem:[%s2256 + $0x20] sm:$0xf]
      %v2266 = vld [vmem:[%s2256 + $0x24] sm:$0xf]
      %v2267 = vld [vmem:[%s2256 + $0x28] sm:$0xf]
      %v2268 = vld [vmem:[%s2256 + $0x2c] sm:$0xf]
      %v2269 = vld [vmem:[%s2256 + $0x30] sm:$0xf]
      %v2270 = vld [vmem:[%s2256 + $0x34] sm:$0xf]
      %v2271 = vld [vmem:[%s2256 + $0x38] sm:$0xf]
      %v2272 = vld [vmem:[%s2256 + $0x3c] sm:$0xf]
      %v2273 = vunpack.c.l.b16 %v2147
      %v2274 = vunpack.c.l.b16 %v2150
      %v2275 = vunpack.c.l.b16 %v2154
      %v2276 = vunpack.c.l.b16 %v2157
      %v2277 = vunpack.c.l.b16 %v2161
      %v2278 = vunpack.c.l.b16 %v2164
      %v2279 = vunpack.c.l.b16 %v2168
      %v2280 = vunpack.c.l.b16 %v2171
      %v2281 = vunpack.c.l.b16 %v2175
      %v2282 = vunpack.c.l.b16 %v2178
      %v2283 = vunpack.c.l.b16 %v2182
      %v2284 = vunpack.c.l.b16 %v2185
      %v2285 = vunpack.c.l.b16 %v2189
      %v2286 = vunpack.c.l.b16 %v2192
      %v2287 = vunpack.c.l.b16 %v2196
      %v2288 = vunpack.c.l.b16 %v2199
      %v2289 = vunpack.c.l.b16 %v2203
      %v2290 = vunpack.c.l.b16 %v2206
      %v2291 = vunpack.c.l.b16 %v2210
      %v2292 = vunpack.c.l.b16 %v2213
      %v2293 = vunpack.c.l.b16 %v2217
      %v2294 = vunpack.c.l.b16 %v2220
      %v2295 = vunpack.c.l.b16 %v2224
      %v2296 = vunpack.c.l.b16 %v2227
      %v2297 = vunpack.c.l.b16 %v2231
      %v2298 = vunpack.c.l.b16 %v2234
      %v2299 = vunpack.c.l.b16 %v2238
      %v2300 = vunpack.c.l.b16 %v2241
      %v2301 = vunpack.c.l.b16 %v2245
      %v2302 = vunpack.c.l.b16 %v2248
      %v2303 = vunpack.c.l.b16 %v2252
      %v2304 = vunpack.c.l.b16 %v2255
      %v2305 = vpack.c.b16 %v2274, %v2273
      %v2306 = vpack.c.b16 %v2276, %v2275
      %v2307 = vpack.c.b16 %v2278, %v2277
      %v2308 = vpack.c.b16 %v2280, %v2279
      %v2309 = vpack.c.b16 %v2282, %v2281
      %v2310 = vpack.c.b16 %v2284, %v2283
      %v2311 = vpack.c.b16 %v2286, %v2285
      %v2312 = vpack.c.b16 %v2288, %v2287
      %v2313 = vpack.c.b16 %v2290, %v2289
      %v2314 = vpack.c.b16 %v2292, %v2291
      %v2315 = vpack.c.b16 %v2294, %v2293
      %v2316 = vpack.c.b16 %v2296, %v2295
      %v2317 = vpack.c.b16 %v2298, %v2297
      %v2318 = vpack.c.b16 %v2300, %v2299
      %v2319 = vpack.c.b16 %v2302, %v2301
      %v2320 = vpack.c.b16 %v2304, %v2303
      %v2353 = vunpack.c.l.b16 %v2257
      %v2354 = vunpack.c.l.b16 %v2258
      %v2355 = vunpack.c.l.b16 %v2259
      %v2356 = vunpack.c.l.b16 %v2260
      %v2357 = vunpack.c.l.b16 %v2261
      %v2358 = vunpack.c.l.b16 %v2262
      %v2359 = vunpack.c.l.b16 %v2263
      %v2360 = vunpack.c.l.b16 %v2264
      %v2361 = vunpack.c.l.b16 %v2265
      %v2362 = vunpack.c.l.b16 %v2266
      %v2363 = vunpack.c.l.b16 %v2267
      %v2364 = vunpack.c.l.b16 %v2268
      %v2365 = vunpack.c.l.b16 %v2269
      %v2366 = vunpack.c.l.b16 %v2270
      %v2367 = vunpack.c.l.b16 %v2271
      %v2368 = vunpack.c.l.b16 %v2272
      %v2369 = vpack.c.b16 %v2354, %v2353
      %v2370 = vpack.c.b16 %v2356, %v2355
      %v2371 = vpack.c.b16 %v2358, %v2357
      %v2372 = vpack.c.b16 %v2360, %v2359
      %v2373 = vpack.c.b16 %v2362, %v2361
      %v2374 = vpack.c.b16 %v2364, %v2363
      %v2375 = vpack.c.b16 %v2366, %v2365
      %v2376 = vpack.c.b16 %v2368, %v2367
      %2385 = vmatprep.subr.bf16.mxu0 0
      %2386 = vmatpush1.bf16.msra.mxu0 %v2376
      %2387 = vmatprep.subr.bf16.mxu0 0
      %2388 = vmatpush1.bf16.msra.mxu0 %v2375
      %2389 = vmatprep.subr.bf16.mxu0 0
      %2390 = vmatpush1.bf16.msra.mxu0 %v2374
      %2391 = vmatprep.subr.bf16.mxu0 0
      %2392 = vmatpush1.bf16.msra.mxu0 %v2373
      %2393 = vmatprep.subr.bf16.mxu0 0
      %2394 = vmatpush1.bf16.msra.mxu0 %v2372
      %2395 = vmatprep.subr.bf16.mxu0 0
      %2396 = vmatpush1.bf16.msra.mxu0 %v2371
      %2397 = vmatprep.subr.bf16.mxu0 0
      %2398 = vmatpush1.bf16.msra.mxu0 %v2370
      %2399 = vmatprep.subr.bf16.mxu0 0
      %2400 = vmatpush1.bf16.msra.mxu0 %v2369
      %2401 = vmatprep.subr.bf16.mxu0 0
      %2402 = vmatpush2.bf16.msra.mxu0 0
      %2403 = vmatprep.subr.bf16.mxu0 0
      %2404 = vmatpush2.bf16.msra.mxu0 0
      %2405 = vmatprep.subr.bf16.mxu0 0
      %2406 = vmatpush2.bf16.msra.mxu0 0
      %2407 = vmatprep.subr.bf16.mxu0 0
      %2408 = vmatpush2.bf16.msra.mxu0 0
      %2409 = vmatprep.subr.bf16.mxu0 0
      %2410 = vmatpush2.bf16.msra.mxu0 0
      %2411 = vmatprep.subr.bf16.mxu0 0
      %2412 = vmatpush2.bf16.msra.mxu0 0
      %2413 = vmatprep.subr.bf16.mxu0 0
      %2414 = vmatpush2.bf16.msra.mxu0 0
      %2415 = vmatprep.subr.bf16.mxu0 0
      %2416 = vmatpush2.bf16.msra.mxu0 0
      %2417 = vmatprep.mubr.bf16.mxu0 0
      %2418 = vmatmul.mubr.bf16.gmra.mxu0 %v2305
      %v2419 = vpop.f32.mrf.mxu0
      %v2420 = vadd.f32 0.0, %v2419
      %v2421 = vpop.f32.mrf.mxu0
      %v2422 = vpop.f32.mrf.mxu0
      %v2423 = vadd.f32 0.0, %v2422
      %v2424 = vpop.f32.mrf.mxu0
      %2425 = vmatprep.mubr.bf16.mxu0 0
      %2426 = vmatmul.mubr.bf16.gmra.mxu0 %v2306
      %v2427 = vpop.f32.mrf.mxu0
      %v2428 = vadd.f32 0.0, %v2427
      %v2429 = vpop.f32.mrf.mxu0
      %v2430 = vpop.f32.mrf.mxu0
      %v2431 = vadd.f32 0.0, %v2430
      %v2432 = vpop.f32.mrf.mxu0
      %2433 = vmatprep.mubr.bf16.mxu0 0
      %2434 = vmatmul.mubr.bf16.gmra.mxu0 %v2307
      %v2435 = vpop.f32.mrf.mxu0
      %v2436 = vadd.f32 0.0, %v2435
      %v2437 = vpop.f32.mrf.mxu0
      %v2438 = vpop.f32.mrf.mxu0
      %v2439 = vadd.f32 0.0, %v2438
      %v2440 = vpop.f32.mrf.mxu0
      %2441 = vmatprep.mubr.bf16.mxu0 0
      %2442 = vmatmul.mubr.bf16.gmra.mxu0 %v2308
      %v2443 = vpop.f32.mrf.mxu0
      %v2444 = vadd.f32 0.0, %v2443
      %v2445 = vpop.f32.mrf.mxu0
      %v2446 = vpop.f32.mrf.mxu0
      %v2447 = vadd.f32 0.0, %v2446
      %v2448 = vpop.f32.mrf.mxu0
      %2449 = vmatprep.mubr.bf16.mxu0 0
      %2450 = vmatmul.mubr.bf16.gmra.mxu0 %v2309
      %v2451 = vpop.f32.mrf.mxu0
      %v2452 = vadd.f32 0.0, %v2451
      %v2453 = vpop.f32.mrf.mxu0
      %v2454 = vpop.f32.mrf.mxu0
      %v2455 = vadd.f32 0.0, %v2454
      %v2456 = vpop.f32.mrf.mxu0
      %2457 = vmatprep.mubr.bf16.mxu0 0
      %2458 = vmatmul.mubr.bf16.gmra.mxu0 %v2310
      %v2459 = vpop.f32.mrf.mxu0
      %v2460 = vadd.f32 0.0, %v2459
      %v2461 = vpop.f32.mrf.mxu0
      %v2462 = vpop.f32.mrf.mxu0
      %v2463 = vadd.f32 0.0, %v2462
      %v2464 = vpop.f32.mrf.mxu0
      %2465 = vmatprep.mubr.bf16.mxu0 0
      %2466 = vmatmul.mubr.bf16.gmra.mxu0 %v2311
      %v2467 = vpop.f32.mrf.mxu0
      %v2468 = vadd.f32 0.0, %v2467
      %v2469 = vpop.f32.mrf.mxu0
      %v2470 = vpop.f32.mrf.mxu0
      %v2471 = vadd.f32 0.0, %v2470
      %v2472 = vpop.f32.mrf.mxu0
      %2473 = vmatprep.mubr.bf16.mxu0 0
      %2474 = vmatmul.mubr.bf16.gmra.mxu0 %v2312
      %v2475 = vpop.f32.mrf.mxu0
      %v2476 = vadd.f32 0.0, %v2475
      %v2477 = vpop.f32.mrf.mxu0
      %v2478 = vpop.f32.mrf.mxu0
      %v2479 = vadd.f32 0.0, %v2478
      %v2480 = vpop.f32.mrf.mxu0
      %2481 = vmatprep.mubr.bf16.mxu0 0
      %2482 = vmatmul.mubr.bf16.gmra.mxu0 %v2313
      %v2483 = vpop.f32.mrf.mxu0
      %v2484 = vadd.f32 0.0, %v2483
      %v2485 = vpop.f32.mrf.mxu0
      %v2486 = vpop.f32.mrf.mxu0
      %v2487 = vadd.f32 0.0, %v2486
      %v2488 = vpop.f32.mrf.mxu0
      %2489 = vmatprep.mubr.bf16.mxu0 0
      %2490 = vmatmul.mubr.bf16.gmra.mxu0 %v2314
      %v2491 = vpop.f32.mrf.mxu0
      %v2492 = vadd.f32 0.0, %v2491
      %v2493 = vpop.f32.mrf.mxu0
      %v2494 = vpop.f32.mrf.mxu0
      %v2495 = vadd.f32 0.0, %v2494
      %v2496 = vpop.f32.mrf.mxu0
      %2497 = vmatprep.mubr.bf16.mxu0 0
      %2498 = vmatmul.mubr.bf16.gmra.mxu0 %v2315
      %v2499 = vpop.f32.mrf.mxu0
      %v2500 = vadd.f32 0.0, %v2499
      %v2501 = vpop.f32.mrf.mxu0
      %v2502 = vpop.f32.mrf.mxu0
      %v2503 = vadd.f32 0.0, %v2502
      %v2504 = vpop.f32.mrf.mxu0
      %2505 = vmatprep.mubr.bf16.mxu0 0
      %2506 = vmatmul.mubr.bf16.gmra.mxu0 %v2316
      %v2507 = vpop.f32.mrf.mxu0
      %v2508 = vadd.f32 0.0, %v2507
      %v2509 = vpop.f32.mrf.mxu0
      %v2510 = vpop.f32.mrf.mxu0
      %v2511 = vadd.f32 0.0, %v2510
      %v2512 = vpop.f32.mrf.mxu0
      %2513 = vmatprep.mubr.bf16.mxu0 0
      %2514 = vmatmul.mubr.bf16.gmra.mxu0 %v2317
      %v2515 = vpop.f32.mrf.mxu0
      %v2516 = vadd.f32 0.0, %v2515
      %v2517 = vpop.f32.mrf.mxu0
      %v2518 = vpop.f32.mrf.mxu0
      %v2519 = vadd.f32 0.0, %v2518
      %v2520 = vpop.f32.mrf.mxu0
      %2521 = vmatprep.mubr.bf16.mxu0 0
      %2522 = vmatmul.mubr.bf16.gmra.mxu0 %v2318
      %v2523 = vpop.f32.mrf.mxu0
      %v2524 = vadd.f32 0.0, %v2523
      %v2525 = vpop.f32.mrf.mxu0
      %v2526 = vpop.f32.mrf.mxu0
      %v2527 = vadd.f32 0.0, %v2526
      %v2528 = vpop.f32.mrf.mxu0
      %2529 = vmatprep.mubr.bf16.mxu0 0
      %2530 = vmatmul.mubr.bf16.gmra.mxu0 %v2319
      %v2531 = vpop.f32.mrf.mxu0
      %v2532 = vadd.f32 0.0, %v2531
      %v2533 = vpop.f32.mrf.mxu0
      %v2534 = vpop.f32.mrf.mxu0
      %v2535 = vadd.f32 0.0, %v2534
      %v2536 = vpop.f32.mrf.mxu0
      %2537 = vmatprep.mubr.bf16.mxu0 0
      %2538 = vmatmul.mubr.bf16.gmra.mxu0 %v2320
      %v2539 = vpop.f32.mrf.mxu0
      %v2540 = vadd.f32 0.0, %v2539
      %v2541 = vpop.f32.mrf.mxu0
      %v2542 = vpop.f32.mrf.mxu0
      %v2543 = vadd.f32 0.0, %v2542
      %v2544 = vpop.f32.mrf.mxu0
      %2545 = vdwg.mxu0
      %v2546 = vadd.f32 %v1999, %v2420
      %v2547 = vadd.f32 %v2002, %v2423
      %v2548 = vadd.f32 %v2007, %v2428
      %v2549 = vadd.f32 %v2010, %v2431
      %v2550 = vadd.f32 %v2015, %v2436
      %v2551 = vadd.f32 %v2018, %v2439
      %v2552 = vadd.f32 %v2023, %v2444
      %v2553 = vadd.f32 %v2026, %v2447
      %v2554 = vadd.f32 %v2031, %v2452
      %v2555 = vadd.f32 %v2034, %v2455
      %v2556 = vadd.f32 %v2039, %v2460
      %v2557 = vadd.f32 %v2042, %v2463
      %v2558 = vadd.f32 %v2047, %v2468
      %v2559 = vadd.f32 %v2050, %v2471
      %v2560 = vadd.f32 %v2055, %v2476
      %v2561 = vadd.f32 %v2058, %v2479
      %v2562 = vadd.f32 %v2063, %v2484
      %v2563 = vadd.f32 %v2066, %v2487
      %v2564 = vadd.f32 %v2071, %v2492
      %v2565 = vadd.f32 %v2074, %v2495
      %v2566 = vadd.f32 %v2079, %v2500
      %v2567 = vadd.f32 %v2082, %v2503
      %v2568 = vadd.f32 %v2087, %v2508
      %v2569 = vadd.f32 %v2090, %v2511
      %v2570 = vadd.f32 %v2095, %v2516
      %v2571 = vadd.f32 %v2098, %v2519
      %v2572 = vadd.f32 %v2103, %v2524
      %v2573 = vadd.f32 %v2106, %v2527
      %v2574 = vadd.f32 %v2111, %v2532
      %v2575 = vadd.f32 %v2114, %v2535
      %v2576 = vadd.f32 %v2119, %v2540
      %v2577 = vadd.f32 %v2122, %v2543
      %s2578 = scalar_lea.vmem %s4, 192
      %v2579 = vld [vmem:[%s2578] sm:$0xf]
      %v2580 = vld [vmem:[%s2578 + $0x4] sm:$0xf]
      %v2581 = vld [vmem:[%s2578 + $0x8] sm:$0xf]
      %v2582 = vld [vmem:[%s2578 + $0xc] sm:$0xf]
      %v2583 = vld [vmem:[%s2578 + $0x10] sm:$0xf]
      %v2584 = vld [vmem:[%s2578 + $0x14] sm:$0xf]
      %v2585 = vld [vmem:[%s2578 + $0x18] sm:$0xf]
      %v2586 = vld [vmem:[%s2578 + $0x1c] sm:$0xf]
      %v2587 = vld [vmem:[%s2578 + $0x20] sm:$0xf]
      %v2588 = vld [vmem:[%s2578 + $0x24] sm:$0xf]
      %v2589 = vld [vmem:[%s2578 + $0x28] sm:$0xf]
      %v2590 = vld [vmem:[%s2578 + $0x2c] sm:$0xf]
      %v2591 = vld [vmem:[%s2578 + $0x30] sm:$0xf]
      %v2592 = vld [vmem:[%s2578 + $0x34] sm:$0xf]
      %v2593 = vld [vmem:[%s2578 + $0x38] sm:$0xf]
      %v2594 = vld [vmem:[%s2578 + $0x3c] sm:$0xf]
      %v2597 = vunpack.c.l.b16 %v1121
      %v2598 = vunpack.c.l.b16 %v1122
      %v2599 = vpack.c.b16 %v2598, %v2597
      %v2617 = vunpack.c.l.b16 %v2579
      %v2618 = vunpack.c.l.b16 %v2580
      %v2619 = vunpack.c.l.b16 %v2581
      %v2620 = vunpack.c.l.b16 %v2582
      %v2621 = vunpack.c.l.b16 %v2583
      %v2622 = vunpack.c.l.b16 %v2584
      %v2623 = vunpack.c.l.b16 %v2585
      %v2624 = vunpack.c.l.b16 %v2586
      %v2625 = vunpack.c.l.b16 %v2587
      %v2626 = vunpack.c.l.b16 %v2588
      %v2627 = vunpack.c.l.b16 %v2589
      %v2628 = vunpack.c.l.b16 %v2590
      %v2629 = vunpack.c.l.b16 %v2591
      %v2630 = vunpack.c.l.b16 %v2592
      %v2631 = vunpack.c.l.b16 %v2593
      %v2632 = vunpack.c.l.b16 %v2594
      %v2633 = vpack.c.b16 %v2618, %v2617
      %v2634 = vpack.c.b16 %v2620, %v2619
      %v2635 = vpack.c.b16 %v2622, %v2621
      %v2636 = vpack.c.b16 %v2624, %v2623
      %v2637 = vpack.c.b16 %v2626, %v2625
      %v2638 = vpack.c.b16 %v2628, %v2627
      %v2639 = vpack.c.b16 %v2630, %v2629
      %v2640 = vpack.c.b16 %v2632, %v2631
      %2649 = vmatprep.subr.bf16.mxu0 0
      %2650 = vmatpush1.bf16.msra.mxu0 %v2640
      %2651 = vmatprep.subr.bf16.mxu0 0
      %2652 = vmatpush1.bf16.msra.mxu0 %v2639
      %2653 = vmatprep.subr.bf16.mxu0 0
      %2654 = vmatpush1.bf16.msra.mxu0 %v2638
      %2655 = vmatprep.subr.bf16.mxu0 0
      %2656 = vmatpush1.bf16.msra.mxu0 %v2637
      %2657 = vmatprep.subr.bf16.mxu0 0
      %2658 = vmatpush1.bf16.msra.mxu0 %v2636
      %2659 = vmatprep.subr.bf16.mxu0 0
      %2660 = vmatpush1.bf16.msra.mxu0 %v2635
      %2661 = vmatprep.subr.bf16.mxu0 0
      %2662 = vmatpush1.bf16.msra.mxu0 %v2634
      %2663 = vmatprep.subr.bf16.mxu0 0
      %2664 = vmatpush1.bf16.msra.mxu0 %v2633
      %2665 = vmatprep.subr.bf16.mxu0 0
      %2666 = vmatpush2.bf16.msra.mxu0 0
      %2667 = vmatprep.subr.bf16.mxu0 0
      %2668 = vmatpush2.bf16.msra.mxu0 0
      %2669 = vmatprep.subr.bf16.mxu0 0
      %2670 = vmatpush2.bf16.msra.mxu0 0
      %2671 = vmatprep.subr.bf16.mxu0 0
      %2672 = vmatpush2.bf16.msra.mxu0 0
      %2673 = vmatprep.subr.bf16.mxu0 0
      %2674 = vmatpush2.bf16.msra.mxu0 0
      %2675 = vmatprep.subr.bf16.mxu0 0
      %2676 = vmatpush2.bf16.msra.mxu0 0
      %2677 = vmatprep.subr.bf16.mxu0 0
      %2678 = vmatpush2.bf16.msra.mxu0 0
      %2679 = vmatprep.subr.bf16.mxu0 0
      %2680 = vmatpush2.bf16.msra.mxu0 0
      %2681 = vmatprep.mubr.bf16.mxu0 0
      %2682 = vmatmul.mubr.bf16.gmra.mxu0 %v1885
      %v2683 = vpop.f32.mrf.mxu0
      %v2684 = vadd.f32 0.0, %v2683
      %v2685 = vpop.f32.mrf.mxu0
      %v2686 = vpop.f32.mrf.mxu0
      %v2687 = vadd.f32 0.0, %v2686
      %v2688 = vpop.f32.mrf.mxu0
      %2689 = vmatprep.mubr.bf16.mxu0 0
      %2690 = vmatmul.mubr.bf16.gmra.mxu0 %v1886
      %v2691 = vpop.f32.mrf.mxu0
      %v2692 = vadd.f32 0.0, %v2691
      %v2693 = vpop.f32.mrf.mxu0
      %v2694 = vpop.f32.mrf.mxu0
      %v2695 = vadd.f32 0.0, %v2694
      %v2696 = vpop.f32.mrf.mxu0
      %2697 = vmatprep.mubr.bf16.mxu0 0
      %2698 = vmatmul.mubr.bf16.gmra.mxu0 %v1887
      %v2699 = vpop.f32.mrf.mxu0
      %v2700 = vadd.f32 0.0, %v2699
      %v2701 = vpop.f32.mrf.mxu0
      %v2702 = vpop.f32.mrf.mxu0
      %v2703 = vadd.f32 0.0, %v2702
      %v2704 = vpop.f32.mrf.mxu0
      %2705 = vmatprep.mubr.bf16.mxu0 0
      %2706 = vmatmul.mubr.bf16.gmra.mxu0 %v1888
      %v2707 = vpop.f32.mrf.mxu0
      %v2708 = vadd.f32 0.0, %v2707
      %v2709 = vpop.f32.mrf.mxu0
      %v2710 = vpop.f32.mrf.mxu0
      %v2711 = vadd.f32 0.0, %v2710
      %v2712 = vpop.f32.mrf.mxu0
      %2713 = vmatprep.mubr.bf16.mxu0 0
      %2714 = vmatmul.mubr.bf16.gmra.mxu0 %v1889
      %v2715 = vpop.f32.mrf.mxu0
      %v2716 = vadd.f32 0.0, %v2715
      %v2717 = vpop.f32.mrf.mxu0
      %v2718 = vpop.f32.mrf.mxu0
      %v2719 = vadd.f32 0.0, %v2718
      %v2720 = vpop.f32.mrf.mxu0
      %2721 = vmatprep.mubr.bf16.mxu0 0
      %2722 = vmatmul.mubr.bf16.gmra.mxu0 %v1890
      %v2723 = vpop.f32.mrf.mxu0
      %v2724 = vadd.f32 0.0, %v2723
      %v2725 = vpop.f32.mrf.mxu0
      %v2726 = vpop.f32.mrf.mxu0
      %v2727 = vadd.f32 0.0, %v2726
      %v2728 = vpop.f32.mrf.mxu0
      %2729 = vmatprep.mubr.bf16.mxu0 0
      %2730 = vmatmul.mubr.bf16.gmra.mxu0 %v1891
      %v2731 = vpop.f32.mrf.mxu0
      %v2732 = vadd.f32 0.0, %v2731
      %v2733 = vpop.f32.mrf.mxu0
      %v2734 = vpop.f32.mrf.mxu0
      %v2735 = vadd.f32 0.0, %v2734
      %v2736 = vpop.f32.mrf.mxu0
      %2737 = vmatprep.mubr.bf16.mxu0 0
      %2738 = vmatmul.mubr.bf16.gmra.mxu0 %v1892
      %v2739 = vpop.f32.mrf.mxu0
      %v2740 = vadd.f32 0.0, %v2739
      %v2741 = vpop.f32.mrf.mxu0
      %v2742 = vpop.f32.mrf.mxu0
      %v2743 = vadd.f32 0.0, %v2742
      %v2744 = vpop.f32.mrf.mxu0
      %2745 = vmatprep.mubr.bf16.mxu0 0
      %2746 = vmatmul.mubr.bf16.gmra.mxu0 %v1893
      %v2747 = vpop.f32.mrf.mxu0
      %v2748 = vadd.f32 0.0, %v2747
      %v2749 = vpop.f32.mrf.mxu0
      %v2750 = vpop.f32.mrf.mxu0
      %v2751 = vadd.f32 0.0, %v2750
      %v2752 = vpop.f32.mrf.mxu0
      %2753 = vmatprep.mubr.bf16.mxu0 0
      %2754 = vmatmul.mubr.bf16.gmra.mxu0 %v1894
      %v2755 = vpop.f32.mrf.mxu0
      %v2756 = vadd.f32 0.0, %v2755
      %v2757 = vpop.f32.mrf.mxu0
      %v2758 = vpop.f32.mrf.mxu0
      %v2759 = vadd.f32 0.0, %v2758
      %v2760 = vpop.f32.mrf.mxu0
      %2761 = vmatprep.mubr.bf16.mxu0 0
      %2762 = vmatmul.mubr.bf16.gmra.mxu0 %v1895
      %v2763 = vpop.f32.mrf.mxu0
      %v2764 = vadd.f32 0.0, %v2763
      %v2765 = vpop.f32.mrf.mxu0
      %v2766 = vpop.f32.mrf.mxu0
      %v2767 = vadd.f32 0.0, %v2766
      %v2768 = vpop.f32.mrf.mxu0
      %2769 = vmatprep.mubr.bf16.mxu0 0
      %2770 = vmatmul.mubr.bf16.gmra.mxu0 %v1896
      %v2771 = vpop.f32.mrf.mxu0
      %v2772 = vadd.f32 0.0, %v2771
      %v2773 = vpop.f32.mrf.mxu0
      %v2774 = vpop.f32.mrf.mxu0
      %v2775 = vadd.f32 0.0, %v2774
      %v2776 = vpop.f32.mrf.mxu0
      %2777 = vmatprep.mubr.bf16.mxu0 0
      %2778 = vmatmul.mubr.bf16.gmra.mxu0 %v1897
      %v2779 = vpop.f32.mrf.mxu0
      %v2780 = vadd.f32 0.0, %v2779
      %v2781 = vpop.f32.mrf.mxu0
      %v2782 = vpop.f32.mrf.mxu0
      %v2783 = vadd.f32 0.0, %v2782
      %v2784 = vpop.f32.mrf.mxu0
      %2785 = vmatprep.mubr.bf16.mxu0 0
      %2786 = vmatmul.mubr.bf16.gmra.mxu0 %v1898
      %v2787 = vpop.f32.mrf.mxu0
      %v2788 = vadd.f32 0.0, %v2787
      %v2789 = vpop.f32.mrf.mxu0
      %v2790 = vpop.f32.mrf.mxu0
      %v2791 = vadd.f32 0.0, %v2790
      %v2792 = vpop.f32.mrf.mxu0
      %2793 = vmatprep.mubr.bf16.mxu0 0
      %2794 = vmatmul.mubr.bf16.gmra.mxu0 %v1899
      %v2795 = vpop.f32.mrf.mxu0
      %v2796 = vadd.f32 0.0, %v2795
      %v2797 = vpop.f32.mrf.mxu0
      %v2798 = vpop.f32.mrf.mxu0
      %v2799 = vadd.f32 0.0, %v2798
      %v2800 = vpop.f32.mrf.mxu0
      %2801 = vmatprep.mubr.bf16.mxu0 0
      %2802 = vmatmul.mubr.bf16.gmra.mxu0 %v2599
      %v2803 = vpop.f32.mrf.mxu0
      %v2804 = vadd.f32 0.0, %v2803
      %v2805 = vpop.f32.mrf.mxu0
      %v2806 = vpop.f32.mrf.mxu0
      %v2807 = vadd.f32 0.0, %v2806
      %v2808 = vpop.f32.mrf.mxu0
      %2809 = vdwg.mxu0
      %v2810 = vadd.f32 %v2546, %v2684
      %v2811 = vadd.f32 %v2547, %v2687
      %v2812 = vadd.f32 %v2548, %v2692
      %v2813 = vadd.f32 %v2549, %v2695
      %v2814 = vadd.f32 %v2550, %v2700
      %v2815 = vadd.f32 %v2551, %v2703
      %v2816 = vadd.f32 %v2552, %v2708
      %v2817 = vadd.f32 %v2553, %v2711
      %v2818 = vadd.f32 %v2554, %v2716
      %v2819 = vadd.f32 %v2555, %v2719
      %v2820 = vadd.f32 %v2556, %v2724
      %v2821 = vadd.f32 %v2557, %v2727
      %v2822 = vadd.f32 %v2558, %v2732
      %v2823 = vadd.f32 %v2559, %v2735
      %v2824 = vadd.f32 %v2560, %v2740
      %v2825 = vadd.f32 %v2561, %v2743
      %v2826 = vadd.f32 %v2562, %v2748
      %v2827 = vadd.f32 %v2563, %v2751
      %v2828 = vadd.f32 %v2564, %v2756
      %v2829 = vadd.f32 %v2565, %v2759
      %v2830 = vadd.f32 %v2566, %v2764
      %v2831 = vadd.f32 %v2567, %v2767
      %v2832 = vadd.f32 %v2568, %v2772
      %v2833 = vadd.f32 %v2569, %v2775
      %v2834 = vadd.f32 %v2570, %v2780
      %v2835 = vadd.f32 %v2571, %v2783
      %v2836 = vadd.f32 %v2572, %v2788
      %v2837 = vadd.f32 %v2573, %v2791
      %v2838 = vadd.f32 %v2574, %v2796
      %v2839 = vadd.f32 %v2575, %v2799
      %v2840 = vadd.f32 %v2576, %v2804
      %v2841 = vadd.f32 %v2577, %v2807
      %v2843 = vshrl.u32 %v1121, 16
      %v2845 = vrot.slane %v2843, 4
      %v2846 = vshll.u32 %v1121, 16
      %v2848 = vrot.slane %v2846, 5
      %v2849 = vor.u32 %v2845, %v2848
      %v2850 = vrot.slane %v2849, 4
      %v2852 = vshll.u32 %v1122, 16
      %v2854 = vrot.slane %v2852, 5
      %v2855 = vsel %vm1145, %v2850, %v2854
      %v2856 = vshrl.u32 %v1122, 16
      %v2858 = vrot.slane %v2856, 4
      %v2859 = vor.u32 %v2858, %v2854
      %v2860 = vrot.slane %v2859, 4
      %v2862 = vshll.u32 %v1123, 16
      %v2864 = vrot.slane %v2862, 5
      %v2865 = vsel %vm1145, %v2860, %v2864
      %s2866 = scalar_lea.vmem %s4, 256
      %v2867 = vld [vmem:[%s2866] sm:$0xf]
      %v2868 = vld [vmem:[%s2866 + $0x4] sm:$0xf]
      %v2869 = vld [vmem:[%s2866 + $0x8] sm:$0xf]
      %v2870 = vld [vmem:[%s2866 + $0xc] sm:$0xf]
      %v2871 = vld [vmem:[%s2866 + $0x10] sm:$0xf]
      %v2872 = vld [vmem:[%s2866 + $0x14] sm:$0xf]
      %v2873 = vld [vmem:[%s2866 + $0x18] sm:$0xf]
      %v2874 = vld [vmem:[%s2866 + $0x1c] sm:$0xf]
      %v2875 = vld [vmem:[%s2866 + $0x20] sm:$0xf]
      %v2876 = vld [vmem:[%s2866 + $0x24] sm:$0xf]
      %v2877 = vld [vmem:[%s2866 + $0x28] sm:$0xf]
      %v2878 = vld [vmem:[%s2866 + $0x2c] sm:$0xf]
      %v2879 = vld [vmem:[%s2866 + $0x30] sm:$0xf]
      %v2880 = vld [vmem:[%s2866 + $0x34] sm:$0xf]
      %v2881 = vld [vmem:[%s2866 + $0x38] sm:$0xf]
      %v2882 = vld [vmem:[%s2866 + $0x3c] sm:$0xf]
      %v2883 = vunpack.c.l.b16 %v2855
      %v2884 = vunpack.c.l.b16 %v2865
      %v2885 = vpack.c.b16 %v2884, %v2883
      %v2903 = vunpack.c.l.b16 %v2867
      %v2904 = vunpack.c.l.b16 %v2868
      %v2905 = vunpack.c.l.b16 %v2869
      %v2906 = vunpack.c.l.b16 %v2870
      %v2907 = vunpack.c.l.b16 %v2871
      %v2908 = vunpack.c.l.b16 %v2872
      %v2909 = vunpack.c.l.b16 %v2873
      %v2910 = vunpack.c.l.b16 %v2874
      %v2911 = vunpack.c.l.b16 %v2875
      %v2912 = vunpack.c.l.b16 %v2876
      %v2913 = vunpack.c.l.b16 %v2877
      %v2914 = vunpack.c.l.b16 %v2878
      %v2915 = vunpack.c.l.b16 %v2879
      %v2916 = vunpack.c.l.b16 %v2880
      %v2917 = vunpack.c.l.b16 %v2881
      %v2918 = vunpack.c.l.b16 %v2882
      %v2919 = vpack.c.b16 %v2904, %v2903
      %v2920 = vpack.c.b16 %v2906, %v2905
      %v2921 = vpack.c.b16 %v2908, %v2907
      %v2922 = vpack.c.b16 %v2910, %v2909
      %v2923 = vpack.c.b16 %v2912, %v2911
      %v2924 = vpack.c.b16 %v2914, %v2913
      %v2925 = vpack.c.b16 %v2916, %v2915
      %v2926 = vpack.c.b16 %v2918, %v2917
      %2935 = vmatprep.subr.bf16.mxu0 0
      %2936 = vmatpush1.bf16.msra.mxu0 %v2926
      %2937 = vmatprep.subr.bf16.mxu0 0
      %2938 = vmatpush1.bf16.msra.mxu0 %v2925
      %2939 = vmatprep.subr.bf16.mxu0 0
      %2940 = vmatpush1.bf16.msra.mxu0 %v2924
      %2941 = vmatprep.subr.bf16.mxu0 0
      %2942 = vmatpush1.bf16.msra.mxu0 %v2923
      %2943 = vmatprep.subr.bf16.mxu0 0
      %2944 = vmatpush1.bf16.msra.mxu0 %v2922
      %2945 = vmatprep.subr.bf16.mxu0 0
      %2946 = vmatpush1.bf16.msra.mxu0 %v2921
      %2947 = vmatprep.subr.bf16.mxu0 0
      %2948 = vmatpush1.bf16.msra.mxu0 %v2920
      %2949 = vmatprep.subr.bf16.mxu0 0
      %2950 = vmatpush1.bf16.msra.mxu0 %v2919
      %2951 = vmatprep.subr.bf16.mxu0 0
      %2952 = vmatpush2.bf16.msra.mxu0 0
      %2953 = vmatprep.subr.bf16.mxu0 0
      %2954 = vmatpush2.bf16.msra.mxu0 0
      %2955 = vmatprep.subr.bf16.mxu0 0
      %2956 = vmatpush2.bf16.msra.mxu0 0
      %2957 = vmatprep.subr.bf16.mxu0 0
      %2958 = vmatpush2.bf16.msra.mxu0 0
      %2959 = vmatprep.subr.bf16.mxu0 0
      %2960 = vmatpush2.bf16.msra.mxu0 0
      %2961 = vmatprep.subr.bf16.mxu0 0
      %2962 = vmatpush2.bf16.msra.mxu0 0
      %2963 = vmatprep.subr.bf16.mxu0 0
      %2964 = vmatpush2.bf16.msra.mxu0 0
      %2965 = vmatprep.subr.bf16.mxu0 0
      %2966 = vmatpush2.bf16.msra.mxu0 0
      %2967 = vmatprep.mubr.bf16.mxu0 0
      %2968 = vmatmul.mubr.bf16.gmra.mxu0 %v1580
      %v2969 = vpop.f32.mrf.mxu0
      %v2970 = vadd.f32 0.0, %v2969
      %v2971 = vpop.f32.mrf.mxu0
      %v2972 = vpop.f32.mrf.mxu0
      %v2973 = vadd.f32 0.0, %v2972
      %v2974 = vpop.f32.mrf.mxu0
      %2975 = vmatprep.mubr.bf16.mxu0 0
      %2976 = vmatmul.mubr.bf16.gmra.mxu0 %v1581
      %v2977 = vpop.f32.mrf.mxu0
      %v2978 = vadd.f32 0.0, %v2977
      %v2979 = vpop.f32.mrf.mxu0
      %v2980 = vpop.f32.mrf.mxu0
      %v2981 = vadd.f32 0.0, %v2980
      %v2982 = vpop.f32.mrf.mxu0
      %2983 = vmatprep.mubr.bf16.mxu0 0
      %2984 = vmatmul.mubr.bf16.gmra.mxu0 %v1582
      %v2985 = vpop.f32.mrf.mxu0
      %v2986 = vadd.f32 0.0, %v2985
      %v2987 = vpop.f32.mrf.mxu0
      %v2988 = vpop.f32.mrf.mxu0
      %v2989 = vadd.f32 0.0, %v2988
      %v2990 = vpop.f32.mrf.mxu0
      %2991 = vmatprep.mubr.bf16.mxu0 0
      %2992 = vmatmul.mubr.bf16.gmra.mxu0 %v1583
      %v2993 = vpop.f32.mrf.mxu0
      %v2994 = vadd.f32 0.0, %v2993
      %v2995 = vpop.f32.mrf.mxu0
      %v2996 = vpop.f32.mrf.mxu0
      %v2997 = vadd.f32 0.0, %v2996
      %v2998 = vpop.f32.mrf.mxu0
      %2999 = vmatprep.mubr.bf16.mxu0 0
      %3000 = vmatmul.mubr.bf16.gmra.mxu0 %v1584
      %v3001 = vpop.f32.mrf.mxu0
      %v3002 = vadd.f32 0.0, %v3001
      %v3003 = vpop.f32.mrf.mxu0
      %v3004 = vpop.f32.mrf.mxu0
      %v3005 = vadd.f32 0.0, %v3004
      %v3006 = vpop.f32.mrf.mxu0
      %3007 = vmatprep.mubr.bf16.mxu0 0
      %3008 = vmatmul.mubr.bf16.gmra.mxu0 %v1585
      %v3009 = vpop.f32.mrf.mxu0
      %v3010 = vadd.f32 0.0, %v3009
      %v3011 = vpop.f32.mrf.mxu0
      %v3012 = vpop.f32.mrf.mxu0
      %v3013 = vadd.f32 0.0, %v3012
      %v3014 = vpop.f32.mrf.mxu0
      %3015 = vmatprep.mubr.bf16.mxu0 0
      %3016 = vmatmul.mubr.bf16.gmra.mxu0 %v1586
      %v3017 = vpop.f32.mrf.mxu0
      %v3018 = vadd.f32 0.0, %v3017
      %v3019 = vpop.f32.mrf.mxu0
      %v3020 = vpop.f32.mrf.mxu0
      %v3021 = vadd.f32 0.0, %v3020
      %v3022 = vpop.f32.mrf.mxu0
      %3023 = vmatprep.mubr.bf16.mxu0 0
      %3024 = vmatmul.mubr.bf16.gmra.mxu0 %v1587
      %v3025 = vpop.f32.mrf.mxu0
      %v3026 = vadd.f32 0.0, %v3025
      %v3027 = vpop.f32.mrf.mxu0
      %v3028 = vpop.f32.mrf.mxu0
      %v3029 = vadd.f32 0.0, %v3028
      %v3030 = vpop.f32.mrf.mxu0
      %3031 = vmatprep.mubr.bf16.mxu0 0
      %3032 = vmatmul.mubr.bf16.gmra.mxu0 %v1588
      %v3033 = vpop.f32.mrf.mxu0
      %v3034 = vadd.f32 0.0, %v3033
      %v3035 = vpop.f32.mrf.mxu0
      %v3036 = vpop.f32.mrf.mxu0
      %v3037 = vadd.f32 0.0, %v3036
      %v3038 = vpop.f32.mrf.mxu0
      %3039 = vmatprep.mubr.bf16.mxu0 0
      %3040 = vmatmul.mubr.bf16.gmra.mxu0 %v1589
      %v3041 = vpop.f32.mrf.mxu0
      %v3042 = vadd.f32 0.0, %v3041
      %v3043 = vpop.f32.mrf.mxu0
      %v3044 = vpop.f32.mrf.mxu0
      %v3045 = vadd.f32 0.0, %v3044
      %v3046 = vpop.f32.mrf.mxu0
      %3047 = vmatprep.mubr.bf16.mxu0 0
      %3048 = vmatmul.mubr.bf16.gmra.mxu0 %v1590
      %v3049 = vpop.f32.mrf.mxu0
      %v3050 = vadd.f32 0.0, %v3049
      %v3051 = vpop.f32.mrf.mxu0
      %v3052 = vpop.f32.mrf.mxu0
      %v3053 = vadd.f32 0.0, %v3052
      %v3054 = vpop.f32.mrf.mxu0
      %3055 = vmatprep.mubr.bf16.mxu0 0
      %3056 = vmatmul.mubr.bf16.gmra.mxu0 %v1591
      %v3057 = vpop.f32.mrf.mxu0
      %v3058 = vadd.f32 0.0, %v3057
      %v3059 = vpop.f32.mrf.mxu0
      %v3060 = vpop.f32.mrf.mxu0
      %v3061 = vadd.f32 0.0, %v3060
      %v3062 = vpop.f32.mrf.mxu0
      %3063 = vmatprep.mubr.bf16.mxu0 0
      %3064 = vmatmul.mubr.bf16.gmra.mxu0 %v1592
      %v3065 = vpop.f32.mrf.mxu0
      %v3066 = vadd.f32 0.0, %v3065
      %v3067 = vpop.f32.mrf.mxu0
      %v3068 = vpop.f32.mrf.mxu0
      %v3069 = vadd.f32 0.0, %v3068
      %v3070 = vpop.f32.mrf.mxu0
      %3071 = vmatprep.mubr.bf16.mxu0 0
      %3072 = vmatmul.mubr.bf16.gmra.mxu0 %v1593
      %v3073 = vpop.f32.mrf.mxu0
      %v3074 = vadd.f32 0.0, %v3073
      %v3075 = vpop.f32.mrf.mxu0
      %v3076 = vpop.f32.mrf.mxu0
      %v3077 = vadd.f32 0.0, %v3076
      %v3078 = vpop.f32.mrf.mxu0
      %3079 = vmatprep.mubr.bf16.mxu0 0
      %3080 = vmatmul.mubr.bf16.gmra.mxu0 %v1594
      %v3081 = vpop.f32.mrf.mxu0
      %v3082 = vadd.f32 0.0, %v3081
      %v3083 = vpop.f32.mrf.mxu0
      %v3084 = vpop.f32.mrf.mxu0
      %v3085 = vadd.f32 0.0, %v3084
      %v3086 = vpop.f32.mrf.mxu0
      %3087 = vmatprep.mubr.bf16.mxu0 0
      %3088 = vmatmul.mubr.bf16.gmra.mxu0 %v2885
      %v3089 = vpop.f32.mrf.mxu0
      %v3090 = vadd.f32 0.0, %v3089
      %v3091 = vpop.f32.mrf.mxu0
      %v3092 = vpop.f32.mrf.mxu0
      %v3093 = vadd.f32 0.0, %v3092
      %v3094 = vpop.f32.mrf.mxu0
      %3095 = vdwg.mxu0
      %v3096 = vadd.f32 %v2810, %v2970
      %v3097 = vadd.f32 %v2811, %v2973
      %v3098 = vadd.f32 %v2812, %v2978
      %v3099 = vadd.f32 %v2813, %v2981
      %v3100 = vadd.f32 %v2814, %v2986
      %v3101 = vadd.f32 %v2815, %v2989
      %v3102 = vadd.f32 %v2816, %v2994
      %v3103 = vadd.f32 %v2817, %v2997
      %v3104 = vadd.f32 %v2818, %v3002
      %v3105 = vadd.f32 %v2819, %v3005
      %v3106 = vadd.f32 %v2820, %v3010
      %v3107 = vadd.f32 %v2821, %v3013
      %v3108 = vadd.f32 %v2822, %v3018
      %v3109 = vadd.f32 %v2823, %v3021
      %v3110 = vadd.f32 %v2824, %v3026
      %v3111 = vadd.f32 %v2825, %v3029
      %v3112 = vadd.f32 %v2826, %v3034
      %v3113 = vadd.f32 %v2827, %v3037
      %v3114 = vadd.f32 %v2828, %v3042
      %v3115 = vadd.f32 %v2829, %v3045
      %v3116 = vadd.f32 %v2830, %v3050
      %v3117 = vadd.f32 %v2831, %v3053
      %v3118 = vadd.f32 %v2832, %v3058
      %v3119 = vadd.f32 %v2833, %v3061
      %v3120 = vadd.f32 %v2834, %v3066
      %v3121 = vadd.f32 %v2835, %v3069
      %v3122 = vadd.f32 %v2836, %v3074
      %v3123 = vadd.f32 %v2837, %v3077
      %v3124 = vadd.f32 %v2838, %v3082
      %v3125 = vadd.f32 %v2839, %v3085
      %v3126 = vadd.f32 %v2840, %v3090
      %v3127 = vadd.f32 %v2841, %v3093
      %v3129 = vrot.slane %v1121, 5
      %v3130 = vrot.slane %v3129, 4
      %v3131 = vrot.slane %v1122, 5
      %v3132 = vsel %vm2143, %v3130, %v3131
      %v3133 = vrot.slane %v3131, 4
      %v3134 = vrot.slane %v1123, 5
      %v3135 = vsel %vm2143, %v3133, %v3134
      %s3136 = scalar_lea.vmem %s4, 320
      %v3137 = vld [vmem:[%s3136] sm:$0xf]
      %v3138 = vld [vmem:[%s3136 + $0x4] sm:$0xf]
      %v3139 = vld [vmem:[%s3136 + $0x8] sm:$0xf]
      %v3140 = vld [vmem:[%s3136 + $0xc] sm:$0xf]
      %v3141 = vld [vmem:[%s3136 + $0x10] sm:$0xf]
      %v3142 = vld [vmem:[%s3136 + $0x14] sm:$0xf]
      %v3143 = vld [vmem:[%s3136 + $0x18] sm:$0xf]
      %v3144 = vld [vmem:[%s3136 + $0x1c] sm:$0xf]
      %v3145 = vld [vmem:[%s3136 + $0x20] sm:$0xf]
      %v3146 = vld [vmem:[%s3136 + $0x24] sm:$0xf]
      %v3147 = vld [vmem:[%s3136 + $0x28] sm:$0xf]
      %v3148 = vld [vmem:[%s3136 + $0x2c] sm:$0xf]
      %v3149 = vld [vmem:[%s3136 + $0x30] sm:$0xf]
      %v3150 = vld [vmem:[%s3136 + $0x34] sm:$0xf]
      %v3151 = vld [vmem:[%s3136 + $0x38] sm:$0xf]
      %v3152 = vld [vmem:[%s3136 + $0x3c] sm:$0xf]
      %v3153 = vunpack.c.l.b16 %v3132
      %v3154 = vunpack.c.l.b16 %v3135
      %v3155 = vpack.c.b16 %v3154, %v3153
      %v3173 = vunpack.c.l.b16 %v3137
      %v3174 = vunpack.c.l.b16 %v3138
      %v3175 = vunpack.c.l.b16 %v3139
      %v3176 = vunpack.c.l.b16 %v3140
      %v3177 = vunpack.c.l.b16 %v3141
      %v3178 = vunpack.c.l.b16 %v3142
      %v3179 = vunpack.c.l.b16 %v3143
      %v3180 = vunpack.c.l.b16 %v3144
      %v3181 = vunpack.c.l.b16 %v3145
      %v3182 = vunpack.c.l.b16 %v3146
      %v3183 = vunpack.c.l.b16 %v3147
      %v3184 = vunpack.c.l.b16 %v3148
      %v3185 = vunpack.c.l.b16 %v3149
      %v3186 = vunpack.c.l.b16 %v3150
      %v3187 = vunpack.c.l.b16 %v3151
      %v3188 = vunpack.c.l.b16 %v3152
      %v3189 = vpack.c.b16 %v3174, %v3173
      %v3190 = vpack.c.b16 %v3176, %v3175
      %v3191 = vpack.c.b16 %v3178, %v3177
      %v3192 = vpack.c.b16 %v3180, %v3179
      %v3193 = vpack.c.b16 %v3182, %v3181
      %v3194 = vpack.c.b16 %v3184, %v3183
      %v3195 = vpack.c.b16 %v3186, %v3185
      %v3196 = vpack.c.b16 %v3188, %v3187
      %3205 = vmatprep.subr.bf16.mxu0 0
      %3206 = vmatpush1.bf16.msra.mxu0 %v3196
      %3207 = vmatprep.subr.bf16.mxu0 0
      %3208 = vmatpush1.bf16.msra.mxu0 %v3195
      %3209 = vmatprep.subr.bf16.mxu0 0
      %3210 = vmatpush1.bf16.msra.mxu0 %v3194
      %3211 = vmatprep.subr.bf16.mxu0 0
      %3212 = vmatpush1.bf16.msra.mxu0 %v3193
      %3213 = vmatprep.subr.bf16.mxu0 0
      %3214 = vmatpush1.bf16.msra.mxu0 %v3192
      %3215 = vmatprep.subr.bf16.mxu0 0
      %3216 = vmatpush1.bf16.msra.mxu0 %v3191
      %3217 = vmatprep.subr.bf16.mxu0 0
      %3218 = vmatpush1.bf16.msra.mxu0 %v3190
      %3219 = vmatprep.subr.bf16.mxu0 0
      %3220 = vmatpush1.bf16.msra.mxu0 %v3189
      %3221 = vmatprep.subr.bf16.mxu0 0
      %3222 = vmatpush2.bf16.msra.mxu0 0
      %3223 = vmatprep.subr.bf16.mxu0 0
      %3224 = vmatpush2.bf16.msra.mxu0 0
      %3225 = vmatprep.subr.bf16.mxu0 0
      %3226 = vmatpush2.bf16.msra.mxu0 0
      %3227 = vmatprep.subr.bf16.mxu0 0
      %3228 = vmatpush2.bf16.msra.mxu0 0
      %3229 = vmatprep.subr.bf16.mxu0 0
      %3230 = vmatpush2.bf16.msra.mxu0 0
      %3231 = vmatprep.subr.bf16.mxu0 0
      %3232 = vmatpush2.bf16.msra.mxu0 0
      %3233 = vmatprep.subr.bf16.mxu0 0
      %3234 = vmatpush2.bf16.msra.mxu0 0
      %3235 = vmatprep.subr.bf16.mxu0 0
      %3236 = vmatpush2.bf16.msra.mxu0 0
      %3237 = vmatprep.mubr.bf16.mxu0 0
      %3238 = vmatmul.mubr.bf16.gmra.mxu0 %v2306
      %v3239 = vpop.f32.mrf.mxu0
      %v3240 = vadd.f32 0.0, %v3239
      %v3241 = vpop.f32.mrf.mxu0
      %v3242 = vpop.f32.mrf.mxu0
      %v3243 = vadd.f32 0.0, %v3242
      %v3244 = vpop.f32.mrf.mxu0
      %3245 = vmatprep.mubr.bf16.mxu0 0
      %3246 = vmatmul.mubr.bf16.gmra.mxu0 %v2307
      %v3247 = vpop.f32.mrf.mxu0
      %v3248 = vadd.f32 0.0, %v3247
      %v3249 = vpop.f32.mrf.mxu0
      %v3250 = vpop.f32.mrf.mxu0
      %v3251 = vadd.f32 0.0, %v3250
      %v3252 = vpop.f32.mrf.mxu0
      %3253 = vmatprep.mubr.bf16.mxu0 0
      %3254 = vmatmul.mubr.bf16.gmra.mxu0 %v2308
      %v3255 = vpop.f32.mrf.mxu0
      %v3256 = vadd.f32 0.0, %v3255
      %v3257 = vpop.f32.mrf.mxu0
      %v3258 = vpop.f32.mrf.mxu0
      %v3259 = vadd.f32 0.0, %v3258
      %v3260 = vpop.f32.mrf.mxu0
      %3261 = vmatprep.mubr.bf16.mxu0 0
      %3262 = vmatmul.mubr.bf16.gmra.mxu0 %v2309
      %v3263 = vpop.f32.mrf.mxu0
      %v3264 = vadd.f32 0.0, %v3263
      %v3265 = vpop.f32.mrf.mxu0
      %v3266 = vpop.f32.mrf.mxu0
      %v3267 = vadd.f32 0.0, %v3266
      %v3268 = vpop.f32.mrf.mxu0
      %3269 = vmatprep.mubr.bf16.mxu0 0
      %3270 = vmatmul.mubr.bf16.gmra.mxu0 %v2310
      %v3271 = vpop.f32.mrf.mxu0
      %v3272 = vadd.f32 0.0, %v3271
      %v3273 = vpop.f32.mrf.mxu0
      %v3274 = vpop.f32.mrf.mxu0
      %v3275 = vadd.f32 0.0, %v3274
      %v3276 = vpop.f32.mrf.mxu0
      %3277 = vmatprep.mubr.bf16.mxu0 0
      %3278 = vmatmul.mubr.bf16.gmra.mxu0 %v2311
      %v3279 = vpop.f32.mrf.mxu0
      %v3280 = vadd.f32 0.0, %v3279
      %v3281 = vpop.f32.mrf.mxu0
      %v3282 = vpop.f32.mrf.mxu0
      %v3283 = vadd.f32 0.0, %v3282
      %v3284 = vpop.f32.mrf.mxu0
      %3285 = vmatprep.mubr.bf16.mxu0 0
      %3286 = vmatmul.mubr.bf16.gmra.mxu0 %v2312
      %v3287 = vpop.f32.mrf.mxu0
      %v3288 = vadd.f32 0.0, %v3287
      %v3289 = vpop.f32.mrf.mxu0
      %v3290 = vpop.f32.mrf.mxu0
      %v3291 = vadd.f32 0.0, %v3290
      %v3292 = vpop.f32.mrf.mxu0
      %3293 = vmatprep.mubr.bf16.mxu0 0
      %3294 = vmatmul.mubr.bf16.gmra.mxu0 %v2313
      %v3295 = vpop.f32.mrf.mxu0
      %v3296 = vadd.f32 0.0, %v3295
      %v3297 = vpop.f32.mrf.mxu0
      %v3298 = vpop.f32.mrf.mxu0
      %v3299 = vadd.f32 0.0, %v3298
      %v3300 = vpop.f32.mrf.mxu0
      %3301 = vmatprep.mubr.bf16.mxu0 0
      %3302 = vmatmul.mubr.bf16.gmra.mxu0 %v2314
      %v3303 = vpop.f32.mrf.mxu0
      %v3304 = vadd.f32 0.0, %v3303
      %v3305 = vpop.f32.mrf.mxu0
      %v3306 = vpop.f32.mrf.mxu0
      %v3307 = vadd.f32 0.0, %v3306
      %v3308 = vpop.f32.mrf.mxu0
      %3309 = vmatprep.mubr.bf16.mxu0 0
      %3310 = vmatmul.mubr.bf16.gmra.mxu0 %v2315
      %v3311 = vpop.f32.mrf.mxu0
      %v3312 = vadd.f32 0.0, %v3311
      %v3313 = vpop.f32.mrf.mxu0
      %v3314 = vpop.f32.mrf.mxu0
      %v3315 = vadd.f32 0.0, %v3314
      %v3316 = vpop.f32.mrf.mxu0
      %3317 = vmatprep.mubr.bf16.mxu0 0
      %3318 = vmatmul.mubr.bf16.gmra.mxu0 %v2316
      %v3319 = vpop.f32.mrf.mxu0
      %v3320 = vadd.f32 0.0, %v3319
      %v3321 = vpop.f32.mrf.mxu0
      %v3322 = vpop.f32.mrf.mxu0
      %v3323 = vadd.f32 0.0, %v3322
      %v3324 = vpop.f32.mrf.mxu0
      %3325 = vmatprep.mubr.bf16.mxu0 0
      %3326 = vmatmul.mubr.bf16.gmra.mxu0 %v2317
      %v3327 = vpop.f32.mrf.mxu0
      %v3328 = vadd.f32 0.0, %v3327
      %v3329 = vpop.f32.mrf.mxu0
      %v3330 = vpop.f32.mrf.mxu0
      %v3331 = vadd.f32 0.0, %v3330
      %v3332 = vpop.f32.mrf.mxu0
      %3333 = vmatprep.mubr.bf16.mxu0 0
      %3334 = vmatmul.mubr.bf16.gmra.mxu0 %v2318
      %v3335 = vpop.f32.mrf.mxu0
      %v3336 = vadd.f32 0.0, %v3335
      %v3337 = vpop.f32.mrf.mxu0
      %v3338 = vpop.f32.mrf.mxu0
      %v3339 = vadd.f32 0.0, %v3338
      %v3340 = vpop.f32.mrf.mxu0
      %3341 = vmatprep.mubr.bf16.mxu0 0
      %3342 = vmatmul.mubr.bf16.gmra.mxu0 %v2319
      %v3343 = vpop.f32.mrf.mxu0
      %v3344 = vadd.f32 0.0, %v3343
      %v3345 = vpop.f32.mrf.mxu0
      %v3346 = vpop.f32.mrf.mxu0
      %v3347 = vadd.f32 0.0, %v3346
      %v3348 = vpop.f32.mrf.mxu0
      %3349 = vmatprep.mubr.bf16.mxu0 0
      %3350 = vmatmul.mubr.bf16.gmra.mxu0 %v2320
      %v3351 = vpop.f32.mrf.mxu0
      %v3352 = vadd.f32 0.0, %v3351
      %v3353 = vpop.f32.mrf.mxu0
      %v3354 = vpop.f32.mrf.mxu0
      %v3355 = vadd.f32 0.0, %v3354
      %v3356 = vpop.f32.mrf.mxu0
      %3357 = vmatprep.mubr.bf16.mxu0 0
      %3358 = vmatmul.mubr.bf16.gmra.mxu0 %v3155
      %v3359 = vpop.f32.mrf.mxu0
      %v3360 = vadd.f32 0.0, %v3359
      %v3361 = vpop.f32.mrf.mxu0
      %v3362 = vpop.f32.mrf.mxu0
      %v3363 = vadd.f32 0.0, %v3362
      %v3364 = vpop.f32.mrf.mxu0
      %3365 = vdwg.mxu0
      %v3366 = vadd.f32 %v3096, %v3240
      %v3367 = vadd.f32 %v3097, %v3243
      %v3368 = vadd.f32 %v3098, %v3248
      %v3369 = vadd.f32 %v3099, %v3251
      %v3370 = vadd.f32 %v3100, %v3256
      %v3371 = vadd.f32 %v3101, %v3259
      %v3372 = vadd.f32 %v3102, %v3264
      %v3373 = vadd.f32 %v3103, %v3267
      %v3374 = vadd.f32 %v3104, %v3272
      %v3375 = vadd.f32 %v3105, %v3275
      %v3376 = vadd.f32 %v3106, %v3280
      %v3377 = vadd.f32 %v3107, %v3283
      %v3378 = vadd.f32 %v3108, %v3288
      %v3379 = vadd.f32 %v3109, %v3291
      %v3380 = vadd.f32 %v3110, %v3296
      %v3381 = vadd.f32 %v3111, %v3299
      %v3382 = vadd.f32 %v3112, %v3304
      %v3383 = vadd.f32 %v3113, %v3307
      %v3384 = vadd.f32 %v3114, %v3312
      %v3385 = vadd.f32 %v3115, %v3315
      %v3386 = vadd.f32 %v3116, %v3320
      %v3387 = vadd.f32 %v3117, %v3323
      %v3388 = vadd.f32 %v3118, %v3328
      %v3389 = vadd.f32 %v3119, %v3331
      %v3390 = vadd.f32 %v3120, %v3336
      %v3391 = vadd.f32 %v3121, %v3339
      %v3392 = vadd.f32 %v3122, %v3344
      %v3393 = vadd.f32 %v3123, %v3347
      %v3394 = vadd.f32 %v3124, %v3352
      %v3395 = vadd.f32 %v3125, %v3355
      %v3396 = vadd.f32 %v3126, %v3360
      %v3397 = vadd.f32 %v3127, %v3363
      %s3398 = scalar_lea.vmem %s4, 384
      %v3399 = vld [vmem:[%s3398] sm:$0xf]
      %v3400 = vld [vmem:[%s3398 + $0x4] sm:$0xf]
      %v3401 = vld [vmem:[%s3398 + $0x8] sm:$0xf]
      %v3402 = vld [vmem:[%s3398 + $0xc] sm:$0xf]
      %v3403 = vld [vmem:[%s3398 + $0x10] sm:$0xf]
      %v3404 = vld [vmem:[%s3398 + $0x14] sm:$0xf]
      %v3405 = vld [vmem:[%s3398 + $0x18] sm:$0xf]
      %v3406 = vld [vmem:[%s3398 + $0x1c] sm:$0xf]
      %v3407 = vld [vmem:[%s3398 + $0x20] sm:$0xf]
      %v3408 = vld [vmem:[%s3398 + $0x24] sm:$0xf]
      %v3409 = vld [vmem:[%s3398 + $0x28] sm:$0xf]
      %v3410 = vld [vmem:[%s3398 + $0x2c] sm:$0xf]
      %v3411 = vld [vmem:[%s3398 + $0x30] sm:$0xf]
      %v3412 = vld [vmem:[%s3398 + $0x34] sm:$0xf]
      %v3413 = vld [vmem:[%s3398 + $0x38] sm:$0xf]
      %v3414 = vld [vmem:[%s3398 + $0x3c] sm:$0xf]
      %v3417 = vunpack.c.l.b16 %v1124
      %v3418 = vunpack.c.l.b16 %v1125
      %v3419 = vpack.c.b16 %v3418, %v3417
      %v3437 = vunpack.c.l.b16 %v3399
      %v3438 = vunpack.c.l.b16 %v3400
      %v3439 = vunpack.c.l.b16 %v3401
      %v3440 = vunpack.c.l.b16 %v3402
      %v3441 = vunpack.c.l.b16 %v3403
      %v3442 = vunpack.c.l.b16 %v3404
      %v3443 = vunpack.c.l.b16 %v3405
      %v3444 = vunpack.c.l.b16 %v3406
      %v3445 = vunpack.c.l.b16 %v3407
      %v3446 = vunpack.c.l.b16 %v3408
      %v3447 = vunpack.c.l.b16 %v3409
      %v3448 = vunpack.c.l.b16 %v3410
      %v3449 = vunpack.c.l.b16 %v3411
      %v3450 = vunpack.c.l.b16 %v3412
      %v3451 = vunpack.c.l.b16 %v3413
      %v3452 = vunpack.c.l.b16 %v3414
      %v3453 = vpack.c.b16 %v3438, %v3437
      %v3454 = vpack.c.b16 %v3440, %v3439
      %v3455 = vpack.c.b16 %v3442, %v3441
      %v3456 = vpack.c.b16 %v3444, %v3443
      %v3457 = vpack.c.b16 %v3446, %v3445
      %v3458 = vpack.c.b16 %v3448, %v3447
      %v3459 = vpack.c.b16 %v3450, %v3449
      %v3460 = vpack.c.b16 %v3452, %v3451
      %3469 = vmatprep.subr.bf16.mxu0 0
      %3470 = vmatpush1.bf16.msra.mxu0 %v3460
      %3471 = vmatprep.subr.bf16.mxu0 0
      %3472 = vmatpush1.bf16.msra.mxu0 %v3459
      %3473 = vmatprep.subr.bf16.mxu0 0
      %3474 = vmatpush1.bf16.msra.mxu0 %v3458
      %3475 = vmatprep.subr.bf16.mxu0 0
      %3476 = vmatpush1.bf16.msra.mxu0 %v3457
      %3477 = vmatprep.subr.bf16.mxu0 0
      %3478 = vmatpush1.bf16.msra.mxu0 %v3456
      %3479 = vmatprep.subr.bf16.mxu0 0
      %3480 = vmatpush1.bf16.msra.mxu0 %v3455
      %3481 = vmatprep.subr.bf16.mxu0 0
      %3482 = vmatpush1.bf16.msra.mxu0 %v3454
      %3483 = vmatprep.subr.bf16.mxu0 0
      %3484 = vmatpush1.bf16.msra.mxu0 %v3453
      %3485 = vmatprep.subr.bf16.mxu0 0
      %3486 = vmatpush2.bf16.msra.mxu0 0
      %3487 = vmatprep.subr.bf16.mxu0 0
      %3488 = vmatpush2.bf16.msra.mxu0 0
      %3489 = vmatprep.subr.bf16.mxu0 0
      %3490 = vmatpush2.bf16.msra.mxu0 0
      %3491 = vmatprep.subr.bf16.mxu0 0
      %3492 = vmatpush2.bf16.msra.mxu0 0
      %3493 = vmatprep.subr.bf16.mxu0 0
      %3494 = vmatpush2.bf16.msra.mxu0 0
      %3495 = vmatprep.subr.bf16.mxu0 0
      %3496 = vmatpush2.bf16.msra.mxu0 0
      %3497 = vmatprep.subr.bf16.mxu0 0
      %3498 = vmatpush2.bf16.msra.mxu0 0
      %3499 = vmatprep.subr.bf16.mxu0 0
      %3500 = vmatpush2.bf16.msra.mxu0 0
      %3501 = vmatprep.mubr.bf16.mxu0 0
      %3502 = vmatmul.mubr.bf16.gmra.mxu0 %v1886
      %v3503 = vpop.f32.mrf.mxu0
      %v3504 = vadd.f32 0.0, %v3503
      %v3505 = vpop.f32.mrf.mxu0
      %v3506 = vpop.f32.mrf.mxu0
      %v3507 = vadd.f32 0.0, %v3506
      %v3508 = vpop.f32.mrf.mxu0
      %3509 = vmatprep.mubr.bf16.mxu0 0
      %3510 = vmatmul.mubr.bf16.gmra.mxu0 %v1887
      %v3511 = vpop.f32.mrf.mxu0
      %v3512 = vadd.f32 0.0, %v3511
      %v3513 = vpop.f32.mrf.mxu0
      %v3514 = vpop.f32.mrf.mxu0
      %v3515 = vadd.f32 0.0, %v3514
      %v3516 = vpop.f32.mrf.mxu0
      %3517 = vmatprep.mubr.bf16.mxu0 0
      %3518 = vmatmul.mubr.bf16.gmra.mxu0 %v1888
      %v3519 = vpop.f32.mrf.mxu0
      %v3520 = vadd.f32 0.0, %v3519
      %v3521 = vpop.f32.mrf.mxu0
      %v3522 = vpop.f32.mrf.mxu0
      %v3523 = vadd.f32 0.0, %v3522
      %v3524 = vpop.f32.mrf.mxu0
      %3525 = vmatprep.mubr.bf16.mxu0 0
      %3526 = vmatmul.mubr.bf16.gmra.mxu0 %v1889
      %v3527 = vpop.f32.mrf.mxu0
      %v3528 = vadd.f32 0.0, %v3527
      %v3529 = vpop.f32.mrf.mxu0
      %v3530 = vpop.f32.mrf.mxu0
      %v3531 = vadd.f32 0.0, %v3530
      %v3532 = vpop.f32.mrf.mxu0
      %3533 = vmatprep.mubr.bf16.mxu0 0
      %3534 = vmatmul.mubr.bf16.gmra.mxu0 %v1890
      %v3535 = vpop.f32.mrf.mxu0
      %v3536 = vadd.f32 0.0, %v3535
      %v3537 = vpop.f32.mrf.mxu0
      %v3538 = vpop.f32.mrf.mxu0
      %v3539 = vadd.f32 0.0, %v3538
      %v3540 = vpop.f32.mrf.mxu0
      %3541 = vmatprep.mubr.bf16.mxu0 0
      %3542 = vmatmul.mubr.bf16.gmra.mxu0 %v1891
      %v3543 = vpop.f32.mrf.mxu0
      %v3544 = vadd.f32 0.0, %v3543
      %v3545 = vpop.f32.mrf.mxu0
      %v3546 = vpop.f32.mrf.mxu0
      %v3547 = vadd.f32 0.0, %v3546
      %v3548 = vpop.f32.mrf.mxu0
      %3549 = vmatprep.mubr.bf16.mxu0 0
      %3550 = vmatmul.mubr.bf16.gmra.mxu0 %v1892
      %v3551 = vpop.f32.mrf.mxu0
      %v3552 = vadd.f32 0.0, %v3551
      %v3553 = vpop.f32.mrf.mxu0
      %v3554 = vpop.f32.mrf.mxu0
      %v3555 = vadd.f32 0.0, %v3554
      %v3556 = vpop.f32.mrf.mxu0
      %3557 = vmatprep.mubr.bf16.mxu0 0
      %3558 = vmatmul.mubr.bf16.gmra.mxu0 %v1893
      %v3559 = vpop.f32.mrf.mxu0
      %v3560 = vadd.f32 0.0, %v3559
      %v3561 = vpop.f32.mrf.mxu0
      %v3562 = vpop.f32.mrf.mxu0
      %v3563 = vadd.f32 0.0, %v3562
      %v3564 = vpop.f32.mrf.mxu0
      %3565 = vmatprep.mubr.bf16.mxu0 0
      %3566 = vmatmul.mubr.bf16.gmra.mxu0 %v1894
      %v3567 = vpop.f32.mrf.mxu0
      %v3568 = vadd.f32 0.0, %v3567
      %v3569 = vpop.f32.mrf.mxu0
      %v3570 = vpop.f32.mrf.mxu0
      %v3571 = vadd.f32 0.0, %v3570
      %v3572 = vpop.f32.mrf.mxu0
      %3573 = vmatprep.mubr.bf16.mxu0 0
      %3574 = vmatmul.mubr.bf16.gmra.mxu0 %v1895
      %v3575 = vpop.f32.mrf.mxu0
      %v3576 = vadd.f32 0.0, %v3575
      %v3577 = vpop.f32.mrf.mxu0
      %v3578 = vpop.f32.mrf.mxu0
      %v3579 = vadd.f32 0.0, %v3578
      %v3580 = vpop.f32.mrf.mxu0
      %3581 = vmatprep.mubr.bf16.mxu0 0
      %3582 = vmatmul.mubr.bf16.gmra.mxu0 %v1896
      %v3583 = vpop.f32.mrf.mxu0
      %v3584 = vadd.f32 0.0, %v3583
      %v3585 = vpop.f32.mrf.mxu0
      %v3586 = vpop.f32.mrf.mxu0
      %v3587 = vadd.f32 0.0, %v3586
      %v3588 = vpop.f32.mrf.mxu0
      %3589 = vmatprep.mubr.bf16.mxu0 0
      %3590 = vmatmul.mubr.bf16.gmra.mxu0 %v1897
      %v3591 = vpop.f32.mrf.mxu0
      %v3592 = vadd.f32 0.0, %v3591
      %v3593 = vpop.f32.mrf.mxu0
      %v3594 = vpop.f32.mrf.mxu0
      %v3595 = vadd.f32 0.0, %v3594
      %v3596 = vpop.f32.mrf.mxu0
      %3597 = vmatprep.mubr.bf16.mxu0 0
      %3598 = vmatmul.mubr.bf16.gmra.mxu0 %v1898
      %v3599 = vpop.f32.mrf.mxu0
      %v3600 = vadd.f32 0.0, %v3599
      %v3601 = vpop.f32.mrf.mxu0
      %v3602 = vpop.f32.mrf.mxu0
      %v3603 = vadd.f32 0.0, %v3602
      %v3604 = vpop.f32.mrf.mxu0
      %3605 = vmatprep.mubr.bf16.mxu0 0
      %3606 = vmatmul.mubr.bf16.gmra.mxu0 %v1899
      %v3607 = vpop.f32.mrf.mxu0
      %v3608 = vadd.f32 0.0, %v3607
      %v3609 = vpop.f32.mrf.mxu0
      %v3610 = vpop.f32.mrf.mxu0
      %v3611 = vadd.f32 0.0, %v3610
      %v3612 = vpop.f32.mrf.mxu0
      %3613 = vmatprep.mubr.bf16.mxu0 0
      %3614 = vmatmul.mubr.bf16.gmra.mxu0 %v2599
      %v3615 = vpop.f32.mrf.mxu0
      %v3616 = vadd.f32 0.0, %v3615
      %v3617 = vpop.f32.mrf.mxu0
      %v3618 = vpop.f32.mrf.mxu0
      %v3619 = vadd.f32 0.0, %v3618
      %v3620 = vpop.f32.mrf.mxu0
      %3621 = vmatprep.mubr.bf16.mxu0 0
      %3622 = vmatmul.mubr.bf16.gmra.mxu0 %v3419
      %v3623 = vpop.f32.mrf.mxu0
      %v3624 = vadd.f32 0.0, %v3623
      %v3625 = vpop.f32.mrf.mxu0
      %v3626 = vpop.f32.mrf.mxu0
      %v3627 = vadd.f32 0.0, %v3626
      %v3628 = vpop.f32.mrf.mxu0
      %3629 = vdwg.mxu0
      %v3630 = vadd.f32 %v3366, %v3504
      %v3631 = vadd.f32 %v3367, %v3507
      %v3632 = vadd.f32 %v3368, %v3512
      %v3633 = vadd.f32 %v3369, %v3515
      %v3634 = vadd.f32 %v3370, %v3520
      %v3635 = vadd.f32 %v3371, %v3523
      %v3636 = vadd.f32 %v3372, %v3528
      %v3637 = vadd.f32 %v3373, %v3531
      %v3638 = vadd.f32 %v3374, %v3536
      %v3639 = vadd.f32 %v3375, %v3539
      %v3640 = vadd.f32 %v3376, %v3544
      %v3641 = vadd.f32 %v3377, %v3547
      %v3642 = vadd.f32 %v3378, %v3552
      %v3643 = vadd.f32 %v3379, %v3555
      %v3644 = vadd.f32 %v3380, %v3560
      %v3645 = vadd.f32 %v3381, %v3563
      %v3646 = vadd.f32 %v3382, %v3568
      %v3647 = vadd.f32 %v3383, %v3571
      %v3648 = vadd.f32 %v3384, %v3576
      %v3649 = vadd.f32 %v3385, %v3579
      %v3650 = vadd.f32 %v3386, %v3584
      %v3651 = vadd.f32 %v3387, %v3587
      %v3652 = vadd.f32 %v3388, %v3592
      %v3653 = vadd.f32 %v3389, %v3595
      %v3654 = vadd.f32 %v3390, %v3600
      %v3655 = vadd.f32 %v3391, %v3603
      %v3656 = vadd.f32 %v3392, %v3608
      %v3657 = vadd.f32 %v3393, %v3611
      %v3658 = vadd.f32 %v3394, %v3616
      %v3659 = vadd.f32 %v3395, %v3619
      %v3660 = vadd.f32 %v3396, %v3624
      %v3661 = vadd.f32 %v3397, %v3627
      %v3663 = vshrl.u32 %v1124, 16
      %v3665 = vrot.slane %v3663, 4
      %v3666 = vshll.u32 %v1124, 16
      %v3668 = vrot.slane %v3666, 5
      %v3669 = vor.u32 %v3665, %v3668
      %v3670 = vrot.slane %v3669, 4
      %v3672 = vshll.u32 %v1125, 16
      %v3674 = vrot.slane %v3672, 5
      %v3675 = vsel %vm1145, %v3670, %v3674
      %v3676 = vshrl.u32 %v1125, 16
      %v3678 = vrot.slane %v3676, 4
      %v3679 = vor.u32 %v3678, %v3674
      %v3680 = vrot.slane %v3679, 4
      %v3682 = vshll.u32 %v1126, 16
      %v3684 = vrot.slane %v3682, 5
      %v3685 = vsel %vm1145, %v3680, %v3684
      %s3686 = scalar_lea.vmem %s4, 448
      %v3687 = vld [vmem:[%s3686] sm:$0xf]
      %v3688 = vld [vmem:[%s3686 + $0x4] sm:$0xf]
      %v3689 = vld [vmem:[%s3686 + $0x8] sm:$0xf]
      %v3690 = vld [vmem:[%s3686 + $0xc] sm:$0xf]
      %v3691 = vld [vmem:[%s3686 + $0x10] sm:$0xf]
      %v3692 = vld [vmem:[%s3686 + $0x14] sm:$0xf]
      %v3693 = vld [vmem:[%s3686 + $0x18] sm:$0xf]
      %v3694 = vld [vmem:[%s3686 + $0x1c] sm:$0xf]
      %v3695 = vld [vmem:[%s3686 + $0x20] sm:$0xf]
      %v3696 = vld [vmem:[%s3686 + $0x24] sm:$0xf]
      %v3697 = vld [vmem:[%s3686 + $0x28] sm:$0xf]
      %v3698 = vld [vmem:[%s3686 + $0x2c] sm:$0xf]
      %v3699 = vld [vmem:[%s3686 + $0x30] sm:$0xf]
      %v3700 = vld [vmem:[%s3686 + $0x34] sm:$0xf]
      %v3701 = vld [vmem:[%s3686 + $0x38] sm:$0xf]
      %v3702 = vld [vmem:[%s3686 + $0x3c] sm:$0xf]
      %v3703 = vunpack.c.l.b16 %v3675
      %v3704 = vunpack.c.l.b16 %v3685
      %v3705 = vpack.c.b16 %v3704, %v3703
      %v3723 = vunpack.c.l.b16 %v3687
      %v3724 = vunpack.c.l.b16 %v3688
      %v3725 = vunpack.c.l.b16 %v3689
      %v3726 = vunpack.c.l.b16 %v3690
      %v3727 = vunpack.c.l.b16 %v3691
      %v3728 = vunpack.c.l.b16 %v3692
      %v3729 = vunpack.c.l.b16 %v3693
      %v3730 = vunpack.c.l.b16 %v3694
      %v3731 = vunpack.c.l.b16 %v3695
      %v3732 = vunpack.c.l.b16 %v3696
      %v3733 = vunpack.c.l.b16 %v3697
      %v3734 = vunpack.c.l.b16 %v3698
      %v3735 = vunpack.c.l.b16 %v3699
      %v3736 = vunpack.c.l.b16 %v3700
      %v3737 = vunpack.c.l.b16 %v3701
      %v3738 = vunpack.c.l.b16 %v3702
      %v3739 = vpack.c.b16 %v3724, %v3723
      %v3740 = vpack.c.b16 %v3726, %v3725
      %v3741 = vpack.c.b16 %v3728, %v3727
      %v3742 = vpack.c.b16 %v3730, %v3729
      %v3743 = vpack.c.b16 %v3732, %v3731
      %v3744 = vpack.c.b16 %v3734, %v3733
      %v3745 = vpack.c.b16 %v3736, %v3735
      %v3746 = vpack.c.b16 %v3738, %v3737
      %3755 = vmatprep.subr.bf16.mxu0 0
      %3756 = vmatpush1.bf16.msra.mxu0 %v3746
      %3757 = vmatprep.subr.bf16.mxu0 0
      %3758 = vmatpush1.bf16.msra.mxu0 %v3745
      %3759 = vmatprep.subr.bf16.mxu0 0
      %3760 = vmatpush1.bf16.msra.mxu0 %v3744
      %3761 = vmatprep.subr.bf16.mxu0 0
      %3762 = vmatpush1.bf16.msra.mxu0 %v3743
      %3763 = vmatprep.subr.bf16.mxu0 0
      %3764 = vmatpush1.bf16.msra.mxu0 %v3742
      %3765 = vmatprep.subr.bf16.mxu0 0
      %3766 = vmatpush1.bf16.msra.mxu0 %v3741
      %3767 = vmatprep.subr.bf16.mxu0 0
      %3768 = vmatpush1.bf16.msra.mxu0 %v3740
      %3769 = vmatprep.subr.bf16.mxu0 0
      %3770 = vmatpush1.bf16.msra.mxu0 %v3739
      %3771 = vmatprep.subr.bf16.mxu0 0
      %3772 = vmatpush2.bf16.msra.mxu0 0
      %3773 = vmatprep.subr.bf16.mxu0 0
      %3774 = vmatpush2.bf16.msra.mxu0 0
      %3775 = vmatprep.subr.bf16.mxu0 0
      %3776 = vmatpush2.bf16.msra.mxu0 0
      %3777 = vmatprep.subr.bf16.mxu0 0
      %3778 = vmatpush2.bf16.msra.mxu0 0
      %3779 = vmatprep.subr.bf16.mxu0 0
      %3780 = vmatpush2.bf16.msra.mxu0 0
      %3781 = vmatprep.subr.bf16.mxu0 0
      %3782 = vmatpush2.bf16.msra.mxu0 0
      %3783 = vmatprep.subr.bf16.mxu0 0
      %3784 = vmatpush2.bf16.msra.mxu0 0
      %3785 = vmatprep.subr.bf16.mxu0 0
      %3786 = vmatpush2.bf16.msra.mxu0 0
      %3787 = vmatprep.mubr.bf16.mxu0 0
      %3788 = vmatmul.mubr.bf16.gmra.mxu0 %v1581
      %v3789 = vpop.f32.mrf.mxu0
      %v3790 = vadd.f32 0.0, %v3789
      %v3791 = vpop.f32.mrf.mxu0
      %v3792 = vpop.f32.mrf.mxu0
      %v3793 = vadd.f32 0.0, %v3792
      %v3794 = vpop.f32.mrf.mxu0
      %3795 = vmatprep.mubr.bf16.mxu0 0
      %3796 = vmatmul.mubr.bf16.gmra.mxu0 %v1582
      %v3797 = vpop.f32.mrf.mxu0
      %v3798 = vadd.f32 0.0, %v3797
      %v3799 = vpop.f32.mrf.mxu0
      %v3800 = vpop.f32.mrf.mxu0
      %v3801 = vadd.f32 0.0, %v3800
      %v3802 = vpop.f32.mrf.mxu0
      %3803 = vmatprep.mubr.bf16.mxu0 0
      %3804 = vmatmul.mubr.bf16.gmra.mxu0 %v1583
      %v3805 = vpop.f32.mrf.mxu0
      %v3806 = vadd.f32 0.0, %v3805
      %v3807 = vpop.f32.mrf.mxu0
      %v3808 = vpop.f32.mrf.mxu0
      %v3809 = vadd.f32 0.0, %v3808
      %v3810 = vpop.f32.mrf.mxu0
      %3811 = vmatprep.mubr.bf16.mxu0 0
      %3812 = vmatmul.mubr.bf16.gmra.mxu0 %v1584
      %v3813 = vpop.f32.mrf.mxu0
      %v3814 = vadd.f32 0.0, %v3813
      %v3815 = vpop.f32.mrf.mxu0
      %v3816 = vpop.f32.mrf.mxu0
      %v3817 = vadd.f32 0.0, %v3816
      %v3818 = vpop.f32.mrf.mxu0
      %3819 = vmatprep.mubr.bf16.mxu0 0
      %3820 = vmatmul.mubr.bf16.gmra.mxu0 %v1585
      %v3821 = vpop.f32.mrf.mxu0
      %v3822 = vadd.f32 0.0, %v3821
      %v3823 = vpop.f32.mrf.mxu0
      %v3824 = vpop.f32.mrf.mxu0
      %v3825 = vadd.f32 0.0, %v3824
      %v3826 = vpop.f32.mrf.mxu0
      %3827 = vmatprep.mubr.bf16.mxu0 0
      %3828 = vmatmul.mubr.bf16.gmra.mxu0 %v1586
      %v3829 = vpop.f32.mrf.mxu0
      %v3830 = vadd.f32 0.0, %v3829
      %v3831 = vpop.f32.mrf.mxu0
      %v3832 = vpop.f32.mrf.mxu0
      %v3833 = vadd.f32 0.0, %v3832
      %v3834 = vpop.f32.mrf.mxu0
      %3835 = vmatprep.mubr.bf16.mxu0 0
      %3836 = vmatmul.mubr.bf16.gmra.mxu0 %v1587
      %v3837 = vpop.f32.mrf.mxu0
      %v3838 = vadd.f32 0.0, %v3837
      %v3839 = vpop.f32.mrf.mxu0
      %v3840 = vpop.f32.mrf.mxu0
      %v3841 = vadd.f32 0.0, %v3840
      %v3842 = vpop.f32.mrf.mxu0
      %3843 = vmatprep.mubr.bf16.mxu0 0
      %3844 = vmatmul.mubr.bf16.gmra.mxu0 %v1588
      %v3845 = vpop.f32.mrf.mxu0
      %v3846 = vadd.f32 0.0, %v3845
      %v3847 = vpop.f32.mrf.mxu0
      %v3848 = vpop.f32.mrf.mxu0
      %v3849 = vadd.f32 0.0, %v3848
      %v3850 = vpop.f32.mrf.mxu0
      %3851 = vmatprep.mubr.bf16.mxu0 0
      %3852 = vmatmul.mubr.bf16.gmra.mxu0 %v1589
      %v3853 = vpop.f32.mrf.mxu0
      %v3854 = vadd.f32 0.0, %v3853
      %v3855 = vpop.f32.mrf.mxu0
      %v3856 = vpop.f32.mrf.mxu0
      %v3857 = vadd.f32 0.0, %v3856
      %v3858 = vpop.f32.mrf.mxu0
      %3859 = vmatprep.mubr.bf16.mxu0 0
      %3860 = vmatmul.mubr.bf16.gmra.mxu0 %v1590
      %v3861 = vpop.f32.mrf.mxu0
      %v3862 = vadd.f32 0.0, %v3861
      %v3863 = vpop.f32.mrf.mxu0
      %v3864 = vpop.f32.mrf.mxu0
      %v3865 = vadd.f32 0.0, %v3864
      %v3866 = vpop.f32.mrf.mxu0
      %3867 = vmatprep.mubr.bf16.mxu0 0
      %3868 = vmatmul.mubr.bf16.gmra.mxu0 %v1591
      %v3869 = vpop.f32.mrf.mxu0
      %v3870 = vadd.f32 0.0, %v3869
      %v3871 = vpop.f32.mrf.mxu0
      %v3872 = vpop.f32.mrf.mxu0
      %v3873 = vadd.f32 0.0, %v3872
      %v3874 = vpop.f32.mrf.mxu0
      %3875 = vmatprep.mubr.bf16.mxu0 0
      %3876 = vmatmul.mubr.bf16.gmra.mxu0 %v1592
      %v3877 = vpop.f32.mrf.mxu0
      %v3878 = vadd.f32 0.0, %v3877
      %v3879 = vpop.f32.mrf.mxu0
      %v3880 = vpop.f32.mrf.mxu0
      %v3881 = vadd.f32 0.0, %v3880
      %v3882 = vpop.f32.mrf.mxu0
      %3883 = vmatprep.mubr.bf16.mxu0 0
      %3884 = vmatmul.mubr.bf16.gmra.mxu0 %v1593
      %v3885 = vpop.f32.mrf.mxu0
      %v3886 = vadd.f32 0.0, %v3885
      %v3887 = vpop.f32.mrf.mxu0
      %v3888 = vpop.f32.mrf.mxu0
      %v3889 = vadd.f32 0.0, %v3888
      %v3890 = vpop.f32.mrf.mxu0
      %3891 = vmatprep.mubr.bf16.mxu0 0
      %3892 = vmatmul.mubr.bf16.gmra.mxu0 %v1594
      %v3893 = vpop.f32.mrf.mxu0
      %v3894 = vadd.f32 0.0, %v3893
      %v3895 = vpop.f32.mrf.mxu0
      %v3896 = vpop.f32.mrf.mxu0
      %v3897 = vadd.f32 0.0, %v3896
      %v3898 = vpop.f32.mrf.mxu0
      %3899 = vmatprep.mubr.bf16.mxu0 0
      %3900 = vmatmul.mubr.bf16.gmra.mxu0 %v2885
      %v3901 = vpop.f32.mrf.mxu0
      %v3902 = vadd.f32 0.0, %v3901
      %v3903 = vpop.f32.mrf.mxu0
      %v3904 = vpop.f32.mrf.mxu0
      %v3905 = vadd.f32 0.0, %v3904
      %v3906 = vpop.f32.mrf.mxu0
      %3907 = vmatprep.mubr.bf16.mxu0 0
      %3908 = vmatmul.mubr.bf16.gmra.mxu0 %v3705
      %v3909 = vpop.f32.mrf.mxu0
      %v3910 = vadd.f32 0.0, %v3909
      %v3911 = vpop.f32.mrf.mxu0
      %v3912 = vpop.f32.mrf.mxu0
      %v3913 = vadd.f32 0.0, %v3912
      %v3914 = vpop.f32.mrf.mxu0
      %3915 = vdwg.mxu0
      %v3916 = vadd.f32 %v3630, %v3790
      %v3917 = vadd.f32 %v3631, %v3793
      %v3918 = vadd.f32 %v3632, %v3798
      %v3919 = vadd.f32 %v3633, %v3801
      %v3920 = vadd.f32 %v3634, %v3806
      %v3921 = vadd.f32 %v3635, %v3809
      %v3922 = vadd.f32 %v3636, %v3814
      %v3923 = vadd.f32 %v3637, %v3817
      %v3924 = vadd.f32 %v3638, %v3822
      %v3925 = vadd.f32 %v3639, %v3825
      %v3926 = vadd.f32 %v3640, %v3830
      %v3927 = vadd.f32 %v3641, %v3833
      %v3928 = vadd.f32 %v3642, %v3838
      %v3929 = vadd.f32 %v3643, %v3841
      %v3930 = vadd.f32 %v3644, %v3846
      %v3931 = vadd.f32 %v3645, %v3849
      %v3932 = vadd.f32 %v3646, %v3854
      %v3933 = vadd.f32 %v3647, %v3857
      %v3934 = vadd.f32 %v3648, %v3862
      %v3935 = vadd.f32 %v3649, %v3865
      %v3936 = vadd.f32 %v3650, %v3870
      %v3937 = vadd.f32 %v3651, %v3873
      %v3938 = vadd.f32 %v3652, %v3878
      %v3939 = vadd.f32 %v3653, %v3881
      %v3940 = vadd.f32 %v3654, %v3886
      %v3941 = vadd.f32 %v3655, %v3889
      %v3942 = vadd.f32 %v3656, %v3894
      %v3943 = vadd.f32 %v3657, %v3897
      %v3944 = vadd.f32 %v3658, %v3902
      %v3945 = vadd.f32 %v3659, %v3905
      %v3946 = vadd.f32 %v3660, %v3910
      %v3947 = vadd.f32 %v3661, %v3913
      %v3949 = vrot.slane %v1124, 5
      %v3950 = vrot.slane %v3949, 4
      %v3951 = vrot.slane %v1125, 5
      %v3952 = vsel %vm2143, %v3950, %v3951
      %v3953 = vrot.slane %v3951, 4
      %v3954 = vrot.slane %v1126, 5
      %v3955 = vsel %vm2143, %v3953, %v3954
      %s3956 = scalar_lea.vmem %s4, 512
      %v3957 = vld [vmem:[%s3956] sm:$0xf]
      %v3958 = vld [vmem:[%s3956 + $0x4] sm:$0xf]
      %v3959 = vld [vmem:[%s3956 + $0x8] sm:$0xf]
      %v3960 = vld [vmem:[%s3956 + $0xc] sm:$0xf]
      %v3961 = vld [vmem:[%s3956 + $0x10] sm:$0xf]
      %v3962 = vld [vmem:[%s3956 + $0x14] sm:$0xf]
      %v3963 = vld [vmem:[%s3956 + $0x18] sm:$0xf]
      %v3964 = vld [vmem:[%s3956 + $0x1c] sm:$0xf]
      %v3965 = vld [vmem:[%s3956 + $0x20] sm:$0xf]
      %v3966 = vld [vmem:[%s3956 + $0x24] sm:$0xf]
      %v3967 = vld [vmem:[%s3956 + $0x28] sm:$0xf]
      %v3968 = vld [vmem:[%s3956 + $0x2c] sm:$0xf]
      %v3969 = vld [vmem:[%s3956 + $0x30] sm:$0xf]
      %v3970 = vld [vmem:[%s3956 + $0x34] sm:$0xf]
      %v3971 = vld [vmem:[%s3956 + $0x38] sm:$0xf]
      %v3972 = vld [vmem:[%s3956 + $0x3c] sm:$0xf]
      %v3973 = vunpack.c.l.b16 %v3952
      %v3974 = vunpack.c.l.b16 %v3955
      %v3975 = vpack.c.b16 %v3974, %v3973
      %v3993 = vunpack.c.l.b16 %v3957
      %v3994 = vunpack.c.l.b16 %v3958
      %v3995 = vunpack.c.l.b16 %v3959
      %v3996 = vunpack.c.l.b16 %v3960
      %v3997 = vunpack.c.l.b16 %v3961
      %v3998 = vunpack.c.l.b16 %v3962
      %v3999 = vunpack.c.l.b16 %v3963
      %v4000 = vunpack.c.l.b16 %v3964
      %v4001 = vunpack.c.l.b16 %v3965
      %v4002 = vunpack.c.l.b16 %v3966
      %v4003 = vunpack.c.l.b16 %v3967
      %v4004 = vunpack.c.l.b16 %v3968
      %v4005 = vunpack.c.l.b16 %v3969
      %v4006 = vunpack.c.l.b16 %v3970
      %v4007 = vunpack.c.l.b16 %v3971
      %v4008 = vunpack.c.l.b16 %v3972
      %v4009 = vpack.c.b16 %v3994, %v3993
      %v4010 = vpack.c.b16 %v3996, %v3995
      %v4011 = vpack.c.b16 %v3998, %v3997
      %v4012 = vpack.c.b16 %v4000, %v3999
      %v4013 = vpack.c.b16 %v4002, %v4001
      %v4014 = vpack.c.b16 %v4004, %v4003
      %v4015 = vpack.c.b16 %v4006, %v4005
      %v4016 = vpack.c.b16 %v4008, %v4007
      %4025 = vmatprep.subr.bf16.mxu0 0
      %4026 = vmatpush1.bf16.msra.mxu0 %v4016
      %4027 = vmatprep.subr.bf16.mxu0 0
      %4028 = vmatpush1.bf16.msra.mxu0 %v4015
      %4029 = vmatprep.subr.bf16.mxu0 0
      %4030 = vmatpush1.bf16.msra.mxu0 %v4014
      %4031 = vmatprep.subr.bf16.mxu0 0
      %4032 = vmatpush1.bf16.msra.mxu0 %v4013
      %4033 = vmatprep.subr.bf16.mxu0 0
      %4034 = vmatpush1.bf16.msra.mxu0 %v4012
      %4035 = vmatprep.subr.bf16.mxu0 0
      %4036 = vmatpush1.bf16.msra.mxu0 %v4011
      %4037 = vmatprep.subr.bf16.mxu0 0
      %4038 = vmatpush1.bf16.msra.mxu0 %v4010
      %4039 = vmatprep.subr.bf16.mxu0 0
      %4040 = vmatpush1.bf16.msra.mxu0 %v4009
      %4041 = vmatprep.subr.bf16.mxu0 0
      %4042 = vmatpush2.bf16.msra.mxu0 0
      %4043 = vmatprep.subr.bf16.mxu0 0
      %4044 = vmatpush2.bf16.msra.mxu0 0
      %4045 = vmatprep.subr.bf16.mxu0 0
      %4046 = vmatpush2.bf16.msra.mxu0 0
      %4047 = vmatprep.subr.bf16.mxu0 0
      %4048 = vmatpush2.bf16.msra.mxu0 0
      %4049 = vmatprep.subr.bf16.mxu0 0
      %4050 = vmatpush2.bf16.msra.mxu0 0
      %4051 = vmatprep.subr.bf16.mxu0 0
      %4052 = vmatpush2.bf16.msra.mxu0 0
      %4053 = vmatprep.subr.bf16.mxu0 0
      %4054 = vmatpush2.bf16.msra.mxu0 0
      %4055 = vmatprep.subr.bf16.mxu0 0
      %4056 = vmatpush2.bf16.msra.mxu0 0
      %4057 = vmatprep.mubr.bf16.mxu0 0
      %4058 = vmatmul.mubr.bf16.gmra.mxu0 %v2307
      %v4059 = vpop.f32.mrf.mxu0
      %v4060 = vadd.f32 0.0, %v4059
      %v4061 = vpop.f32.mrf.mxu0
      %v4062 = vpop.f32.mrf.mxu0
      %v4063 = vadd.f32 0.0, %v4062
      %v4064 = vpop.f32.mrf.mxu0
      %4065 = vmatprep.mubr.bf16.mxu0 0
      %4066 = vmatmul.mubr.bf16.gmra.mxu0 %v2308
      %v4067 = vpop.f32.mrf.mxu0
      %v4068 = vadd.f32 0.0, %v4067
      %v4069 = vpop.f32.mrf.mxu0
      %v4070 = vpop.f32.mrf.mxu0
      %v4071 = vadd.f32 0.0, %v4070
      %v4072 = vpop.f32.mrf.mxu0
      %4073 = vmatprep.mubr.bf16.mxu0 0
      %4074 = vmatmul.mubr.bf16.gmra.mxu0 %v2309
      %v4075 = vpop.f32.mrf.mxu0
      %v4076 = vadd.f32 0.0, %v4075
      %v4077 = vpop.f32.mrf.mxu0
      %v4078 = vpop.f32.mrf.mxu0
      %v4079 = vadd.f32 0.0, %v4078
      %v4080 = vpop.f32.mrf.mxu0
      %4081 = vmatprep.mubr.bf16.mxu0 0
      %4082 = vmatmul.mubr.bf16.gmra.mxu0 %v2310
      %v4083 = vpop.f32.mrf.mxu0
      %v4084 = vadd.f32 0.0, %v4083
      %v4085 = vpop.f32.mrf.mxu0
      %v4086 = vpop.f32.mrf.mxu0
      %v4087 = vadd.f32 0.0, %v4086
      %v4088 = vpop.f32.mrf.mxu0
      %4089 = vmatprep.mubr.bf16.mxu0 0
      %4090 = vmatmul.mubr.bf16.gmra.mxu0 %v2311
      %v4091 = vpop.f32.mrf.mxu0
      %v4092 = vadd.f32 0.0, %v4091
      %v4093 = vpop.f32.mrf.mxu0
      %v4094 = vpop.f32.mrf.mxu0
      %v4095 = vadd.f32 0.0, %v4094
      %v4096 = vpop.f32.mrf.mxu0
      %4097 = vmatprep.mubr.bf16.mxu0 0
      %4098 = vmatmul.mubr.bf16.gmra.mxu0 %v2312
      %v4099 = vpop.f32.mrf.mxu0
      %v4100 = vadd.f32 0.0, %v4099
      %v4101 = vpop.f32.mrf.mxu0
      %v4102 = vpop.f32.mrf.mxu0
      %v4103 = vadd.f32 0.0, %v4102
      %v4104 = vpop.f32.mrf.mxu0
      %4105 = vmatprep.mubr.bf16.mxu0 0
      %4106 = vmatmul.mubr.bf16.gmra.mxu0 %v2313
      %v4107 = vpop.f32.mrf.mxu0
      %v4108 = vadd.f32 0.0, %v4107
      %v4109 = vpop.f32.mrf.mxu0
      %v4110 = vpop.f32.mrf.mxu0
      %v4111 = vadd.f32 0.0, %v4110
      %v4112 = vpop.f32.mrf.mxu0
      %4113 = vmatprep.mubr.bf16.mxu0 0
      %4114 = vmatmul.mubr.bf16.gmra.mxu0 %v2314
      %v4115 = vpop.f32.mrf.mxu0
      %v4116 = vadd.f32 0.0, %v4115
      %v4117 = vpop.f32.mrf.mxu0
      %v4118 = vpop.f32.mrf.mxu0
      %v4119 = vadd.f32 0.0, %v4118
      %v4120 = vpop.f32.mrf.mxu0
      %4121 = vmatprep.mubr.bf16.mxu0 0
      %4122 = vmatmul.mubr.bf16.gmra.mxu0 %v2315
      %v4123 = vpop.f32.mrf.mxu0
      %v4124 = vadd.f32 0.0, %v4123
      %v4125 = vpop.f32.mrf.mxu0
      %v4126 = vpop.f32.mrf.mxu0
      %v4127 = vadd.f32 0.0, %v4126
      %v4128 = vpop.f32.mrf.mxu0
      %4129 = vmatprep.mubr.bf16.mxu0 0
      %4130 = vmatmul.mubr.bf16.gmra.mxu0 %v2316
      %v4131 = vpop.f32.mrf.mxu0
      %v4132 = vadd.f32 0.0, %v4131
      %v4133 = vpop.f32.mrf.mxu0
      %v4134 = vpop.f32.mrf.mxu0
      %v4135 = vadd.f32 0.0, %v4134
      %v4136 = vpop.f32.mrf.mxu0
      %4137 = vmatprep.mubr.bf16.mxu0 0
      %4138 = vmatmul.mubr.bf16.gmra.mxu0 %v2317
      %v4139 = vpop.f32.mrf.mxu0
      %v4140 = vadd.f32 0.0, %v4139
      %v4141 = vpop.f32.mrf.mxu0
      %v4142 = vpop.f32.mrf.mxu0
      %v4143 = vadd.f32 0.0, %v4142
      %v4144 = vpop.f32.mrf.mxu0
      %4145 = vmatprep.mubr.bf16.mxu0 0
      %4146 = vmatmul.mubr.bf16.gmra.mxu0 %v2318
      %v4147 = vpop.f32.mrf.mxu0
      %v4148 = vadd.f32 0.0, %v4147
      %v4149 = vpop.f32.mrf.mxu0
      %v4150 = vpop.f32.mrf.mxu0
      %v4151 = vadd.f32 0.0, %v4150
      %v4152 = vpop.f32.mrf.mxu0
      %4153 = vmatprep.mubr.bf16.mxu0 0
      %4154 = vmatmul.mubr.bf16.gmra.mxu0 %v2319
      %v4155 = vpop.f32.mrf.mxu0
      %v4156 = vadd.f32 0.0, %v4155
      %v4157 = vpop.f32.mrf.mxu0
      %v4158 = vpop.f32.mrf.mxu0
      %v4159 = vadd.f32 0.0, %v4158
      %v4160 = vpop.f32.mrf.mxu0
      %4161 = vmatprep.mubr.bf16.mxu0 0
      %4162 = vmatmul.mubr.bf16.gmra.mxu0 %v2320
      %v4163 = vpop.f32.mrf.mxu0
      %v4164 = vadd.f32 0.0, %v4163
      %v4165 = vpop.f32.mrf.mxu0
      %v4166 = vpop.f32.mrf.mxu0
      %v4167 = vadd.f32 0.0, %v4166
      %v4168 = vpop.f32.mrf.mxu0
      %4169 = vmatprep.mubr.bf16.mxu0 0
      %4170 = vmatmul.mubr.bf16.gmra.mxu0 %v3155
      %v4171 = vpop.f32.mrf.mxu0
      %v4172 = vadd.f32 0.0, %v4171
      %v4173 = vpop.f32.mrf.mxu0
      %v4174 = vpop.f32.mrf.mxu0
      %v4175 = vadd.f32 0.0, %v4174
      %v4176 = vpop.f32.mrf.mxu0
      %4177 = vmatprep.mubr.bf16.mxu0 0
      %4178 = vmatmul.mubr.bf16.gmra.mxu0 %v3975
      %v4179 = vpop.f32.mrf.mxu0
      %v4180 = vadd.f32 0.0, %v4179
      %v4181 = vpop.f32.mrf.mxu0
      %v4182 = vpop.f32.mrf.mxu0
      %v4183 = vadd.f32 0.0, %v4182
      %v4184 = vpop.f32.mrf.mxu0
      %4185 = vdwg.mxu0
      %v4186 = vadd.f32 %v3916, %v4060
      %v4187 = vadd.f32 %v3917, %v4063
      %v4188 = vadd.f32 %v3918, %v4068
      %v4189 = vadd.f32 %v3919, %v4071
      %v4190 = vadd.f32 %v3920, %v4076
      %v4191 = vadd.f32 %v3921, %v4079
      %v4192 = vadd.f32 %v3922, %v4084
      %v4193 = vadd.f32 %v3923, %v4087
      %v4194 = vadd.f32 %v3924, %v4092
      %v4195 = vadd.f32 %v3925, %v4095
      %v4196 = vadd.f32 %v3926, %v4100
      %v4197 = vadd.f32 %v3927, %v4103
      %v4198 = vadd.f32 %v3928, %v4108
      %v4199 = vadd.f32 %v3929, %v4111
      %v4200 = vadd.f32 %v3930, %v4116
      %v4201 = vadd.f32 %v3931, %v4119
      %v4202 = vadd.f32 %v3932, %v4124
      %v4203 = vadd.f32 %v3933, %v4127
      %v4204 = vadd.f32 %v3934, %v4132
      %v4205 = vadd.f32 %v3935, %v4135
      %v4206 = vadd.f32 %v3936, %v4140
      %v4207 = vadd.f32 %v3937, %v4143
      %v4208 = vadd.f32 %v3938, %v4148
      %v4209 = vadd.f32 %v3939, %v4151
      %v4210 = vadd.f32 %v3940, %v4156
      %v4211 = vadd.f32 %v3941, %v4159
      %v4212 = vadd.f32 %v3942, %v4164
      %v4213 = vadd.f32 %v3943, %v4167
      %v4214 = vadd.f32 %v3944, %v4172
      %v4215 = vadd.f32 %v3945, %v4175
      %v4216 = vadd.f32 %v3946, %v4180
      %v4217 = vadd.f32 %v3947, %v4183
      %v4218 = vpack.c.bf16 %v4187, %v4186
      %v4219 = vpack.c.bf16 %v4189, %v4188
      %v4220 = vpack.c.bf16 %v4191, %v4190
      %v4221 = vpack.c.bf16 %v4193, %v4192
      %v4222 = vpack.c.bf16 %v4195, %v4194
      %v4223 = vpack.c.bf16 %v4197, %v4196
      %v4224 = vpack.c.bf16 %v4199, %v4198
      %v4225 = vpack.c.bf16 %v4201, %v4200
      %v4226 = vpack.c.bf16 %v4203, %v4202
      %v4227 = vpack.c.bf16 %v4205, %v4204
      %v4228 = vpack.c.bf16 %v4207, %v4206
      %v4229 = vpack.c.bf16 %v4209, %v4208
      %v4230 = vpack.c.bf16 %v4211, %v4210
      %v4231 = vpack.c.bf16 %v4213, %v4212
      %v4232 = vpack.c.bf16 %v4215, %v4214
      %v4233 = vpack.c.bf16 %v4217, %v4216
      %v4250 = vunpack.c.l.b16 %v4218
      %v4251 = vunpack.c.h.b16 %v4218
      %v4252 = vunpack.c.l.b16 %v4219
      %v4253 = vunpack.c.h.b16 %v4219
      %v4254 = vunpack.c.l.b16 %v4220
      %v4255 = vunpack.c.h.b16 %v4220
      %v4256 = vunpack.c.l.b16 %v4221
      %v4257 = vunpack.c.h.b16 %v4221
      %v4258 = vunpack.c.l.b16 %v4222
      %v4259 = vunpack.c.h.b16 %v4222
      %v4260 = vunpack.c.l.b16 %v4223
      %v4261 = vunpack.c.h.b16 %v4223
      %v4262 = vunpack.c.l.b16 %v4224
      %v4263 = vunpack.c.h.b16 %v4224
      %v4264 = vunpack.c.l.b16 %v4225
      %v4265 = vunpack.c.h.b16 %v4225
      %v4266 = vunpack.c.l.b16 %v4226
      %v4267 = vunpack.c.h.b16 %v4226
      %v4268 = vunpack.c.l.b16 %v4227
      %v4269 = vunpack.c.h.b16 %v4227
      %v4270 = vunpack.c.l.b16 %v4228
      %v4271 = vunpack.c.h.b16 %v4228
      %v4272 = vunpack.c.l.b16 %v4229
      %v4273 = vunpack.c.h.b16 %v4229
      %v4274 = vunpack.c.l.b16 %v4230
      %v4275 = vunpack.c.h.b16 %v4230
      %v4276 = vunpack.c.l.b16 %v4231
      %v4277 = vunpack.c.h.b16 %v4231
      %v4278 = vunpack.c.l.b16 %v4232
      %v4279 = vunpack.c.h.b16 %v4232
      %v4280 = vunpack.c.l.b16 %v4233
      %v4281 = vunpack.c.h.b16 %v4233
      %v4282 = vpack.c.b16 %v4250, %v4250
      %v4283 = vpack.c.b16 %v4251, %v4251
      %v4284 = vpack.c.b16 %v4252, %v4252
      %v4285 = vpack.c.b16 %v4253, %v4253
      %v4286 = vpack.c.b16 %v4254, %v4254
      %v4287 = vpack.c.b16 %v4255, %v4255
      %v4288 = vpack.c.b16 %v4256, %v4256
      %v4289 = vpack.c.b16 %v4257, %v4257
      %v4290 = vpack.c.b16 %v4258, %v4258
      %v4291 = vpack.c.b16 %v4259, %v4259
      %v4292 = vpack.c.b16 %v4260, %v4260
      %v4293 = vpack.c.b16 %v4261, %v4261
      %v4294 = vpack.c.b16 %v4262, %v4262
      %v4295 = vpack.c.b16 %v4263, %v4263
      %v4296 = vpack.c.b16 %v4264, %v4264
      %v4297 = vpack.c.b16 %v4265, %v4265
      %v4298 = vpack.c.b16 %v4266, %v4266
      %v4299 = vpack.c.b16 %v4267, %v4267
      %v4300 = vpack.c.b16 %v4268, %v4268
      %v4301 = vpack.c.b16 %v4269, %v4269
      %v4302 = vpack.c.b16 %v4270, %v4270
      %v4303 = vpack.c.b16 %v4271, %v4271
      %v4304 = vpack.c.b16 %v4272, %v4272
      %v4305 = vpack.c.b16 %v4273, %v4273
      %v4306 = vpack.c.b16 %v4274, %v4274
      %v4307 = vpack.c.b16 %v4275, %v4275
      %v4308 = vpack.c.b16 %v4276, %v4276
      %v4309 = vpack.c.b16 %v4277, %v4277
      %v4310 = vpack.c.b16 %v4278, %v4278
      %v4311 = vpack.c.b16 %v4279, %v4279
      %v4312 = vpack.c.b16 %v4280, %v4280
      %v4313 = vpack.c.b16 %v4281, %v4281
      %4346 = vst [vmem:[%s258] sm:$0xf] %v4282
      %4347 = vst [vmem:[%s258 + $0x4] sm:$0xf] %v4283
      %4348 = vst [vmem:[%s258 + $0x8] sm:$0xf] %v4284
      %4349 = vst [vmem:[%s258 + $0xc] sm:$0xf] %v4285
      %4350 = vst [vmem:[%s258 + $0x10] sm:$0xf] %v4286
      %4351 = vst [vmem:[%s258 + $0x14] sm:$0xf] %v4287
      %4352 = vst [vmem:[%s258 + $0x18] sm:$0xf] %v4288
      %4353 = vst [vmem:[%s258 + $0x1c] sm:$0xf] %v4289
      %4354 = vst [vmem:[%s258 + $0x20] sm:$0xf] %v4290
      %4355 = vst [vmem:[%s258 + $0x24] sm:$0xf] %v4291
      %4356 = vst [vmem:[%s258 + $0x28] sm:$0xf] %v4292
      %4357 = vst [vmem:[%s258 + $0x2c] sm:$0xf] %v4293
      %4358 = vst [vmem:[%s258 + $0x30] sm:$0xf] %v4294
      %4359 = vst [vmem:[%s258 + $0x34] sm:$0xf] %v4295
      %4360 = vst [vmem:[%s258 + $0x38] sm:$0xf] %v4296
      %4361 = vst [vmem:[%s258 + $0x3c] sm:$0xf] %v4297
      %4362 = vst [vmem:[%s258 + $0x40] sm:$0xf] %v4298
      %4363 = vst [vmem:[%s258 + $0x44] sm:$0xf] %v4299
      %4364 = vst [vmem:[%s258 + $0x48] sm:$0xf] %v4300
      %4365 = vst [vmem:[%s258 + $0x4c] sm:$0xf] %v4301
      %4366 = vst [vmem:[%s258 + $0x50] sm:$0xf] %v4302
      %4367 = vst [vmem:[%s258 + $0x54] sm:$0xf] %v4303
      %4368 = vst [vmem:[%s258 + $0x58] sm:$0xf] %v4304
      %4369 = vst [vmem:[%s258 + $0x5c] sm:$0xf] %v4305
      %4370 = vst [vmem:[%s258 + $0x60] sm:$0xf] %v4306
      %4371 = vst [vmem:[%s258 + $0x64] sm:$0xf] %v4307
      %4372 = vst [vmem:[%s258 + $0x68] sm:$0xf] %v4308
      %4373 = vst [vmem:[%s258 + $0x6c] sm:$0xf] %v4309
      %4374 = vst [vmem:[%s258 + $0x70] sm:$0xf] %v4310
      %4375 = vst [vmem:[%s258 + $0x74] sm:$0xf] %v4311
      %4376 = vst [vmem:[%s258 + $0x78] sm:$0xf] %v4312
      %4377 = vst [vmem:[%s258 + $0x7c] sm:$0xf] %v4313
      %v4378 = vadd.f32 %v4186, %v4187
      %v4379 = vadd.f32 %v4378, %v4188
      %v4380 = vadd.f32 %v4379, %v4189
      %v4381 = vadd.f32 %v4380, %v4190
      %v4382 = vadd.f32 %v4381, %v4191
      %v4383 = vadd.f32 %v4382, %v4192
      %v4384 = vadd.f32 %v4383, %v4193
      %v4385 = vadd.f32 %v4384, %v4194
      %v4386 = vadd.f32 %v4385, %v4195
      %v4387 = vadd.f32 %v4386, %v4196
      %v4388 = vadd.f32 %v4387, %v4197
      %v4389 = vadd.f32 %v4388, %v4198
      %v4390 = vadd.f32 %v4389, %v4199
      %v4391 = vadd.f32 %v4390, %v4200
      %v4392 = vadd.f32 %v4391, %v4201
      %v4393 = vadd.f32 %v4392, %v4202
      %v4394 = vadd.f32 %v4393, %v4203
      %v4395 = vadd.f32 %v4394, %v4204
      %v4396 = vadd.f32 %v4395, %v4205
      %v4397 = vadd.f32 %v4396, %v4206
      %v4398 = vadd.f32 %v4397, %v4207
      %v4399 = vadd.f32 %v4398, %v4208
      %v4400 = vadd.f32 %v4399, %v4209
      %v4401 = vadd.f32 %v4400, %v4210
      %v4402 = vadd.f32 %v4401, %v4211
      %v4403 = vadd.f32 %v4402, %v4212
      %v4404 = vadd.f32 %v4403, %v4213
      %v4405 = vadd.f32 %v4404, %v4214
      %v4406 = vadd.f32 %v4405, %v4215
      %v4407 = vadd.f32 %v4406, %v4216
      %v4408 = vadd.f32 %v4407, %v4217
      %v4409 = vrot.slane %v4408, 4
      %v4410 = vadd.f32 %v4408, %v4409
      %v4411 = vrot.slane %v4410, 2
      %v4412 = vadd.f32 %v4410, %v4411
      %v4413 = vrot.slane %v4412, 1
      %v4414 = vadd.f32 %v4412, %v4413
      %v4415 = vmul.f32 %v4186, %v4186
      %v4416 = vmul.f32 %v4187, %v4187
      %v4417 = vmul.f32 %v4188, %v4188
      %v4418 = vmul.f32 %v4189, %v4189
      %v4419 = vmul.f32 %v4190, %v4190
      %v4420 = vmul.f32 %v4191, %v4191
      %v4421 = vmul.f32 %v4192, %v4192
      %v4422 = vmul.f32 %v4193, %v4193
      %v4423 = vmul.f32 %v4194, %v4194
      %v4424 = vmul.f32 %v4195, %v4195
      %v4425 = vmul.f32 %v4196, %v4196
      %v4426 = vmul.f32 %v4197, %v4197
      %v4427 = vmul.f32 %v4198, %v4198
      %v4428 = vmul.f32 %v4199, %v4199
      %v4429 = vmul.f32 %v4200, %v4200
      %v4430 = vmul.f32 %v4201, %v4201
      %v4431 = vmul.f32 %v4202, %v4202
      %v4432 = vmul.f32 %v4203, %v4203
      %v4433 = vmul.f32 %v4204, %v4204
      %v4434 = vmul.f32 %v4205, %v4205
      %v4435 = vmul.f32 %v4206, %v4206
      %v4436 = vmul.f32 %v4207, %v4207
      %v4437 = vmul.f32 %v4208, %v4208
      %v4438 = vmul.f32 %v4209, %v4209
      %v4439 = vmul.f32 %v4210, %v4210
      %v4440 = vmul.f32 %v4211, %v4211
      %v4441 = vmul.f32 %v4212, %v4212
      %v4442 = vmul.f32 %v4213, %v4213
      %v4443 = vmul.f32 %v4214, %v4214
      %v4444 = vmul.f32 %v4215, %v4215
      %v4445 = vmul.f32 %v4216, %v4216
      %v4446 = vmul.f32 %v4217, %v4217
      %v4447 = vadd.f32 %v4415, %v4416
      %v4448 = vadd.f32 %v4447, %v4417
      %v4449 = vadd.f32 %v4448, %v4418
      %v4450 = vadd.f32 %v4449, %v4419
      %v4451 = vadd.f32 %v4450, %v4420
      %v4452 = vadd.f32 %v4451, %v4421
      %v4453 = vadd.f32 %v4452, %v4422
      %v4454 = vadd.f32 %v4453, %v4423
      %v4455 = vadd.f32 %v4454, %v4424
      %v4456 = vadd.f32 %v4455, %v4425
      %v4457 = vadd.f32 %v4456, %v4426
      %v4458 = vadd.f32 %v4457, %v4427
      %v4459 = vadd.f32 %v4458, %v4428
      %v4460 = vadd.f32 %v4459, %v4429
      %v4461 = vadd.f32 %v4460, %v4430
      %v4462 = vadd.f32 %v4461, %v4431
      %v4463 = vadd.f32 %v4462, %v4432
      %v4464 = vadd.f32 %v4463, %v4433
      %v4465 = vadd.f32 %v4464, %v4434
      %v4466 = vadd.f32 %v4465, %v4435
      %v4467 = vadd.f32 %v4466, %v4436
      %v4468 = vadd.f32 %v4467, %v4437
      %v4469 = vadd.f32 %v4468, %v4438
      %v4470 = vadd.f32 %v4469, %v4439
      %v4471 = vadd.f32 %v4470, %v4440
      %v4472 = vadd.f32 %v4471, %v4441
      %v4473 = vadd.f32 %v4472, %v4442
      %v4474 = vadd.f32 %v4473, %v4443
      %v4475 = vadd.f32 %v4474, %v4444
      %v4476 = vadd.f32 %v4475, %v4445
      %v4477 = vadd.f32 %v4476, %v4446
      %v4478 = vrot.slane %v4477, 4
      %v4479 = vadd.f32 %v4477, %v4478
      %v4480 = vrot.slane %v4479, 2
      %v4481 = vadd.f32 %v4479, %v4480
      %v4482 = vrot.slane %v4481, 1
      %v4483 = vadd.f32 %v4481, %v4482
      %vm4484 = vcmask 1040384
      %v4485 = vsel %vm4484, %v4414, %v4483
      %4486 = vst [vmem:[%s262] sm:$0x3] %v4485
      %p4487 = scmp.lt.s32.totalorder %s18, 1
      %s4488 = scalar_select %p4487, %s18, 1
      %s4489 = smul.addr %s4488, 32
      %s4490 = smul.addr %s4489, 4
      %s4491 = scalar_lea.vmem %s5, %s4490
      %p4492 = scmp.lt.s32.totalorder %s18, 1
      %s4493 = scalar_select %p4492, %s18, 1
      %s4494 = smul.addr %s4493, 2
      %s4495 = scalar_lea.vmem %s6, %s4494
      // Predicated region
      $region41: #{bottleneck_forward.5} parent=39 // pred_check
        %p4496 = pneg %p146
      $region42: #{bottleneck_forward.5} parent=39 // pred_check_branch
        %4498 = sbr.rel (%p4496) target = $region44
      $region43: #{bottleneck_forward.5} parent=39 // pred_region
        _
      $region44: #{bottleneck_forward.5} parent=39 // pred_fallthru
        _
      // Predicated region
      $region45: #{bottleneck_forward.5} parent=39 // pred_check
        %p4499 = pneg %p172
      $region46: #{bottleneck_forward.5} parent=39 // pred_check_branch
        %4501 = sbr.rel (%p4499) target = $region48
      $region47: #{bottleneck_forward.5} parent=39 // pred_region
        _
      $region48: #{bottleneck_forward.5} parent=39 // pred_fallthru
        _
    $region40: #{bottleneck_forward.5} parent=5 // pred_fallthru
      _
    %p4502 = scmp.le.s32.totalorder 2, %s13
    // Predicated region
    $region49: #{bottleneck_forward.5} parent=5 // pred_check
      %p4503 = pneg %p4502
    $region50: #{bottleneck_forward.5} parent=5 // pred_check_branch
      %4505 = sbr.rel (%p4503) target = $region52
    $region51: #{bottleneck_forward.5} parent=5 // pred_region
      %s4506 = ssub.s32 %s13, 2
      // Predicated region
      $region53: #{bottleneck_forward.5} parent=51 // pred_check
        %p4507 = pneg %p152
      $region54: #{bottleneck_forward.5} parent=51 // pred_check_branch
        %4509 = sbr.rel (%p4507) target = $region56
      $region55: #{bottleneck_forward.5} parent=51 // pred_region
        %p4510 = scmp.lt.s32.totalorder %s19, 1
        %s4511 = scalar_select %p4510, %s19, 1
        %s4512 = smul.addr %s4511, 32
        %s4513 = smul.addr %s4512, 4
        %s4514 = scalar_lea.vmem %s5, %s4513
      $region56: #{bottleneck_forward.5} parent=51 // pred_fallthru
        _
      // Predicated region
      $region57: #{bottleneck_forward.5} parent=51 // pred_check
        %p4515 = pneg %p178
      $region58: #{bottleneck_forward.5} parent=51 // pred_check_branch
        %4517 = sbr.rel (%p4515) target = $region60
      $region59: #{bottleneck_forward.5} parent=51 // pred_region
        %p4518 = scmp.lt.s32.totalorder %s19, 1
        %s4519 = scalar_select %p4518, %s19, 1
        %s4520 = smul.addr %s4519, 2
        %s4521 = scalar_lea.vmem %s6, %s4520
      $region60: #{bottleneck_forward.5} parent=51 // pred_fallthru
        _
    $region52: #{bottleneck_forward.5} parent=5 // pred_fallthru
      _
  $region6: #{bottleneck_forward.5} parent=0 // loop_footer
    %s17 = sadd.s32 1, %s13
  $region7: #{bottleneck_forward.5} parent=0 // loop_footer_branch
    %12 = sbr.rel target = $region3
  $region8: #{bottleneck_forward.5} parent=0 // loop_exit
    _

</llo_original>
